<compile_context>
chip_gen: v6e
topology: v6e:2x2x1
jax: 0.10.0
libtpu: 0.0.40
codegen_flags: <defaults>
</compile_context>

<pallas_src>
import functools

import jax
import jax.numpy as jnp
from jax.experimental import pallas as pl
from jax.experimental.pallas import tpu as pltpu


_VMEM_LIMIT_BYTES = 32 * 1024 * 1024   # conservative: fits v7x (64 MiB physical)
_M_TILE = 2048                          # lane tile once M exceeds this
_BN_EPS = 1e-5                          # nn.BatchNorm2d default


def _round_up(x, m):
    return (x + m - 1) // m * m


# ---------------------------------------------------------------------------
# Pallas kernels
# ---------------------------------------------------------------------------
def _fused_gemm_bn_relu_kernel(w_ref, p_ref, g_ref, b_ref, o_ref,
                               y_scr, ssum_scr, ssq_scr, *, count, eps, tm):
    """One ConvTranspose+BN+ReLU layer, fully fused.

    Per grid step (an M tile):
      y      = W^T @ patches            (all phases batched, f32 MXU accum)
      y_scr  <- y                       (stays resident in VMEM)
      stats += per-channel sum / sumsq over phases and pixels
    On the last step: finalize batch-BN affine and write relu(y*scale+shift)
    for the whole layer from VMEM scratch (output block is resident)."""
    i = pl.program_id(0)
    nm = pl.num_programs(0)

    @pl.when(i == 0)
    def _init():
        ssum_scr[...] = jnp.zeros_like(ssum_scr)
        ssq_scr[...] = jnp.zeros_like(ssq_scr)

    # (P, C, K) x (P, K, tm) -> (P, C, tm); phases are a batch dim.
    y = jax.lax.dot_general(
        w_ref[...], p_ref[...],
        dimension_numbers=(((2,), (1,)), ((0,), (0,))),
        preferred_element_type=jnp.float32)

    off = pl.multiple_of(i * tm, 128)
    y_scr[:, :, pl.ds(off, tm)] = y
    ssum_scr[...] += jnp.sum(y, axis=2, keepdims=True).sum(axis=0)
    ssq_scr[...] += jnp.sum(y * y, axis=2, keepdims=True).sum(axis=0)

    @pl.when(i == nm - 1)
    def _finalize():
        mean = ssum_scr[...] * (1.0 / count)
        var = jnp.maximum(ssq_scr[...] * (1.0 / count) - mean * mean, 0.0)
        inv = g_ref[...] * jax.lax.rsqrt(var + eps)
        shift = b_ref[...] - mean * inv
        o_ref[...] = jnp.maximum(
            y_scr[...] * inv[None, :, :] + shift[None, :, :], 0.0
        ).astype(o_ref.dtype)


def _fused_gemm_tanh_kernel(w_ref, p_ref, o_ref):
    """Final (BN-free) layer: out = tanh(W^T @ patches); tanh runs on the EUP."""
    y = jax.lax.dot_general(
        w_ref[...], p_ref[...],
        dimension_numbers=(((2,), (1,)), ((0,), (0,))),
        preferred_element_type=jnp.float32)
    o_ref[...] = jnp.tanh(y).astype(o_ref.dtype)


# ---------------------------------------------------------------------------
# pallas_call wrappers
# ---------------------------------------------------------------------------
def _pad_operands(w_t, patches):
    """Pad Cout to a multiple of 16 (bf16 packing) and M to a multiple of 128
    (lane-dense stores); pick the M tile."""
    num_p, cout, k = w_t.shape
    m = patches.shape[2]
    co_p = _round_up(max(cout, 16), 16)
    mp = _round_up(m, 128)
    if mp > _M_TILE:
        mp = _round_up(m, _M_TILE)
        tm = _M_TILE
    else:
        tm = mp
    if co_p != cout:
        w_t = jnp.pad(w_t, ((0, 0), (0, co_p - cout), (0, 0)))
    if mp != m:
        patches = jnp.pad(patches, ((0, 0), (0, 0), (0, mp - m)))
    return w_t, patches, co_p, mp, tm


def _fused_convt_bn_relu(w_t, patches, gamma, beta, count):
    """w_t: (P, Cout, K) bf16, patches: (P, K, M) bf16, gamma/beta: (Cout,) f32.
    Returns relu(BN(conv)) as (P, Cout, M) bf16."""
    num_p, cout, k = w_t.shape
    m = patches.shape[2]
    w_t, patches, co_p, mp, tm = _pad_operands(w_t, patches)
    gp = jnp.pad(gamma.astype(jnp.float32), (0, co_p - cout))[:, None]
    bp = jnp.pad(beta.astype(jnp.float32), (0, co_p - cout))[:, None]
    nm = mp // tm

    out = pl.pallas_call(
        functools.partial(_fused_gemm_bn_relu_kernel,
                          count=float(count), eps=_BN_EPS, tm=tm),
        out_shape=jax.ShapeDtypeStruct((num_p, co_p, mp), jnp.bfloat16),
        grid_spec=pltpu.PrefetchScalarGridSpec(
            num_scalar_prefetch=0,
            grid=(nm,),
            in_specs=[
                pl.BlockSpec((num_p, co_p, k), lambda i: (0, 0, 0)),  # resident
                pl.BlockSpec((num_p, k, tm), lambda i: (0, 0, i)),
                pl.BlockSpec((co_p, 1), lambda i: (0, 0)),
                pl.BlockSpec((co_p, 1), lambda i: (0, 0)),
            ],
            out_specs=pl.BlockSpec((num_p, co_p, mp), lambda i: (0, 0, 0)),
            scratch_shapes=[
                pltpu.VMEM((num_p, co_p, mp), jnp.float32),   # resident f32 y
                pltpu.VMEM((co_p, 1), jnp.float32),           # channel sum
                pltpu.VMEM((co_p, 1), jnp.float32),           # channel sum-of-squares
            ]),
        compiler_params=pltpu.CompilerParams(
            dimension_semantics=("arbitrary",),               # last-step finalize
            vmem_limit_bytes=_VMEM_LIMIT_BYTES),
    )(w_t, patches, gp, bp)
    return out[:, :cout, :m]


def _fused_convt_tanh(w_t, patches):
    """Final layer: tanh(conv) as (P, Cout, M) f32.  No BN -> M is parallel."""
    num_p, cout, k = w_t.shape
    m = patches.shape[2]
    w_t, patches, co_p, mp, tm = _pad_operands(w_t, patches)
    nm = mp // tm

    out = pl.pallas_call(
        _fused_gemm_tanh_kernel,
        out_shape=jax.ShapeDtypeStruct((num_p, co_p, mp), jnp.float32),
        grid_spec=pltpu.PrefetchScalarGridSpec(
            num_scalar_prefetch=0,
            grid=(nm,),
            in_specs=[
                pl.BlockSpec((num_p, co_p, k), lambda i: (0, 0, 0)),
                pl.BlockSpec((num_p, k, tm), lambda i: (0, 0, i)),
            ],
            out_specs=pl.BlockSpec((num_p, co_p, tm), lambda i: (0, 0, i))),
        compiler_params=pltpu.CompilerParams(
            dimension_semantics=("parallel",),
            vmem_limit_bytes=_VMEM_LIMIT_BYTES),
    )(w_t, patches)
    return out[:, :cout, :m]


# ---------------------------------------------------------------------------
# JAX glue: im2col tap slicing, phase decomposition, sub-pixel interleave
# ---------------------------------------------------------------------------
def _s1_patches_weights(a, w, padding):
    """Stride-1 transposed conv as a dense conv with the flipped kernel on the
    (k-1-p)-padded input.  a: (Cin, N, H, W); w: (Cin, Cout, kH, kW)."""
    cin, n, h, ww = a.shape
    _, cout, kh, kw = w.shape
    ph, pw = padding
    ho = h + kh - 1 - 2 * ph
    wo = ww + kw - 1 - 2 * pw
    ap = jnp.pad(a, ((0, 0), (0, 0),
                     (kh - 1 - ph, kh - 1 - ph),
                     (kw - 1 - pw, kw - 1 - pw)))
    taps = []
    for dh in range(kh):
        for dw in range(kw):
            taps.append(ap[:, :, dh:dh + ho, dw:dw + wo])      # (Cin, N, Ho, Wo)
    patches = jnp.stack(taps, axis=1).reshape(cin * kh * kw, n * ho * wo)
    # tap (dh, dw) multiplies W[:, :, kh-1-dh, kw-1-dw]  (flipped kernel)
    w_t = jnp.flip(w, axis=(2, 3)).transpose(1, 0, 2, 3).reshape(cout, cin * kh * kw)
    return (w_t[None].astype(jnp.bfloat16),
            patches[None].astype(jnp.bfloat16),
            (cout, n, ho, wo))


def _s2_phase_patches_weights(a, w):
    """Sub-pixel phase decomposition of ConvTranspose2d(k=4, s=2, p=1).
    a: (Cin, N, H, W); w: (Cin, Cout, 4, 4).
    Phase (ph, pw) of the 2H x 2W output: y[2i+ph, 2j+pw] uses taps
    xpad[i+ph+dh, j+pw+dw] * W[3-ph-2dh, 3-pw-2dw],  dh, dw in {0, 1}."""
    cin, n, h, ww = a.shape
    _, cout, kh, kw = w.shape
    assert kh == 4 and kw == 4, "phase path specialized to k=4, s=2, p=1"
    ap = jnp.pad(a, ((0, 0), (0, 0), (1, 1), (1, 1)))
    p_list, w_list = [], []
    for ph in range(2):
        for pw in range(2):
            taps = []
            for dh in range(2):
                for dw in range(2):
                    taps.append(ap[:, :, ph + dh:ph + dh + h, pw + dw:pw + dw + ww])
            p_list.append(jnp.stack(taps, axis=1).reshape(cin * 4, n * h * ww))
            wp = w[:, :, (3 - ph, 1 - ph), :][:, :, :, (3 - pw, 1 - pw)]  # (Cin,Cout,2,2)
            w_list.append(wp.transpose(1, 0, 2, 3).reshape(cout, cin * 4))
    patches = jnp.stack(p_list, axis=0).astype(jnp.bfloat16)   # (4, 4*Cin, N*H*W)
    w_t = jnp.stack(w_list, axis=0).astype(jnp.bfloat16)       # (4, Cout, 4*Cin)
    return w_t, patches, (cout, n, 2 * h, 2 * ww)


def _interleave_phases(y, cout, n, h, w):
    """y: (4, Cout, N*H*W), phase index = ph*2 + pw -> (Cout, N, 2H, 2W)."""
    y = y.reshape(2, 2, cout, n, h, w)
    y = y.transpose(2, 3, 4, 0, 5, 1)            # (Cout, N, H, ph, W, pw)
    return y.reshape(cout, n, 2 * h, 2 * w)


# ---------------------------------------------------------------------------
# Layer drivers (activations live in (C, N, H, W) layout, bf16)
# ---------------------------------------------------------------------------
def _convT_bn_relu_s1(a, w, gamma, beta, padding=(0, 0)):
    w_t, patches, (cout, n, ho, wo) = _s1_patches_weights(a, w, padding)
    y = _fused_convt_bn_relu(w_t, patches, gamma, beta, count=n * ho * wo)
    return y[0].reshape(cout, n, ho, wo)


def _convT_bn_relu_s2(a, w, gamma, beta):
    _, n, h, ww = a.shape
    w_t, patches, (cout, _, ho, wo) = _s2_phase_patches_weights(a, w)
    y = _fused_convt_bn_relu(w_t, patches, gamma, beta, count=n * ho * wo)
    return _interleave_phases(y, cout, n, h, ww)


def _convT_tanh_s2(a, w):
    _, n, h, ww = a.shape
    w_t, patches, (cout, _, _, _) = _s2_phase_patches_weights(a, w)
    y = _fused_convt_tanh(w_t, patches)
    return _interleave_phases(y, cout, n, h, ww)


# ---------------------------------------------------------------------------
# LINnet_G parameters + forward
# ---------------------------------------------------------------------------
def init_params(key, nc=1, ngf=8, nz=16):
    ks = jax.random.split(key, 9)

    def conv_w(k, cin, cout, kh, kw):
        # weights_init: Conv* -> N(0, 0.02); ConvTranspose2d weight is (Cin, Cout, kH, kW)
        return 0.02 * jax.random.normal(k, (cin, cout, kh, kw), jnp.float32)

    def bn_params(k, c):
        # weights_init: BatchNorm -> weight ~ N(1, 0.02), bias = 0
        return (1.0 + 0.02 * jax.random.normal(k, (c,), jnp.float32),
                jnp.zeros((c,), jnp.float32))

    p = {}
    p["w1"] = conv_w(ks[0], nz, ngf * 8, 3, 5)
    p["g1"], p["b1"] = bn_params(ks[1], ngf * 8)
    p["w2"] = conv_w(ks[2], ngf * 8, ngf * 4, 4, 4)
    p["g2"], p["b2"] = bn_params(ks[3], ngf * 4)
    p["w3"] = conv_w(ks[4], ngf * 4, ngf * 2, 4, 4)
    p["g3"], p["b3"] = bn_params(ks[5], ngf * 2)
    p["w4"] = conv_w(ks[6], ngf * 2, ngf, 4, 4)
    p["g4"], p["b4"] = bn_params(ks[7], ngf)
    p["w5"] = conv_w(ks[8], ngf, nc, 4, 4)
    return p


def linnet_g_forward(x, p):
    # x: (N, Cin, H, W) NCHW -> internal (C, N, H, W) bf16 layout
    a = x.astype(jnp.bfloat16).transpose(1, 0, 2, 3)
    # layer1: ConvTranspose2d(nz, ngf*8, k=(3,5), s=1, p=0) + BN + ReLU
    a = _convT_bn_relu_s1(a, p["w1"], p["g1"], p["b1"], padding=(0, 0))
    # layers 2-4: ConvTranspose2d(k=4, s=2, p=1) + BN + ReLU (phase-decomposed)
    a = _convT_bn_relu_s2(a, p["w2"], p["g2"], p["b2"])
    a = _convT_bn_relu_s2(a, p["w3"], p["g3"], p["b3"])
    a = _convT_bn_relu_s2(a, p["w4"], p["g4"], p["b4"])
    # layer5: ConvTranspose2d(ngf, nc, k=4, s=2, p=1) + Tanh (fused in GEMM)
    a = _convT_tanh_s2(a, p["w5"])                   # (nc, N, Ho, Wo) f32
    return a.transpose(1, 0, 2, 3)                   # back to NCHW


if __name__ == "__main__":
    nc, ngf, nz = 1, 8, 16          # small but structurally identical to LINnet_G
    batch = 2
    key = jax.random.PRNGKey(0)
    kx, kp = jax.random.split(key)

    x = jax.random.normal(kx, (batch, nz, 1, 1), jnp.float32)   # DCGAN latent
    params = init_params(kp, nc=nc, ngf=ngf, nz=nz)

    fwd = jax.jit(lambda xx: linnet_g_forward(xx, params))
    out = jax.block_until_ready(fwd(x))

    # spatial: 1x1 -> 3x5 -> 6x10 -> 12x20 -> 24x40 -> 48x80
    assert out.shape == (batch, nc, 48, 80), out.shape
    assert out.dtype == jnp.float32
    assert bool(jnp.all(jnp.isfinite(out)))
    assert bool(jnp.all(jnp.abs(out) <= 1.0 + 1e-5))   # tanh range
    print("KERNEL_OK")
</pallas_src>

<mosaic_0001>
module attributes {stable_mosaic.version = 11 : i64} {
  func.func @_fused_gemm_bn_relu_kernel(%arg0: i32, %arg1: memref<1x64x240xbf16, #tpu.memory_space<vmem>>, %arg2: memref<1x240x128xbf16, #tpu.memory_space<vmem>>, %arg3: memref<64x1xf32, #tpu.memory_space<vmem>>, %arg4: memref<64x1xf32, #tpu.memory_space<vmem>>, %arg5: memref<1x64x128xbf16, #tpu.memory_space<vmem>>, %arg6: memref<1x64x128xf32, #tpu.memory_space<vmem>>, %arg7: memref<64x1xf32, #tpu.memory_space<vmem>>, %arg8: memref<64x1xf32, #tpu.memory_space<vmem>>) attributes {dimension_semantics = [#tpu.dimension_semantics<arbitrary>], iteration_bounds = array<i64: 1>, scalar_prefetch = 0 : i64, scratch_operands = 3 : i64, tpu.core_type = #tpu.core_type<tc>, window_params = [{pipeline_mode = #tpu.pipeline_mode<synchronous>, transform_indices = @transform_0, window_bounds = array<i64: 1, 64, 240>}, {transform_indices = @transform_1, window_bounds = array<i64: 1, 240, 128>}, {pipeline_mode = #tpu.pipeline_mode<synchronous>, transform_indices = @transform_2, window_bounds = array<i64: 64, 1>}, {pipeline_mode = #tpu.pipeline_mode<synchronous>, transform_indices = @transform_3, window_bounds = array<i64: 64, 1>}, {pipeline_mode = #tpu.pipeline_mode<synchronous>, transform_indices = @transform_4, window_bounds = array<i64: 1, 64, 128>}]} {
    %c0_i32 = arith.constant 0 : i32
    %0 = arith.cmpi eq, %arg0, %c0_i32 : i32
    %1 = arith.extui %0 : i1 to i32
    %c0_i32_0 = arith.constant 0 : i32
    %2 = arith.cmpi ne, %1, %c0_i32_0 : i32
    scf.if %2 {
      %cst_22 = arith.constant 0.000000e+00 : f32
      %26 = vector.broadcast %cst_22 : f32 to vector<64x1xf32>
      %c0_23 = arith.constant 0 : index
      %c0_24 = arith.constant 0 : index
      %27 = vector.load %arg7[%c0_23, %c0_24] : memref<64x1xf32, #tpu.memory_space<vmem>>, vector<64x1xf32>
      tpu.vector_store %arg7[%c0_23, %c0_24], %26 {strides = array<i32>} : memref<64x1xf32, #tpu.memory_space<vmem>>, vector<64x1xf32>,
      %cst_25 = arith.constant 0.000000e+00 : f32
      %28 = vector.broadcast %cst_25 : f32 to vector<64x1xf32>
      %c0_26 = arith.constant 0 : index
      %c0_27 = arith.constant 0 : index
      %29 = vector.load %arg8[%c0_26, %c0_27] : memref<64x1xf32, #tpu.memory_space<vmem>>, vector<64x1xf32>
      tpu.vector_store %arg8[%c0_26, %c0_27], %28 {strides = array<i32>} : memref<64x1xf32, #tpu.memory_space<vmem>>, vector<64x1xf32>,
    } else {
    }
    %c0 = arith.constant 0 : index
    %c0_1 = arith.constant 0 : index
    %c0_2 = arith.constant 0 : index
    %3 = vector.load %arg1[%c0, %c0_1, %c0_2] : memref<1x64x240xbf16, #tpu.memory_space<vmem>>, vector<1x64x240xbf16>
    %c0_3 = arith.constant 0 : index
    %c0_4 = arith.constant 0 : index
    %c0_5 = arith.constant 0 : index
    %4 = vector.load %arg2[%c0_3, %c0_4, %c0_5] : memref<1x240x128xbf16, #tpu.memory_space<vmem>>, vector<1x240x128xbf16>
    %cst = arith.constant dense<0.000000e+00> : vector<1x64x128xf32>
    %5 = tpu.matmul %3, %4, %cst {dimension_numbers = #tpu.dot_dimension_numbers<[2], [1], [1], [2], [0, 0, 0, 1, 1, 2], [0], [0]>} : vector<1x64x240xbf16>, vector<1x240x128xbf16>, vector<1x64x128xf32> -> vector<1x64x128xf32>
    %c128_i32 = arith.constant 128 : i32
    %6 = arith.muli %arg0, %c128_i32 : i32
    %7 = tpu.assume_multiple %6, 128 : i32
    %c0_6 = arith.constant 0 : index
    %c0_7 = arith.constant 0 : index
    %8 = arith.index_cast %7 : i32 to index
    %9 = vector.load %arg6[%c0_6, %c0_7, %8] : memref<1x64x128xf32, #tpu.memory_space<vmem>>, vector<1x64x128xf32>
    tpu.vector_store %arg6[%c0_6, %c0_7, %8], %5 {strides = array<i32>} : memref<1x64x128xf32, #tpu.memory_space<vmem>>, vector<1x64x128xf32>,
    %c0_8 = arith.constant 0 : index
    %c0_9 = arith.constant 0 : index
    %10 = vector.load %arg7[%c0_8, %c0_9] : memref<64x1xf32, #tpu.memory_space<vmem>>, vector<64x1xf32>
    %cst_10 = arith.constant dense<0.000000e+00> : vector<1x64xf32>
    %11 = vector.multi_reduction <add>, %5, %cst_10 [2] : vector<1x64x128xf32> to vector<1x64xf32>
    %12 = vector.shape_cast %11 : vector<1x64xf32> to vector<1x64x1xf32>
    %cst_11 = arith.constant dense<0.000000e+00> : vector<64x1xf32>
    %13 = vector.multi_reduction <add>, %12, %cst_11 [0] : vector<1x64x1xf32> to vector<64x1xf32>
    %14 = arith.addf %10, %13 : vector<64x1xf32>
    %c0_12 = arith.constant 0 : index
    %c0_13 = arith.constant 0 : index
    %15 = vector.load %arg7[%c0_12, %c0_13] : memref<64x1xf32, #tpu.memory_space<vmem>>, vector<64x1xf32>
    tpu.vector_store %arg7[%c0_12, %c0_13], %14 {strides = array<i32>} : memref<64x1xf32, #tpu.memory_space<vmem>>, vector<64x1xf32>,
    %c0_14 = arith.constant 0 : index
    %c0_15 = arith.constant 0 : index
    %16 = vector.load %arg8[%c0_14, %c0_15] : memref<64x1xf32, #tpu.memory_space<vmem>>, vector<64x1xf32>
    %17 = arith.mulf %5, %5 : vector<1x64x128xf32>
    %cst_16 = arith.constant dense<0.000000e+00> : vector<1x64xf32>
    %18 = vector.multi_reduction <add>, %17, %cst_16 [2] : vector<1x64x128xf32> to vector<1x64xf32>
    %19 = vector.shape_cast %18 : vector<1x64xf32> to vector<1x64x1xf32>
    %cst_17 = arith.constant dense<0.000000e+00> : vector<64x1xf32>
    %20 = vector.multi_reduction <add>, %19, %cst_17 [0] : vector<1x64x1xf32> to vector<64x1xf32>
    %21 = arith.addf %16, %20 : vector<64x1xf32>
    %c0_18 = arith.constant 0 : index
    %c0_19 = arith.constant 0 : index
    %22 = vector.load %arg8[%c0_18, %c0_19] : memref<64x1xf32, #tpu.memory_space<vmem>>, vector<64x1xf32>
    tpu.vector_store %arg8[%c0_18, %c0_19], %21 {strides = array<i32>} : memref<64x1xf32, #tpu.memory_space<vmem>>, vector<64x1xf32>,
    %c0_i32_20 = arith.constant 0 : i32
    %23 = arith.cmpi eq, %arg0, %c0_i32_20 : i32
    %24 = arith.extui %23 : i1 to i32
    %c0_i32_21 = arith.constant 0 : i32
    %25 = arith.cmpi ne, %24, %c0_i32_21 : i32
    scf.if %25 {
      %c0_22 = arith.constant 0 : index
      %c0_23 = arith.constant 0 : index
      %26 = vector.load %arg7[%c0_22, %c0_23] : memref<64x1xf32, #tpu.memory_space<vmem>>, vector<64x1xf32>
      %cst_24 = arith.constant 0.0333333351 : f32
      %27 = vector.broadcast %cst_24 : f32 to vector<64x1xf32>
      %28 = arith.mulf %26, %27 : vector<64x1xf32>
      %c0_25 = arith.constant 0 : index
      %c0_26 = arith.constant 0 : index
      %29 = vector.load %arg8[%c0_25, %c0_26] : memref<64x1xf32, #tpu.memory_space<vmem>>, vector<64x1xf32>
      %cst_27 = arith.constant 0.0333333351 : f32
      %30 = vector.broadcast %cst_27 : f32 to vector<64x1xf32>
      %31 = arith.mulf %29, %30 : vector<64x1xf32>
      %32 = arith.mulf %28, %28 : vector<64x1xf32>
      %33 = arith.subf %31, %32 : vector<64x1xf32>
      %cst_28 = arith.constant 0.000000e+00 : f32
      %34 = vector.broadcast %cst_28 : f32 to vector<64x1xf32>
      %35 = arith.maximumf %33, %34 : vector<64x1xf32>
      %c0_29 = arith.constant 0 : index
      %c0_30 = arith.constant 0 : index
      %36 = vector.load %arg3[%c0_29, %c0_30] : memref<64x1xf32, #tpu.memory_space<vmem>>, vector<64x1xf32>
      %cst_31 = arith.constant 9.99999974E-6 : f32
      %37 = vector.broadcast %cst_31 : f32 to vector<64x1xf32>
      %38 = arith.addf %35, %37 : vector<64x1xf32>
      %39 = math.rsqrt %38 : vector<64x1xf32>
      %40 = arith.mulf %36, %39 : vector<64x1xf32>
      %c0_32 = arith.constant 0 : index
      %c0_33 = arith.constant 0 : index
      %41 = vector.load %arg4[%c0_32, %c0_33] : memref<64x1xf32, #tpu.memory_space<vmem>>, vector<64x1xf32>
      %42 = arith.mulf %28, %40 : vector<64x1xf32>
      %43 = arith.subf %41, %42 : vector<64x1xf32>
      %c0_34 = arith.constant 0 : index
      %c0_35 = arith.constant 0 : index
      %c0_36 = arith.constant 0 : index
      %44 = vector.load %arg6[%c0_34, %c0_35, %c0_36] : memref<1x64x128xf32, #tpu.memory_space<vmem>>, vector<1x64x128xf32>
      %45 = vector.shape_cast %40 : vector<64x1xf32> to vector<1x64x1xf32>
      %46 = vector.broadcast %45 : vector<1x64x1xf32> to vector<1x64x128xf32>
      %47 = arith.mulf %44, %46 : vector<1x64x128xf32>
      %48 = vector.shape_cast %43 : vector<64x1xf32> to vector<1x64x1xf32>
      %49 = vector.broadcast %48 : vector<1x64x1xf32> to vector<1x64x128xf32>
      %50 = arith.addf %47, %49 : vector<1x64x128xf32>
      %cst_37 = arith.constant 0.000000e+00 : f32
      %51 = vector.broadcast %cst_37 : f32 to vector<1x64x128xf32>
      %52 = arith.maximumf %50, %51 : vector<1x64x128xf32>
      %53 = arith.truncf %52 : vector<1x64x128xf32> to vector<1x64x128xbf16>
      %c0_38 = arith.constant 0 : index
      %c0_39 = arith.constant 0 : index
      %c0_40 = arith.constant 0 : index
      %54 = vector.load %arg5[%c0_38, %c0_39, %c0_40] : memref<1x64x128xbf16, #tpu.memory_space<vmem>>, vector<1x64x128xbf16>
      tpu.vector_store %arg5[%c0_38, %c0_39, %c0_40], %53 {strides = array<i32>} : memref<1x64x128xbf16, #tpu.memory_space<vmem>>, vector<1x64x128xbf16>,
    } else {
    }
    return
  }
  func.func @transform_0(%arg0: i32) -> (i32, i32, i32) {
    %c0_i32 = arith.constant 0 : i32
    %c0_i32_0 = arith.constant 0 : i32
    %c0_i32_1 = arith.constant 0 : i32
    %c0_i32_2 = arith.constant 0 : i32
    return %c0_i32, %c0_i32_0, %c0_i32_1 : i32, i32, i32
  }
  func.func @transform_1(%arg0: i32) -> (i32, i32, i32) {
    %c0_i32 = arith.constant 0 : i32
    %c0_i32_0 = arith.constant 0 : i32
    %c0_i32_1 = arith.constant 0 : i32
    return %c0_i32, %c0_i32_0, %arg0 : i32, i32, i32
  }
  func.func @transform_2(%arg0: i32) -> (i32, i32) {
    %c0_i32 = arith.constant 0 : i32
    %c0_i32_0 = arith.constant 0 : i32
    %c0_i32_1 = arith.constant 0 : i32
    return %c0_i32, %c0_i32_0 : i32, i32
  }
  func.func @transform_3(%arg0: i32) -> (i32, i32) {
    %c0_i32 = arith.constant 0 : i32
    %c0_i32_0 = arith.constant 0 : i32
    %c0_i32_1 = arith.constant 0 : i32
    return %c0_i32, %c0_i32_0 : i32, i32
  }
  func.func @transform_4(%arg0: i32) -> (i32, i32, i32) {
    %c0_i32 = arith.constant 0 : i32
    %c0_i32_0 = arith.constant 0 : i32
    %c0_i32_1 = arith.constant 0 : i32
    %c0_i32_2 = arith.constant 0 : i32
    return %c0_i32, %c0_i32_0, %c0_i32_1 : i32, i32, i32
  }
}

module attributes {stable_mosaic.version = 11 : i64} {
  func.func @_fused_gemm_bn_relu_kernel(%arg0: i32, %arg1: memref<4x32x256xbf16, #tpu.memory_space<vmem>>, %arg2: memref<4x256x128xbf16, #tpu.memory_space<vmem>>, %arg3: memref<32x1xf32, #tpu.memory_space<vmem>>, %arg4: memref<32x1xf32, #tpu.memory_space<vmem>>, %arg5: memref<4x32x128xbf16, #tpu.memory_space<vmem>>, %arg6: memref<4x32x128xf32, #tpu.memory_space<vmem>>, %arg7: memref<32x1xf32, #tpu.memory_space<vmem>>, %arg8: memref<32x1xf32, #tpu.memory_space<vmem>>) attributes {dimension_semantics = [#tpu.dimension_semantics<arbitrary>], iteration_bounds = array<i64: 1>, scalar_prefetch = 0 : i64, scratch_operands = 3 : i64, tpu.core_type = #tpu.core_type<tc>, window_params = [{pipeline_mode = #tpu.pipeline_mode<synchronous>, transform_indices = @transform_0, window_bounds = array<i64: 4, 32, 256>}, {transform_indices = @transform_1, window_bounds = array<i64: 4, 256, 128>}, {pipeline_mode = #tpu.pipeline_mode<synchronous>, transform_indices = @transform_2, window_bounds = array<i64: 32, 1>}, {pipeline_mode = #tpu.pipeline_mode<synchronous>, transform_indices = @transform_3, window_bounds = array<i64: 32, 1>}, {pipeline_mode = #tpu.pipeline_mode<synchronous>, transform_indices = @transform_4, window_bounds = array<i64: 4, 32, 128>}]} {
    %c0_i32 = arith.constant 0 : i32
    %0 = arith.cmpi eq, %arg0, %c0_i32 : i32
    %1 = arith.extui %0 : i1 to i32
    %c0_i32_0 = arith.constant 0 : i32
    %2 = arith.cmpi ne, %1, %c0_i32_0 : i32
    scf.if %2 {
      %cst_22 = arith.constant 0.000000e+00 : f32
      %26 = vector.broadcast %cst_22 : f32 to vector<32x1xf32>
      %c0_23 = arith.constant 0 : index
      %c0_24 = arith.constant 0 : index
      %27 = vector.load %arg7[%c0_23, %c0_24] : memref<32x1xf32, #tpu.memory_space<vmem>>, vector<32x1xf32>
      tpu.vector_store %arg7[%c0_23, %c0_24], %26 {strides = array<i32>} : memref<32x1xf32, #tpu.memory_space<vmem>>, vector<32x1xf32>,
      %cst_25 = arith.constant 0.000000e+00 : f32
      %28 = vector.broadcast %cst_25 : f32 to vector<32x1xf32>
      %c0_26 = arith.constant 0 : index
      %c0_27 = arith.constant 0 : index
      %29 = vector.load %arg8[%c0_26, %c0_27] : memref<32x1xf32, #tpu.memory_space<vmem>>, vector<32x1xf32>
      tpu.vector_store %arg8[%c0_26, %c0_27], %28 {strides = array<i32>} : memref<32x1xf32, #tpu.memory_space<vmem>>, vector<32x1xf32>,
    } else {
    }
    %c0 = arith.constant 0 : index
    %c0_1 = arith.constant 0 : index
    %c0_2 = arith.constant 0 : index
    %3 = vector.load %arg1[%c0, %c0_1, %c0_2] : memref<4x32x256xbf16, #tpu.memory_space<vmem>>, vector<4x32x256xbf16>
    %c0_3 = arith.constant 0 : index
    %c0_4 = arith.constant 0 : index
    %c0_5 = arith.constant 0 : index
    %4 = vector.load %arg2[%c0_3, %c0_4, %c0_5] : memref<4x256x128xbf16, #tpu.memory_space<vmem>>, vector<4x256x128xbf16>
    %cst = arith.constant dense<0.000000e+00> : vector<4x32x128xf32>
    %5 = tpu.matmul %3, %4, %cst {dimension_numbers = #tpu.dot_dimension_numbers<[2], [1], [1], [2], [0, 0, 0, 1, 1, 2], [0], [0]>} : vector<4x32x256xbf16>, vector<4x256x128xbf16>, vector<4x32x128xf32> -> vector<4x32x128xf32>
    %c128_i32 = arith.constant 128 : i32
    %6 = arith.muli %arg0, %c128_i32 : i32
    %7 = tpu.assume_multiple %6, 128 : i32
    %c0_6 = arith.constant 0 : index
    %c0_7 = arith.constant 0 : index
    %8 = arith.index_cast %7 : i32 to index
    %9 = vector.load %arg6[%c0_6, %c0_7, %8] : memref<4x32x128xf32, #tpu.memory_space<vmem>>, vector<4x32x128xf32>
    tpu.vector_store %arg6[%c0_6, %c0_7, %8], %5 {strides = array<i32>} : memref<4x32x128xf32, #tpu.memory_space<vmem>>, vector<4x32x128xf32>,
    %c0_8 = arith.constant 0 : index
    %c0_9 = arith.constant 0 : index
    %10 = vector.load %arg7[%c0_8, %c0_9] : memref<32x1xf32, #tpu.memory_space<vmem>>, vector<32x1xf32>
    %cst_10 = arith.constant dense<0.000000e+00> : vector<4x32xf32>
    %11 = vector.multi_reduction <add>, %5, %cst_10 [2] : vector<4x32x128xf32> to vector<4x32xf32>
    %12 = vector.shape_cast %11 : vector<4x32xf32> to vector<4x32x1xf32>
    %cst_11 = arith.constant dense<0.000000e+00> : vector<32x1xf32>
    %13 = vector.multi_reduction <add>, %12, %cst_11 [0] : vector<4x32x1xf32> to vector<32x1xf32>
    %14 = arith.addf %10, %13 : vector<32x1xf32>
    %c0_12 = arith.constant 0 : index
    %c0_13 = arith.constant 0 : index
    %15 = vector.load %arg7[%c0_12, %c0_13] : memref<32x1xf32, #tpu.memory_space<vmem>>, vector<32x1xf32>
    tpu.vector_store %arg7[%c0_12, %c0_13], %14 {strides = array<i32>} : memref<32x1xf32, #tpu.memory_space<vmem>>, vector<32x1xf32>,
    %c0_14 = arith.constant 0 : index
    %c0_15 = arith.constant 0 : index
    %16 = vector.load %arg8[%c0_14, %c0_15] : memref<32x1xf32, #tpu.memory_space<vmem>>, vector<32x1xf32>
    %17 = arith.mulf %5, %5 : vector<4x32x128xf32>
    %cst_16 = arith.constant dense<0.000000e+00> : vector<4x32xf32>
    %18 = vector.multi_reduction <add>, %17, %cst_16 [2] : vector<4x32x128xf32> to vector<4x32xf32>
    %19 = vector.shape_cast %18 : vector<4x32xf32> to vector<4x32x1xf32>
    %cst_17 = arith.constant dense<0.000000e+00> : vector<32x1xf32>
    %20 = vector.multi_reduction <add>, %19, %cst_17 [0] : vector<4x32x1xf32> to vector<32x1xf32>
    %21 = arith.addf %16, %20 : vector<32x1xf32>
    %c0_18 = arith.constant 0 : index
    %c0_19 = arith.constant 0 : index
    %22 = vector.load %arg8[%c0_18, %c0_19] : memref<32x1xf32, #tpu.memory_space<vmem>>, vector<32x1xf32>
    tpu.vector_store %arg8[%c0_18, %c0_19], %21 {strides = array<i32>} : memref<32x1xf32, #tpu.memory_space<vmem>>, vector<32x1xf32>,
    %c0_i32_20 = arith.constant 0 : i32
    %23 = arith.cmpi eq, %arg0, %c0_i32_20 : i32
    %24 = arith.extui %23 : i1 to i32
    %c0_i32_21 = arith.constant 0 : i32
    %25 = arith.cmpi ne, %24, %c0_i32_21 : i32
    scf.if %25 {
      %c0_22 = arith.constant 0 : index
      %c0_23 = arith.constant 0 : index
      %26 = vector.load %arg7[%c0_22, %c0_23] : memref<32x1xf32, #tpu.memory_space<vmem>>, vector<32x1xf32>
      %cst_24 = arith.constant 0.00833333377 : f32
      %27 = vector.broadcast %cst_24 : f32 to vector<32x1xf32>
      %28 = arith.mulf %26, %27 : vector<32x1xf32>
      %c0_25 = arith.constant 0 : index
      %c0_26 = arith.constant 0 : index
      %29 = vector.load %arg8[%c0_25, %c0_26] : memref<32x1xf32, #tpu.memory_space<vmem>>, vector<32x1xf32>
      %cst_27 = arith.constant 0.00833333377 : f32
      %30 = vector.broadcast %cst_27 : f32 to vector<32x1xf32>
      %31 = arith.mulf %29, %30 : vector<32x1xf32>
      %32 = arith.mulf %28, %28 : vector<32x1xf32>
      %33 = arith.subf %31, %32 : vector<32x1xf32>
      %cst_28 = arith.constant 0.000000e+00 : f32
      %34 = vector.broadcast %cst_28 : f32 to vector<32x1xf32>
      %35 = arith.maximumf %33, %34 : vector<32x1xf32>
      %c0_29 = arith.constant 0 : index
      %c0_30 = arith.constant 0 : index
      %36 = vector.load %arg3[%c0_29, %c0_30] : memref<32x1xf32, #tpu.memory_space<vmem>>, vector<32x1xf32>
      %cst_31 = arith.constant 9.99999974E-6 : f32
      %37 = vector.broadcast %cst_31 : f32 to vector<32x1xf32>
      %38 = arith.addf %35, %37 : vector<32x1xf32>
      %39 = math.rsqrt %38 : vector<32x1xf32>
      %40 = arith.mulf %36, %39 : vector<32x1xf32>
      %c0_32 = arith.constant 0 : index
      %c0_33 = arith.constant 0 : index
      %41 = vector.load %arg4[%c0_32, %c0_33] : memref<32x1xf32, #tpu.memory_space<vmem>>, vector<32x1xf32>
      %42 = arith.mulf %28, %40 : vector<32x1xf32>
      %43 = arith.subf %41, %42 : vector<32x1xf32>
      %c0_34 = arith.constant 0 : index
      %c0_35 = arith.constant 0 : index
      %c0_36 = arith.constant 0 : index
      %44 = vector.load %arg6[%c0_34, %c0_35, %c0_36] : memref<4x32x128xf32, #tpu.memory_space<vmem>>, vector<4x32x128xf32>
      %45 = vector.shape_cast %40 : vector<32x1xf32> to vector<1x32x1xf32>
      %46 = vector.broadcast %45 : vector<1x32x1xf32> to vector<4x32x128xf32>
      %47 = arith.mulf %44, %46 : vector<4x32x128xf32>
      %48 = vector.shape_cast %43 : vector<32x1xf32> to vector<1x32x1xf32>
      %49 = vector.broadcast %48 : vector<1x32x1xf32> to vector<4x32x128xf32>
      %50 = arith.addf %47, %49 : vector<4x32x128xf32>
      %cst_37 = arith.constant 0.000000e+00 : f32
      %51 = vector.broadcast %cst_37 : f32 to vector<4x32x128xf32>
      %52 = arith.maximumf %50, %51 : vector<4x32x128xf32>
      %53 = arith.truncf %52 : vector<4x32x128xf32> to vector<4x32x128xbf16>
      %c0_38 = arith.constant 0 : index
      %c0_39 = arith.constant 0 : index
      %c0_40 = arith.constant 0 : index
      %54 = vector.load %arg5[%c0_38, %c0_39, %c0_40] : memref<4x32x128xbf16, #tpu.memory_space<vmem>>, vector<4x32x128xbf16>
      tpu.vector_store %arg5[%c0_38, %c0_39, %c0_40], %53 {strides = array<i32>} : memref<4x32x128xbf16, #tpu.memory_space<vmem>>, vector<4x32x128xbf16>,
    } else {
    }
    return
  }
  func.func @transform_0(%arg0: i32) -> (i32, i32, i32) {
    %c0_i32 = arith.constant 0 : i32
    %c0_i32_0 = arith.constant 0 : i32
    %c0_i32_1 = arith.constant 0 : i32
    %c0_i32_2 = arith.constant 0 : i32
    return %c0_i32, %c0_i32_0, %c0_i32_1 : i32, i32, i32
  }
  func.func @transform_1(%arg0: i32) -> (i32, i32, i32) {
    %c0_i32 = arith.constant 0 : i32
    %c0_i32_0 = arith.constant 0 : i32
    %c0_i32_1 = arith.constant 0 : i32
    return %c0_i32, %c0_i32_0, %arg0 : i32, i32, i32
  }
  func.func @transform_2(%arg0: i32) -> (i32, i32) {
    %c0_i32 = arith.constant 0 : i32
    %c0_i32_0 = arith.constant 0 : i32
    %c0_i32_1 = arith.constant 0 : i32
    return %c0_i32, %c0_i32_0 : i32, i32
  }
  func.func @transform_3(%arg0: i32) -> (i32, i32) {
    %c0_i32 = arith.constant 0 : i32
    %c0_i32_0 = arith.constant 0 : i32
    %c0_i32_1 = arith.constant 0 : i32
    return %c0_i32, %c0_i32_0 : i32, i32
  }
  func.func @transform_4(%arg0: i32) -> (i32, i32, i32) {
    %c0_i32 = arith.constant 0 : i32
    %c0_i32_0 = arith.constant 0 : i32
    %c0_i32_1 = arith.constant 0 : i32
    %c0_i32_2 = arith.constant 0 : i32
    return %c0_i32, %c0_i32_0, %c0_i32_1 : i32, i32, i32
  }
}

module attributes {stable_mosaic.version = 11 : i64} {
  func.func @_fused_gemm_bn_relu_kernel(%arg0: i32, %arg1: memref<4x16x128xbf16, #tpu.memory_space<vmem>>, %arg2: memref<4x128x128xbf16, #tpu.memory_space<vmem>>, %arg3: memref<16x1xf32, #tpu.memory_space<vmem>>, %arg4: memref<16x1xf32, #tpu.memory_space<vmem>>, %arg5: memref<4x16x128xbf16, #tpu.memory_space<vmem>>, %arg6: memref<4x16x128xf32, #tpu.memory_space<vmem>>, %arg7: memref<16x1xf32, #tpu.memory_space<vmem>>, %arg8: memref<16x1xf32, #tpu.memory_space<vmem>>) attributes {dimension_semantics = [#tpu.dimension_semantics<arbitrary>], iteration_bounds = array<i64: 1>, scalar_prefetch = 0 : i64, scratch_operands = 3 : i64, tpu.core_type = #tpu.core_type<tc>, window_params = [{pipeline_mode = #tpu.pipeline_mode<synchronous>, transform_indices = @transform_0, window_bounds = array<i64: 4, 16, 128>}, {transform_indices = @transform_1, window_bounds = array<i64: 4, 128, 128>}, {pipeline_mode = #tpu.pipeline_mode<synchronous>, transform_indices = @transform_2, window_bounds = array<i64: 16, 1>}, {pipeline_mode = #tpu.pipeline_mode<synchronous>, transform_indices = @transform_3, window_bounds = array<i64: 16, 1>}, {pipeline_mode = #tpu.pipeline_mode<synchronous>, transform_indices = @transform_4, window_bounds = array<i64: 4, 16, 128>}]} {
    %c0_i32 = arith.constant 0 : i32
    %0 = arith.cmpi eq, %arg0, %c0_i32 : i32
    %1 = arith.extui %0 : i1 to i32
    %c0_i32_0 = arith.constant 0 : i32
    %2 = arith.cmpi ne, %1, %c0_i32_0 : i32
    scf.if %2 {
      %cst_22 = arith.constant 0.000000e+00 : f32
      %26 = vector.broadcast %cst_22 : f32 to vector<16x1xf32>
      %c0_23 = arith.constant 0 : index
      %c0_24 = arith.constant 0 : index
      %27 = vector.load %arg7[%c0_23, %c0_24] : memref<16x1xf32, #tpu.memory_space<vmem>>, vector<16x1xf32>
      tpu.vector_store %arg7[%c0_23, %c0_24], %26 {strides = array<i32>} : memref<16x1xf32, #tpu.memory_space<vmem>>, vector<16x1xf32>,
      %cst_25 = arith.constant 0.000000e+00 : f32
      %28 = vector.broadcast %cst_25 : f32 to vector<16x1xf32>
      %c0_26 = arith.constant 0 : index
      %c0_27 = arith.constant 0 : index
      %29 = vector.load %arg8[%c0_26, %c0_27] : memref<16x1xf32, #tpu.memory_space<vmem>>, vector<16x1xf32>
      tpu.vector_store %arg8[%c0_26, %c0_27], %28 {strides = array<i32>} : memref<16x1xf32, #tpu.memory_space<vmem>>, vector<16x1xf32>,
    } else {
    }
    %c0 = arith.constant 0 : index
    %c0_1 = arith.constant 0 : index
    %c0_2 = arith.constant 0 : index
    %3 = vector.load %arg1[%c0, %c0_1, %c0_2] : memref<4x16x128xbf16, #tpu.memory_space<vmem>>, vector<4x16x128xbf16>
    %c0_3 = arith.constant 0 : index
    %c0_4 = arith.constant 0 : index
    %c0_5 = arith.constant 0 : index
    %4 = vector.load %arg2[%c0_3, %c0_4, %c0_5] : memref<4x128x128xbf16, #tpu.memory_space<vmem>>, vector<4x128x128xbf16>
    %cst = arith.constant dense<0.000000e+00> : vector<4x16x128xf32>
    %5 = tpu.matmul %3, %4, %cst {dimension_numbers = #tpu.dot_dimension_numbers<[2], [1], [1], [2], [0, 0, 0, 1, 1, 2], [0], [0]>} : vector<4x16x128xbf16>, vector<4x128x128xbf16>, vector<4x16x128xf32> -> vector<4x16x128xf32>
    %c128_i32 = arith.constant 128 : i32
    %6 = arith.muli %arg0, %c128_i32 : i32
    %7 = tpu.assume_multiple %6, 128 : i32
    %c0_6 = arith.constant 0 : index
    %c0_7 = arith.constant 0 : index
    %8 = arith.index_cast %7 : i32 to index
    %9 = vector.load %arg6[%c0_6, %c0_7, %8] : memref<4x16x128xf32, #tpu.memory_space<vmem>>, vector<4x16x128xf32>
    tpu.vector_store %arg6[%c0_6, %c0_7, %8], %5 {strides = array<i32>} : memref<4x16x128xf32, #tpu.memory_space<vmem>>, vector<4x16x128xf32>,
    %c0_8 = arith.constant 0 : index
    %c0_9 = arith.constant 0 : index
    %10 = vector.load %arg7[%c0_8, %c0_9] : memref<16x1xf32, #tpu.memory_space<vmem>>, vector<16x1xf32>
    %cst_10 = arith.constant dense<0.000000e+00> : vector<4x16xf32>
    %11 = vector.multi_reduction <add>, %5, %cst_10 [2] : vector<4x16x128xf32> to vector<4x16xf32>
    %12 = vector.shape_cast %11 : vector<4x16xf32> to vector<4x16x1xf32>
    %cst_11 = arith.constant dense<0.000000e+00> : vector<16x1xf32>
    %13 = vector.multi_reduction <add>, %12, %cst_11 [0] : vector<4x16x1xf32> to vector<16x1xf32>
    %14 = arith.addf %10, %13 : vector<16x1xf32>
    %c0_12 = arith.constant 0 : index
    %c0_13 = arith.constant 0 : index
    %15 = vector.load %arg7[%c0_12, %c0_13] : memref<16x1xf32, #tpu.memory_space<vmem>>, vector<16x1xf32>
    tpu.vector_store %arg7[%c0_12, %c0_13], %14 {strides = array<i32>} : memref<16x1xf32, #tpu.memory_space<vmem>>, vector<16x1xf32>,
    %c0_14 = arith.constant 0 : index
    %c0_15 = arith.constant 0 : index
    %16 = vector.load %arg8[%c0_14, %c0_15] : memref<16x1xf32, #tpu.memory_space<vmem>>, vector<16x1xf32>
    %17 = arith.mulf %5, %5 : vector<4x16x128xf32>
    %cst_16 = arith.constant dense<0.000000e+00> : vector<4x16xf32>
    %18 = vector.multi_reduction <add>, %17, %cst_16 [2] : vector<4x16x128xf32> to vector<4x16xf32>
    %19 = vector.shape_cast %18 : vector<4x16xf32> to vector<4x16x1xf32>
    %cst_17 = arith.constant dense<0.000000e+00> : vector<16x1xf32>
    %20 = vector.multi_reduction <add>, %19, %cst_17 [0] : vector<4x16x1xf32> to vector<16x1xf32>
    %21 = arith.addf %16, %20 : vector<16x1xf32>
    %c0_18 = arith.constant 0 : index
    %c0_19 = arith.constant 0 : index
    %22 = vector.load %arg8[%c0_18, %c0_19] : memref<16x1xf32, #tpu.memory_space<vmem>>, vector<16x1xf32>
    tpu.vector_store %arg8[%c0_18, %c0_19], %21 {strides = array<i32>} : memref<16x1xf32, #tpu.memory_space<vmem>>, vector<16x1xf32>,
    %c0_i32_20 = arith.constant 0 : i32
    %23 = arith.cmpi eq, %arg0, %c0_i32_20 : i32
    %24 = arith.extui %23 : i1 to i32
    %c0_i32_21 = arith.constant 0 : i32
    %25 = arith.cmpi ne, %24, %c0_i32_21 : i32
    scf.if %25 {
      %c0_22 = arith.constant 0 : index
      %c0_23 = arith.constant 0 : index
      %26 = vector.load %arg7[%c0_22, %c0_23] : memref<16x1xf32, #tpu.memory_space<vmem>>, vector<16x1xf32>
      %cst_24 = arith.constant 0.00208333344 : f32
      %27 = vector.broadcast %cst_24 : f32 to vector<16x1xf32>
      %28 = arith.mulf %26, %27 : vector<16x1xf32>
      %c0_25 = arith.constant 0 : index
      %c0_26 = arith.constant 0 : index
      %29 = vector.load %arg8[%c0_25, %c0_26] : memref<16x1xf32, #tpu.memory_space<vmem>>, vector<16x1xf32>
      %cst_27 = arith.constant 0.00208333344 : f32
      %30 = vector.broadcast %cst_27 : f32 to vector<16x1xf32>
      %31 = arith.mulf %29, %30 : vector<16x1xf32>
      %32 = arith.mulf %28, %28 : vector<16x1xf32>
      %33 = arith.subf %31, %32 : vector<16x1xf32>
      %cst_28 = arith.constant 0.000000e+00 : f32
      %34 = vector.broadcast %cst_28 : f32 to vector<16x1xf32>
      %35 = arith.maximumf %33, %34 : vector<16x1xf32>
      %c0_29 = arith.constant 0 : index
      %c0_30 = arith.constant 0 : index
      %36 = vector.load %arg3[%c0_29, %c0_30] : memref<16x1xf32, #tpu.memory_space<vmem>>, vector<16x1xf32>
      %cst_31 = arith.constant 9.99999974E-6 : f32
      %37 = vector.broadcast %cst_31 : f32 to vector<16x1xf32>
      %38 = arith.addf %35, %37 : vector<16x1xf32>
      %39 = math.rsqrt %38 : vector<16x1xf32>
      %40 = arith.mulf %36, %39 : vector<16x1xf32>
      %c0_32 = arith.constant 0 : index
      %c0_33 = arith.constant 0 : index
      %41 = vector.load %arg4[%c0_32, %c0_33] : memref<16x1xf32, #tpu.memory_space<vmem>>, vector<16x1xf32>
      %42 = arith.mulf %28, %40 : vector<16x1xf32>
      %43 = arith.subf %41, %42 : vector<16x1xf32>
      %c0_34 = arith.constant 0 : index
      %c0_35 = arith.constant 0 : index
      %c0_36 = arith.constant 0 : index
      %44 = vector.load %arg6[%c0_34, %c0_35, %c0_36] : memref<4x16x128xf32, #tpu.memory_space<vmem>>, vector<4x16x128xf32>
      %45 = vector.shape_cast %40 : vector<16x1xf32> to vector<1x16x1xf32>
      %46 = vector.broadcast %45 : vector<1x16x1xf32> to vector<4x16x128xf32>
      %47 = arith.mulf %44, %46 : vector<4x16x128xf32>
      %48 = vector.shape_cast %43 : vector<16x1xf32> to vector<1x16x1xf32>
      %49 = vector.broadcast %48 : vector<1x16x1xf32> to vector<4x16x128xf32>
      %50 = arith.addf %47, %49 : vector<4x16x128xf32>
      %cst_37 = arith.constant 0.000000e+00 : f32
      %51 = vector.broadcast %cst_37 : f32 to vector<4x16x128xf32>
      %52 = arith.maximumf %50, %51 : vector<4x16x128xf32>
      %53 = arith.truncf %52 : vector<4x16x128xf32> to vector<4x16x128xbf16>
      %c0_38 = arith.constant 0 : index
      %c0_39 = arith.constant 0 : index
      %c0_40 = arith.constant 0 : index
      %54 = vector.load %arg5[%c0_38, %c0_39, %c0_40] : memref<4x16x128xbf16, #tpu.memory_space<vmem>>, vector<4x16x128xbf16>
      tpu.vector_store %arg5[%c0_38, %c0_39, %c0_40], %53 {strides = array<i32>} : memref<4x16x128xbf16, #tpu.memory_space<vmem>>, vector<4x16x128xbf16>,
    } else {
    }
    return
  }
  func.func @transform_0(%arg0: i32) -> (i32, i32, i32) {
    %c0_i32 = arith.constant 0 : i32
    %c0_i32_0 = arith.constant 0 : i32
    %c0_i32_1 = arith.constant 0 : i32
    %c0_i32_2 = arith.constant 0 : i32
    return %c0_i32, %c0_i32_0, %c0_i32_1 : i32, i32, i32
  }
  func.func @transform_1(%arg0: i32) -> (i32, i32, i32) {
    %c0_i32 = arith.constant 0 : i32
    %c0_i32_0 = arith.constant 0 : i32
    %c0_i32_1 = arith.constant 0 : i32
    return %c0_i32, %c0_i32_0, %arg0 : i32, i32, i32
  }
  func.func @transform_2(%arg0: i32) -> (i32, i32) {
    %c0_i32 = arith.constant 0 : i32
    %c0_i32_0 = arith.constant 0 : i32
    %c0_i32_1 = arith.constant 0 : i32
    return %c0_i32, %c0_i32_0 : i32, i32
  }
  func.func @transform_3(%arg0: i32) -> (i32, i32) {
    %c0_i32 = arith.constant 0 : i32
    %c0_i32_0 = arith.constant 0 : i32
    %c0_i32_1 = arith.constant 0 : i32
    return %c0_i32, %c0_i32_0 : i32, i32
  }
  func.func @transform_4(%arg0: i32) -> (i32, i32, i32) {
    %c0_i32 = arith.constant 0 : i32
    %c0_i32_0 = arith.constant 0 : i32
    %c0_i32_1 = arith.constant 0 : i32
    %c0_i32_2 = arith.constant 0 : i32
    return %c0_i32, %c0_i32_0, %c0_i32_1 : i32, i32, i32
  }
}

module attributes {stable_mosaic.version = 11 : i64} {
  func.func @_fused_gemm_bn_relu_kernel(%arg0: i32, %arg1: memref<4x16x64xbf16, #tpu.memory_space<vmem>>, %arg2: memref<4x64x512xbf16, #tpu.memory_space<vmem>>, %arg3: memref<16x1xf32, #tpu.memory_space<vmem>>, %arg4: memref<16x1xf32, #tpu.memory_space<vmem>>, %arg5: memref<4x16x512xbf16, #tpu.memory_space<vmem>>, %arg6: memref<4x16x512xf32, #tpu.memory_space<vmem>>, %arg7: memref<16x1xf32, #tpu.memory_space<vmem>>, %arg8: memref<16x1xf32, #tpu.memory_space<vmem>>) attributes {dimension_semantics = [#tpu.dimension_semantics<arbitrary>], iteration_bounds = array<i64: 1>, scalar_prefetch = 0 : i64, scratch_operands = 3 : i64, tpu.core_type = #tpu.core_type<tc>, window_params = [{pipeline_mode = #tpu.pipeline_mode<synchronous>, transform_indices = @transform_0, window_bounds = array<i64: 4, 16, 64>}, {transform_indices = @transform_1, window_bounds = array<i64: 4, 64, 512>}, {pipeline_mode = #tpu.pipeline_mode<synchronous>, transform_indices = @transform_2, window_bounds = array<i64: 16, 1>}, {pipeline_mode = #tpu.pipeline_mode<synchronous>, transform_indices = @transform_3, window_bounds = array<i64: 16, 1>}, {pipeline_mode = #tpu.pipeline_mode<synchronous>, transform_indices = @transform_4, window_bounds = array<i64: 4, 16, 512>}]} {
    %c0_i32 = arith.constant 0 : i32
    %0 = arith.cmpi eq, %arg0, %c0_i32 : i32
    %1 = arith.extui %0 : i1 to i32
    %c0_i32_0 = arith.constant 0 : i32
    %2 = arith.cmpi ne, %1, %c0_i32_0 : i32
    scf.if %2 {
      %cst_22 = arith.constant 0.000000e+00 : f32
      %26 = vector.broadcast %cst_22 : f32 to vector<16x1xf32>
      %c0_23 = arith.constant 0 : index
      %c0_24 = arith.constant 0 : index
      %27 = vector.load %arg7[%c0_23, %c0_24] : memref<16x1xf32, #tpu.memory_space<vmem>>, vector<16x1xf32>
      tpu.vector_store %arg7[%c0_23, %c0_24], %26 {strides = array<i32>} : memref<16x1xf32, #tpu.memory_space<vmem>>, vector<16x1xf32>,
      %cst_25 = arith.constant 0.000000e+00 : f32
      %28 = vector.broadcast %cst_25 : f32 to vector<16x1xf32>
      %c0_26 = arith.constant 0 : index
      %c0_27 = arith.constant 0 : index
      %29 = vector.load %arg8[%c0_26, %c0_27] : memref<16x1xf32, #tpu.memory_space<vmem>>, vector<16x1xf32>
      tpu.vector_store %arg8[%c0_26, %c0_27], %28 {strides = array<i32>} : memref<16x1xf32, #tpu.memory_space<vmem>>, vector<16x1xf32>,
    } else {
    }
    %c0 = arith.constant 0 : index
    %c0_1 = arith.constant 0 : index
    %c0_2 = arith.constant 0 : index
    %3 = vector.load %arg1[%c0, %c0_1, %c0_2] : memref<4x16x64xbf16, #tpu.memory_space<vmem>>, vector<4x16x64xbf16>
    %c0_3 = arith.constant 0 : index
    %c0_4 = arith.constant 0 : index
    %c0_5 = arith.constant 0 : index
    %4 = vector.load %arg2[%c0_3, %c0_4, %c0_5] : memref<4x64x512xbf16, #tpu.memory_space<vmem>>, vector<4x64x512xbf16>
    %cst = arith.constant dense<0.000000e+00> : vector<4x16x512xf32>
    %5 = tpu.matmul %3, %4, %cst {dimension_numbers = #tpu.dot_dimension_numbers<[2], [1], [1], [2], [0, 0, 0, 1, 1, 2], [0], [0]>} : vector<4x16x64xbf16>, vector<4x64x512xbf16>, vector<4x16x512xf32> -> vector<4x16x512xf32>
    %c512_i32 = arith.constant 512 : i32
    %6 = arith.muli %arg0, %c512_i32 : i32
    %7 = tpu.assume_multiple %6, 128 : i32
    %c0_6 = arith.constant 0 : index
    %c0_7 = arith.constant 0 : index
    %8 = arith.index_cast %7 : i32 to index
    %9 = vector.load %arg6[%c0_6, %c0_7, %8] : memref<4x16x512xf32, #tpu.memory_space<vmem>>, vector<4x16x512xf32>
    tpu.vector_store %arg6[%c0_6, %c0_7, %8], %5 {strides = array<i32>} : memref<4x16x512xf32, #tpu.memory_space<vmem>>, vector<4x16x512xf32>,
    %c0_8 = arith.constant 0 : index
    %c0_9 = arith.constant 0 : index
    %10 = vector.load %arg7[%c0_8, %c0_9] : memref<16x1xf32, #tpu.memory_space<vmem>>, vector<16x1xf32>
    %cst_10 = arith.constant dense<0.000000e+00> : vector<4x16xf32>
    %11 = vector.multi_reduction <add>, %5, %cst_10 [2] : vector<4x16x512xf32> to vector<4x16xf32>
    %12 = vector.shape_cast %11 : vector<4x16xf32> to vector<4x16x1xf32>
    %cst_11 = arith.constant dense<0.000000e+00> : vector<16x1xf32>
    %13 = vector.multi_reduction <add>, %12, %cst_11 [0] : vector<4x16x1xf32> to vector<16x1xf32>
    %14 = arith.addf %10, %13 : vector<16x1xf32>
    %c0_12 = arith.constant 0 : index
    %c0_13 = arith.constant 0 : index
    %15 = vector.load %arg7[%c0_12, %c0_13] : memref<16x1xf32, #tpu.memory_space<vmem>>, vector<16x1xf32>
    tpu.vector_store %arg7[%c0_12, %c0_13], %14 {strides = array<i32>} : memref<16x1xf32, #tpu.memory_space<vmem>>, vector<16x1xf32>,
    %c0_14 = arith.constant 0 : index
    %c0_15 = arith.constant 0 : index
    %16 = vector.load %arg8[%c0_14, %c0_15] : memref<16x1xf32, #tpu.memory_space<vmem>>, vector<16x1xf32>
    %17 = arith.mulf %5, %5 : vector<4x16x512xf32>
    %cst_16 = arith.constant dense<0.000000e+00> : vector<4x16xf32>
    %18 = vector.multi_reduction <add>, %17, %cst_16 [2] : vector<4x16x512xf32> to vector<4x16xf32>
    %19 = vector.shape_cast %18 : vector<4x16xf32> to vector<4x16x1xf32>
    %cst_17 = arith.constant dense<0.000000e+00> : vector<16x1xf32>
    %20 = vector.multi_reduction <add>, %19, %cst_17 [0] : vector<4x16x1xf32> to vector<16x1xf32>
    %21 = arith.addf %16, %20 : vector<16x1xf32>
    %c0_18 = arith.constant 0 : index
    %c0_19 = arith.constant 0 : index
    %22 = vector.load %arg8[%c0_18, %c0_19] : memref<16x1xf32, #tpu.memory_space<vmem>>, vector<16x1xf32>
    tpu.vector_store %arg8[%c0_18, %c0_19], %21 {strides = array<i32>} : memref<16x1xf32, #tpu.memory_space<vmem>>, vector<16x1xf32>,
    %c0_i32_20 = arith.constant 0 : i32
    %23 = arith.cmpi eq, %arg0, %c0_i32_20 : i32
    %24 = arith.extui %23 : i1 to i32
    %c0_i32_21 = arith.constant 0 : i32
    %25 = arith.cmpi ne, %24, %c0_i32_21 : i32
    scf.if %25 {
      %c0_22 = arith.constant 0 : index
      %c0_23 = arith.constant 0 : index
      %26 = vector.load %arg7[%c0_22, %c0_23] : memref<16x1xf32, #tpu.memory_space<vmem>>, vector<16x1xf32>
      %cst_24 = arith.constant 5.2083336E-4 : f32
      %27 = vector.broadcast %cst_24 : f32 to vector<16x1xf32>
      %28 = arith.mulf %26, %27 : vector<16x1xf32>
      %c0_25 = arith.constant 0 : index
      %c0_26 = arith.constant 0 : index
      %29 = vector.load %arg8[%c0_25, %c0_26] : memref<16x1xf32, #tpu.memory_space<vmem>>, vector<16x1xf32>
      %cst_27 = arith.constant 5.2083336E-4 : f32
      %30 = vector.broadcast %cst_27 : f32 to vector<16x1xf32>
      %31 = arith.mulf %29, %30 : vector<16x1xf32>
      %32 = arith.mulf %28, %28 : vector<16x1xf32>
      %33 = arith.subf %31, %32 : vector<16x1xf32>
      %cst_28 = arith.constant 0.000000e+00 : f32
      %34 = vector.broadcast %cst_28 : f32 to vector<16x1xf32>
      %35 = arith.maximumf %33, %34 : vector<16x1xf32>
      %c0_29 = arith.constant 0 : index
      %c0_30 = arith.constant 0 : index
      %36 = vector.load %arg3[%c0_29, %c0_30] : memref<16x1xf32, #tpu.memory_space<vmem>>, vector<16x1xf32>
      %cst_31 = arith.constant 9.99999974E-6 : f32
      %37 = vector.broadcast %cst_31 : f32 to vector<16x1xf32>
      %38 = arith.addf %35, %37 : vector<16x1xf32>
      %39 = math.rsqrt %38 : vector<16x1xf32>
      %40 = arith.mulf %36, %39 : vector<16x1xf32>
      %c0_32 = arith.constant 0 : index
      %c0_33 = arith.constant 0 : index
      %41 = vector.load %arg4[%c0_32, %c0_33] : memref<16x1xf32, #tpu.memory_space<vmem>>, vector<16x1xf32>
      %42 = arith.mulf %28, %40 : vector<16x1xf32>
      %43 = arith.subf %41, %42 : vector<16x1xf32>
      %c0_34 = arith.constant 0 : index
      %c0_35 = arith.constant 0 : index
      %c0_36 = arith.constant 0 : index
      %44 = vector.load %arg6[%c0_34, %c0_35, %c0_36] : memref<4x16x512xf32, #tpu.memory_space<vmem>>, vector<4x16x512xf32>
      %45 = vector.shape_cast %40 : vector<16x1xf32> to vector<1x16x1xf32>
      %46 = vector.broadcast %45 : vector<1x16x1xf32> to vector<4x16x512xf32>
      %47 = arith.mulf %44, %46 : vector<4x16x512xf32>
      %48 = vector.shape_cast %43 : vector<16x1xf32> to vector<1x16x1xf32>
      %49 = vector.broadcast %48 : vector<1x16x1xf32> to vector<4x16x512xf32>
      %50 = arith.addf %47, %49 : vector<4x16x512xf32>
      %cst_37 = arith.constant 0.000000e+00 : f32
      %51 = vector.broadcast %cst_37 : f32 to vector<4x16x512xf32>
      %52 = arith.maximumf %50, %51 : vector<4x16x512xf32>
      %53 = arith.truncf %52 : vector<4x16x512xf32> to vector<4x16x512xbf16>
      %c0_38 = arith.constant 0 : index
      %c0_39 = arith.constant 0 : index
      %c0_40 = arith.constant 0 : index
      %54 = vector.load %arg5[%c0_38, %c0_39, %c0_40] : memref<4x16x512xbf16, #tpu.memory_space<vmem>>, vector<4x16x512xbf16>
      tpu.vector_store %arg5[%c0_38, %c0_39, %c0_40], %53 {strides = array<i32>} : memref<4x16x512xbf16, #tpu.memory_space<vmem>>, vector<4x16x512xbf16>,
    } else {
    }
    return
  }
  func.func @transform_0(%arg0: i32) -> (i32, i32, i32) {
    %c0_i32 = arith.constant 0 : i32
    %c0_i32_0 = arith.constant 0 : i32
    %c0_i32_1 = arith.constant 0 : i32
    %c0_i32_2 = arith.constant 0 : i32
    return %c0_i32, %c0_i32_0, %c0_i32_1 : i32, i32, i32
  }
  func.func @transform_1(%arg0: i32) -> (i32, i32, i32) {
    %c0_i32 = arith.constant 0 : i32
    %c0_i32_0 = arith.constant 0 : i32
    %c0_i32_1 = arith.constant 0 : i32
    return %c0_i32, %c0_i32_0, %arg0 : i32, i32, i32
  }
  func.func @transform_2(%arg0: i32) -> (i32, i32) {
    %c0_i32 = arith.constant 0 : i32
    %c0_i32_0 = arith.constant 0 : i32
    %c0_i32_1 = arith.constant 0 : i32
    return %c0_i32, %c0_i32_0 : i32, i32
  }
  func.func @transform_3(%arg0: i32) -> (i32, i32) {
    %c0_i32 = arith.constant 0 : i32
    %c0_i32_0 = arith.constant 0 : i32
    %c0_i32_1 = arith.constant 0 : i32
    return %c0_i32, %c0_i32_0 : i32, i32
  }
  func.func @transform_4(%arg0: i32) -> (i32, i32, i32) {
    %c0_i32 = arith.constant 0 : i32
    %c0_i32_0 = arith.constant 0 : i32
    %c0_i32_1 = arith.constant 0 : i32
    %c0_i32_2 = arith.constant 0 : i32
    return %c0_i32, %c0_i32_0, %c0_i32_1 : i32, i32, i32
  }
}

module attributes {stable_mosaic.version = 11 : i64} {
  func.func @_fused_gemm_tanh_kernel(%arg0: i32, %arg1: memref<4x16x32xbf16, #tpu.memory_space<vmem>>, %arg2: memref<4x32x1920xbf16, #tpu.memory_space<vmem>>, %arg3: memref<4x16x1920xf32, #tpu.memory_space<vmem>>) attributes {dimension_semantics = [#tpu.dimension_semantics<parallel>], iteration_bounds = array<i64: 1>, scalar_prefetch = 0 : i64, scratch_operands = 0 : i64, tpu.core_type = #tpu.core_type<tc>, window_params = [{pipeline_mode = #tpu.pipeline_mode<synchronous>, transform_indices = @transform_0, window_bounds = array<i64: 4, 16, 32>}, {transform_indices = @transform_1, window_bounds = array<i64: 4, 32, 1920>}, {transform_indices = @transform_2, window_bounds = array<i64: 4, 16, 1920>}]} {
    %c0 = arith.constant 0 : index
    %c0_0 = arith.constant 0 : index
    %c0_1 = arith.constant 0 : index
    %0 = vector.load %arg1[%c0, %c0_0, %c0_1] : memref<4x16x32xbf16, #tpu.memory_space<vmem>>, vector<4x16x32xbf16>
    %c0_2 = arith.constant 0 : index
    %c0_3 = arith.constant 0 : index
    %c0_4 = arith.constant 0 : index
    %1 = vector.load %arg2[%c0_2, %c0_3, %c0_4] : memref<4x32x1920xbf16, #tpu.memory_space<vmem>>, vector<4x32x1920xbf16>
    %cst = arith.constant dense<0.000000e+00> : vector<4x16x1920xf32>
    %2 = tpu.matmul %0, %1, %cst {dimension_numbers = #tpu.dot_dimension_numbers<[2], [1], [1], [2], [0, 0, 0, 1, 1, 2], [0], [0]>} : vector<4x16x32xbf16>, vector<4x32x1920xbf16>, vector<4x16x1920xf32> -> vector<4x16x1920xf32>
    %3 = math.tanh %2 : vector<4x16x1920xf32>
    %c0_5 = arith.constant 0 : index
    %c0_6 = arith.constant 0 : index
    %c0_7 = arith.constant 0 : index
    %4 = vector.load %arg3[%c0_5, %c0_6, %c0_7] : memref<4x16x1920xf32, #tpu.memory_space<vmem>>, vector<4x16x1920xf32>
    tpu.vector_store %arg3[%c0_5, %c0_6, %c0_7], %3 {strides = array<i32>} : memref<4x16x1920xf32, #tpu.memory_space<vmem>>, vector<4x16x1920xf32>,
    return
  }
  func.func @transform_0(%arg0: i32) -> (i32, i32, i32) {
    %c0_i32 = arith.constant 0 : i32
    %c0_i32_0 = arith.constant 0 : i32
    %c0_i32_1 = arith.constant 0 : i32
    %c0_i32_2 = arith.constant 0 : i32
    return %c0_i32, %c0_i32_0, %c0_i32_1 : i32, i32, i32
  }
  func.func @transform_1(%arg0: i32) -> (i32, i32, i32) {
    %c0_i32 = arith.constant 0 : i32
    %c0_i32_0 = arith.constant 0 : i32
    %c0_i32_1 = arith.constant 0 : i32
    return %c0_i32, %c0_i32_0, %arg0 : i32, i32, i32
  }
  func.func @transform_2(%arg0: i32) -> (i32, i32, i32) {
    %c0_i32 = arith.constant 0 : i32
    %c0_i32_0 = arith.constant 0 : i32
    %c0_i32_1 = arith.constant 0 : i32
    return %c0_i32, %c0_i32_0, %arg0 : i32, i32, i32
  }
}

</mosaic_0001>

<llo_original>
// kernel: squeeze.1
$region0: #{squeeze.1}
  %s0 = inlined_call_operand.vmem [shape: bf16[1,64,30], index: 0, kind: input, shape index: {}]
  %s1 = inlined_call_operand.vmem [shape: bf16[64,2,3,5], index: 1, kind: output, shape index: {}]
  $region1: #{squeeze.1} parent=0
    #allocation0 [shape = 'u8[24576]{0}', space=vmem, size = 0x6000, scoped, tag = 'scoped mem for output reshape']
    #allocation1 [shape = 'u8[16384]{0}', space=vmem, size = 0x4000, scoped, tag = 'scoped mem for input reshape']
    %s3 = smul.u32 4, 2
    %s4 = sshll.u32 1, %s3
    %s5 = ssub.s32 %s4, 1
    %s6 = smul.addr 4, 3
    %s7 = scalar_lea.vmem %s0, %s6
    %s8 = sshrl.u32 %s5, 1
    %s9 = sor.u32 %s5, %s8
    %s10 = sand.u32 %s9, 85
    %s11 = sshrl.u32 %s10, 1
    %s12 = sor.u32 %s10, %s11
    %s13 = sand.u32 51, %s12
    %s14 = sshrl.u32 %s13, 2
    %s15 = sor.u32 %s13, %s14
    %s16 = sand.u32 15, %s15
    %v17 = vld [vmem:[%s7] sm:%s16]
    %v18 = vunpack.c.l.bf16 %v17
    %v19 = vunpack.c.h.bf16 %v17
    %s20 = scalar_lea.vmem [#allocation1], 24
    %21 = vst [vmem:[%s20] sm:%s5] %v18
    %s22 = smul.addr 4, 2
    %s23 = scalar_lea.vmem %s0, %s22
    %s24 = sshrl.u32 %s5, 1
    %s25 = sor.u32 %s5, %s24
    %s26 = sand.u32 %s25, 85
    %s27 = sshrl.u32 %s26, 1
    %s28 = sor.u32 %s26, %s27
    %s29 = sand.u32 51, %s28
    %s30 = sshrl.u32 %s29, 2
    %s31 = sor.u32 %s29, %s30
    %s32 = sand.u32 15, %s31
    %v33 = vld [vmem:[%s23] sm:%s32]
    %v34 = vunpack.c.l.bf16 %v33
    %v35 = vunpack.c.h.bf16 %v33
    %s36 = scalar_lea.vmem [#allocation1], 16
    %37 = vst [vmem:[%s36] sm:%s5] %v34
    %s38 = scalar_lea.vmem %s0, 4
    %s39 = sshrl.u32 %s5, 1
    %s40 = sor.u32 %s5, %s39
    %s41 = sand.u32 %s40, 85
    %s42 = sshrl.u32 %s41, 1
    %s43 = sor.u32 %s41, %s42
    %s44 = sand.u32 51, %s43
    %s45 = sshrl.u32 %s44, 2
    %s46 = sor.u32 %s44, %s45
    %s47 = sand.u32 15, %s46
    %v48 = vld [vmem:[%s38] sm:%s47]
    %v49 = vunpack.c.l.bf16 %v48
    %v50 = vunpack.c.h.bf16 %v48
    %s51 = scalar_lea.vmem [#allocation1], 8
    %52 = vst [vmem:[%s51] sm:%s5] %v49
    %s53 = sshrl.u32 %s5, 1
    %s54 = sor.u32 %s5, %s53
    %s55 = sand.u32 %s54, 85
    %s56 = sshrl.u32 %s55, 1
    %s57 = sor.u32 %s55, %s56
    %s58 = sand.u32 51, %s57
    %s59 = sshrl.u32 %s58, 2
    %s60 = sor.u32 %s58, %s59
    %s61 = sand.u32 15, %s60
    %v62 = vld [vmem:[%s0] sm:%s61]
    %v63 = vunpack.c.l.bf16 %v62
    %v64 = vunpack.c.h.bf16 %v62
    %65 = vst [vmem:[#allocation1] sm:%s5] %v63
    %v66 = vld [vmem:[#allocation1] sm:$0xff]
    %vm67 = vcmask 523264
    %68 = vst.msk [vmem:[#allocation0] sm:$0x1f] %vm67, %v66
    %s69 = scalar_lea.vmem [#allocation0], 3
    %70 = vst.msk [vmem:[%s69] sm:$0xe0] %vm67, %v66
    %s71 = scalar_lea.vmem [#allocation1], 8
    %v72 = vld [vmem:[%s71] sm:$0xff]
    %vm73 = vcmask 523264
    %s74 = scalar_lea.vmem [#allocation0], 11
    %75 = vst.msk [vmem:[%s74] sm:$0x3] %vm73, %v72
    %s76 = scalar_lea.vmem [#allocation0], 14
    %77 = vst.msk [vmem:[%s76] sm:$0x7c] %vm73, %v72
    %s78 = scalar_lea.vmem [#allocation0], 17
    %79 = vst.msk [vmem:[%s78] sm:$0x80] %vm73, %v72
    %s80 = scalar_lea.vmem [#allocation1], 16
    %v81 = vld [vmem:[%s80] sm:$0xff]
    %vm82 = vcmask 523264
    %s83 = scalar_lea.vmem [#allocation0], 25
    %84 = vst.msk [vmem:[%s83] sm:$0xf] %vm82, %v81
    %s85 = scalar_lea.vmem [#allocation0], 28
    %86 = vst.msk [vmem:[%s85] sm:$0xf0] %vm82, %v81
    %s87 = scalar_lea.vmem [#allocation1], 24
    %v88 = vld [vmem:[%s87] sm:$0x3f]
    %vm89 = vcmask 523264
    %s90 = scalar_lea.vmem [#allocation0], 36
    %91 = vst.msk [vmem:[%s90] ss:$4 sm:$0x3] %vm89, %v88
    %s92 = scalar_lea.vmem [#allocation0], 39
    %93 = vst.msk [vmem:[%s92] sm:$0x3c] %vm89, %v88
    %s95 = smul.u32 4, 2
    %s96 = sshll.u32 1, %s95
    %s97 = ssub.s32 %s96, 1
    %s98 = sshrl.u32 %s95, 1
    %v99 = vld [vmem:[#allocation0] sm:%s97]
    %v100 = vpack.c.bf16 0.0, %v99
    %s101 = sshll.u32 1, %s98
    %s102 = ssub.s32 %s101, 1
    %103 = vst [vmem:[%s1] sm:%s102] %v100
    %s104 = scalar_lea.vmem [#allocation0], 8
    %v105 = vld [vmem:[%s104] sm:%s97]
    %v106 = vpack.c.bf16 0.0, %v105
    %s107 = sshll.u32 1, %s98
    %s108 = ssub.s32 %s107, 1
    %s109 = scalar_lea.vmem %s1, 4
    %110 = vst [vmem:[%s109] sm:%s108] %v106
    %s111 = scalar_lea.vmem [#allocation0], 16
    %v112 = vld [vmem:[%s111] sm:%s97]
    %v113 = vpack.c.bf16 0.0, %v112
    %s114 = sshll.u32 1, %s98
    %s115 = ssub.s32 %s114, 1
    %s116 = smul.addr 4, 2
    %s117 = scalar_lea.vmem %s1, %s116
    %118 = vst [vmem:[%s117] sm:%s115] %v113
    %s119 = scalar_lea.vmem [#allocation0], 24
    %v120 = vld [vmem:[%s119] sm:%s97]
    %v121 = vpack.c.bf16 0.0, %v120
    %s122 = sshll.u32 1, %s98
    %s123 = ssub.s32 %s122, 1
    %s124 = smul.addr 4, 3
    %s125 = scalar_lea.vmem %s1, %s124
    %126 = vst [vmem:[%s125] sm:%s123] %v121
    %s127 = scalar_lea.vmem [#allocation0], 32
    %v128 = vld [vmem:[%s127] sm:%s97]
    %v129 = vpack.c.bf16 0.0, %v128
    %s130 = sshll.u32 1, %s98
    %s131 = ssub.s32 %s130, 1
    %s132 = smul.addr 4, 4
    %s133 = scalar_lea.vmem %s1, %s132
    %134 = vst [vmem:[%s133] sm:%s131] %v129
    %s135 = scalar_lea.vmem [#allocation0], 40
    %v136 = vld [vmem:[%s135] sm:%s97]
    %v137 = vpack.c.bf16 0.0, %v136
    %s138 = sshll.u32 1, %s98
    %s139 = ssub.s32 %s138, 1
    %s140 = smul.addr 4, 5
    %s141 = scalar_lea.vmem %s1, %s140
    %142 = vst [vmem:[%s141] sm:%s139] %v137

// kernel: _lambda_.5
$region0: #{_lambda_.5}
  #allocation0 [shape = 'u32[]', space=smem, size = 0x4, offset = 0x4, fixed_abs, tag = 'smem constant byte address 0x4 - core index']
  #allocation1 [shape = 'u32[144,128]{1,0:T(1,128)}', space=vmem, size = 0x12000, scoped, tag = 'internal scratch']
  #allocation2 [shape = 'f32[1,64,128]{2,1,0:T(8,128)}', space=vmem, size = 0x8000, scoped, tag = 'scratch operand']
  #allocation3 [shape = 'f32[64,1]{1,0:T(8,128)}', space=vmem, size = 0x8000, scoped, tag = 'scratch operand']
  #allocation4 [shape = 'f32[64,1]{1,0:T(8,128)}', space=vmem, size = 0x8000, scoped, tag = 'scratch operand']
  %s0 = inlined_call_operand.hbm [shape: bf16[1,64,240], index: 0, kind: input, shape index: {}]
  %s1 = inlined_call_operand.vmem [shape: bf16[1,240,128], index: 1, kind: input, shape index: {}]
  %s2 = inlined_call_operand.hbm [shape: f32[64,1], index: 2, kind: input, shape index: {}]
  %s3 = inlined_call_operand.vmem [shape: f32[64,1], index: 3, kind: input, shape index: {}]
  %s4 = inlined_call_operand.vmem [shape: bf16[1,64,128], index: 4, kind: output, shape index: {}]
  %s5 = sld [smem:[#allocation0]]
  $region42: #{_lambda_.5} parent=0
    _
  %s7 = ssub.s32 1, %s5
  %s8 = scalar_select 0, %s7, %s5
  $region1: #{_lambda_.5} parent=0
    #allocation5 [shape = 'u8[32768]{0}', space=vmem, size = 0x8000, scoped, tag = 'input window, operand 0, single buffered']
    #allocation6 [shape = 's32[1]{0}', space=sflag, size = 0x4, scoped, tag = 'scoped memory for _lambda_.5']
    #allocation7 [shape = 'u8[32768]{0}', space=vmem, size = 0x8000, scoped, tag = 'input window, operand 2, single buffered']
    #allocation8 [shape = 's32[1]{0}', space=sflag, size = 0x4, scoped, tag = 'scoped memory for _lambda_.5']
    %9 = vsyncpa [#allocation6], 0
    %10 = vsyncpa [#allocation8], 0
    // Predicated region
    $region2: #{_lambda_.5} parent=1 // pred_check
      _
    $region3: #{_lambda_.5} parent=1 // pred_check_branch
      %12 = sbr.rel (0) target = $region5
    $region4: #{_lambda_.5} parent=1 // pred_region
      %s14 = ssub.s32 1024, 1024
      %15 = vsyncadd [#allocation6], %s14
      %s16 = sshll.u32 [#allocation5], 4
      %s17 = int_to_ptr.vmem [resolvable:$true] %s16
      %22 = dma.hbm_to_vmem [thread:$0]  %s0, 1024, %s17, [#allocation6], 128, 128, 8
    $region5: #{_lambda_.5} parent=1 // pred_fallthru
      _
    // Predicated region
    $region6: #{_lambda_.5} parent=1 // pred_check
      _
    $region7: #{_lambda_.5} parent=1 // pred_check_branch
      %24 = sbr.rel (0) target = $region9
    $region8: #{_lambda_.5} parent=1 // pred_region
      _
    $region9: #{_lambda_.5} parent=1 // pred_fallthru
      _
    // Predicated region
    $region10: #{_lambda_.5} parent=1 // pred_check
      _
    $region11: #{_lambda_.5} parent=1 // pred_check_branch
      %26 = sbr.rel (0) target = $region13
    $region12: #{_lambda_.5} parent=1 // pred_region
      %s28 = ssub.s32 1024, 1024
      %29 = vsyncadd [#allocation8], %s28
      %s30 = sshll.u32 [#allocation7], 4
      %s31 = int_to_ptr.vmem [resolvable:$true] %s30
      %36 = dma.hbm_to_vmem [thread:$0]  %s2, 1024, %s31, [#allocation8], 128, 128, 8
    $region13: #{_lambda_.5} parent=1 // pred_fallthru
      _
    // Predicated region
    $region14: #{_lambda_.5} parent=1 // pred_check
      _
    $region15: #{_lambda_.5} parent=1 // pred_check_branch
      %38 = sbr.rel (0) target = $region17
    $region16: #{_lambda_.5} parent=1 // pred_region
      _
    $region17: #{_lambda_.5} parent=1 // pred_fallthru
      _
    // Predicated region
    $region18: #{_lambda_.5} parent=1 // pred_check
      _
    $region19: #{_lambda_.5} parent=1 // pred_check_branch
      %40 = sbr.rel (0) target = $region21
    $region20: #{_lambda_.5} parent=1 // pred_region
      %41 = dma.done [#allocation6], 1024
    $region21: #{_lambda_.5} parent=1 // pred_fallthru
      _
    // Predicated region
    $region22: #{_lambda_.5} parent=1 // pred_check
      _
    $region23: #{_lambda_.5} parent=1 // pred_check_branch
      %43 = sbr.rel (0) target = $region25
    $region24: #{_lambda_.5} parent=1 // pred_region
      %44 = dma.done [#allocation8], 1024
    $region25: #{_lambda_.5} parent=1 // pred_fallthru
      _
    %p46 = scmp.eq.s32.totalorder 0, 0
    // Predicated region
    $region26: #{_lambda_.5} parent=1 // pred_check
      %p47 = pneg %p46
    $region27: #{_lambda_.5} parent=1 // pred_check_branch
      %49 = sbr.rel (%p47) target = $region29
    $region28: #{_lambda_.5} parent=1 // pred_region
      %vm50 = vcmask 7168
      %51 = vst.msk [vmem:[#allocation3] sm:$0xff] %vm50, 0.0
      %52 = vst.msk [vmem:[#allocation3 + $0x8] sm:$0xff] %vm50, 0.0
      %53 = vst.msk [vmem:[#allocation3 + $0x10] sm:$0xff] %vm50, 0.0
      %54 = vst.msk [vmem:[#allocation3 + $0x18] sm:$0xff] %vm50, 0.0
      %55 = vst.msk [vmem:[#allocation3 + $0x20] sm:$0xff] %vm50, 0.0
      %56 = vst.msk [vmem:[#allocation3 + $0x28] sm:$0xff] %vm50, 0.0
      %57 = vst.msk [vmem:[#allocation3 + $0x30] sm:$0xff] %vm50, 0.0
      %58 = vst.msk [vmem:[#allocation3 + $0x38] sm:$0xff] %vm50, 0.0
      %59 = vst.msk [vmem:[#allocation4] sm:$0xff] %vm50, 0.0
      %60 = vst.msk [vmem:[#allocation4 + $0x8] sm:$0xff] %vm50, 0.0
      %61 = vst.msk [vmem:[#allocation4 + $0x10] sm:$0xff] %vm50, 0.0
      %62 = vst.msk [vmem:[#allocation4 + $0x18] sm:$0xff] %vm50, 0.0
      %63 = vst.msk [vmem:[#allocation4 + $0x20] sm:$0xff] %vm50, 0.0
      %64 = vst.msk [vmem:[#allocation4 + $0x28] sm:$0xff] %vm50, 0.0
      %65 = vst.msk [vmem:[#allocation4 + $0x30] sm:$0xff] %vm50, 0.0
      %66 = vst.msk [vmem:[#allocation4 + $0x38] sm:$0xff] %vm50, 0.0
    $region29: #{_lambda_.5} parent=1 // pred_fallthru
      _
    %v67 = vld [vmem:[#allocation5] sm:$0xff]
    %v68 = vld [vmem:[#allocation5 + $0x8] sm:$0xff]
    %v69 = vld [vmem:[#allocation5 + $0x10] sm:$0xff]
    %v70 = vld [vmem:[#allocation5 + $0x18] sm:$0xff]
    %v71 = vld [vmem:[#allocation5 + $0x20] sm:$0xff]
    %v72 = vld [vmem:[#allocation5 + $0x28] sm:$0xff]
    %v73 = vld [vmem:[#allocation5 + $0x30] sm:$0xff]
    %v74 = vld [vmem:[#allocation5 + $0x38] sm:$0xff]
    %v75 = vld [vmem:[%s1] sm:$0xf]
    %v76 = vld [vmem:[%s1 + $0x4] sm:$0xf]
    %v77 = vld [vmem:[%s1 + $0x8] sm:$0xf]
    %v78 = vld [vmem:[%s1 + $0xc] sm:$0xf]
    %v79 = vld [vmem:[%s1 + $0x10] sm:$0xf]
    %v80 = vld [vmem:[%s1 + $0x14] sm:$0xf]
    %v81 = vld [vmem:[%s1 + $0x18] sm:$0xf]
    %v82 = vld [vmem:[%s1 + $0x1c] sm:$0xf]
    %v83 = vld [vmem:[%s1 + $0x20] sm:$0xf]
    %v84 = vld [vmem:[%s1 + $0x24] sm:$0xf]
    %v85 = vld [vmem:[%s1 + $0x28] sm:$0xf]
    %v86 = vld [vmem:[%s1 + $0x2c] sm:$0xf]
    %v87 = vld [vmem:[%s1 + $0x30] sm:$0xf]
    %v88 = vld [vmem:[%s1 + $0x34] sm:$0xf]
    %v89 = vld [vmem:[%s1 + $0x38] sm:$0xf]
    %v90 = vld [vmem:[%s1 + $0x3c] sm:$0xf]
    %v91 = vld [vmem:[%s1 + $0x40] sm:$0xf]
    %v92 = vld [vmem:[%s1 + $0x44] sm:$0xf]
    %v93 = vld [vmem:[%s1 + $0x48] sm:$0xf]
    %v94 = vld [vmem:[%s1 + $0x4c] sm:$0xf]
    %v95 = vld [vmem:[%s1 + $0x50] sm:$0xf]
    %v96 = vld [vmem:[%s1 + $0x54] sm:$0xf]
    %v97 = vld [vmem:[%s1 + $0x58] sm:$0xf]
    %v98 = vld [vmem:[%s1 + $0x5c] sm:$0xf]
    %v99 = vld [vmem:[%s1 + $0x60] sm:$0xf]
    %v100 = vld [vmem:[%s1 + $0x64] sm:$0xf]
    %v101 = vld [vmem:[%s1 + $0x68] sm:$0xf]
    %v102 = vld [vmem:[%s1 + $0x6c] sm:$0xf]
    %v103 = vld [vmem:[%s1 + $0x70] sm:$0xf]
    %v104 = vld [vmem:[%s1 + $0x74] sm:$0xf]
    %v113 = vunpack.c.l.b16 %v67
    %v114 = vunpack.c.h.b16 %v67
    %v115 = vunpack.c.l.b16 %v68
    %v116 = vunpack.c.h.b16 %v68
    %v117 = vunpack.c.l.b16 %v69
    %v118 = vunpack.c.h.b16 %v69
    %v119 = vunpack.c.l.b16 %v70
    %v120 = vunpack.c.h.b16 %v70
    %v121 = vunpack.c.l.b16 %v71
    %v122 = vunpack.c.h.b16 %v71
    %v123 = vunpack.c.l.b16 %v72
    %v124 = vunpack.c.h.b16 %v72
    %v125 = vunpack.c.l.b16 %v73
    %v126 = vunpack.c.h.b16 %v73
    %v127 = vunpack.c.l.b16 %v74
    %v128 = vunpack.c.h.b16 %v74
    %v129 = vpack.c.b16 %v115, %v113
    %v130 = vpack.c.b16 %v116, %v114
    %v131 = vpack.c.b16 %v119, %v117
    %v132 = vpack.c.b16 %v120, %v118
    %v133 = vpack.c.b16 %v123, %v121
    %v134 = vpack.c.b16 %v124, %v122
    %v135 = vpack.c.b16 %v127, %v125
    %v136 = vpack.c.b16 %v128, %v126
    %v171 = vunpack.c.l.b16 %v75
    %v172 = vunpack.c.l.b16 %v76
    %v173 = vunpack.c.l.b16 %v77
    %v174 = vunpack.c.l.b16 %v78
    %v175 = vunpack.c.l.b16 %v79
    %v176 = vunpack.c.l.b16 %v80
    %v177 = vunpack.c.l.b16 %v81
    %v178 = vunpack.c.l.b16 %v82
    %v179 = vunpack.c.l.b16 %v83
    %v180 = vunpack.c.l.b16 %v84
    %v181 = vunpack.c.l.b16 %v85
    %v182 = vunpack.c.l.b16 %v86
    %v183 = vunpack.c.l.b16 %v87
    %v184 = vunpack.c.l.b16 %v88
    %v185 = vunpack.c.l.b16 %v89
    %v186 = vunpack.c.l.b16 %v90
    %v187 = vunpack.c.l.b16 %v91
    %v188 = vunpack.c.l.b16 %v92
    %v189 = vunpack.c.l.b16 %v93
    %v190 = vunpack.c.l.b16 %v94
    %v191 = vunpack.c.l.b16 %v95
    %v192 = vunpack.c.l.b16 %v96
    %v193 = vunpack.c.l.b16 %v97
    %v194 = vunpack.c.l.b16 %v98
    %v195 = vunpack.c.l.b16 %v99
    %v196 = vunpack.c.l.b16 %v100
    %v197 = vunpack.c.l.b16 %v101
    %v198 = vunpack.c.l.b16 %v102
    %v199 = vunpack.c.l.b16 %v103
    %v200 = vunpack.c.l.b16 %v104
    %v201 = vpack.c.b16 %v172, %v171
    %v202 = vpack.c.b16 %v174, %v173
    %v203 = vpack.c.b16 %v176, %v175
    %v204 = vpack.c.b16 %v178, %v177
    %v205 = vpack.c.b16 %v180, %v179
    %v206 = vpack.c.b16 %v182, %v181
    %v207 = vpack.c.b16 %v184, %v183
    %v208 = vpack.c.b16 %v186, %v185
    %v209 = vpack.c.b16 %v188, %v187
    %v210 = vpack.c.b16 %v190, %v189
    %v211 = vpack.c.b16 %v192, %v191
    %v212 = vpack.c.b16 %v194, %v193
    %v213 = vpack.c.b16 %v196, %v195
    %v214 = vpack.c.b16 %v198, %v197
    %v215 = vpack.c.b16 %v200, %v199
    %vm231 = vcmask 916480
    %v233 = vsel %vm231, %v130, 0
    %v236 = vsel %vm231, %v132, 0
    %v239 = vsel %vm231, %v134, 0
    %v242 = vsel %vm231, %v136, 0
    %244 = vmatprep.subr.bf16.mxu0 0
    %245 = vmatpush1.bf16.msra.mxu0 %v208
    %246 = vmatprep.subr.bf16.mxu0 0
    %247 = vmatpush1.bf16.msra.mxu0 %v207
    %248 = vmatprep.subr.bf16.mxu0 0
    %249 = vmatpush1.bf16.msra.mxu0 %v206
    %250 = vmatprep.subr.bf16.mxu0 0
    %251 = vmatpush1.bf16.msra.mxu0 %v205
    %252 = vmatprep.subr.bf16.mxu0 0
    %253 = vmatpush1.bf16.msra.mxu0 %v204
    %254 = vmatprep.subr.bf16.mxu0 0
    %255 = vmatpush1.bf16.msra.mxu0 %v203
    %256 = vmatprep.subr.bf16.mxu0 0
    %257 = vmatpush1.bf16.msra.mxu0 %v202
    %258 = vmatprep.subr.bf16.mxu0 0
    %259 = vmatpush1.bf16.msra.mxu0 %v201
    %260 = vmatprep.subr.bf16.mxu0 0
    %261 = vmatpush2.bf16.msra.mxu0 0
    %262 = vmatprep.subr.bf16.mxu0 0
    %263 = vmatpush2.bf16.msra.mxu0 %v215
    %264 = vmatprep.subr.bf16.mxu0 0
    %265 = vmatpush2.bf16.msra.mxu0 %v214
    %266 = vmatprep.subr.bf16.mxu0 0
    %267 = vmatpush2.bf16.msra.mxu0 %v213
    %268 = vmatprep.subr.bf16.mxu0 0
    %269 = vmatpush2.bf16.msra.mxu0 %v212
    %270 = vmatprep.subr.bf16.mxu0 0
    %271 = vmatpush2.bf16.msra.mxu0 %v211
    %272 = vmatprep.subr.bf16.mxu0 0
    %273 = vmatpush2.bf16.msra.mxu0 %v210
    %274 = vmatprep.subr.bf16.mxu0 0
    %275 = vmatpush2.bf16.msra.mxu0 %v209
    %276 = vmatprep.mubr.bf16.mxu0 %v233
    %277 = vmatmul.mubr.bf16.gmra.mxu0 %v129
    %v278 = vpop.f32.mrf.mxu0
    %v279 = vadd.f32 0.0, %v278
    %v280 = vpop.f32.mrf.mxu0
    %v281 = vpop.f32.mrf.mxu0
    %v282 = vadd.f32 0.0, %v281
    %v283 = vpop.f32.mrf.mxu0
    %284 = vmatprep.mubr.bf16.mxu0 %v236
    %285 = vmatmul.mubr.bf16.gmra.mxu0 %v131
    %v286 = vpop.f32.mrf.mxu0
    %v287 = vadd.f32 0.0, %v286
    %v288 = vpop.f32.mrf.mxu0
    %v289 = vpop.f32.mrf.mxu0
    %v290 = vadd.f32 0.0, %v289
    %v291 = vpop.f32.mrf.mxu0
    %292 = vmatprep.mubr.bf16.mxu0 %v239
    %293 = vmatmul.mubr.bf16.gmra.mxu0 %v133
    %v294 = vpop.f32.mrf.mxu0
    %v295 = vadd.f32 0.0, %v294
    %v296 = vpop.f32.mrf.mxu0
    %v297 = vpop.f32.mrf.mxu0
    %v298 = vadd.f32 0.0, %v297
    %v299 = vpop.f32.mrf.mxu0
    %300 = vmatprep.mubr.bf16.mxu0 %v242
    %301 = vmatmul.mubr.bf16.gmra.mxu0 %v135
    %v302 = vpop.f32.mrf.mxu0
    %v303 = vadd.f32 0.0, %v302
    %v304 = vpop.f32.mrf.mxu0
    %v305 = vpop.f32.mrf.mxu0
    %v306 = vadd.f32 0.0, %v305
    %v307 = vpop.f32.mrf.mxu0
    %308 = vdwg.mxu0
    %s309 = smul.u32 0, 128
    %s310 = sshra.s32 %s309, 7
    %s311 = sand.u32 %s309, 127
    %s312 = scalar_lea.vmem [#allocation2], %s310
    %313 = vst [vmem:[%s312] sm:$0xff] %v279
    %314 = vst [vmem:[%s312 + $0x8] sm:$0xff] %v282
    %315 = vst [vmem:[%s312 + $0x10] sm:$0xff] %v287
    %316 = vst [vmem:[%s312 + $0x18] sm:$0xff] %v290
    %317 = vst [vmem:[%s312 + $0x20] sm:$0xff] %v295
    %318 = vst [vmem:[%s312 + $0x28] sm:$0xff] %v298
    %319 = vst [vmem:[%s312 + $0x30] sm:$0xff] %v303
    %320 = vst [vmem:[%s312 + $0x38] sm:$0xff] %v306
    %v321 = vld [vmem:[#allocation3] sm:$0xff]
    %v322 = vld [vmem:[#allocation3 + $0x8] sm:$0xff]
    %v323 = vld [vmem:[#allocation3 + $0x10] sm:$0xff]
    %v324 = vld [vmem:[#allocation3 + $0x18] sm:$0xff]
    %v325 = vld [vmem:[#allocation3 + $0x20] sm:$0xff]
    %v326 = vld [vmem:[#allocation3 + $0x28] sm:$0xff]
    %v327 = vld [vmem:[#allocation3 + $0x30] sm:$0xff]
    %v328 = vld [vmem:[#allocation3 + $0x38] sm:$0xff]
    %329 = vadd.xlane.f32.xlu0 %v279
    %v330 = vpop.xlane.xlu0 %329
    %331 = vadd.xlane.f32.xlu0 %v282
    %v332 = vpop.xlane.xlu0 %331
    %333 = vadd.xlane.f32.xlu0 %v287
    %v334 = vpop.xlane.xlu0 %333
    %335 = vadd.xlane.f32.xlu0 %v290
    %v336 = vpop.xlane.xlu0 %335
    %337 = vadd.xlane.f32.xlu0 %v295
    %v338 = vpop.xlane.xlu0 %337
    %339 = vadd.xlane.f32.xlu0 %v298
    %v340 = vpop.xlane.xlu0 %339
    %341 = vadd.xlane.f32.xlu0 %v303
    %v342 = vpop.xlane.xlu0 %341
    %343 = vadd.xlane.f32.xlu0 %v306
    %v344 = vpop.xlane.xlu0 %343
    %v345 = vadd.f32 %v330, 0.0
    %v346 = vadd.f32 %v332, 0.0
    %v347 = vadd.f32 %v334, 0.0
    %v348 = vadd.f32 %v336, 0.0
    %v349 = vadd.f32 %v338, 0.0
    %v350 = vadd.f32 %v340, 0.0
    %v351 = vadd.f32 %v342, 0.0
    %v352 = vadd.f32 %v344, 0.0
    %v353 = vadd.f32 %v321, %v345
    %v354 = vadd.f32 %v322, %v346
    %v355 = vadd.f32 %v323, %v347
    %v356 = vadd.f32 %v324, %v348
    %v357 = vadd.f32 %v325, %v349
    %v358 = vadd.f32 %v326, %v350
    %v359 = vadd.f32 %v327, %v351
    %v360 = vadd.f32 %v328, %v352
    %vm361 = vcmask 7168
    %362 = vst.msk [vmem:[#allocation3] sm:$0xff] %vm361, %v353
    %363 = vst.msk [vmem:[#allocation3 + $0x8] sm:$0xff] %vm361, %v354
    %364 = vst.msk [vmem:[#allocation3 + $0x10] sm:$0xff] %vm361, %v355
    %365 = vst.msk [vmem:[#allocation3 + $0x18] sm:$0xff] %vm361, %v356
    %366 = vst.msk [vmem:[#allocation3 + $0x20] sm:$0xff] %vm361, %v357
    %367 = vst.msk [vmem:[#allocation3 + $0x28] sm:$0xff] %vm361, %v358
    %368 = vst.msk [vmem:[#allocation3 + $0x30] sm:$0xff] %vm361, %v359
    %369 = vst.msk [vmem:[#allocation3 + $0x38] sm:$0xff] %vm361, %v360
    %v370 = vld [vmem:[#allocation4] sm:$0xff]
    %v371 = vld [vmem:[#allocation4 + $0x8] sm:$0xff]
    %v372 = vld [vmem:[#allocation4 + $0x10] sm:$0xff]
    %v373 = vld [vmem:[#allocation4 + $0x18] sm:$0xff]
    %v374 = vld [vmem:[#allocation4 + $0x20] sm:$0xff]
    %v375 = vld [vmem:[#allocation4 + $0x28] sm:$0xff]
    %v376 = vld [vmem:[#allocation4 + $0x30] sm:$0xff]
    %v377 = vld [vmem:[#allocation4 + $0x38] sm:$0xff]
    %v378 = vmul.f32 %v279, %v279
    %v379 = vmul.f32 %v282, %v282
    %v380 = vmul.f32 %v287, %v287
    %v381 = vmul.f32 %v290, %v290
    %v382 = vmul.f32 %v295, %v295
    %v383 = vmul.f32 %v298, %v298
    %v384 = vmul.f32 %v303, %v303
    %v385 = vmul.f32 %v306, %v306
    %386 = vadd.xlane.f32.xlu0 %v378
    %v387 = vpop.xlane.xlu0 %386
    %388 = vadd.xlane.f32.xlu0 %v379
    %v389 = vpop.xlane.xlu0 %388
    %390 = vadd.xlane.f32.xlu0 %v380
    %v391 = vpop.xlane.xlu0 %390
    %392 = vadd.xlane.f32.xlu0 %v381
    %v393 = vpop.xlane.xlu0 %392
    %394 = vadd.xlane.f32.xlu0 %v382
    %v395 = vpop.xlane.xlu0 %394
    %396 = vadd.xlane.f32.xlu0 %v383
    %v397 = vpop.xlane.xlu0 %396
    %398 = vadd.xlane.f32.xlu0 %v384
    %v399 = vpop.xlane.xlu0 %398
    %400 = vadd.xlane.f32.xlu0 %v385
    %v401 = vpop.xlane.xlu0 %400
    %v402 = vadd.f32 %v387, 0.0
    %v403 = vadd.f32 %v389, 0.0
    %v404 = vadd.f32 %v391, 0.0
    %v405 = vadd.f32 %v393, 0.0
    %v406 = vadd.f32 %v395, 0.0
    %v407 = vadd.f32 %v397, 0.0
    %v408 = vadd.f32 %v399, 0.0
    %v409 = vadd.f32 %v401, 0.0
    %v410 = vadd.f32 %v370, %v402
    %v411 = vadd.f32 %v371, %v403
    %v412 = vadd.f32 %v372, %v404
    %v413 = vadd.f32 %v373, %v405
    %v414 = vadd.f32 %v374, %v406
    %v415 = vadd.f32 %v375, %v407
    %v416 = vadd.f32 %v376, %v408
    %v417 = vadd.f32 %v377, %v409
    %418 = vst.msk [vmem:[#allocation4] sm:$0xff] %vm361, %v410
    %419 = vst.msk [vmem:[#allocation4 + $0x8] sm:$0xff] %vm361, %v411
    %420 = vst.msk [vmem:[#allocation4 + $0x10] sm:$0xff] %vm361, %v412
    %421 = vst.msk [vmem:[#allocation4 + $0x18] sm:$0xff] %vm361, %v413
    %422 = vst.msk [vmem:[#allocation4 + $0x20] sm:$0xff] %vm361, %v414
    %423 = vst.msk [vmem:[#allocation4 + $0x28] sm:$0xff] %vm361, %v415
    %424 = vst.msk [vmem:[#allocation4 + $0x30] sm:$0xff] %vm361, %v416
    %425 = vst.msk [vmem:[#allocation4 + $0x38] sm:$0xff] %vm361, %v417
    // Predicated region
    $region30: #{_lambda_.5} parent=1 // pred_check
      %p426 = pneg %p46
    $region31: #{_lambda_.5} parent=1 // pred_check_branch
      %428 = sbr.rel (%p426) target = $region33
    $region32: #{_lambda_.5} parent=1 // pred_region
      %v429 = vld [vmem:[#allocation3] sm:$0xff]
      %v430 = vld [vmem:[#allocation3 + $0x8] sm:$0xff]
      %v431 = vld [vmem:[#allocation3 + $0x10] sm:$0xff]
      %v432 = vld [vmem:[#allocation3 + $0x18] sm:$0xff]
      %v433 = vld [vmem:[#allocation3 + $0x20] sm:$0xff]
      %v434 = vld [vmem:[#allocation3 + $0x28] sm:$0xff]
      %v435 = vld [vmem:[#allocation3 + $0x30] sm:$0xff]
      %v436 = vld [vmem:[#allocation3 + $0x38] sm:$0xff]
      %v437 = vmul.f32 %v429, 0.033333335
      %v438 = vmul.f32 %v430, 0.033333335
      %v439 = vmul.f32 %v431, 0.033333335
      %v440 = vmul.f32 %v432, 0.033333335
      %v441 = vmul.f32 %v433, 0.033333335
      %v442 = vmul.f32 %v434, 0.033333335
      %v443 = vmul.f32 %v435, 0.033333335
      %v444 = vmul.f32 %v436, 0.033333335
      %v445 = vld [vmem:[#allocation4] sm:$0xff]
      %v446 = vld [vmem:[#allocation4 + $0x8] sm:$0xff]
      %v447 = vld [vmem:[#allocation4 + $0x10] sm:$0xff]
      %v448 = vld [vmem:[#allocation4 + $0x18] sm:$0xff]
      %v449 = vld [vmem:[#allocation4 + $0x20] sm:$0xff]
      %v450 = vld [vmem:[#allocation4 + $0x28] sm:$0xff]
      %v451 = vld [vmem:[#allocation4 + $0x30] sm:$0xff]
      %v452 = vld [vmem:[#allocation4 + $0x38] sm:$0xff]
      %v453 = vmul.f32 %v445, 0.033333335
      %v454 = vmul.f32 %v446, 0.033333335
      %v455 = vmul.f32 %v447, 0.033333335
      %v456 = vmul.f32 %v448, 0.033333335
      %v457 = vmul.f32 %v449, 0.033333335
      %v458 = vmul.f32 %v450, 0.033333335
      %v459 = vmul.f32 %v451, 0.033333335
      %v460 = vmul.f32 %v452, 0.033333335
      %v461 = vmul.f32 %v437, %v437
      %v462 = vmul.f32 %v438, %v438
      %v463 = vmul.f32 %v439, %v439
      %v464 = vmul.f32 %v440, %v440
      %v465 = vmul.f32 %v441, %v441
      %v466 = vmul.f32 %v442, %v442
      %v467 = vmul.f32 %v443, %v443
      %v468 = vmul.f32 %v444, %v444
      %v469 = vsub.f32 %v453, %v461
      %v470 = vsub.f32 %v454, %v462
      %v471 = vsub.f32 %v455, %v463
      %v472 = vsub.f32 %v456, %v464
      %v473 = vsub.f32 %v457, %v465
      %v474 = vsub.f32 %v458, %v466
      %v475 = vsub.f32 %v459, %v467
      %v476 = vsub.f32 %v460, %v468
      %v477 = vmax.f32 %v469, 0.0
      %v478 = vmax.f32 %v470, 0.0
      %v479 = vmax.f32 %v471, 0.0
      %v480 = vmax.f32 %v472, 0.0
      %v481 = vmax.f32 %v473, 0.0
      %v482 = vmax.f32 %v474, 0.0
      %v483 = vmax.f32 %v475, 0.0
      %v484 = vmax.f32 %v476, 0.0
      %v485 = vld [vmem:[#allocation7] sm:$0xff]
      %v486 = vld [vmem:[#allocation7 + $0x8] sm:$0xff]
      %v487 = vld [vmem:[#allocation7 + $0x10] sm:$0xff]
      %v488 = vld [vmem:[#allocation7 + $0x18] sm:$0xff]
      %v489 = vld [vmem:[#allocation7 + $0x20] sm:$0xff]
      %v490 = vld [vmem:[#allocation7 + $0x28] sm:$0xff]
      %v491 = vld [vmem:[#allocation7 + $0x30] sm:$0xff]
      %v492 = vld [vmem:[#allocation7 + $0x38] sm:$0xff]
      %v493 = vadd.f32 %v477, 1e-05
      %v494 = vadd.f32 %v478, 1e-05
      %v495 = vadd.f32 %v479, 1e-05
      %v496 = vadd.f32 %v480, 1e-05
      %v497 = vadd.f32 %v481, 1e-05
      %v498 = vadd.f32 %v482, 1e-05
      %v499 = vadd.f32 %v483, 1e-05
      %v500 = vadd.f32 %v484, 1e-05
      %v501 = vrsqrt.pop %v493
      %v502 = vrsqrt.pop %v494
      %v503 = vrsqrt.pop %v495
      %v504 = vrsqrt.pop %v496
      %v505 = vrsqrt.pop %v497
      %v506 = vrsqrt.pop %v498
      %v507 = vrsqrt.pop %v499
      %v508 = vrsqrt.pop %v500
      %v509 = vmul.f32 %v485, %v501
      %v510 = vmul.f32 %v486, %v502
      %v511 = vmul.f32 %v487, %v503
      %v512 = vmul.f32 %v488, %v504
      %v513 = vmul.f32 %v489, %v505
      %v514 = vmul.f32 %v490, %v506
      %v515 = vmul.f32 %v491, %v507
      %v516 = vmul.f32 %v492, %v508
      %v517 = vld [vmem:[%s3] sm:$0xff]
      %v518 = vld [vmem:[%s3 + $0x8] sm:$0xff]
      %v519 = vld [vmem:[%s3 + $0x10] sm:$0xff]
      %v520 = vld [vmem:[%s3 + $0x18] sm:$0xff]
      %v521 = vld [vmem:[%s3 + $0x20] sm:$0xff]
      %v522 = vld [vmem:[%s3 + $0x28] sm:$0xff]
      %v523 = vld [vmem:[%s3 + $0x30] sm:$0xff]
      %v524 = vld [vmem:[%s3 + $0x38] sm:$0xff]
      %v525 = vmul.f32 %v437, %v509
      %v526 = vmul.f32 %v438, %v510
      %v527 = vmul.f32 %v439, %v511
      %v528 = vmul.f32 %v440, %v512
      %v529 = vmul.f32 %v441, %v513
      %v530 = vmul.f32 %v442, %v514
      %v531 = vmul.f32 %v443, %v515
      %v532 = vmul.f32 %v444, %v516
      %v533 = vsub.f32 %v517, %v525
      %v534 = vsub.f32 %v518, %v526
      %v535 = vsub.f32 %v519, %v527
      %v536 = vsub.f32 %v520, %v528
      %v537 = vsub.f32 %v521, %v529
      %v538 = vsub.f32 %v522, %v530
      %v539 = vsub.f32 %v523, %v531
      %v540 = vsub.f32 %v524, %v532
      %v541 = vld [vmem:[#allocation2] sm:$0xff]
      %v542 = vld [vmem:[#allocation2 + $0x8] sm:$0xff]
      %v543 = vld [vmem:[#allocation2 + $0x10] sm:$0xff]
      %v544 = vld [vmem:[#allocation2 + $0x18] sm:$0xff]
      %v545 = vld [vmem:[#allocation2 + $0x20] sm:$0xff]
      %v546 = vld [vmem:[#allocation2 + $0x28] sm:$0xff]
      %v547 = vld [vmem:[#allocation2 + $0x30] sm:$0xff]
      %v548 = vld [vmem:[#allocation2 + $0x38] sm:$0xff]
      %550 = vset.pattern.permute.xlu0 0
      %551 = vperm.xlu0 %550, %v509
      %v552 = vpop.permute.xlu0 %551
      %555 = vset.pattern.permute.xlu0 0
      %556 = vperm.xlu0 %555, %v510
      %v557 = vpop.permute.xlu0 %556
      %560 = vset.pattern.permute.xlu0 0
      %561 = vperm.xlu0 %560, %v511
      %v562 = vpop.permute.xlu0 %561
      %565 = vset.pattern.permute.xlu0 0
      %566 = vperm.xlu0 %565, %v512
      %v567 = vpop.permute.xlu0 %566
      %570 = vset.pattern.permute.xlu0 0
      %571 = vperm.xlu0 %570, %v513
      %v572 = vpop.permute.xlu0 %571
      %575 = vset.pattern.permute.xlu0 0
      %576 = vperm.xlu0 %575, %v514
      %v577 = vpop.permute.xlu0 %576
      %580 = vset.pattern.permute.xlu0 0
      %581 = vperm.xlu0 %580, %v515
      %v582 = vpop.permute.xlu0 %581
      %585 = vset.pattern.permute.xlu0 0
      %586 = vperm.xlu0 %585, %v516
      %v587 = vpop.permute.xlu0 %586
      %v589 = vmul.f32 %v541, %v552
      %v590 = vmul.f32 %v542, %v557
      %v591 = vmul.f32 %v543, %v562
      %v592 = vmul.f32 %v544, %v567
      %v593 = vmul.f32 %v545, %v572
      %v594 = vmul.f32 %v546, %v577
      %v595 = vmul.f32 %v547, %v582
      %v596 = vmul.f32 %v548, %v587
      %598 = vset.pattern.permute.xlu0 0
      %599 = vperm.xlu0 %598, %v533
      %v600 = vpop.permute.xlu0 %599
      %603 = vset.pattern.permute.xlu0 0
      %604 = vperm.xlu0 %603, %v534
      %v605 = vpop.permute.xlu0 %604
      %608 = vset.pattern.permute.xlu0 0
      %609 = vperm.xlu0 %608, %v535
      %v610 = vpop.permute.xlu0 %609
      %613 = vset.pattern.permute.xlu0 0
      %614 = vperm.xlu0 %613, %v536
      %v615 = vpop.permute.xlu0 %614
      %618 = vset.pattern.permute.xlu0 0
      %619 = vperm.xlu0 %618, %v537
      %v620 = vpop.permute.xlu0 %619
      %623 = vset.pattern.permute.xlu0 0
      %624 = vperm.xlu0 %623, %v538
      %v625 = vpop.permute.xlu0 %624
      %628 = vset.pattern.permute.xlu0 0
      %629 = vperm.xlu0 %628, %v539
      %v630 = vpop.permute.xlu0 %629
      %633 = vset.pattern.permute.xlu0 0
      %634 = vperm.xlu0 %633, %v540
      %v635 = vpop.permute.xlu0 %634
      %v637 = vadd.f32 %v589, %v600
      %v638 = vadd.f32 %v590, %v605
      %v639 = vadd.f32 %v591, %v610
      %v640 = vadd.f32 %v592, %v615
      %v641 = vadd.f32 %v593, %v620
      %v642 = vadd.f32 %v594, %v625
      %v643 = vadd.f32 %v595, %v630
      %v644 = vadd.f32 %v596, %v635
      %v645 = vmax.f32 %v637, 0.0
      %v646 = vmax.f32 %v638, 0.0
      %v647 = vmax.f32 %v639, 0.0
      %v648 = vmax.f32 %v640, 0.0
      %v649 = vmax.f32 %v641, 0.0
      %v650 = vmax.f32 %v642, 0.0
      %v651 = vmax.f32 %v643, 0.0
      %v652 = vmax.f32 %v644, 0.0
      %v653 = vpack.c.bf16 %v646, %v645
      %v654 = vpack.c.bf16 %v648, %v647
      %v655 = vpack.c.bf16 %v650, %v649
      %v656 = vpack.c.bf16 %v652, %v651
      %v661 = vunpack.c.l.b16 %v653
      %v662 = vunpack.c.h.b16 %v653
      %v663 = vunpack.c.l.b16 %v654
      %v664 = vunpack.c.h.b16 %v654
      %v665 = vunpack.c.l.b16 %v655
      %v666 = vunpack.c.h.b16 %v655
      %v667 = vunpack.c.l.b16 %v656
      %v668 = vunpack.c.h.b16 %v656
      %v669 = vpack.c.b16 %v661, %v661
      %v670 = vpack.c.b16 %v662, %v662
      %v671 = vpack.c.b16 %v663, %v663
      %v672 = vpack.c.b16 %v664, %v664
      %v673 = vpack.c.b16 %v665, %v665
      %v674 = vpack.c.b16 %v666, %v666
      %v675 = vpack.c.b16 %v667, %v667
      %v676 = vpack.c.b16 %v668, %v668
      %685 = vst [vmem:[%s4] sm:$0xf] %v669
      %686 = vst [vmem:[%s4 + $0x4] sm:$0xf] %v670
      %687 = vst [vmem:[%s4 + $0x8] sm:$0xf] %v671
      %688 = vst [vmem:[%s4 + $0xc] sm:$0xf] %v672
      %689 = vst [vmem:[%s4 + $0x10] sm:$0xf] %v673
      %690 = vst [vmem:[%s4 + $0x14] sm:$0xf] %v674
      %691 = vst [vmem:[%s4 + $0x18] sm:$0xf] %v675
      %692 = vst [vmem:[%s4 + $0x1c] sm:$0xf] %v676
    $region33: #{_lambda_.5} parent=1 // pred_fallthru
      _
    // Predicated region
    $region34: #{_lambda_.5} parent=1 // pred_check
      _
    $region35: #{_lambda_.5} parent=1 // pred_check_branch
      %694 = sbr.rel (0) target = $region37
    $region36: #{_lambda_.5} parent=1 // pred_region
      _
    $region37: #{_lambda_.5} parent=1 // pred_fallthru
      _
    // Predicated region
    $region38: #{_lambda_.5} parent=1 // pred_check
      _
    $region39: #{_lambda_.5} parent=1 // pred_check_branch
      %696 = sbr.rel (0) target = $region41
    $region40: #{_lambda_.5} parent=1 // pred_region
      _
    $region41: #{_lambda_.5} parent=1 // pred_fallthru
      _
    %697 = vsyncpa [#allocation6], 1
    %698 = vsyncpa [#allocation8], 1

// kernel: _lambda_.6
$region0: #{_lambda_.6}
  #allocation0 [shape = 'u32[]', space=smem, size = 0x4, offset = 0x4, fixed_abs, tag = 'smem constant byte address 0x4 - core index']
  #allocation1 [shape = 'u32[144,128]{1,0:T(1,128)}', space=vmem, size = 0x12000, scoped, tag = 'internal scratch']
  #allocation2 [shape = 'f32[4,32,128]{2,1,0:T(8,128)}', space=vmem, size = 0x10000, scoped, tag = 'scratch operand']
  #allocation3 [shape = 'f32[32,1]{1,0:T(8,128)}', space=vmem, size = 0x4000, scoped, tag = 'scratch operand']
  #allocation4 [shape = 'f32[32,1]{1,0:T(8,128)}', space=vmem, size = 0x4000, scoped, tag = 'scratch operand']
  %s0 = inlined_call_operand.vmem [shape: bf16[4,32,256], index: 0, kind: input, shape index: {}]
  %s1 = inlined_call_operand.vmem [shape: bf16[4,256,128], index: 1, kind: input, shape index: {}]
  %s2 = inlined_call_operand.vmem [shape: f32[32,1], index: 2, kind: input, shape index: {}]
  %s3 = inlined_call_operand.vmem [shape: f32[32,1], index: 3, kind: input, shape index: {}]
  %s4 = inlined_call_operand.vmem [shape: bf16[4,32,128], index: 4, kind: output, shape index: {}]
  %s5 = sld [smem:[#allocation0]]
  $region34: #{_lambda_.6} parent=0
    _
  %s7 = ssub.s32 1, %s5
  %s8 = scalar_select 0, %s7, %s5
  // Predicated region
  $region2: #{_lambda_.6} parent=0 // pred_check
    _
  $region3: #{_lambda_.6} parent=0 // pred_check_branch
    %10 = sbr.rel (0) target = $region5
  $region4: #{_lambda_.6} parent=0 // pred_region
    _
  $region5: #{_lambda_.6} parent=0 // pred_fallthru
    _
  // Predicated region
  $region6: #{_lambda_.6} parent=0 // pred_check
    _
  $region7: #{_lambda_.6} parent=0 // pred_check_branch
    %12 = sbr.rel (0) target = $region9
  $region8: #{_lambda_.6} parent=0 // pred_region
    _
  $region9: #{_lambda_.6} parent=0 // pred_fallthru
    _
  // Predicated region
  $region10: #{_lambda_.6} parent=0 // pred_check
    _
  $region11: #{_lambda_.6} parent=0 // pred_check_branch
    %14 = sbr.rel (0) target = $region13
  $region12: #{_lambda_.6} parent=0 // pred_region
    _
  $region13: #{_lambda_.6} parent=0 // pred_fallthru
    _
  // Predicated region
  $region14: #{_lambda_.6} parent=0 // pred_check
    _
  $region15: #{_lambda_.6} parent=0 // pred_check_branch
    %16 = sbr.rel (0) target = $region17
  $region16: #{_lambda_.6} parent=0 // pred_region
    _
  $region17: #{_lambda_.6} parent=0 // pred_fallthru
    _
  %p18 = scmp.eq.s32.totalorder 0, 0
  // Predicated region
  $region18: #{_lambda_.6} parent=0 // pred_check
    %p19 = pneg %p18
  $region19: #{_lambda_.6} parent=0 // pred_check_branch
    %21 = sbr.rel (%p19) target = $region21
  $region20: #{_lambda_.6} parent=0 // pred_region
    %vm22 = vcmask 7168
    %23 = vst.msk [vmem:[#allocation3] sm:$0xff] %vm22, 0.0
    %24 = vst.msk [vmem:[#allocation3 + $0x8] sm:$0xff] %vm22, 0.0
    %25 = vst.msk [vmem:[#allocation3 + $0x10] sm:$0xff] %vm22, 0.0
    %26 = vst.msk [vmem:[#allocation3 + $0x18] sm:$0xff] %vm22, 0.0
    %27 = vst.msk [vmem:[#allocation4] sm:$0xff] %vm22, 0.0
    %28 = vst.msk [vmem:[#allocation4 + $0x8] sm:$0xff] %vm22, 0.0
    %29 = vst.msk [vmem:[#allocation4 + $0x10] sm:$0xff] %vm22, 0.0
    %30 = vst.msk [vmem:[#allocation4 + $0x18] sm:$0xff] %vm22, 0.0
  $region21: #{_lambda_.6} parent=0 // pred_fallthru
    _
  %v31 = vld [vmem:[%s0] sm:$0xff]
  %v32 = vld [vmem:[%s0 + $0x8] sm:$0xff]
  %v33 = vld [vmem:[%s0 + $0x10] sm:$0xff]
  %v34 = vld [vmem:[%s0 + $0x18] sm:$0xff]
  %v35 = vld [vmem:[%s0 + $0x20] sm:$0xff]
  %v36 = vld [vmem:[%s0 + $0x28] sm:$0xff]
  %v37 = vld [vmem:[%s0 + $0x30] sm:$0xff]
  %v38 = vld [vmem:[%s0 + $0x38] sm:$0xff]
  %v39 = vld [vmem:[%s0 + $0x40] sm:$0xff]
  %v40 = vld [vmem:[%s0 + $0x48] sm:$0xff]
  %v41 = vld [vmem:[%s0 + $0x50] sm:$0xff]
  %v42 = vld [vmem:[%s0 + $0x58] sm:$0xff]
  %v43 = vld [vmem:[%s0 + $0x60] sm:$0xff]
  %v44 = vld [vmem:[%s0 + $0x68] sm:$0xff]
  %v45 = vld [vmem:[%s0 + $0x70] sm:$0xff]
  %v46 = vld [vmem:[%s0 + $0x78] sm:$0xff]
  %v47 = vld [vmem:[%s1] sm:$0xf]
  %v48 = vld [vmem:[%s1 + $0x4] sm:$0xf]
  %v49 = vld [vmem:[%s1 + $0x8] sm:$0xf]
  %v50 = vld [vmem:[%s1 + $0xc] sm:$0xf]
  %v51 = vld [vmem:[%s1 + $0x10] sm:$0xf]
  %v52 = vld [vmem:[%s1 + $0x14] sm:$0xf]
  %v53 = vld [vmem:[%s1 + $0x18] sm:$0xf]
  %v54 = vld [vmem:[%s1 + $0x1c] sm:$0xf]
  %v55 = vld [vmem:[%s1 + $0x20] sm:$0xf]
  %v56 = vld [vmem:[%s1 + $0x24] sm:$0xf]
  %v57 = vld [vmem:[%s1 + $0x28] sm:$0xf]
  %v58 = vld [vmem:[%s1 + $0x2c] sm:$0xf]
  %v59 = vld [vmem:[%s1 + $0x30] sm:$0xf]
  %v60 = vld [vmem:[%s1 + $0x34] sm:$0xf]
  %v61 = vld [vmem:[%s1 + $0x38] sm:$0xf]
  %v62 = vld [vmem:[%s1 + $0x3c] sm:$0xf]
  %v63 = vld [vmem:[%s1 + $0x40] sm:$0xf]
  %v64 = vld [vmem:[%s1 + $0x44] sm:$0xf]
  %v65 = vld [vmem:[%s1 + $0x48] sm:$0xf]
  %v66 = vld [vmem:[%s1 + $0x4c] sm:$0xf]
  %v67 = vld [vmem:[%s1 + $0x50] sm:$0xf]
  %v68 = vld [vmem:[%s1 + $0x54] sm:$0xf]
  %v69 = vld [vmem:[%s1 + $0x58] sm:$0xf]
  %v70 = vld [vmem:[%s1 + $0x5c] sm:$0xf]
  %v71 = vld [vmem:[%s1 + $0x60] sm:$0xf]
  %v72 = vld [vmem:[%s1 + $0x64] sm:$0xf]
  %v73 = vld [vmem:[%s1 + $0x68] sm:$0xf]
  %v74 = vld [vmem:[%s1 + $0x6c] sm:$0xf]
  %v75 = vld [vmem:[%s1 + $0x70] sm:$0xf]
  %v76 = vld [vmem:[%s1 + $0x74] sm:$0xf]
  %v77 = vld [vmem:[%s1 + $0x78] sm:$0xf]
  %v78 = vld [vmem:[%s1 + $0x7c] sm:$0xf]
  %v79 = vld [vmem:[%s1 + $0x80] sm:$0xf]
  %v80 = vld [vmem:[%s1 + $0x84] sm:$0xf]
  %v81 = vld [vmem:[%s1 + $0x88] sm:$0xf]
  %v82 = vld [vmem:[%s1 + $0x8c] sm:$0xf]
  %v83 = vld [vmem:[%s1 + $0x90] sm:$0xf]
  %v84 = vld [vmem:[%s1 + $0x94] sm:$0xf]
  %v85 = vld [vmem:[%s1 + $0x98] sm:$0xf]
  %v86 = vld [vmem:[%s1 + $0x9c] sm:$0xf]
  %v87 = vld [vmem:[%s1 + $0xa0] sm:$0xf]
  %v88 = vld [vmem:[%s1 + $0xa4] sm:$0xf]
  %v89 = vld [vmem:[%s1 + $0xa8] sm:$0xf]
  %v90 = vld [vmem:[%s1 + $0xac] sm:$0xf]
  %v91 = vld [vmem:[%s1 + $0xb0] sm:$0xf]
  %v92 = vld [vmem:[%s1 + $0xb4] sm:$0xf]
  %v93 = vld [vmem:[%s1 + $0xb8] sm:$0xf]
  %v94 = vld [vmem:[%s1 + $0xbc] sm:$0xf]
  %v95 = vld [vmem:[%s1 + $0xc0] sm:$0xf]
  %v96 = vld [vmem:[%s1 + $0xc4] sm:$0xf]
  %v97 = vld [vmem:[%s1 + $0xc8] sm:$0xf]
  %v98 = vld [vmem:[%s1 + $0xcc] sm:$0xf]
  %v99 = vld [vmem:[%s1 + $0xd0] sm:$0xf]
  %v100 = vld [vmem:[%s1 + $0xd4] sm:$0xf]
  %v101 = vld [vmem:[%s1 + $0xd8] sm:$0xf]
  %v102 = vld [vmem:[%s1 + $0xdc] sm:$0xf]
  %v103 = vld [vmem:[%s1 + $0xe0] sm:$0xf]
  %v104 = vld [vmem:[%s1 + $0xe4] sm:$0xf]
  %v105 = vld [vmem:[%s1 + $0xe8] sm:$0xf]
  %v106 = vld [vmem:[%s1 + $0xec] sm:$0xf]
  %v107 = vld [vmem:[%s1 + $0xf0] sm:$0xf]
  %v108 = vld [vmem:[%s1 + $0xf4] sm:$0xf]
  %v109 = vld [vmem:[%s1 + $0xf8] sm:$0xf]
  %v110 = vld [vmem:[%s1 + $0xfc] sm:$0xf]
  %v111 = vld [vmem:[%s1 + $0x100] sm:$0xf]
  %v112 = vld [vmem:[%s1 + $0x104] sm:$0xf]
  %v113 = vld [vmem:[%s1 + $0x108] sm:$0xf]
  %v114 = vld [vmem:[%s1 + $0x10c] sm:$0xf]
  %v115 = vld [vmem:[%s1 + $0x110] sm:$0xf]
  %v116 = vld [vmem:[%s1 + $0x114] sm:$0xf]
  %v117 = vld [vmem:[%s1 + $0x118] sm:$0xf]
  %v118 = vld [vmem:[%s1 + $0x11c] sm:$0xf]
  %v119 = vld [vmem:[%s1 + $0x120] sm:$0xf]
  %v120 = vld [vmem:[%s1 + $0x124] sm:$0xf]
  %v121 = vld [vmem:[%s1 + $0x128] sm:$0xf]
  %v122 = vld [vmem:[%s1 + $0x12c] sm:$0xf]
  %v123 = vld [vmem:[%s1 + $0x130] sm:$0xf]
  %v124 = vld [vmem:[%s1 + $0x134] sm:$0xf]
  %v125 = vld [vmem:[%s1 + $0x138] sm:$0xf]
  %v126 = vld [vmem:[%s1 + $0x13c] sm:$0xf]
  %v127 = vld [vmem:[%s1 + $0x140] sm:$0xf]
  %v128 = vld [vmem:[%s1 + $0x144] sm:$0xf]
  %v129 = vld [vmem:[%s1 + $0x148] sm:$0xf]
  %v130 = vld [vmem:[%s1 + $0x14c] sm:$0xf]
  %v131 = vld [vmem:[%s1 + $0x150] sm:$0xf]
  %v132 = vld [vmem:[%s1 + $0x154] sm:$0xf]
  %v133 = vld [vmem:[%s1 + $0x158] sm:$0xf]
  %v134 = vld [vmem:[%s1 + $0x15c] sm:$0xf]
  %v135 = vld [vmem:[%s1 + $0x160] sm:$0xf]
  %v136 = vld [vmem:[%s1 + $0x164] sm:$0xf]
  %v137 = vld [vmem:[%s1 + $0x168] sm:$0xf]
  %v138 = vld [vmem:[%s1 + $0x16c] sm:$0xf]
  %v139 = vld [vmem:[%s1 + $0x170] sm:$0xf]
  %v140 = vld [vmem:[%s1 + $0x174] sm:$0xf]
  %v141 = vld [vmem:[%s1 + $0x178] sm:$0xf]
  %v142 = vld [vmem:[%s1 + $0x17c] sm:$0xf]
  %v143 = vld [vmem:[%s1 + $0x180] sm:$0xf]
  %v144 = vld [vmem:[%s1 + $0x184] sm:$0xf]
  %v145 = vld [vmem:[%s1 + $0x188] sm:$0xf]
  %v146 = vld [vmem:[%s1 + $0x18c] sm:$0xf]
  %v147 = vld [vmem:[%s1 + $0x190] sm:$0xf]
  %v148 = vld [vmem:[%s1 + $0x194] sm:$0xf]
  %v149 = vld [vmem:[%s1 + $0x198] sm:$0xf]
  %v150 = vld [vmem:[%s1 + $0x19c] sm:$0xf]
  %v151 = vld [vmem:[%s1 + $0x1a0] sm:$0xf]
  %v152 = vld [vmem:[%s1 + $0x1a4] sm:$0xf]
  %v153 = vld [vmem:[%s1 + $0x1a8] sm:$0xf]
  %v154 = vld [vmem:[%s1 + $0x1ac] sm:$0xf]
  %v155 = vld [vmem:[%s1 + $0x1b0] sm:$0xf]
  %v156 = vld [vmem:[%s1 + $0x1b4] sm:$0xf]
  %v157 = vld [vmem:[%s1 + $0x1b8] sm:$0xf]
  %v158 = vld [vmem:[%s1 + $0x1bc] sm:$0xf]
  %v159 = vld [vmem:[%s1 + $0x1c0] sm:$0xf]
  %v160 = vld [vmem:[%s1 + $0x1c4] sm:$0xf]
  %v161 = vld [vmem:[%s1 + $0x1c8] sm:$0xf]
  %v162 = vld [vmem:[%s1 + $0x1cc] sm:$0xf]
  %v163 = vld [vmem:[%s1 + $0x1d0] sm:$0xf]
  %v164 = vld [vmem:[%s1 + $0x1d4] sm:$0xf]
  %v165 = vld [vmem:[%s1 + $0x1d8] sm:$0xf]
  %v166 = vld [vmem:[%s1 + $0x1dc] sm:$0xf]
  %v167 = vld [vmem:[%s1 + $0x1e0] sm:$0xf]
  %v168 = vld [vmem:[%s1 + $0x1e4] sm:$0xf]
  %v169 = vld [vmem:[%s1 + $0x1e8] sm:$0xf]
  %v170 = vld [vmem:[%s1 + $0x1ec] sm:$0xf]
  %v171 = vld [vmem:[%s1 + $0x1f0] sm:$0xf]
  %v172 = vld [vmem:[%s1 + $0x1f4] sm:$0xf]
  %v173 = vld [vmem:[%s1 + $0x1f8] sm:$0xf]
  %v174 = vld [vmem:[%s1 + $0x1fc] sm:$0xf]
  %v179 = vunpack.c.l.b16 %v31
  %v180 = vunpack.c.h.b16 %v31
  %v181 = vunpack.c.l.b16 %v32
  %v182 = vunpack.c.h.b16 %v32
  %v183 = vunpack.c.l.b16 %v33
  %v184 = vunpack.c.h.b16 %v33
  %v185 = vunpack.c.l.b16 %v34
  %v186 = vunpack.c.h.b16 %v34
  %v187 = vpack.c.b16 %v181, %v179
  %v188 = vpack.c.b16 %v182, %v180
  %v189 = vpack.c.b16 %v185, %v183
  %v190 = vpack.c.b16 %v186, %v184
  %v227 = vunpack.c.l.b16 %v47
  %v228 = vunpack.c.l.b16 %v48
  %v229 = vunpack.c.l.b16 %v49
  %v230 = vunpack.c.l.b16 %v50
  %v231 = vunpack.c.l.b16 %v51
  %v232 = vunpack.c.l.b16 %v52
  %v233 = vunpack.c.l.b16 %v53
  %v234 = vunpack.c.l.b16 %v54
  %v235 = vunpack.c.l.b16 %v55
  %v236 = vunpack.c.l.b16 %v56
  %v237 = vunpack.c.l.b16 %v57
  %v238 = vunpack.c.l.b16 %v58
  %v239 = vunpack.c.l.b16 %v59
  %v240 = vunpack.c.l.b16 %v60
  %v241 = vunpack.c.l.b16 %v61
  %v242 = vunpack.c.l.b16 %v62
  %v243 = vunpack.c.l.b16 %v63
  %v244 = vunpack.c.l.b16 %v64
  %v245 = vunpack.c.l.b16 %v65
  %v246 = vunpack.c.l.b16 %v66
  %v247 = vunpack.c.l.b16 %v67
  %v248 = vunpack.c.l.b16 %v68
  %v249 = vunpack.c.l.b16 %v69
  %v250 = vunpack.c.l.b16 %v70
  %v251 = vunpack.c.l.b16 %v71
  %v252 = vunpack.c.l.b16 %v72
  %v253 = vunpack.c.l.b16 %v73
  %v254 = vunpack.c.l.b16 %v74
  %v255 = vunpack.c.l.b16 %v75
  %v256 = vunpack.c.l.b16 %v76
  %v257 = vunpack.c.l.b16 %v77
  %v258 = vunpack.c.l.b16 %v78
  %v259 = vpack.c.b16 %v228, %v227
  %v260 = vpack.c.b16 %v230, %v229
  %v261 = vpack.c.b16 %v232, %v231
  %v262 = vpack.c.b16 %v234, %v233
  %v263 = vpack.c.b16 %v236, %v235
  %v264 = vpack.c.b16 %v238, %v237
  %v265 = vpack.c.b16 %v240, %v239
  %v266 = vpack.c.b16 %v242, %v241
  %v267 = vpack.c.b16 %v244, %v243
  %v268 = vpack.c.b16 %v246, %v245
  %v269 = vpack.c.b16 %v248, %v247
  %v270 = vpack.c.b16 %v250, %v249
  %v271 = vpack.c.b16 %v252, %v251
  %v272 = vpack.c.b16 %v254, %v253
  %v273 = vpack.c.b16 %v256, %v255
  %v274 = vpack.c.b16 %v258, %v257
  %291 = vmatprep.subr.bf16.mxu0 0
  %292 = vmatpush1.bf16.msra.mxu0 %v266
  %293 = vmatprep.subr.bf16.mxu0 0
  %294 = vmatpush1.bf16.msra.mxu0 %v265
  %295 = vmatprep.subr.bf16.mxu0 0
  %296 = vmatpush1.bf16.msra.mxu0 %v264
  %297 = vmatprep.subr.bf16.mxu0 0
  %298 = vmatpush1.bf16.msra.mxu0 %v263
  %299 = vmatprep.subr.bf16.mxu0 0
  %300 = vmatpush1.bf16.msra.mxu0 %v262
  %301 = vmatprep.subr.bf16.mxu0 0
  %302 = vmatpush1.bf16.msra.mxu0 %v261
  %303 = vmatprep.subr.bf16.mxu0 0
  %304 = vmatpush1.bf16.msra.mxu0 %v260
  %305 = vmatprep.subr.bf16.mxu0 0
  %306 = vmatpush1.bf16.msra.mxu0 %v259
  %307 = vmatprep.subr.bf16.mxu0 0
  %308 = vmatpush2.bf16.msra.mxu0 %v274
  %309 = vmatprep.subr.bf16.mxu0 0
  %310 = vmatpush2.bf16.msra.mxu0 %v273
  %311 = vmatprep.subr.bf16.mxu0 0
  %312 = vmatpush2.bf16.msra.mxu0 %v272
  %313 = vmatprep.subr.bf16.mxu0 0
  %314 = vmatpush2.bf16.msra.mxu0 %v271
  %315 = vmatprep.subr.bf16.mxu0 0
  %316 = vmatpush2.bf16.msra.mxu0 %v270
  %317 = vmatprep.subr.bf16.mxu0 0
  %318 = vmatpush2.bf16.msra.mxu0 %v269
  %319 = vmatprep.subr.bf16.mxu0 0
  %320 = vmatpush2.bf16.msra.mxu0 %v268
  %321 = vmatprep.subr.bf16.mxu0 0
  %322 = vmatpush2.bf16.msra.mxu0 %v267
  %323 = vmatprep.mubr.bf16.mxu0 %v188
  %324 = vmatmul.mubr.bf16.gmra.mxu0 %v187
  %v325 = vpop.f32.mrf.mxu0
  %v326 = vadd.f32 0.0, %v325
  %v327 = vpop.f32.mrf.mxu0
  %v328 = vpop.f32.mrf.mxu0
  %v329 = vadd.f32 0.0, %v328
  %v330 = vpop.f32.mrf.mxu0
  %331 = vmatprep.mubr.bf16.mxu0 %v190
  %332 = vmatmul.mubr.bf16.gmra.mxu0 %v189
  %v333 = vpop.f32.mrf.mxu0
  %v334 = vadd.f32 0.0, %v333
  %v335 = vpop.f32.mrf.mxu0
  %v336 = vpop.f32.mrf.mxu0
  %v337 = vadd.f32 0.0, %v336
  %v338 = vpop.f32.mrf.mxu0
  %339 = vdwg.mxu0
  %v344 = vunpack.c.l.b16 %v35
  %v345 = vunpack.c.h.b16 %v35
  %v346 = vunpack.c.l.b16 %v36
  %v347 = vunpack.c.h.b16 %v36
  %v348 = vunpack.c.l.b16 %v37
  %v349 = vunpack.c.h.b16 %v37
  %v350 = vunpack.c.l.b16 %v38
  %v351 = vunpack.c.h.b16 %v38
  %v352 = vpack.c.b16 %v346, %v344
  %v353 = vpack.c.b16 %v347, %v345
  %v354 = vpack.c.b16 %v350, %v348
  %v355 = vpack.c.b16 %v351, %v349
  %v392 = vunpack.c.l.b16 %v79
  %v393 = vunpack.c.l.b16 %v80
  %v394 = vunpack.c.l.b16 %v81
  %v395 = vunpack.c.l.b16 %v82
  %v396 = vunpack.c.l.b16 %v83
  %v397 = vunpack.c.l.b16 %v84
  %v398 = vunpack.c.l.b16 %v85
  %v399 = vunpack.c.l.b16 %v86
  %v400 = vunpack.c.l.b16 %v87
  %v401 = vunpack.c.l.b16 %v88
  %v402 = vunpack.c.l.b16 %v89
  %v403 = vunpack.c.l.b16 %v90
  %v404 = vunpack.c.l.b16 %v91
  %v405 = vunpack.c.l.b16 %v92
  %v406 = vunpack.c.l.b16 %v93
  %v407 = vunpack.c.l.b16 %v94
  %v408 = vunpack.c.l.b16 %v95
  %v409 = vunpack.c.l.b16 %v96
  %v410 = vunpack.c.l.b16 %v97
  %v411 = vunpack.c.l.b16 %v98
  %v412 = vunpack.c.l.b16 %v99
  %v413 = vunpack.c.l.b16 %v100
  %v414 = vunpack.c.l.b16 %v101
  %v415 = vunpack.c.l.b16 %v102
  %v416 = vunpack.c.l.b16 %v103
  %v417 = vunpack.c.l.b16 %v104
  %v418 = vunpack.c.l.b16 %v105
  %v419 = vunpack.c.l.b16 %v106
  %v420 = vunpack.c.l.b16 %v107
  %v421 = vunpack.c.l.b16 %v108
  %v422 = vunpack.c.l.b16 %v109
  %v423 = vunpack.c.l.b16 %v110
  %v424 = vpack.c.b16 %v393, %v392
  %v425 = vpack.c.b16 %v395, %v394
  %v426 = vpack.c.b16 %v397, %v396
  %v427 = vpack.c.b16 %v399, %v398
  %v428 = vpack.c.b16 %v401, %v400
  %v429 = vpack.c.b16 %v403, %v402
  %v430 = vpack.c.b16 %v405, %v404
  %v431 = vpack.c.b16 %v407, %v406
  %v432 = vpack.c.b16 %v409, %v408
  %v433 = vpack.c.b16 %v411, %v410
  %v434 = vpack.c.b16 %v413, %v412
  %v435 = vpack.c.b16 %v415, %v414
  %v436 = vpack.c.b16 %v417, %v416
  %v437 = vpack.c.b16 %v419, %v418
  %v438 = vpack.c.b16 %v421, %v420
  %v439 = vpack.c.b16 %v423, %v422
  %456 = vmatprep.subr.bf16.mxu0 0
  %457 = vmatpush1.bf16.msra.mxu0 %v431
  %458 = vmatprep.subr.bf16.mxu0 0
  %459 = vmatpush1.bf16.msra.mxu0 %v430
  %460 = vmatprep.subr.bf16.mxu0 0
  %461 = vmatpush1.bf16.msra.mxu0 %v429
  %462 = vmatprep.subr.bf16.mxu0 0
  %463 = vmatpush1.bf16.msra.mxu0 %v428
  %464 = vmatprep.subr.bf16.mxu0 0
  %465 = vmatpush1.bf16.msra.mxu0 %v427
  %466 = vmatprep.subr.bf16.mxu0 0
  %467 = vmatpush1.bf16.msra.mxu0 %v426
  %468 = vmatprep.subr.bf16.mxu0 0
  %469 = vmatpush1.bf16.msra.mxu0 %v425
  %470 = vmatprep.subr.bf16.mxu0 0
  %471 = vmatpush1.bf16.msra.mxu0 %v424
  %472 = vmatprep.subr.bf16.mxu0 0
  %473 = vmatpush2.bf16.msra.mxu0 %v439
  %474 = vmatprep.subr.bf16.mxu0 0
  %475 = vmatpush2.bf16.msra.mxu0 %v438
  %476 = vmatprep.subr.bf16.mxu0 0
  %477 = vmatpush2.bf16.msra.mxu0 %v437
  %478 = vmatprep.subr.bf16.mxu0 0
  %479 = vmatpush2.bf16.msra.mxu0 %v436
  %480 = vmatprep.subr.bf16.mxu0 0
  %481 = vmatpush2.bf16.msra.mxu0 %v435
  %482 = vmatprep.subr.bf16.mxu0 0
  %483 = vmatpush2.bf16.msra.mxu0 %v434
  %484 = vmatprep.subr.bf16.mxu0 0
  %485 = vmatpush2.bf16.msra.mxu0 %v433
  %486 = vmatprep.subr.bf16.mxu0 0
  %487 = vmatpush2.bf16.msra.mxu0 %v432
  %488 = vmatprep.mubr.bf16.mxu0 %v353
  %489 = vmatmul.mubr.bf16.gmra.mxu0 %v352
  %v490 = vpop.f32.mrf.mxu0
  %v491 = vadd.f32 0.0, %v490
  %v492 = vpop.f32.mrf.mxu0
  %v493 = vpop.f32.mrf.mxu0
  %v494 = vadd.f32 0.0, %v493
  %v495 = vpop.f32.mrf.mxu0
  %496 = vmatprep.mubr.bf16.mxu0 %v355
  %497 = vmatmul.mubr.bf16.gmra.mxu0 %v354
  %v498 = vpop.f32.mrf.mxu0
  %v499 = vadd.f32 0.0, %v498
  %v500 = vpop.f32.mrf.mxu0
  %v501 = vpop.f32.mrf.mxu0
  %v502 = vadd.f32 0.0, %v501
  %v503 = vpop.f32.mrf.mxu0
  %504 = vdwg.mxu0
  %v509 = vunpack.c.l.b16 %v39
  %v510 = vunpack.c.h.b16 %v39
  %v511 = vunpack.c.l.b16 %v40
  %v512 = vunpack.c.h.b16 %v40
  %v513 = vunpack.c.l.b16 %v41
  %v514 = vunpack.c.h.b16 %v41
  %v515 = vunpack.c.l.b16 %v42
  %v516 = vunpack.c.h.b16 %v42
  %v517 = vpack.c.b16 %v511, %v509
  %v518 = vpack.c.b16 %v512, %v510
  %v519 = vpack.c.b16 %v515, %v513
  %v520 = vpack.c.b16 %v516, %v514
  %v557 = vunpack.c.l.b16 %v111
  %v558 = vunpack.c.l.b16 %v112
  %v559 = vunpack.c.l.b16 %v113
  %v560 = vunpack.c.l.b16 %v114
  %v561 = vunpack.c.l.b16 %v115
  %v562 = vunpack.c.l.b16 %v116
  %v563 = vunpack.c.l.b16 %v117
  %v564 = vunpack.c.l.b16 %v118
  %v565 = vunpack.c.l.b16 %v119
  %v566 = vunpack.c.l.b16 %v120
  %v567 = vunpack.c.l.b16 %v121
  %v568 = vunpack.c.l.b16 %v122
  %v569 = vunpack.c.l.b16 %v123
  %v570 = vunpack.c.l.b16 %v124
  %v571 = vunpack.c.l.b16 %v125
  %v572 = vunpack.c.l.b16 %v126
  %v573 = vunpack.c.l.b16 %v127
  %v574 = vunpack.c.l.b16 %v128
  %v575 = vunpack.c.l.b16 %v129
  %v576 = vunpack.c.l.b16 %v130
  %v577 = vunpack.c.l.b16 %v131
  %v578 = vunpack.c.l.b16 %v132
  %v579 = vunpack.c.l.b16 %v133
  %v580 = vunpack.c.l.b16 %v134
  %v581 = vunpack.c.l.b16 %v135
  %v582 = vunpack.c.l.b16 %v136
  %v583 = vunpack.c.l.b16 %v137
  %v584 = vunpack.c.l.b16 %v138
  %v585 = vunpack.c.l.b16 %v139
  %v586 = vunpack.c.l.b16 %v140
  %v587 = vunpack.c.l.b16 %v141
  %v588 = vunpack.c.l.b16 %v142
  %v589 = vpack.c.b16 %v558, %v557
  %v590 = vpack.c.b16 %v560, %v559
  %v591 = vpack.c.b16 %v562, %v561
  %v592 = vpack.c.b16 %v564, %v563
  %v593 = vpack.c.b16 %v566, %v565
  %v594 = vpack.c.b16 %v568, %v567
  %v595 = vpack.c.b16 %v570, %v569
  %v596 = vpack.c.b16 %v572, %v571
  %v597 = vpack.c.b16 %v574, %v573
  %v598 = vpack.c.b16 %v576, %v575
  %v599 = vpack.c.b16 %v578, %v577
  %v600 = vpack.c.b16 %v580, %v579
  %v601 = vpack.c.b16 %v582, %v581
  %v602 = vpack.c.b16 %v584, %v583
  %v603 = vpack.c.b16 %v586, %v585
  %v604 = vpack.c.b16 %v588, %v587
  %621 = vmatprep.subr.bf16.mxu0 0
  %622 = vmatpush1.bf16.msra.mxu0 %v596
  %623 = vmatprep.subr.bf16.mxu0 0
  %624 = vmatpush1.bf16.msra.mxu0 %v595
  %625 = vmatprep.subr.bf16.mxu0 0
  %626 = vmatpush1.bf16.msra.mxu0 %v594
  %627 = vmatprep.subr.bf16.mxu0 0
  %628 = vmatpush1.bf16.msra.mxu0 %v593
  %629 = vmatprep.subr.bf16.mxu0 0
  %630 = vmatpush1.bf16.msra.mxu0 %v592
  %631 = vmatprep.subr.bf16.mxu0 0
  %632 = vmatpush1.bf16.msra.mxu0 %v591
  %633 = vmatprep.subr.bf16.mxu0 0
  %634 = vmatpush1.bf16.msra.mxu0 %v590
  %635 = vmatprep.subr.bf16.mxu0 0
  %636 = vmatpush1.bf16.msra.mxu0 %v589
  %637 = vmatprep.subr.bf16.mxu0 0
  %638 = vmatpush2.bf16.msra.mxu0 %v604
  %639 = vmatprep.subr.bf16.mxu0 0
  %640 = vmatpush2.bf16.msra.mxu0 %v603
  %641 = vmatprep.subr.bf16.mxu0 0
  %642 = vmatpush2.bf16.msra.mxu0 %v602
  %643 = vmatprep.subr.bf16.mxu0 0
  %644 = vmatpush2.bf16.msra.mxu0 %v601
  %645 = vmatprep.subr.bf16.mxu0 0
  %646 = vmatpush2.bf16.msra.mxu0 %v600
  %647 = vmatprep.subr.bf16.mxu0 0
  %648 = vmatpush2.bf16.msra.mxu0 %v599
  %649 = vmatprep.subr.bf16.mxu0 0
  %650 = vmatpush2.bf16.msra.mxu0 %v598
  %651 = vmatprep.subr.bf16.mxu0 0
  %652 = vmatpush2.bf16.msra.mxu0 %v597
  %653 = vmatprep.mubr.bf16.mxu0 %v518
  %654 = vmatmul.mubr.bf16.gmra.mxu0 %v517
  %v655 = vpop.f32.mrf.mxu0
  %v656 = vadd.f32 0.0, %v655
  %v657 = vpop.f32.mrf.mxu0
  %v658 = vpop.f32.mrf.mxu0
  %v659 = vadd.f32 0.0, %v658
  %v660 = vpop.f32.mrf.mxu0
  %661 = vmatprep.mubr.bf16.mxu0 %v520
  %662 = vmatmul.mubr.bf16.gmra.mxu0 %v519
  %v663 = vpop.f32.mrf.mxu0
  %v664 = vadd.f32 0.0, %v663
  %v665 = vpop.f32.mrf.mxu0
  %v666 = vpop.f32.mrf.mxu0
  %v667 = vadd.f32 0.0, %v666
  %v668 = vpop.f32.mrf.mxu0
  %669 = vdwg.mxu0
  %v674 = vunpack.c.l.b16 %v43
  %v675 = vunpack.c.h.b16 %v43
  %v676 = vunpack.c.l.b16 %v44
  %v677 = vunpack.c.h.b16 %v44
  %v678 = vunpack.c.l.b16 %v45
  %v679 = vunpack.c.h.b16 %v45
  %v680 = vunpack.c.l.b16 %v46
  %v681 = vunpack.c.h.b16 %v46
  %v682 = vpack.c.b16 %v676, %v674
  %v683 = vpack.c.b16 %v677, %v675
  %v684 = vpack.c.b16 %v680, %v678
  %v685 = vpack.c.b16 %v681, %v679
  %v722 = vunpack.c.l.b16 %v143
  %v723 = vunpack.c.l.b16 %v144
  %v724 = vunpack.c.l.b16 %v145
  %v725 = vunpack.c.l.b16 %v146
  %v726 = vunpack.c.l.b16 %v147
  %v727 = vunpack.c.l.b16 %v148
  %v728 = vunpack.c.l.b16 %v149
  %v729 = vunpack.c.l.b16 %v150
  %v730 = vunpack.c.l.b16 %v151
  %v731 = vunpack.c.l.b16 %v152
  %v732 = vunpack.c.l.b16 %v153
  %v733 = vunpack.c.l.b16 %v154
  %v734 = vunpack.c.l.b16 %v155
  %v735 = vunpack.c.l.b16 %v156
  %v736 = vunpack.c.l.b16 %v157
  %v737 = vunpack.c.l.b16 %v158
  %v738 = vunpack.c.l.b16 %v159
  %v739 = vunpack.c.l.b16 %v160
  %v740 = vunpack.c.l.b16 %v161
  %v741 = vunpack.c.l.b16 %v162
  %v742 = vunpack.c.l.b16 %v163
  %v743 = vunpack.c.l.b16 %v164
  %v744 = vunpack.c.l.b16 %v165
  %v745 = vunpack.c.l.b16 %v166
  %v746 = vunpack.c.l.b16 %v167
  %v747 = vunpack.c.l.b16 %v168
  %v748 = vunpack.c.l.b16 %v169
  %v749 = vunpack.c.l.b16 %v170
  %v750 = vunpack.c.l.b16 %v171
  %v751 = vunpack.c.l.b16 %v172
  %v752 = vunpack.c.l.b16 %v173
  %v753 = vunpack.c.l.b16 %v174
  %v754 = vpack.c.b16 %v723, %v722
  %v755 = vpack.c.b16 %v725, %v724
  %v756 = vpack.c.b16 %v727, %v726
  %v757 = vpack.c.b16 %v729, %v728
  %v758 = vpack.c.b16 %v731, %v730
  %v759 = vpack.c.b16 %v733, %v732
  %v760 = vpack.c.b16 %v735, %v734
  %v761 = vpack.c.b16 %v737, %v736
  %v762 = vpack.c.b16 %v739, %v738
  %v763 = vpack.c.b16 %v741, %v740
  %v764 = vpack.c.b16 %v743, %v742
  %v765 = vpack.c.b16 %v745, %v744
  %v766 = vpack.c.b16 %v747, %v746
  %v767 = vpack.c.b16 %v749, %v748
  %v768 = vpack.c.b16 %v751, %v750
  %v769 = vpack.c.b16 %v753, %v752
  %786 = vmatprep.subr.bf16.mxu0 0
  %787 = vmatpush1.bf16.msra.mxu0 %v761
  %788 = vmatprep.subr.bf16.mxu0 0
  %789 = vmatpush1.bf16.msra.mxu0 %v760
  %790 = vmatprep.subr.bf16.mxu0 0
  %791 = vmatpush1.bf16.msra.mxu0 %v759
  %792 = vmatprep.subr.bf16.mxu0 0
  %793 = vmatpush1.bf16.msra.mxu0 %v758
  %794 = vmatprep.subr.bf16.mxu0 0
  %795 = vmatpush1.bf16.msra.mxu0 %v757
  %796 = vmatprep.subr.bf16.mxu0 0
  %797 = vmatpush1.bf16.msra.mxu0 %v756
  %798 = vmatprep.subr.bf16.mxu0 0
  %799 = vmatpush1.bf16.msra.mxu0 %v755
  %800 = vmatprep.subr.bf16.mxu0 0
  %801 = vmatpush1.bf16.msra.mxu0 %v754
  %802 = vmatprep.subr.bf16.mxu0 0
  %803 = vmatpush2.bf16.msra.mxu0 %v769
  %804 = vmatprep.subr.bf16.mxu0 0
  %805 = vmatpush2.bf16.msra.mxu0 %v768
  %806 = vmatprep.subr.bf16.mxu0 0
  %807 = vmatpush2.bf16.msra.mxu0 %v767
  %808 = vmatprep.subr.bf16.mxu0 0
  %809 = vmatpush2.bf16.msra.mxu0 %v766
  %810 = vmatprep.subr.bf16.mxu0 0
  %811 = vmatpush2.bf16.msra.mxu0 %v765
  %812 = vmatprep.subr.bf16.mxu0 0
  %813 = vmatpush2.bf16.msra.mxu0 %v764
  %814 = vmatprep.subr.bf16.mxu0 0
  %815 = vmatpush2.bf16.msra.mxu0 %v763
  %816 = vmatprep.subr.bf16.mxu0 0
  %817 = vmatpush2.bf16.msra.mxu0 %v762
  %818 = vmatprep.mubr.bf16.mxu0 %v683
  %819 = vmatmul.mubr.bf16.gmra.mxu0 %v682
  %v820 = vpop.f32.mrf.mxu0
  %v821 = vadd.f32 0.0, %v820
  %v822 = vpop.f32.mrf.mxu0
  %v823 = vpop.f32.mrf.mxu0
  %v824 = vadd.f32 0.0, %v823
  %v825 = vpop.f32.mrf.mxu0
  %826 = vmatprep.mubr.bf16.mxu0 %v685
  %827 = vmatmul.mubr.bf16.gmra.mxu0 %v684
  %v828 = vpop.f32.mrf.mxu0
  %v829 = vadd.f32 0.0, %v828
  %v830 = vpop.f32.mrf.mxu0
  %v831 = vpop.f32.mrf.mxu0
  %v832 = vadd.f32 0.0, %v831
  %v833 = vpop.f32.mrf.mxu0
  %834 = vdwg.mxu0
  %s835 = smul.u32 0, 128
  %s836 = sshra.s32 %s835, 7
  %s837 = sand.u32 %s835, 127
  %s838 = scalar_lea.vmem [#allocation2], %s836
  %839 = vst [vmem:[%s838] sm:$0xff] %v326
  %840 = vst [vmem:[%s838 + $0x8] sm:$0xff] %v329
  %841 = vst [vmem:[%s838 + $0x10] sm:$0xff] %v334
  %842 = vst [vmem:[%s838 + $0x18] sm:$0xff] %v337
  %843 = vst [vmem:[%s838 + $0x20] sm:$0xff] %v491
  %844 = vst [vmem:[%s838 + $0x28] sm:$0xff] %v494
  %845 = vst [vmem:[%s838 + $0x30] sm:$0xff] %v499
  %846 = vst [vmem:[%s838 + $0x38] sm:$0xff] %v502
  %847 = vst [vmem:[%s838 + $0x40] sm:$0xff] %v656
  %848 = vst [vmem:[%s838 + $0x48] sm:$0xff] %v659
  %849 = vst [vmem:[%s838 + $0x50] sm:$0xff] %v664
  %850 = vst [vmem:[%s838 + $0x58] sm:$0xff] %v667
  %851 = vst [vmem:[%s838 + $0x60] sm:$0xff] %v821
  %852 = vst [vmem:[%s838 + $0x68] sm:$0xff] %v824
  %853 = vst [vmem:[%s838 + $0x70] sm:$0xff] %v829
  %854 = vst [vmem:[%s838 + $0x78] sm:$0xff] %v832
  %v855 = vld [vmem:[#allocation3] sm:$0xff]
  %v856 = vld [vmem:[#allocation3 + $0x8] sm:$0xff]
  %v857 = vld [vmem:[#allocation3 + $0x10] sm:$0xff]
  %v858 = vld [vmem:[#allocation3 + $0x18] sm:$0xff]
  %859 = vadd.xlane.f32.xlu0 %v326
  %v860 = vpop.xlane.xlu0 %859
  %861 = vadd.xlane.f32.xlu0 %v329
  %v862 = vpop.xlane.xlu0 %861
  %863 = vadd.xlane.f32.xlu0 %v334
  %v864 = vpop.xlane.xlu0 %863
  %865 = vadd.xlane.f32.xlu0 %v337
  %v866 = vpop.xlane.xlu0 %865
  %867 = vadd.xlane.f32.xlu0 %v491
  %v868 = vpop.xlane.xlu0 %867
  %869 = vadd.xlane.f32.xlu0 %v494
  %v870 = vpop.xlane.xlu0 %869
  %871 = vadd.xlane.f32.xlu0 %v499
  %v872 = vpop.xlane.xlu0 %871
  %873 = vadd.xlane.f32.xlu0 %v502
  %v874 = vpop.xlane.xlu0 %873
  %875 = vadd.xlane.f32.xlu0 %v656
  %v876 = vpop.xlane.xlu0 %875
  %877 = vadd.xlane.f32.xlu0 %v659
  %v878 = vpop.xlane.xlu0 %877
  %879 = vadd.xlane.f32.xlu0 %v664
  %v880 = vpop.xlane.xlu0 %879
  %881 = vadd.xlane.f32.xlu0 %v667
  %v882 = vpop.xlane.xlu0 %881
  %883 = vadd.xlane.f32.xlu0 %v821
  %v884 = vpop.xlane.xlu0 %883
  %885 = vadd.xlane.f32.xlu0 %v824
  %v886 = vpop.xlane.xlu0 %885
  %887 = vadd.xlane.f32.xlu0 %v829
  %v888 = vpop.xlane.xlu0 %887
  %889 = vadd.xlane.f32.xlu0 %v832
  %v890 = vpop.xlane.xlu0 %889
  %v891 = vadd.f32 %v860, %v868
  %v892 = vadd.f32 %v891, %v876
  %v893 = vadd.f32 %v892, %v884
  %v894 = vadd.f32 %v862, %v870
  %v895 = vadd.f32 %v894, %v878
  %v896 = vadd.f32 %v895, %v886
  %v897 = vadd.f32 %v864, %v872
  %v898 = vadd.f32 %v897, %v880
  %v899 = vadd.f32 %v898, %v888
  %v900 = vadd.f32 %v866, %v874
  %v901 = vadd.f32 %v900, %v882
  %v902 = vadd.f32 %v901, %v890
  %v903 = vadd.f32 %v855, %v893
  %v904 = vadd.f32 %v856, %v896
  %v905 = vadd.f32 %v857, %v899
  %v906 = vadd.f32 %v858, %v902
  %vm907 = vcmask 7168
  %908 = vst.msk [vmem:[#allocation3] sm:$0xff] %vm907, %v903
  %909 = vst.msk [vmem:[#allocation3 + $0x8] sm:$0xff] %vm907, %v904
  %910 = vst.msk [vmem:[#allocation3 + $0x10] sm:$0xff] %vm907, %v905
  %911 = vst.msk [vmem:[#allocation3 + $0x18] sm:$0xff] %vm907, %v906
  %v912 = vld [vmem:[#allocation4] sm:$0xff]
  %v913 = vld [vmem:[#allocation4 + $0x8] sm:$0xff]
  %v914 = vld [vmem:[#allocation4 + $0x10] sm:$0xff]
  %v915 = vld [vmem:[#allocation4 + $0x18] sm:$0xff]
  %v916 = vmul.f32 %v326, %v326
  %v917 = vmul.f32 %v329, %v329
  %v918 = vmul.f32 %v334, %v334
  %v919 = vmul.f32 %v337, %v337
  %v920 = vmul.f32 %v491, %v491
  %v921 = vmul.f32 %v494, %v494
  %v922 = vmul.f32 %v499, %v499
  %v923 = vmul.f32 %v502, %v502
  %v924 = vmul.f32 %v656, %v656
  %v925 = vmul.f32 %v659, %v659
  %v926 = vmul.f32 %v664, %v664
  %v927 = vmul.f32 %v667, %v667
  %v928 = vmul.f32 %v821, %v821
  %v929 = vmul.f32 %v824, %v824
  %v930 = vmul.f32 %v829, %v829
  %v931 = vmul.f32 %v832, %v832
  %932 = vadd.xlane.f32.xlu0 %v916
  %v933 = vpop.xlane.xlu0 %932
  %934 = vadd.xlane.f32.xlu0 %v917
  %v935 = vpop.xlane.xlu0 %934
  %936 = vadd.xlane.f32.xlu0 %v918
  %v937 = vpop.xlane.xlu0 %936
  %938 = vadd.xlane.f32.xlu0 %v919
  %v939 = vpop.xlane.xlu0 %938
  %940 = vadd.xlane.f32.xlu0 %v920
  %v941 = vpop.xlane.xlu0 %940
  %942 = vadd.xlane.f32.xlu0 %v921
  %v943 = vpop.xlane.xlu0 %942
  %944 = vadd.xlane.f32.xlu0 %v922
  %v945 = vpop.xlane.xlu0 %944
  %946 = vadd.xlane.f32.xlu0 %v923
  %v947 = vpop.xlane.xlu0 %946
  %948 = vadd.xlane.f32.xlu0 %v924
  %v949 = vpop.xlane.xlu0 %948
  %950 = vadd.xlane.f32.xlu0 %v925
  %v951 = vpop.xlane.xlu0 %950
  %952 = vadd.xlane.f32.xlu0 %v926
  %v953 = vpop.xlane.xlu0 %952
  %954 = vadd.xlane.f32.xlu0 %v927
  %v955 = vpop.xlane.xlu0 %954
  %956 = vadd.xlane.f32.xlu0 %v928
  %v957 = vpop.xlane.xlu0 %956
  %958 = vadd.xlane.f32.xlu0 %v929
  %v959 = vpop.xlane.xlu0 %958
  %960 = vadd.xlane.f32.xlu0 %v930
  %v961 = vpop.xlane.xlu0 %960
  %962 = vadd.xlane.f32.xlu0 %v931
  %v963 = vpop.xlane.xlu0 %962
  %v964 = vadd.f32 %v933, %v941
  %v965 = vadd.f32 %v964, %v949
  %v966 = vadd.f32 %v965, %v957
  %v967 = vadd.f32 %v935, %v943
  %v968 = vadd.f32 %v967, %v951
  %v969 = vadd.f32 %v968, %v959
  %v970 = vadd.f32 %v937, %v945
  %v971 = vadd.f32 %v970, %v953
  %v972 = vadd.f32 %v971, %v961
  %v973 = vadd.f32 %v939, %v947
  %v974 = vadd.f32 %v973, %v955
  %v975 = vadd.f32 %v974, %v963
  %v976 = vadd.f32 %v912, %v966
  %v977 = vadd.f32 %v913, %v969
  %v978 = vadd.f32 %v914, %v972
  %v979 = vadd.f32 %v915, %v975
  %980 = vst.msk [vmem:[#allocation4] sm:$0xff] %vm907, %v976
  %981 = vst.msk [vmem:[#allocation4 + $0x8] sm:$0xff] %vm907, %v977
  %982 = vst.msk [vmem:[#allocation4 + $0x10] sm:$0xff] %vm907, %v978
  %983 = vst.msk [vmem:[#allocation4 + $0x18] sm:$0xff] %vm907, %v979
  // Predicated region
  $region22: #{_lambda_.6} parent=0 // pred_check
    %p984 = pneg %p18
  $region23: #{_lambda_.6} parent=0 // pred_check_branch
    %986 = sbr.rel (%p984) target = $region25
  $region24: #{_lambda_.6} parent=0 // pred_region
    %v987 = vld [vmem:[#allocation3] sm:$0xff]
    %v988 = vld [vmem:[#allocation3 + $0x8] sm:$0xff]
    %v989 = vld [vmem:[#allocation3 + $0x10] sm:$0xff]
    %v990 = vld [vmem:[#allocation3 + $0x18] sm:$0xff]
    %v991 = vmul.f32 %v987, 0.008333334
    %v992 = vmul.f32 %v988, 0.008333334
    %v993 = vmul.f32 %v989, 0.008333334
    %v994 = vmul.f32 %v990, 0.008333334
    %v995 = vld [vmem:[#allocation4] sm:$0xff]
    %v996 = vld [vmem:[#allocation4 + $0x8] sm:$0xff]
    %v997 = vld [vmem:[#allocation4 + $0x10] sm:$0xff]
    %v998 = vld [vmem:[#allocation4 + $0x18] sm:$0xff]
    %v999 = vmul.f32 %v995, 0.008333334
    %v1000 = vmul.f32 %v996, 0.008333334
    %v1001 = vmul.f32 %v997, 0.008333334
    %v1002 = vmul.f32 %v998, 0.008333334
    %v1003 = vmul.f32 %v991, %v991
    %v1004 = vmul.f32 %v992, %v992
    %v1005 = vmul.f32 %v993, %v993
    %v1006 = vmul.f32 %v994, %v994
    %v1007 = vsub.f32 %v999, %v1003
    %v1008 = vsub.f32 %v1000, %v1004
    %v1009 = vsub.f32 %v1001, %v1005
    %v1010 = vsub.f32 %v1002, %v1006
    %v1011 = vmax.f32 %v1007, 0.0
    %v1012 = vmax.f32 %v1008, 0.0
    %v1013 = vmax.f32 %v1009, 0.0
    %v1014 = vmax.f32 %v1010, 0.0
    %v1015 = vld [vmem:[%s2] sm:$0xff]
    %v1016 = vld [vmem:[%s2 + $0x8] sm:$0xff]
    %v1017 = vld [vmem:[%s2 + $0x10] sm:$0xff]
    %v1018 = vld [vmem:[%s2 + $0x18] sm:$0xff]
    %v1019 = vadd.f32 %v1011, 1e-05
    %v1020 = vadd.f32 %v1012, 1e-05
    %v1021 = vadd.f32 %v1013, 1e-05
    %v1022 = vadd.f32 %v1014, 1e-05
    %v1023 = vrsqrt.pop %v1019
    %v1024 = vrsqrt.pop %v1020
    %v1025 = vrsqrt.pop %v1021
    %v1026 = vrsqrt.pop %v1022
    %v1027 = vmul.f32 %v1015, %v1023
    %v1028 = vmul.f32 %v1016, %v1024
    %v1029 = vmul.f32 %v1017, %v1025
    %v1030 = vmul.f32 %v1018, %v1026
    %v1031 = vld [vmem:[%s3] sm:$0xff]
    %v1032 = vld [vmem:[%s3 + $0x8] sm:$0xff]
    %v1033 = vld [vmem:[%s3 + $0x10] sm:$0xff]
    %v1034 = vld [vmem:[%s3 + $0x18] sm:$0xff]
    %v1035 = vmul.f32 %v991, %v1027
    %v1036 = vmul.f32 %v992, %v1028
    %v1037 = vmul.f32 %v993, %v1029
    %v1038 = vmul.f32 %v994, %v1030
    %v1039 = vsub.f32 %v1031, %v1035
    %v1040 = vsub.f32 %v1032, %v1036
    %v1041 = vsub.f32 %v1033, %v1037
    %v1042 = vsub.f32 %v1034, %v1038
    %v1043 = vld [vmem:[#allocation2] sm:$0xff]
    %v1044 = vld [vmem:[#allocation2 + $0x8] sm:$0xff]
    %v1045 = vld [vmem:[#allocation2 + $0x10] sm:$0xff]
    %v1046 = vld [vmem:[#allocation2 + $0x18] sm:$0xff]
    %v1047 = vld [vmem:[#allocation2 + $0x20] sm:$0xff]
    %v1048 = vld [vmem:[#allocation2 + $0x28] sm:$0xff]
    %v1049 = vld [vmem:[#allocation2 + $0x30] sm:$0xff]
    %v1050 = vld [vmem:[#allocation2 + $0x38] sm:$0xff]
    %v1051 = vld [vmem:[#allocation2 + $0x40] sm:$0xff]
    %v1052 = vld [vmem:[#allocation2 + $0x48] sm:$0xff]
    %v1053 = vld [vmem:[#allocation2 + $0x50] sm:$0xff]
    %v1054 = vld [vmem:[#allocation2 + $0x58] sm:$0xff]
    %v1055 = vld [vmem:[#allocation2 + $0x60] sm:$0xff]
    %v1056 = vld [vmem:[#allocation2 + $0x68] sm:$0xff]
    %v1057 = vld [vmem:[#allocation2 + $0x70] sm:$0xff]
    %v1058 = vld [vmem:[#allocation2 + $0x78] sm:$0xff]
    %1060 = vset.pattern.permute.xlu0 0
    %1061 = vperm.xlu0 %1060, %v1027
    %v1062 = vpop.permute.xlu0 %1061
    %1065 = vset.pattern.permute.xlu0 0
    %1066 = vperm.xlu0 %1065, %v1028
    %v1067 = vpop.permute.xlu0 %1066
    %1070 = vset.pattern.permute.xlu0 0
    %1071 = vperm.xlu0 %1070, %v1029
    %v1072 = vpop.permute.xlu0 %1071
    %1075 = vset.pattern.permute.xlu0 0
    %1076 = vperm.xlu0 %1075, %v1030
    %v1077 = vpop.permute.xlu0 %1076
    %v1079 = vmul.f32 %v1043, %v1062
    %v1080 = vmul.f32 %v1044, %v1067
    %v1081 = vmul.f32 %v1045, %v1072
    %v1082 = vmul.f32 %v1046, %v1077
    %v1083 = vmul.f32 %v1047, %v1062
    %v1084 = vmul.f32 %v1048, %v1067
    %v1085 = vmul.f32 %v1049, %v1072
    %v1086 = vmul.f32 %v1050, %v1077
    %v1087 = vmul.f32 %v1051, %v1062
    %v1088 = vmul.f32 %v1052, %v1067
    %v1089 = vmul.f32 %v1053, %v1072
    %v1090 = vmul.f32 %v1054, %v1077
    %v1091 = vmul.f32 %v1055, %v1062
    %v1092 = vmul.f32 %v1056, %v1067
    %v1093 = vmul.f32 %v1057, %v1072
    %v1094 = vmul.f32 %v1058, %v1077
    %1096 = vset.pattern.permute.xlu0 0
    %1097 = vperm.xlu0 %1096, %v1039
    %v1098 = vpop.permute.xlu0 %1097
    %1101 = vset.pattern.permute.xlu0 0
    %1102 = vperm.xlu0 %1101, %v1040
    %v1103 = vpop.permute.xlu0 %1102
    %1106 = vset.pattern.permute.xlu0 0
    %1107 = vperm.xlu0 %1106, %v1041
    %v1108 = vpop.permute.xlu0 %1107
    %1111 = vset.pattern.permute.xlu0 0
    %1112 = vperm.xlu0 %1111, %v1042
    %v1113 = vpop.permute.xlu0 %1112
    %v1115 = vadd.f32 %v1079, %v1098
    %v1116 = vadd.f32 %v1080, %v1103
    %v1117 = vadd.f32 %v1081, %v1108
    %v1118 = vadd.f32 %v1082, %v1113
    %v1119 = vadd.f32 %v1083, %v1098
    %v1120 = vadd.f32 %v1084, %v1103
    %v1121 = vadd.f32 %v1085, %v1108
    %v1122 = vadd.f32 %v1086, %v1113
    %v1123 = vadd.f32 %v1087, %v1098
    %v1124 = vadd.f32 %v1088, %v1103
    %v1125 = vadd.f32 %v1089, %v1108
    %v1126 = vadd.f32 %v1090, %v1113
    %v1127 = vadd.f32 %v1091, %v1098
    %v1128 = vadd.f32 %v1092, %v1103
    %v1129 = vadd.f32 %v1093, %v1108
    %v1130 = vadd.f32 %v1094, %v1113
    %v1131 = vmax.f32 %v1115, 0.0
    %v1132 = vmax.f32 %v1116, 0.0
    %v1133 = vmax.f32 %v1117, 0.0
    %v1134 = vmax.f32 %v1118, 0.0
    %v1135 = vmax.f32 %v1119, 0.0
    %v1136 = vmax.f32 %v1120, 0.0
    %v1137 = vmax.f32 %v1121, 0.0
    %v1138 = vmax.f32 %v1122, 0.0
    %v1139 = vmax.f32 %v1123, 0.0
    %v1140 = vmax.f32 %v1124, 0.0
    %v1141 = vmax.f32 %v1125, 0.0
    %v1142 = vmax.f32 %v1126, 0.0
    %v1143 = vmax.f32 %v1127, 0.0
    %v1144 = vmax.f32 %v1128, 0.0
    %v1145 = vmax.f32 %v1129, 0.0
    %v1146 = vmax.f32 %v1130, 0.0
    %v1147 = vpack.c.bf16 %v1132, %v1131
    %v1148 = vpack.c.bf16 %v1134, %v1133
    %v1149 = vpack.c.bf16 %v1136, %v1135
    %v1150 = vpack.c.bf16 %v1138, %v1137
    %v1151 = vpack.c.bf16 %v1140, %v1139
    %v1152 = vpack.c.bf16 %v1142, %v1141
    %v1153 = vpack.c.bf16 %v1144, %v1143
    %v1154 = vpack.c.bf16 %v1146, %v1145
    %v1163 = vunpack.c.l.b16 %v1147
    %v1164 = vunpack.c.h.b16 %v1147
    %v1165 = vunpack.c.l.b16 %v1148
    %v1166 = vunpack.c.h.b16 %v1148
    %v1167 = vunpack.c.l.b16 %v1149
    %v1168 = vunpack.c.h.b16 %v1149
    %v1169 = vunpack.c.l.b16 %v1150
    %v1170 = vunpack.c.h.b16 %v1150
    %v1171 = vunpack.c.l.b16 %v1151
    %v1172 = vunpack.c.h.b16 %v1151
    %v1173 = vunpack.c.l.b16 %v1152
    %v1174 = vunpack.c.h.b16 %v1152
    %v1175 = vunpack.c.l.b16 %v1153
    %v1176 = vunpack.c.h.b16 %v1153
    %v1177 = vunpack.c.l.b16 %v1154
    %v1178 = vunpack.c.h.b16 %v1154
    %v1179 = vpack.c.b16 %v1163, %v1163
    %v1180 = vpack.c.b16 %v1164, %v1164
    %v1181 = vpack.c.b16 %v1165, %v1165
    %v1182 = vpack.c.b16 %v1166, %v1166
    %v1183 = vpack.c.b16 %v1167, %v1167
    %v1184 = vpack.c.b16 %v1168, %v1168
    %v1185 = vpack.c.b16 %v1169, %v1169
    %v1186 = vpack.c.b16 %v1170, %v1170
    %v1187 = vpack.c.b16 %v1171, %v1171
    %v1188 = vpack.c.b16 %v1172, %v1172
    %v1189 = vpack.c.b16 %v1173, %v1173
    %v1190 = vpack.c.b16 %v1174, %v1174
    %v1191 = vpack.c.b16 %v1175, %v1175
    %v1192 = vpack.c.b16 %v1176, %v1176
    %v1193 = vpack.c.b16 %v1177, %v1177
    %v1194 = vpack.c.b16 %v1178, %v1178
    %1211 = vst [vmem:[%s4] sm:$0xf] %v1179
    %1212 = vst [vmem:[%s4 + $0x4] sm:$0xf] %v1180
    %1213 = vst [vmem:[%s4 + $0x8] sm:$0xf] %v1181
    %1214 = vst [vmem:[%s4 + $0xc] sm:$0xf] %v1182
    %1215 = vst [vmem:[%s4 + $0x10] sm:$0xf] %v1183
    %1216 = vst [vmem:[%s4 + $0x14] sm:$0xf] %v1184
    %1217 = vst [vmem:[%s4 + $0x18] sm:$0xf] %v1185
    %1218 = vst [vmem:[%s4 + $0x1c] sm:$0xf] %v1186
    %1219 = vst [vmem:[%s4 + $0x20] sm:$0xf] %v1187
    %1220 = vst [vmem:[%s4 + $0x24] sm:$0xf] %v1188
    %1221 = vst [vmem:[%s4 + $0x28] sm:$0xf] %v1189
    %1222 = vst [vmem:[%s4 + $0x2c] sm:$0xf] %v1190
    %1223 = vst [vmem:[%s4 + $0x30] sm:$0xf] %v1191
    %1224 = vst [vmem:[%s4 + $0x34] sm:$0xf] %v1192
    %1225 = vst [vmem:[%s4 + $0x38] sm:$0xf] %v1193
    %1226 = vst [vmem:[%s4 + $0x3c] sm:$0xf] %v1194
  $region25: #{_lambda_.6} parent=0 // pred_fallthru
    _
  // Predicated region
  $region26: #{_lambda_.6} parent=0 // pred_check
    _
  $region27: #{_lambda_.6} parent=0 // pred_check_branch
    %1228 = sbr.rel (0) target = $region29
  $region28: #{_lambda_.6} parent=0 // pred_region
    _
  $region29: #{_lambda_.6} parent=0 // pred_fallthru
    _
  // Predicated region
  $region30: #{_lambda_.6} parent=0 // pred_check
    _
  $region31: #{_lambda_.6} parent=0 // pred_check_branch
    %1230 = sbr.rel (0) target = $region33
  $region32: #{_lambda_.6} parent=0 // pred_region
    _
  $region33: #{_lambda_.6} parent=0 // pred_fallthru
    _

// kernel: _lambda_.7
$region0: #{_lambda_.7}
  #allocation0 [shape = 'u32[]', space=smem, size = 0x4, offset = 0x4, fixed_abs, tag = 'smem constant byte address 0x4 - core index']
  #allocation1 [shape = 'u32[144,128]{1,0:T(1,128)}', space=vmem, size = 0x12000, scoped, tag = 'internal scratch']
  #allocation2 [shape = 'f32[4,16,128]{2,1,0:T(8,128)}', space=vmem, size = 0x8000, scoped, tag = 'scratch operand']
  #allocation3 [shape = 'f32[16,1]{1,0:T(8,128)}', space=vmem, size = 0x2000, scoped, tag = 'scratch operand']
  #allocation4 [shape = 'f32[16,1]{1,0:T(8,128)}', space=vmem, size = 0x2000, scoped, tag = 'scratch operand']
  %s0 = inlined_call_operand.vmem [shape: bf16[4,16,128], index: 0, kind: input, shape index: {}]
  %s1 = inlined_call_operand.vmem [shape: bf16[4,128,128], index: 1, kind: input, shape index: {}]
  %s2 = inlined_call_operand.vmem [shape: f32[16,1], index: 2, kind: input, shape index: {}]
  %s3 = inlined_call_operand.vmem [shape: f32[16,1], index: 3, kind: input, shape index: {}]
  %s4 = inlined_call_operand.vmem [shape: bf16[4,16,128], index: 4, kind: output, shape index: {}]
  %s5 = sld [smem:[#allocation0]]
  $region34: #{_lambda_.7} parent=0
    _
  %s7 = ssub.s32 1, %s5
  %s8 = scalar_select 0, %s7, %s5
  // Predicated region
  $region2: #{_lambda_.7} parent=0 // pred_check
    _
  $region3: #{_lambda_.7} parent=0 // pred_check_branch
    %10 = sbr.rel (0) target = $region5
  $region4: #{_lambda_.7} parent=0 // pred_region
    _
  $region5: #{_lambda_.7} parent=0 // pred_fallthru
    _
  // Predicated region
  $region6: #{_lambda_.7} parent=0 // pred_check
    _
  $region7: #{_lambda_.7} parent=0 // pred_check_branch
    %12 = sbr.rel (0) target = $region9
  $region8: #{_lambda_.7} parent=0 // pred_region
    _
  $region9: #{_lambda_.7} parent=0 // pred_fallthru
    _
  // Predicated region
  $region10: #{_lambda_.7} parent=0 // pred_check
    _
  $region11: #{_lambda_.7} parent=0 // pred_check_branch
    %14 = sbr.rel (0) target = $region13
  $region12: #{_lambda_.7} parent=0 // pred_region
    _
  $region13: #{_lambda_.7} parent=0 // pred_fallthru
    _
  // Predicated region
  $region14: #{_lambda_.7} parent=0 // pred_check
    _
  $region15: #{_lambda_.7} parent=0 // pred_check_branch
    %16 = sbr.rel (0) target = $region17
  $region16: #{_lambda_.7} parent=0 // pred_region
    _
  $region17: #{_lambda_.7} parent=0 // pred_fallthru
    _
  %p18 = scmp.eq.s32.totalorder 0, 0
  // Predicated region
  $region18: #{_lambda_.7} parent=0 // pred_check
    %p19 = pneg %p18
  $region19: #{_lambda_.7} parent=0 // pred_check_branch
    %21 = sbr.rel (%p19) target = $region21
  $region20: #{_lambda_.7} parent=0 // pred_region
    %vm22 = vcmask 7168
    %23 = vst.msk [vmem:[#allocation3] sm:$0xff] %vm22, 0.0
    %24 = vst.msk [vmem:[#allocation3 + $0x8] sm:$0xff] %vm22, 0.0
    %25 = vst.msk [vmem:[#allocation4] sm:$0xff] %vm22, 0.0
    %26 = vst.msk [vmem:[#allocation4 + $0x8] sm:$0xff] %vm22, 0.0
  $region21: #{_lambda_.7} parent=0 // pred_fallthru
    _
  %v27 = vld [vmem:[%s0] sm:$0xf]
  %v28 = vld [vmem:[%s0 + $0x4] sm:$0xf]
  %v29 = vld [vmem:[%s0 + $0x8] sm:$0xf]
  %v30 = vld [vmem:[%s0 + $0xc] sm:$0xf]
  %v31 = vld [vmem:[%s0 + $0x10] sm:$0xf]
  %v32 = vld [vmem:[%s0 + $0x14] sm:$0xf]
  %v33 = vld [vmem:[%s0 + $0x18] sm:$0xf]
  %v34 = vld [vmem:[%s0 + $0x1c] sm:$0xf]
  %v35 = vld [vmem:[%s1] sm:$0xf]
  %v36 = vld [vmem:[%s1 + $0x4] sm:$0xf]
  %v37 = vld [vmem:[%s1 + $0x8] sm:$0xf]
  %v38 = vld [vmem:[%s1 + $0xc] sm:$0xf]
  %v39 = vld [vmem:[%s1 + $0x10] sm:$0xf]
  %v40 = vld [vmem:[%s1 + $0x14] sm:$0xf]
  %v41 = vld [vmem:[%s1 + $0x18] sm:$0xf]
  %v42 = vld [vmem:[%s1 + $0x1c] sm:$0xf]
  %v43 = vld [vmem:[%s1 + $0x20] sm:$0xf]
  %v44 = vld [vmem:[%s1 + $0x24] sm:$0xf]
  %v45 = vld [vmem:[%s1 + $0x28] sm:$0xf]
  %v46 = vld [vmem:[%s1 + $0x2c] sm:$0xf]
  %v47 = vld [vmem:[%s1 + $0x30] sm:$0xf]
  %v48 = vld [vmem:[%s1 + $0x34] sm:$0xf]
  %v49 = vld [vmem:[%s1 + $0x38] sm:$0xf]
  %v50 = vld [vmem:[%s1 + $0x3c] sm:$0xf]
  %v51 = vld [vmem:[%s1 + $0x40] sm:$0xf]
  %v52 = vld [vmem:[%s1 + $0x44] sm:$0xf]
  %v53 = vld [vmem:[%s1 + $0x48] sm:$0xf]
  %v54 = vld [vmem:[%s1 + $0x4c] sm:$0xf]
  %v55 = vld [vmem:[%s1 + $0x50] sm:$0xf]
  %v56 = vld [vmem:[%s1 + $0x54] sm:$0xf]
  %v57 = vld [vmem:[%s1 + $0x58] sm:$0xf]
  %v58 = vld [vmem:[%s1 + $0x5c] sm:$0xf]
  %v59 = vld [vmem:[%s1 + $0x60] sm:$0xf]
  %v60 = vld [vmem:[%s1 + $0x64] sm:$0xf]
  %v61 = vld [vmem:[%s1 + $0x68] sm:$0xf]
  %v62 = vld [vmem:[%s1 + $0x6c] sm:$0xf]
  %v63 = vld [vmem:[%s1 + $0x70] sm:$0xf]
  %v64 = vld [vmem:[%s1 + $0x74] sm:$0xf]
  %v65 = vld [vmem:[%s1 + $0x78] sm:$0xf]
  %v66 = vld [vmem:[%s1 + $0x7c] sm:$0xf]
  %v67 = vld [vmem:[%s1 + $0x80] sm:$0xf]
  %v68 = vld [vmem:[%s1 + $0x84] sm:$0xf]
  %v69 = vld [vmem:[%s1 + $0x88] sm:$0xf]
  %v70 = vld [vmem:[%s1 + $0x8c] sm:$0xf]
  %v71 = vld [vmem:[%s1 + $0x90] sm:$0xf]
  %v72 = vld [vmem:[%s1 + $0x94] sm:$0xf]
  %v73 = vld [vmem:[%s1 + $0x98] sm:$0xf]
  %v74 = vld [vmem:[%s1 + $0x9c] sm:$0xf]
  %v75 = vld [vmem:[%s1 + $0xa0] sm:$0xf]
  %v76 = vld [vmem:[%s1 + $0xa4] sm:$0xf]
  %v77 = vld [vmem:[%s1 + $0xa8] sm:$0xf]
  %v78 = vld [vmem:[%s1 + $0xac] sm:$0xf]
  %v79 = vld [vmem:[%s1 + $0xb0] sm:$0xf]
  %v80 = vld [vmem:[%s1 + $0xb4] sm:$0xf]
  %v81 = vld [vmem:[%s1 + $0xb8] sm:$0xf]
  %v82 = vld [vmem:[%s1 + $0xbc] sm:$0xf]
  %v83 = vld [vmem:[%s1 + $0xc0] sm:$0xf]
  %v84 = vld [vmem:[%s1 + $0xc4] sm:$0xf]
  %v85 = vld [vmem:[%s1 + $0xc8] sm:$0xf]
  %v86 = vld [vmem:[%s1 + $0xcc] sm:$0xf]
  %v87 = vld [vmem:[%s1 + $0xd0] sm:$0xf]
  %v88 = vld [vmem:[%s1 + $0xd4] sm:$0xf]
  %v89 = vld [vmem:[%s1 + $0xd8] sm:$0xf]
  %v90 = vld [vmem:[%s1 + $0xdc] sm:$0xf]
  %v91 = vld [vmem:[%s1 + $0xe0] sm:$0xf]
  %v92 = vld [vmem:[%s1 + $0xe4] sm:$0xf]
  %v93 = vld [vmem:[%s1 + $0xe8] sm:$0xf]
  %v94 = vld [vmem:[%s1 + $0xec] sm:$0xf]
  %v95 = vld [vmem:[%s1 + $0xf0] sm:$0xf]
  %v96 = vld [vmem:[%s1 + $0xf4] sm:$0xf]
  %v97 = vld [vmem:[%s1 + $0xf8] sm:$0xf]
  %v98 = vld [vmem:[%s1 + $0xfc] sm:$0xf]
  %v101 = vunpack.c.l.b16 %v27
  %v102 = vunpack.c.l.b16 %v28
  %v103 = vpack.c.b16 %v102, %v101
  %v121 = vunpack.c.l.b16 %v35
  %v122 = vunpack.c.l.b16 %v36
  %v123 = vunpack.c.l.b16 %v37
  %v124 = vunpack.c.l.b16 %v38
  %v125 = vunpack.c.l.b16 %v39
  %v126 = vunpack.c.l.b16 %v40
  %v127 = vunpack.c.l.b16 %v41
  %v128 = vunpack.c.l.b16 %v42
  %v129 = vunpack.c.l.b16 %v43
  %v130 = vunpack.c.l.b16 %v44
  %v131 = vunpack.c.l.b16 %v45
  %v132 = vunpack.c.l.b16 %v46
  %v133 = vunpack.c.l.b16 %v47
  %v134 = vunpack.c.l.b16 %v48
  %v135 = vunpack.c.l.b16 %v49
  %v136 = vunpack.c.l.b16 %v50
  %v137 = vpack.c.b16 %v122, %v121
  %v138 = vpack.c.b16 %v124, %v123
  %v139 = vpack.c.b16 %v126, %v125
  %v140 = vpack.c.b16 %v128, %v127
  %v141 = vpack.c.b16 %v130, %v129
  %v142 = vpack.c.b16 %v132, %v131
  %v143 = vpack.c.b16 %v134, %v133
  %v144 = vpack.c.b16 %v136, %v135
  %153 = vmatprep.subr.bf16.mxu0 0
  %154 = vmatpush1.bf16.msra.mxu0 %v144
  %155 = vmatprep.subr.bf16.mxu0 0
  %156 = vmatpush1.bf16.msra.mxu0 %v143
  %157 = vmatprep.subr.bf16.mxu0 0
  %158 = vmatpush1.bf16.msra.mxu0 %v142
  %159 = vmatprep.subr.bf16.mxu0 0
  %160 = vmatpush1.bf16.msra.mxu0 %v141
  %161 = vmatprep.subr.bf16.mxu0 0
  %162 = vmatpush1.bf16.msra.mxu0 %v140
  %163 = vmatprep.subr.bf16.mxu0 0
  %164 = vmatpush1.bf16.msra.mxu0 %v139
  %165 = vmatprep.subr.bf16.mxu0 0
  %166 = vmatpush1.bf16.msra.mxu0 %v138
  %167 = vmatprep.subr.bf16.mxu0 0
  %168 = vmatpush1.bf16.msra.mxu0 %v137
  %169 = vmatprep.subr.bf16.mxu0 0
  %170 = vmatpush2.bf16.msra.mxu0 0
  %171 = vmatprep.subr.bf16.mxu0 0
  %172 = vmatpush2.bf16.msra.mxu0 0
  %173 = vmatprep.subr.bf16.mxu0 0
  %174 = vmatpush2.bf16.msra.mxu0 0
  %175 = vmatprep.subr.bf16.mxu0 0
  %176 = vmatpush2.bf16.msra.mxu0 0
  %177 = vmatprep.subr.bf16.mxu0 0
  %178 = vmatpush2.bf16.msra.mxu0 0
  %179 = vmatprep.subr.bf16.mxu0 0
  %180 = vmatpush2.bf16.msra.mxu0 0
  %181 = vmatprep.subr.bf16.mxu0 0
  %182 = vmatpush2.bf16.msra.mxu0 0
  %183 = vmatprep.subr.bf16.mxu0 0
  %184 = vmatpush2.bf16.msra.mxu0 0
  %185 = vmatprep.mubr.bf16.mxu0 0
  %186 = vmatmul.mubr.bf16.gmra.mxu0 %v103
  %v187 = vpop.f32.mrf.mxu0
  %v188 = vadd.f32 0.0, %v187
  %v189 = vpop.f32.mrf.mxu0
  %v190 = vpop.f32.mrf.mxu0
  %v191 = vadd.f32 0.0, %v190
  %v192 = vpop.f32.mrf.mxu0
  %193 = vdwg.mxu0
  %v196 = vunpack.c.l.b16 %v29
  %v197 = vunpack.c.l.b16 %v30
  %v198 = vpack.c.b16 %v197, %v196
  %v216 = vunpack.c.l.b16 %v51
  %v217 = vunpack.c.l.b16 %v52
  %v218 = vunpack.c.l.b16 %v53
  %v219 = vunpack.c.l.b16 %v54
  %v220 = vunpack.c.l.b16 %v55
  %v221 = vunpack.c.l.b16 %v56
  %v222 = vunpack.c.l.b16 %v57
  %v223 = vunpack.c.l.b16 %v58
  %v224 = vunpack.c.l.b16 %v59
  %v225 = vunpack.c.l.b16 %v60
  %v226 = vunpack.c.l.b16 %v61
  %v227 = vunpack.c.l.b16 %v62
  %v228 = vunpack.c.l.b16 %v63
  %v229 = vunpack.c.l.b16 %v64
  %v230 = vunpack.c.l.b16 %v65
  %v231 = vunpack.c.l.b16 %v66
  %v232 = vpack.c.b16 %v217, %v216
  %v233 = vpack.c.b16 %v219, %v218
  %v234 = vpack.c.b16 %v221, %v220
  %v235 = vpack.c.b16 %v223, %v222
  %v236 = vpack.c.b16 %v225, %v224
  %v237 = vpack.c.b16 %v227, %v226
  %v238 = vpack.c.b16 %v229, %v228
  %v239 = vpack.c.b16 %v231, %v230
  %248 = vmatprep.subr.bf16.mxu0 0
  %249 = vmatpush1.bf16.msra.mxu0 %v239
  %250 = vmatprep.subr.bf16.mxu0 0
  %251 = vmatpush1.bf16.msra.mxu0 %v238
  %252 = vmatprep.subr.bf16.mxu0 0
  %253 = vmatpush1.bf16.msra.mxu0 %v237
  %254 = vmatprep.subr.bf16.mxu0 0
  %255 = vmatpush1.bf16.msra.mxu0 %v236
  %256 = vmatprep.subr.bf16.mxu0 0
  %257 = vmatpush1.bf16.msra.mxu0 %v235
  %258 = vmatprep.subr.bf16.mxu0 0
  %259 = vmatpush1.bf16.msra.mxu0 %v234
  %260 = vmatprep.subr.bf16.mxu0 0
  %261 = vmatpush1.bf16.msra.mxu0 %v233
  %262 = vmatprep.subr.bf16.mxu0 0
  %263 = vmatpush1.bf16.msra.mxu0 %v232
  %264 = vmatprep.subr.bf16.mxu0 0
  %265 = vmatpush2.bf16.msra.mxu0 0
  %266 = vmatprep.subr.bf16.mxu0 0
  %267 = vmatpush2.bf16.msra.mxu0 0
  %268 = vmatprep.subr.bf16.mxu0 0
  %269 = vmatpush2.bf16.msra.mxu0 0
  %270 = vmatprep.subr.bf16.mxu0 0
  %271 = vmatpush2.bf16.msra.mxu0 0
  %272 = vmatprep.subr.bf16.mxu0 0
  %273 = vmatpush2.bf16.msra.mxu0 0
  %274 = vmatprep.subr.bf16.mxu0 0
  %275 = vmatpush2.bf16.msra.mxu0 0
  %276 = vmatprep.subr.bf16.mxu0 0
  %277 = vmatpush2.bf16.msra.mxu0 0
  %278 = vmatprep.subr.bf16.mxu0 0
  %279 = vmatpush2.bf16.msra.mxu0 0
  %280 = vmatprep.mubr.bf16.mxu0 0
  %281 = vmatmul.mubr.bf16.gmra.mxu0 %v198
  %v282 = vpop.f32.mrf.mxu0
  %v283 = vadd.f32 0.0, %v282
  %v284 = vpop.f32.mrf.mxu0
  %v285 = vpop.f32.mrf.mxu0
  %v286 = vadd.f32 0.0, %v285
  %v287 = vpop.f32.mrf.mxu0
  %288 = vdwg.mxu0
  %v291 = vunpack.c.l.b16 %v31
  %v292 = vunpack.c.l.b16 %v32
  %v293 = vpack.c.b16 %v292, %v291
  %v311 = vunpack.c.l.b16 %v67
  %v312 = vunpack.c.l.b16 %v68
  %v313 = vunpack.c.l.b16 %v69
  %v314 = vunpack.c.l.b16 %v70
  %v315 = vunpack.c.l.b16 %v71
  %v316 = vunpack.c.l.b16 %v72
  %v317 = vunpack.c.l.b16 %v73
  %v318 = vunpack.c.l.b16 %v74
  %v319 = vunpack.c.l.b16 %v75
  %v320 = vunpack.c.l.b16 %v76
  %v321 = vunpack.c.l.b16 %v77
  %v322 = vunpack.c.l.b16 %v78
  %v323 = vunpack.c.l.b16 %v79
  %v324 = vunpack.c.l.b16 %v80
  %v325 = vunpack.c.l.b16 %v81
  %v326 = vunpack.c.l.b16 %v82
  %v327 = vpack.c.b16 %v312, %v311
  %v328 = vpack.c.b16 %v314, %v313
  %v329 = vpack.c.b16 %v316, %v315
  %v330 = vpack.c.b16 %v318, %v317
  %v331 = vpack.c.b16 %v320, %v319
  %v332 = vpack.c.b16 %v322, %v321
  %v333 = vpack.c.b16 %v324, %v323
  %v334 = vpack.c.b16 %v326, %v325
  %343 = vmatprep.subr.bf16.mxu0 0
  %344 = vmatpush1.bf16.msra.mxu0 %v334
  %345 = vmatprep.subr.bf16.mxu0 0
  %346 = vmatpush1.bf16.msra.mxu0 %v333
  %347 = vmatprep.subr.bf16.mxu0 0
  %348 = vmatpush1.bf16.msra.mxu0 %v332
  %349 = vmatprep.subr.bf16.mxu0 0
  %350 = vmatpush1.bf16.msra.mxu0 %v331
  %351 = vmatprep.subr.bf16.mxu0 0
  %352 = vmatpush1.bf16.msra.mxu0 %v330
  %353 = vmatprep.subr.bf16.mxu0 0
  %354 = vmatpush1.bf16.msra.mxu0 %v329
  %355 = vmatprep.subr.bf16.mxu0 0
  %356 = vmatpush1.bf16.msra.mxu0 %v328
  %357 = vmatprep.subr.bf16.mxu0 0
  %358 = vmatpush1.bf16.msra.mxu0 %v327
  %359 = vmatprep.subr.bf16.mxu0 0
  %360 = vmatpush2.bf16.msra.mxu0 0
  %361 = vmatprep.subr.bf16.mxu0 0
  %362 = vmatpush2.bf16.msra.mxu0 0
  %363 = vmatprep.subr.bf16.mxu0 0
  %364 = vmatpush2.bf16.msra.mxu0 0
  %365 = vmatprep.subr.bf16.mxu0 0
  %366 = vmatpush2.bf16.msra.mxu0 0
  %367 = vmatprep.subr.bf16.mxu0 0
  %368 = vmatpush2.bf16.msra.mxu0 0
  %369 = vmatprep.subr.bf16.mxu0 0
  %370 = vmatpush2.bf16.msra.mxu0 0
  %371 = vmatprep.subr.bf16.mxu0 0
  %372 = vmatpush2.bf16.msra.mxu0 0
  %373 = vmatprep.subr.bf16.mxu0 0
  %374 = vmatpush2.bf16.msra.mxu0 0
  %375 = vmatprep.mubr.bf16.mxu0 0
  %376 = vmatmul.mubr.bf16.gmra.mxu0 %v293
  %v377 = vpop.f32.mrf.mxu0
  %v378 = vadd.f32 0.0, %v377
  %v379 = vpop.f32.mrf.mxu0
  %v380 = vpop.f32.mrf.mxu0
  %v381 = vadd.f32 0.0, %v380
  %v382 = vpop.f32.mrf.mxu0
  %383 = vdwg.mxu0
  %v386 = vunpack.c.l.b16 %v33
  %v387 = vunpack.c.l.b16 %v34
  %v388 = vpack.c.b16 %v387, %v386
  %v406 = vunpack.c.l.b16 %v83
  %v407 = vunpack.c.l.b16 %v84
  %v408 = vunpack.c.l.b16 %v85
  %v409 = vunpack.c.l.b16 %v86
  %v410 = vunpack.c.l.b16 %v87
  %v411 = vunpack.c.l.b16 %v88
  %v412 = vunpack.c.l.b16 %v89
  %v413 = vunpack.c.l.b16 %v90
  %v414 = vunpack.c.l.b16 %v91
  %v415 = vunpack.c.l.b16 %v92
  %v416 = vunpack.c.l.b16 %v93
  %v417 = vunpack.c.l.b16 %v94
  %v418 = vunpack.c.l.b16 %v95
  %v419 = vunpack.c.l.b16 %v96
  %v420 = vunpack.c.l.b16 %v97
  %v421 = vunpack.c.l.b16 %v98
  %v422 = vpack.c.b16 %v407, %v406
  %v423 = vpack.c.b16 %v409, %v408
  %v424 = vpack.c.b16 %v411, %v410
  %v425 = vpack.c.b16 %v413, %v412
  %v426 = vpack.c.b16 %v415, %v414
  %v427 = vpack.c.b16 %v417, %v416
  %v428 = vpack.c.b16 %v419, %v418
  %v429 = vpack.c.b16 %v421, %v420
  %438 = vmatprep.subr.bf16.mxu0 0
  %439 = vmatpush1.bf16.msra.mxu0 %v429
  %440 = vmatprep.subr.bf16.mxu0 0
  %441 = vmatpush1.bf16.msra.mxu0 %v428
  %442 = vmatprep.subr.bf16.mxu0 0
  %443 = vmatpush1.bf16.msra.mxu0 %v427
  %444 = vmatprep.subr.bf16.mxu0 0
  %445 = vmatpush1.bf16.msra.mxu0 %v426
  %446 = vmatprep.subr.bf16.mxu0 0
  %447 = vmatpush1.bf16.msra.mxu0 %v425
  %448 = vmatprep.subr.bf16.mxu0 0
  %449 = vmatpush1.bf16.msra.mxu0 %v424
  %450 = vmatprep.subr.bf16.mxu0 0
  %451 = vmatpush1.bf16.msra.mxu0 %v423
  %452 = vmatprep.subr.bf16.mxu0 0
  %453 = vmatpush1.bf16.msra.mxu0 %v422
  %454 = vmatprep.subr.bf16.mxu0 0
  %455 = vmatpush2.bf16.msra.mxu0 0
  %456 = vmatprep.subr.bf16.mxu0 0
  %457 = vmatpush2.bf16.msra.mxu0 0
  %458 = vmatprep.subr.bf16.mxu0 0
  %459 = vmatpush2.bf16.msra.mxu0 0
  %460 = vmatprep.subr.bf16.mxu0 0
  %461 = vmatpush2.bf16.msra.mxu0 0
  %462 = vmatprep.subr.bf16.mxu0 0
  %463 = vmatpush2.bf16.msra.mxu0 0
  %464 = vmatprep.subr.bf16.mxu0 0
  %465 = vmatpush2.bf16.msra.mxu0 0
  %466 = vmatprep.subr.bf16.mxu0 0
  %467 = vmatpush2.bf16.msra.mxu0 0
  %468 = vmatprep.subr.bf16.mxu0 0
  %469 = vmatpush2.bf16.msra.mxu0 0
  %470 = vmatprep.mubr.bf16.mxu0 0
  %471 = vmatmul.mubr.bf16.gmra.mxu0 %v388
  %v472 = vpop.f32.mrf.mxu0
  %v473 = vadd.f32 0.0, %v472
  %v474 = vpop.f32.mrf.mxu0
  %v475 = vpop.f32.mrf.mxu0
  %v476 = vadd.f32 0.0, %v475
  %v477 = vpop.f32.mrf.mxu0
  %478 = vdwg.mxu0
  %s479 = smul.u32 0, 128
  %s480 = sshra.s32 %s479, 7
  %s481 = sand.u32 %s479, 127
  %s482 = scalar_lea.vmem [#allocation2], %s480
  %483 = vst [vmem:[%s482] sm:$0xff] %v188
  %484 = vst [vmem:[%s482 + $0x8] sm:$0xff] %v191
  %485 = vst [vmem:[%s482 + $0x10] sm:$0xff] %v283
  %486 = vst [vmem:[%s482 + $0x18] sm:$0xff] %v286
  %487 = vst [vmem:[%s482 + $0x20] sm:$0xff] %v378
  %488 = vst [vmem:[%s482 + $0x28] sm:$0xff] %v381
  %489 = vst [vmem:[%s482 + $0x30] sm:$0xff] %v473
  %490 = vst [vmem:[%s482 + $0x38] sm:$0xff] %v476
  %v491 = vld [vmem:[#allocation3] sm:$0xff]
  %v492 = vld [vmem:[#allocation3 + $0x8] sm:$0xff]
  %493 = vadd.xlane.f32.xlu0 %v188
  %v494 = vpop.xlane.xlu0 %493
  %495 = vadd.xlane.f32.xlu0 %v191
  %v496 = vpop.xlane.xlu0 %495
  %497 = vadd.xlane.f32.xlu0 %v283
  %v498 = vpop.xlane.xlu0 %497
  %499 = vadd.xlane.f32.xlu0 %v286
  %v500 = vpop.xlane.xlu0 %499
  %501 = vadd.xlane.f32.xlu0 %v378
  %v502 = vpop.xlane.xlu0 %501
  %503 = vadd.xlane.f32.xlu0 %v381
  %v504 = vpop.xlane.xlu0 %503
  %505 = vadd.xlane.f32.xlu0 %v473
  %v506 = vpop.xlane.xlu0 %505
  %507 = vadd.xlane.f32.xlu0 %v476
  %v508 = vpop.xlane.xlu0 %507
  %v509 = vadd.f32 %v494, %v498
  %v510 = vadd.f32 %v509, %v502
  %v511 = vadd.f32 %v510, %v506
  %v512 = vadd.f32 %v496, %v500
  %v513 = vadd.f32 %v512, %v504
  %v514 = vadd.f32 %v513, %v508
  %v515 = vadd.f32 %v491, %v511
  %v516 = vadd.f32 %v492, %v514
  %vm517 = vcmask 7168
  %518 = vst.msk [vmem:[#allocation3] sm:$0xff] %vm517, %v515
  %519 = vst.msk [vmem:[#allocation3 + $0x8] sm:$0xff] %vm517, %v516
  %v520 = vld [vmem:[#allocation4] sm:$0xff]
  %v521 = vld [vmem:[#allocation4 + $0x8] sm:$0xff]
  %v522 = vmul.f32 %v188, %v188
  %v523 = vmul.f32 %v191, %v191
  %v524 = vmul.f32 %v283, %v283
  %v525 = vmul.f32 %v286, %v286
  %v526 = vmul.f32 %v378, %v378
  %v527 = vmul.f32 %v381, %v381
  %v528 = vmul.f32 %v473, %v473
  %v529 = vmul.f32 %v476, %v476
  %530 = vadd.xlane.f32.xlu0 %v522
  %v531 = vpop.xlane.xlu0 %530
  %532 = vadd.xlane.f32.xlu0 %v523
  %v533 = vpop.xlane.xlu0 %532
  %534 = vadd.xlane.f32.xlu0 %v524
  %v535 = vpop.xlane.xlu0 %534
  %536 = vadd.xlane.f32.xlu0 %v525
  %v537 = vpop.xlane.xlu0 %536
  %538 = vadd.xlane.f32.xlu0 %v526
  %v539 = vpop.xlane.xlu0 %538
  %540 = vadd.xlane.f32.xlu0 %v527
  %v541 = vpop.xlane.xlu0 %540
  %542 = vadd.xlane.f32.xlu0 %v528
  %v543 = vpop.xlane.xlu0 %542
  %544 = vadd.xlane.f32.xlu0 %v529
  %v545 = vpop.xlane.xlu0 %544
  %v546 = vadd.f32 %v531, %v535
  %v547 = vadd.f32 %v546, %v539
  %v548 = vadd.f32 %v547, %v543
  %v549 = vadd.f32 %v533, %v537
  %v550 = vadd.f32 %v549, %v541
  %v551 = vadd.f32 %v550, %v545
  %v552 = vadd.f32 %v520, %v548
  %v553 = vadd.f32 %v521, %v551
  %554 = vst.msk [vmem:[#allocation4] sm:$0xff] %vm517, %v552
  %555 = vst.msk [vmem:[#allocation4 + $0x8] sm:$0xff] %vm517, %v553
  // Predicated region
  $region22: #{_lambda_.7} parent=0 // pred_check
    %p556 = pneg %p18
  $region23: #{_lambda_.7} parent=0 // pred_check_branch
    %558 = sbr.rel (%p556) target = $region25
  $region24: #{_lambda_.7} parent=0 // pred_region
    %v559 = vld [vmem:[#allocation3] sm:$0xff]
    %v560 = vld [vmem:[#allocation3 + $0x8] sm:$0xff]
    %v561 = vmul.f32 %v559, 0.0020833334
    %v562 = vmul.f32 %v560, 0.0020833334
    %v563 = vld [vmem:[#allocation4] sm:$0xff]
    %v564 = vld [vmem:[#allocation4 + $0x8] sm:$0xff]
    %v565 = vmul.f32 %v563, 0.0020833334
    %v566 = vmul.f32 %v564, 0.0020833334
    %v567 = vmul.f32 %v561, %v561
    %v568 = vmul.f32 %v562, %v562
    %v569 = vsub.f32 %v565, %v567
    %v570 = vsub.f32 %v566, %v568
    %v571 = vmax.f32 %v569, 0.0
    %v572 = vmax.f32 %v570, 0.0
    %v573 = vld [vmem:[%s2] sm:$0xff]
    %v574 = vld [vmem:[%s2 + $0x8] sm:$0xff]
    %v575 = vadd.f32 %v571, 1e-05
    %v576 = vadd.f32 %v572, 1e-05
    %v577 = vrsqrt.pop %v575
    %v578 = vrsqrt.pop %v576
    %v579 = vmul.f32 %v573, %v577
    %v580 = vmul.f32 %v574, %v578
    %v581 = vld [vmem:[%s3] sm:$0xff]
    %v582 = vld [vmem:[%s3 + $0x8] sm:$0xff]
    %v583 = vmul.f32 %v561, %v579
    %v584 = vmul.f32 %v562, %v580
    %v585 = vsub.f32 %v581, %v583
    %v586 = vsub.f32 %v582, %v584
    %v587 = vld [vmem:[#allocation2] sm:$0xff]
    %v588 = vld [vmem:[#allocation2 + $0x8] sm:$0xff]
    %v589 = vld [vmem:[#allocation2 + $0x10] sm:$0xff]
    %v590 = vld [vmem:[#allocation2 + $0x18] sm:$0xff]
    %v591 = vld [vmem:[#allocation2 + $0x20] sm:$0xff]
    %v592 = vld [vmem:[#allocation2 + $0x28] sm:$0xff]
    %v593 = vld [vmem:[#allocation2 + $0x30] sm:$0xff]
    %v594 = vld [vmem:[#allocation2 + $0x38] sm:$0xff]
    %596 = vset.pattern.permute.xlu0 0
    %597 = vperm.xlu0 %596, %v579
    %v598 = vpop.permute.xlu0 %597
    %601 = vset.pattern.permute.xlu0 0
    %602 = vperm.xlu0 %601, %v580
    %v603 = vpop.permute.xlu0 %602
    %v605 = vmul.f32 %v587, %v598
    %v606 = vmul.f32 %v588, %v603
    %v607 = vmul.f32 %v589, %v598
    %v608 = vmul.f32 %v590, %v603
    %v609 = vmul.f32 %v591, %v598
    %v610 = vmul.f32 %v592, %v603
    %v611 = vmul.f32 %v593, %v598
    %v612 = vmul.f32 %v594, %v603
    %614 = vset.pattern.permute.xlu0 0
    %615 = vperm.xlu0 %614, %v585
    %v616 = vpop.permute.xlu0 %615
    %619 = vset.pattern.permute.xlu0 0
    %620 = vperm.xlu0 %619, %v586
    %v621 = vpop.permute.xlu0 %620
    %v623 = vadd.f32 %v605, %v616
    %v624 = vadd.f32 %v606, %v621
    %v625 = vadd.f32 %v607, %v616
    %v626 = vadd.f32 %v608, %v621
    %v627 = vadd.f32 %v609, %v616
    %v628 = vadd.f32 %v610, %v621
    %v629 = vadd.f32 %v611, %v616
    %v630 = vadd.f32 %v612, %v621
    %v631 = vmax.f32 %v623, 0.0
    %v632 = vmax.f32 %v624, 0.0
    %v633 = vmax.f32 %v625, 0.0
    %v634 = vmax.f32 %v626, 0.0
    %v635 = vmax.f32 %v627, 0.0
    %v636 = vmax.f32 %v628, 0.0
    %v637 = vmax.f32 %v629, 0.0
    %v638 = vmax.f32 %v630, 0.0
    %v639 = vpack.c.bf16 %v632, %v631
    %v640 = vpack.c.bf16 %v634, %v633
    %v641 = vpack.c.bf16 %v636, %v635
    %v642 = vpack.c.bf16 %v638, %v637
    %v647 = vunpack.c.l.b16 %v639
    %v648 = vunpack.c.h.b16 %v639
    %v649 = vunpack.c.l.b16 %v640
    %v650 = vunpack.c.h.b16 %v640
    %v651 = vunpack.c.l.b16 %v641
    %v652 = vunpack.c.h.b16 %v641
    %v653 = vunpack.c.l.b16 %v642
    %v654 = vunpack.c.h.b16 %v642
    %v655 = vpack.c.b16 %v647, %v647
    %v656 = vpack.c.b16 %v648, %v648
    %v657 = vpack.c.b16 %v649, %v649
    %v658 = vpack.c.b16 %v650, %v650
    %v659 = vpack.c.b16 %v651, %v651
    %v660 = vpack.c.b16 %v652, %v652
    %v661 = vpack.c.b16 %v653, %v653
    %v662 = vpack.c.b16 %v654, %v654
    %671 = vst [vmem:[%s4] sm:$0xf] %v655
    %672 = vst [vmem:[%s4 + $0x4] sm:$0xf] %v656
    %673 = vst [vmem:[%s4 + $0x8] sm:$0xf] %v657
    %674 = vst [vmem:[%s4 + $0xc] sm:$0xf] %v658
    %675 = vst [vmem:[%s4 + $0x10] sm:$0xf] %v659
    %676 = vst [vmem:[%s4 + $0x14] sm:$0xf] %v660
    %677 = vst [vmem:[%s4 + $0x18] sm:$0xf] %v661
    %678 = vst [vmem:[%s4 + $0x1c] sm:$0xf] %v662
  $region25: #{_lambda_.7} parent=0 // pred_fallthru
    _
  // Predicated region
  $region26: #{_lambda_.7} parent=0 // pred_check
    _
  $region27: #{_lambda_.7} parent=0 // pred_check_branch
    %680 = sbr.rel (0) target = $region29
  $region28: #{_lambda_.7} parent=0 // pred_region
    _
  $region29: #{_lambda_.7} parent=0 // pred_fallthru
    _
  // Predicated region
  $region30: #{_lambda_.7} parent=0 // pred_check
    _
  $region31: #{_lambda_.7} parent=0 // pred_check_branch
    %682 = sbr.rel (0) target = $region33
  $region32: #{_lambda_.7} parent=0 // pred_region
    _
  $region33: #{_lambda_.7} parent=0 // pred_fallthru
    _

// kernel: _lambda_.8
$region0: #{_lambda_.8}
  #allocation0 [shape = 'u32[]', space=smem, size = 0x4, offset = 0x4, fixed_abs, tag = 'smem constant byte address 0x4 - core index']
  #allocation1 [shape = 'u32[144,128]{1,0:T(1,128)}', space=vmem, size = 0x12000, scoped, tag = 'internal scratch']
  #allocation2 [shape = 'f32[4,16,512]{2,1,0:T(8,128)}', space=vmem, size = 0x20000, scoped, tag = 'scratch operand']
  #allocation3 [shape = 'f32[16,1]{1,0:T(8,128)}', space=vmem, size = 0x2000, scoped, tag = 'scratch operand']
  #allocation4 [shape = 'f32[16,1]{1,0:T(8,128)}', space=vmem, size = 0x2000, scoped, tag = 'scratch operand']
  %s0 = inlined_call_operand.vmem [shape: bf16[4,16,64], index: 0, kind: input, shape index: {}]
  %s1 = inlined_call_operand.vmem [shape: bf16[4,64,512], index: 1, kind: input, shape index: {}]
  %s2 = inlined_call_operand.vmem [shape: f32[16,1], index: 2, kind: input, shape index: {}]
  %s3 = inlined_call_operand.vmem [shape: f32[16,1], index: 3, kind: input, shape index: {}]
  %s4 = inlined_call_operand.vmem [shape: bf16[4,16,512], index: 4, kind: output, shape index: {}]
  %s5 = sld [smem:[#allocation0]]
  $region34: #{_lambda_.8} parent=0
    _
  %s7 = ssub.s32 1, %s5
  %s8 = scalar_select 0, %s7, %s5
  // Predicated region
  $region2: #{_lambda_.8} parent=0 // pred_check
    _
  $region3: #{_lambda_.8} parent=0 // pred_check_branch
    %10 = sbr.rel (0) target = $region5
  $region4: #{_lambda_.8} parent=0 // pred_region
    _
  $region5: #{_lambda_.8} parent=0 // pred_fallthru
    _
  // Predicated region
  $region6: #{_lambda_.8} parent=0 // pred_check
    _
  $region7: #{_lambda_.8} parent=0 // pred_check_branch
    %12 = sbr.rel (0) target = $region9
  $region8: #{_lambda_.8} parent=0 // pred_region
    _
  $region9: #{_lambda_.8} parent=0 // pred_fallthru
    _
  // Predicated region
  $region10: #{_lambda_.8} parent=0 // pred_check
    _
  $region11: #{_lambda_.8} parent=0 // pred_check_branch
    %14 = sbr.rel (0) target = $region13
  $region12: #{_lambda_.8} parent=0 // pred_region
    _
  $region13: #{_lambda_.8} parent=0 // pred_fallthru
    _
  // Predicated region
  $region14: #{_lambda_.8} parent=0 // pred_check
    _
  $region15: #{_lambda_.8} parent=0 // pred_check_branch
    %16 = sbr.rel (0) target = $region17
  $region16: #{_lambda_.8} parent=0 // pred_region
    _
  $region17: #{_lambda_.8} parent=0 // pred_fallthru
    _
  %p18 = scmp.eq.s32.totalorder 0, 0
  // Predicated region
  $region18: #{_lambda_.8} parent=0 // pred_check
    %p19 = pneg %p18
  $region19: #{_lambda_.8} parent=0 // pred_check_branch
    %21 = sbr.rel (%p19) target = $region21
  $region20: #{_lambda_.8} parent=0 // pred_region
    %vm22 = vcmask 7168
    %23 = vst.msk [vmem:[#allocation3] sm:$0xff] %vm22, 0.0
    %24 = vst.msk [vmem:[#allocation3 + $0x8] sm:$0xff] %vm22, 0.0
    %25 = vst.msk [vmem:[#allocation4] sm:$0xff] %vm22, 0.0
    %26 = vst.msk [vmem:[#allocation4 + $0x8] sm:$0xff] %vm22, 0.0
  $region21: #{_lambda_.8} parent=0 // pred_fallthru
    _
  %v27 = vld [vmem:[%s0] sm:$0xf]
  %v28 = vld [vmem:[%s0 + $0x4] sm:$0xf]
  %v29 = vld [vmem:[%s0 + $0x8] sm:$0xf]
  %v30 = vld [vmem:[%s0 + $0xc] sm:$0xf]
  %v31 = vld [vmem:[%s0 + $0x10] sm:$0xf]
  %v32 = vld [vmem:[%s0 + $0x14] sm:$0xf]
  %v33 = vld [vmem:[%s0 + $0x18] sm:$0xf]
  %v34 = vld [vmem:[%s0 + $0x1c] sm:$0xf]
  %v35 = vld [vmem:[%s1] sm:$0xff]
  %v36 = vld [vmem:[%s1 + $0x8] sm:$0xff]
  %v37 = vld [vmem:[%s1 + $0x10] sm:$0xff]
  %v38 = vld [vmem:[%s1 + $0x18] sm:$0xff]
  %v39 = vld [vmem:[%s1 + $0x20] sm:$0xff]
  %v40 = vld [vmem:[%s1 + $0x28] sm:$0xff]
  %v41 = vld [vmem:[%s1 + $0x30] sm:$0xff]
  %v42 = vld [vmem:[%s1 + $0x38] sm:$0xff]
  %v43 = vld [vmem:[%s1 + $0x40] sm:$0xff]
  %v44 = vld [vmem:[%s1 + $0x48] sm:$0xff]
  %v45 = vld [vmem:[%s1 + $0x50] sm:$0xff]
  %v46 = vld [vmem:[%s1 + $0x58] sm:$0xff]
  %v47 = vld [vmem:[%s1 + $0x60] sm:$0xff]
  %v48 = vld [vmem:[%s1 + $0x68] sm:$0xff]
  %v49 = vld [vmem:[%s1 + $0x70] sm:$0xff]
  %v50 = vld [vmem:[%s1 + $0x78] sm:$0xff]
  %v51 = vld [vmem:[%s1 + $0x80] sm:$0xff]
  %v52 = vld [vmem:[%s1 + $0x88] sm:$0xff]
  %v53 = vld [vmem:[%s1 + $0x90] sm:$0xff]
  %v54 = vld [vmem:[%s1 + $0x98] sm:$0xff]
  %v55 = vld [vmem:[%s1 + $0xa0] sm:$0xff]
  %v56 = vld [vmem:[%s1 + $0xa8] sm:$0xff]
  %v57 = vld [vmem:[%s1 + $0xb0] sm:$0xff]
  %v58 = vld [vmem:[%s1 + $0xb8] sm:$0xff]
  %v59 = vld [vmem:[%s1 + $0xc0] sm:$0xff]
  %v60 = vld [vmem:[%s1 + $0xc8] sm:$0xff]
  %v61 = vld [vmem:[%s1 + $0xd0] sm:$0xff]
  %v62 = vld [vmem:[%s1 + $0xd8] sm:$0xff]
  %v63 = vld [vmem:[%s1 + $0xe0] sm:$0xff]
  %v64 = vld [vmem:[%s1 + $0xe8] sm:$0xff]
  %v65 = vld [vmem:[%s1 + $0xf0] sm:$0xff]
  %v66 = vld [vmem:[%s1 + $0xf8] sm:$0xff]
  %v67 = vld [vmem:[%s1 + $0x100] sm:$0xff]
  %v68 = vld [vmem:[%s1 + $0x108] sm:$0xff]
  %v69 = vld [vmem:[%s1 + $0x110] sm:$0xff]
  %v70 = vld [vmem:[%s1 + $0x118] sm:$0xff]
  %v71 = vld [vmem:[%s1 + $0x120] sm:$0xff]
  %v72 = vld [vmem:[%s1 + $0x128] sm:$0xff]
  %v73 = vld [vmem:[%s1 + $0x130] sm:$0xff]
  %v74 = vld [vmem:[%s1 + $0x138] sm:$0xff]
  %v75 = vld [vmem:[%s1 + $0x140] sm:$0xff]
  %v76 = vld [vmem:[%s1 + $0x148] sm:$0xff]
  %v77 = vld [vmem:[%s1 + $0x150] sm:$0xff]
  %v78 = vld [vmem:[%s1 + $0x158] sm:$0xff]
  %v79 = vld [vmem:[%s1 + $0x160] sm:$0xff]
  %v80 = vld [vmem:[%s1 + $0x168] sm:$0xff]
  %v81 = vld [vmem:[%s1 + $0x170] sm:$0xff]
  %v82 = vld [vmem:[%s1 + $0x178] sm:$0xff]
  %v83 = vld [vmem:[%s1 + $0x180] sm:$0xff]
  %v84 = vld [vmem:[%s1 + $0x188] sm:$0xff]
  %v85 = vld [vmem:[%s1 + $0x190] sm:$0xff]
  %v86 = vld [vmem:[%s1 + $0x198] sm:$0xff]
  %v87 = vld [vmem:[%s1 + $0x1a0] sm:$0xff]
  %v88 = vld [vmem:[%s1 + $0x1a8] sm:$0xff]
  %v89 = vld [vmem:[%s1 + $0x1b0] sm:$0xff]
  %v90 = vld [vmem:[%s1 + $0x1b8] sm:$0xff]
  %v91 = vld [vmem:[%s1 + $0x1c0] sm:$0xff]
  %v92 = vld [vmem:[%s1 + $0x1c8] sm:$0xff]
  %v93 = vld [vmem:[%s1 + $0x1d0] sm:$0xff]
  %v94 = vld [vmem:[%s1 + $0x1d8] sm:$0xff]
  %v95 = vld [vmem:[%s1 + $0x1e0] sm:$0xff]
  %v96 = vld [vmem:[%s1 + $0x1e8] sm:$0xff]
  %v97 = vld [vmem:[%s1 + $0x1f0] sm:$0xff]
  %v98 = vld [vmem:[%s1 + $0x1f8] sm:$0xff]
  %v101 = vunpack.c.l.b16 %v27
  %v102 = vunpack.c.l.b16 %v28
  %v103 = vpack.c.b16 %v102, %v101
  %v120 = vunpack.c.l.b16 %v35
  %v121 = vunpack.c.h.b16 %v35
  %v122 = vunpack.c.l.b16 %v36
  %v123 = vunpack.c.h.b16 %v36
  %v124 = vunpack.c.l.b16 %v37
  %v125 = vunpack.c.h.b16 %v37
  %v126 = vunpack.c.l.b16 %v38
  %v127 = vunpack.c.h.b16 %v38
  %v128 = vunpack.c.l.b16 %v39
  %v129 = vunpack.c.h.b16 %v39
  %v130 = vunpack.c.l.b16 %v40
  %v131 = vunpack.c.h.b16 %v40
  %v132 = vunpack.c.l.b16 %v41
  %v133 = vunpack.c.h.b16 %v41
  %v134 = vunpack.c.l.b16 %v42
  %v135 = vunpack.c.h.b16 %v42
  %v136 = vunpack.c.l.b16 %v43
  %v137 = vunpack.c.h.b16 %v43
  %v138 = vunpack.c.l.b16 %v44
  %v139 = vunpack.c.h.b16 %v44
  %v140 = vunpack.c.l.b16 %v45
  %v141 = vunpack.c.h.b16 %v45
  %v142 = vunpack.c.l.b16 %v46
  %v143 = vunpack.c.h.b16 %v46
  %v144 = vunpack.c.l.b16 %v47
  %v145 = vunpack.c.h.b16 %v47
  %v146 = vunpack.c.l.b16 %v48
  %v147 = vunpack.c.h.b16 %v48
  %v148 = vunpack.c.l.b16 %v49
  %v149 = vunpack.c.h.b16 %v49
  %v150 = vunpack.c.l.b16 %v50
  %v151 = vunpack.c.h.b16 %v50
  %v152 = vpack.c.b16 %v124, %v120
  %v153 = vpack.c.b16 %v125, %v121
  %v154 = vpack.c.b16 %v126, %v122
  %v155 = vpack.c.b16 %v127, %v123
  %v156 = vpack.c.b16 %v132, %v128
  %v157 = vpack.c.b16 %v133, %v129
  %v158 = vpack.c.b16 %v134, %v130
  %v159 = vpack.c.b16 %v135, %v131
  %v160 = vpack.c.b16 %v140, %v136
  %v161 = vpack.c.b16 %v141, %v137
  %v162 = vpack.c.b16 %v142, %v138
  %v163 = vpack.c.b16 %v143, %v139
  %v164 = vpack.c.b16 %v148, %v144
  %v165 = vpack.c.b16 %v149, %v145
  %v166 = vpack.c.b16 %v150, %v146
  %v167 = vpack.c.b16 %v151, %v147
  %vm184 = vcmask 523264
  %v186 = vsel %vm184, %v103, 0
  %188 = vmatprep.subr.bf16.mxu0 0
  %189 = vmatpush1.bf16.msra.mxu0 0
  %190 = vmatprep.subr.bf16.mxu0 0
  %191 = vmatpush1.bf16.msra.mxu0 0
  %192 = vmatprep.subr.bf16.mxu0 0
  %193 = vmatpush1.bf16.msra.mxu0 0
  %194 = vmatprep.subr.bf16.mxu0 0
  %195 = vmatpush1.bf16.msra.mxu0 0
  %196 = vmatprep.subr.bf16.mxu0 %v165
  %197 = vmatpush1.bf16.msra.mxu0 %v164
  %198 = vmatprep.subr.bf16.mxu0 %v161
  %199 = vmatpush1.bf16.msra.mxu0 %v160
  %200 = vmatprep.subr.bf16.mxu0 %v157
  %201 = vmatpush1.bf16.msra.mxu0 %v156
  %202 = vmatprep.subr.bf16.mxu0 %v153
  %203 = vmatpush1.bf16.msra.mxu0 %v152
  %204 = vmatprep.subr.bf16.mxu0 0
  %205 = vmatpush2.bf16.msra.mxu0 0
  %206 = vmatprep.subr.bf16.mxu0 0
  %207 = vmatpush2.bf16.msra.mxu0 0
  %208 = vmatprep.subr.bf16.mxu0 0
  %209 = vmatpush2.bf16.msra.mxu0 0
  %210 = vmatprep.subr.bf16.mxu0 0
  %211 = vmatpush2.bf16.msra.mxu0 0
  %212 = vmatprep.subr.bf16.mxu0 0
  %213 = vmatpush2.bf16.msra.mxu0 0
  %214 = vmatprep.subr.bf16.mxu0 0
  %215 = vmatpush2.bf16.msra.mxu0 0
  %216 = vmatprep.subr.bf16.mxu0 0
  %217 = vmatpush2.bf16.msra.mxu0 0
  %218 = vmatprep.subr.bf16.mxu0 0
  %219 = vmatpush2.bf16.msra.mxu0 0
  %220 = vmatprep.mubr.bf16.mxu0 0
  %221 = vmatmul.mubr.bf16.gmra.mxu0 %v186
  %v222 = vpop.f32.mrf.mxu0
  %v223 = vadd.f32 0.0, %v222
  %v224 = vpop.f32.mrf.mxu0
  %v225 = vadd.f32 0.0, %v224
  %v226 = vpop.f32.mrf.mxu0
  %v227 = vadd.f32 0.0, %v226
  %v228 = vpop.f32.mrf.mxu0
  %v229 = vadd.f32 0.0, %v228
  %230 = vdwg.mxu0
  %231 = vmatprep.subr.bf16.mxu0 0
  %232 = vmatpush1.bf16.msra.mxu0 0
  %233 = vmatprep.subr.bf16.mxu0 0
  %234 = vmatpush1.bf16.msra.mxu0 0
  %235 = vmatprep.subr.bf16.mxu0 0
  %236 = vmatpush1.bf16.msra.mxu0 0
  %237 = vmatprep.subr.bf16.mxu0 0
  %238 = vmatpush1.bf16.msra.mxu0 0
  %239 = vmatprep.subr.bf16.mxu0 %v167
  %240 = vmatpush1.bf16.msra.mxu0 %v166
  %241 = vmatprep.subr.bf16.mxu0 %v163
  %242 = vmatpush1.bf16.msra.mxu0 %v162
  %243 = vmatprep.subr.bf16.mxu0 %v159
  %244 = vmatpush1.bf16.msra.mxu0 %v158
  %245 = vmatprep.subr.bf16.mxu0 %v155
  %246 = vmatpush1.bf16.msra.mxu0 %v154
  %247 = vmatprep.subr.bf16.mxu0 0
  %248 = vmatpush2.bf16.msra.mxu0 0
  %249 = vmatprep.subr.bf16.mxu0 0
  %250 = vmatpush2.bf16.msra.mxu0 0
  %251 = vmatprep.subr.bf16.mxu0 0
  %252 = vmatpush2.bf16.msra.mxu0 0
  %253 = vmatprep.subr.bf16.mxu0 0
  %254 = vmatpush2.bf16.msra.mxu0 0
  %255 = vmatprep.subr.bf16.mxu0 0
  %256 = vmatpush2.bf16.msra.mxu0 0
  %257 = vmatprep.subr.bf16.mxu0 0
  %258 = vmatpush2.bf16.msra.mxu0 0
  %259 = vmatprep.subr.bf16.mxu0 0
  %260 = vmatpush2.bf16.msra.mxu0 0
  %261 = vmatprep.subr.bf16.mxu0 0
  %262 = vmatpush2.bf16.msra.mxu0 0
  %263 = vmatprep.mubr.bf16.mxu0 0
  %264 = vmatmul.mubr.bf16.gmra.mxu0 %v186
  %v265 = vpop.f32.mrf.mxu0
  %v266 = vadd.f32 0.0, %v265
  %v267 = vpop.f32.mrf.mxu0
  %v268 = vadd.f32 0.0, %v267
  %v269 = vpop.f32.mrf.mxu0
  %v270 = vadd.f32 0.0, %v269
  %v271 = vpop.f32.mrf.mxu0
  %v272 = vadd.f32 0.0, %v271
  %273 = vdwg.mxu0
  %v276 = vunpack.c.l.b16 %v29
  %v277 = vunpack.c.l.b16 %v30
  %v278 = vpack.c.b16 %v277, %v276
  %v295 = vunpack.c.l.b16 %v51
  %v296 = vunpack.c.h.b16 %v51
  %v297 = vunpack.c.l.b16 %v52
  %v298 = vunpack.c.h.b16 %v52
  %v299 = vunpack.c.l.b16 %v53
  %v300 = vunpack.c.h.b16 %v53
  %v301 = vunpack.c.l.b16 %v54
  %v302 = vunpack.c.h.b16 %v54
  %v303 = vunpack.c.l.b16 %v55
  %v304 = vunpack.c.h.b16 %v55
  %v305 = vunpack.c.l.b16 %v56
  %v306 = vunpack.c.h.b16 %v56
  %v307 = vunpack.c.l.b16 %v57
  %v308 = vunpack.c.h.b16 %v57
  %v309 = vunpack.c.l.b16 %v58
  %v310 = vunpack.c.h.b16 %v58
  %v311 = vunpack.c.l.b16 %v59
  %v312 = vunpack.c.h.b16 %v59
  %v313 = vunpack.c.l.b16 %v60
  %v314 = vunpack.c.h.b16 %v60
  %v315 = vunpack.c.l.b16 %v61
  %v316 = vunpack.c.h.b16 %v61
  %v317 = vunpack.c.l.b16 %v62
  %v318 = vunpack.c.h.b16 %v62
  %v319 = vunpack.c.l.b16 %v63
  %v320 = vunpack.c.h.b16 %v63
  %v321 = vunpack.c.l.b16 %v64
  %v322 = vunpack.c.h.b16 %v64
  %v323 = vunpack.c.l.b16 %v65
  %v324 = vunpack.c.h.b16 %v65
  %v325 = vunpack.c.l.b16 %v66
  %v326 = vunpack.c.h.b16 %v66
  %v327 = vpack.c.b16 %v299, %v295
  %v328 = vpack.c.b16 %v300, %v296
  %v329 = vpack.c.b16 %v301, %v297
  %v330 = vpack.c.b16 %v302, %v298
  %v331 = vpack.c.b16 %v307, %v303
  %v332 = vpack.c.b16 %v308, %v304
  %v333 = vpack.c.b16 %v309, %v305
  %v334 = vpack.c.b16 %v310, %v306
  %v335 = vpack.c.b16 %v315, %v311
  %v336 = vpack.c.b16 %v316, %v312
  %v337 = vpack.c.b16 %v317, %v313
  %v338 = vpack.c.b16 %v318, %v314
  %v339 = vpack.c.b16 %v323, %v319
  %v340 = vpack.c.b16 %v324, %v320
  %v341 = vpack.c.b16 %v325, %v321
  %v342 = vpack.c.b16 %v326, %v322
  %v360 = vsel %vm184, %v278, 0
  %362 = vmatprep.subr.bf16.mxu0 0
  %363 = vmatpush1.bf16.msra.mxu0 0
  %364 = vmatprep.subr.bf16.mxu0 0
  %365 = vmatpush1.bf16.msra.mxu0 0
  %366 = vmatprep.subr.bf16.mxu0 0
  %367 = vmatpush1.bf16.msra.mxu0 0
  %368 = vmatprep.subr.bf16.mxu0 0
  %369 = vmatpush1.bf16.msra.mxu0 0
  %370 = vmatprep.subr.bf16.mxu0 %v340
  %371 = vmatpush1.bf16.msra.mxu0 %v339
  %372 = vmatprep.subr.bf16.mxu0 %v336
  %373 = vmatpush1.bf16.msra.mxu0 %v335
  %374 = vmatprep.subr.bf16.mxu0 %v332
  %375 = vmatpush1.bf16.msra.mxu0 %v331
  %376 = vmatprep.subr.bf16.mxu0 %v328
  %377 = vmatpush1.bf16.msra.mxu0 %v327
  %378 = vmatprep.subr.bf16.mxu0 0
  %379 = vmatpush2.bf16.msra.mxu0 0
  %380 = vmatprep.subr.bf16.mxu0 0
  %381 = vmatpush2.bf16.msra.mxu0 0
  %382 = vmatprep.subr.bf16.mxu0 0
  %383 = vmatpush2.bf16.msra.mxu0 0
  %384 = vmatprep.subr.bf16.mxu0 0
  %385 = vmatpush2.bf16.msra.mxu0 0
  %386 = vmatprep.subr.bf16.mxu0 0
  %387 = vmatpush2.bf16.msra.mxu0 0
  %388 = vmatprep.subr.bf16.mxu0 0
  %389 = vmatpush2.bf16.msra.mxu0 0
  %390 = vmatprep.subr.bf16.mxu0 0
  %391 = vmatpush2.bf16.msra.mxu0 0
  %392 = vmatprep.subr.bf16.mxu0 0
  %393 = vmatpush2.bf16.msra.mxu0 0
  %394 = vmatprep.mubr.bf16.mxu0 0
  %395 = vmatmul.mubr.bf16.gmra.mxu0 %v360
  %v396 = vpop.f32.mrf.mxu0
  %v397 = vadd.f32 0.0, %v396
  %v398 = vpop.f32.mrf.mxu0
  %v399 = vadd.f32 0.0, %v398
  %v400 = vpop.f32.mrf.mxu0
  %v401 = vadd.f32 0.0, %v400
  %v402 = vpop.f32.mrf.mxu0
  %v403 = vadd.f32 0.0, %v402
  %404 = vdwg.mxu0
  %405 = vmatprep.subr.bf16.mxu0 0
  %406 = vmatpush1.bf16.msra.mxu0 0
  %407 = vmatprep.subr.bf16.mxu0 0
  %408 = vmatpush1.bf16.msra.mxu0 0
  %409 = vmatprep.subr.bf16.mxu0 0
  %410 = vmatpush1.bf16.msra.mxu0 0
  %411 = vmatprep.subr.bf16.mxu0 0
  %412 = vmatpush1.bf16.msra.mxu0 0
  %413 = vmatprep.subr.bf16.mxu0 %v342
  %414 = vmatpush1.bf16.msra.mxu0 %v341
  %415 = vmatprep.subr.bf16.mxu0 %v338
  %416 = vmatpush1.bf16.msra.mxu0 %v337
  %417 = vmatprep.subr.bf16.mxu0 %v334
  %418 = vmatpush1.bf16.msra.mxu0 %v333
  %419 = vmatprep.subr.bf16.mxu0 %v330
  %420 = vmatpush1.bf16.msra.mxu0 %v329
  %421 = vmatprep.subr.bf16.mxu0 0
  %422 = vmatpush2.bf16.msra.mxu0 0
  %423 = vmatprep.subr.bf16.mxu0 0
  %424 = vmatpush2.bf16.msra.mxu0 0
  %425 = vmatprep.subr.bf16.mxu0 0
  %426 = vmatpush2.bf16.msra.mxu0 0
  %427 = vmatprep.subr.bf16.mxu0 0
  %428 = vmatpush2.bf16.msra.mxu0 0
  %429 = vmatprep.subr.bf16.mxu0 0
  %430 = vmatpush2.bf16.msra.mxu0 0
  %431 = vmatprep.subr.bf16.mxu0 0
  %432 = vmatpush2.bf16.msra.mxu0 0
  %433 = vmatprep.subr.bf16.mxu0 0
  %434 = vmatpush2.bf16.msra.mxu0 0
  %435 = vmatprep.subr.bf16.mxu0 0
  %436 = vmatpush2.bf16.msra.mxu0 0
  %437 = vmatprep.mubr.bf16.mxu0 0
  %438 = vmatmul.mubr.bf16.gmra.mxu0 %v360
  %v439 = vpop.f32.mrf.mxu0
  %v440 = vadd.f32 0.0, %v439
  %v441 = vpop.f32.mrf.mxu0
  %v442 = vadd.f32 0.0, %v441
  %v443 = vpop.f32.mrf.mxu0
  %v444 = vadd.f32 0.0, %v443
  %v445 = vpop.f32.mrf.mxu0
  %v446 = vadd.f32 0.0, %v445
  %447 = vdwg.mxu0
  %v450 = vunpack.c.l.b16 %v31
  %v451 = vunpack.c.l.b16 %v32
  %v452 = vpack.c.b16 %v451, %v450
  %v469 = vunpack.c.l.b16 %v67
  %v470 = vunpack.c.h.b16 %v67
  %v471 = vunpack.c.l.b16 %v68
  %v472 = vunpack.c.h.b16 %v68
  %v473 = vunpack.c.l.b16 %v69
  %v474 = vunpack.c.h.b16 %v69
  %v475 = vunpack.c.l.b16 %v70
  %v476 = vunpack.c.h.b16 %v70
  %v477 = vunpack.c.l.b16 %v71
  %v478 = vunpack.c.h.b16 %v71
  %v479 = vunpack.c.l.b16 %v72
  %v480 = vunpack.c.h.b16 %v72
  %v481 = vunpack.c.l.b16 %v73
  %v482 = vunpack.c.h.b16 %v73
  %v483 = vunpack.c.l.b16 %v74
  %v484 = vunpack.c.h.b16 %v74
  %v485 = vunpack.c.l.b16 %v75
  %v486 = vunpack.c.h.b16 %v75
  %v487 = vunpack.c.l.b16 %v76
  %v488 = vunpack.c.h.b16 %v76
  %v489 = vunpack.c.l.b16 %v77
  %v490 = vunpack.c.h.b16 %v77
  %v491 = vunpack.c.l.b16 %v78
  %v492 = vunpack.c.h.b16 %v78
  %v493 = vunpack.c.l.b16 %v79
  %v494 = vunpack.c.h.b16 %v79
  %v495 = vunpack.c.l.b16 %v80
  %v496 = vunpack.c.h.b16 %v80
  %v497 = vunpack.c.l.b16 %v81
  %v498 = vunpack.c.h.b16 %v81
  %v499 = vunpack.c.l.b16 %v82
  %v500 = vunpack.c.h.b16 %v82
  %v501 = vpack.c.b16 %v473, %v469
  %v502 = vpack.c.b16 %v474, %v470
  %v503 = vpack.c.b16 %v475, %v471
  %v504 = vpack.c.b16 %v476, %v472
  %v505 = vpack.c.b16 %v481, %v477
  %v506 = vpack.c.b16 %v482, %v478
  %v507 = vpack.c.b16 %v483, %v479
  %v508 = vpack.c.b16 %v484, %v480
  %v509 = vpack.c.b16 %v489, %v485
  %v510 = vpack.c.b16 %v490, %v486
  %v511 = vpack.c.b16 %v491, %v487
  %v512 = vpack.c.b16 %v492, %v488
  %v513 = vpack.c.b16 %v497, %v493
  %v514 = vpack.c.b16 %v498, %v494
  %v515 = vpack.c.b16 %v499, %v495
  %v516 = vpack.c.b16 %v500, %v496
  %v534 = vsel %vm184, %v452, 0
  %536 = vmatprep.subr.bf16.mxu0 0
  %537 = vmatpush1.bf16.msra.mxu0 0
  %538 = vmatprep.subr.bf16.mxu0 0
  %539 = vmatpush1.bf16.msra.mxu0 0
  %540 = vmatprep.subr.bf16.mxu0 0
  %541 = vmatpush1.bf16.msra.mxu0 0
  %542 = vmatprep.subr.bf16.mxu0 0
  %543 = vmatpush1.bf16.msra.mxu0 0
  %544 = vmatprep.subr.bf16.mxu0 %v514
  %545 = vmatpush1.bf16.msra.mxu0 %v513
  %546 = vmatprep.subr.bf16.mxu0 %v510
  %547 = vmatpush1.bf16.msra.mxu0 %v509
  %548 = vmatprep.subr.bf16.mxu0 %v506
  %549 = vmatpush1.bf16.msra.mxu0 %v505
  %550 = vmatprep.subr.bf16.mxu0 %v502
  %551 = vmatpush1.bf16.msra.mxu0 %v501
  %552 = vmatprep.subr.bf16.mxu0 0
  %553 = vmatpush2.bf16.msra.mxu0 0
  %554 = vmatprep.subr.bf16.mxu0 0
  %555 = vmatpush2.bf16.msra.mxu0 0
  %556 = vmatprep.subr.bf16.mxu0 0
  %557 = vmatpush2.bf16.msra.mxu0 0
  %558 = vmatprep.subr.bf16.mxu0 0
  %559 = vmatpush2.bf16.msra.mxu0 0
  %560 = vmatprep.subr.bf16.mxu0 0
  %561 = vmatpush2.bf16.msra.mxu0 0
  %562 = vmatprep.subr.bf16.mxu0 0
  %563 = vmatpush2.bf16.msra.mxu0 0
  %564 = vmatprep.subr.bf16.mxu0 0
  %565 = vmatpush2.bf16.msra.mxu0 0
  %566 = vmatprep.subr.bf16.mxu0 0
  %567 = vmatpush2.bf16.msra.mxu0 0
  %568 = vmatprep.mubr.bf16.mxu0 0
  %569 = vmatmul.mubr.bf16.gmra.mxu0 %v534
  %v570 = vpop.f32.mrf.mxu0
  %v571 = vadd.f32 0.0, %v570
  %v572 = vpop.f32.mrf.mxu0
  %v573 = vadd.f32 0.0, %v572
  %v574 = vpop.f32.mrf.mxu0
  %v575 = vadd.f32 0.0, %v574
  %v576 = vpop.f32.mrf.mxu0
  %v577 = vadd.f32 0.0, %v576
  %578 = vdwg.mxu0
  %579 = vmatprep.subr.bf16.mxu0 0
  %580 = vmatpush1.bf16.msra.mxu0 0
  %581 = vmatprep.subr.bf16.mxu0 0
  %582 = vmatpush1.bf16.msra.mxu0 0
  %583 = vmatprep.subr.bf16.mxu0 0
  %584 = vmatpush1.bf16.msra.mxu0 0
  %585 = vmatprep.subr.bf16.mxu0 0
  %586 = vmatpush1.bf16.msra.mxu0 0
  %587 = vmatprep.subr.bf16.mxu0 %v516
  %588 = vmatpush1.bf16.msra.mxu0 %v515
  %589 = vmatprep.subr.bf16.mxu0 %v512
  %590 = vmatpush1.bf16.msra.mxu0 %v511
  %591 = vmatprep.subr.bf16.mxu0 %v508
  %592 = vmatpush1.bf16.msra.mxu0 %v507
  %593 = vmatprep.subr.bf16.mxu0 %v504
  %594 = vmatpush1.bf16.msra.mxu0 %v503
  %595 = vmatprep.subr.bf16.mxu0 0
  %596 = vmatpush2.bf16.msra.mxu0 0
  %597 = vmatprep.subr.bf16.mxu0 0
  %598 = vmatpush2.bf16.msra.mxu0 0
  %599 = vmatprep.subr.bf16.mxu0 0
  %600 = vmatpush2.bf16.msra.mxu0 0
  %601 = vmatprep.subr.bf16.mxu0 0
  %602 = vmatpush2.bf16.msra.mxu0 0
  %603 = vmatprep.subr.bf16.mxu0 0
  %604 = vmatpush2.bf16.msra.mxu0 0
  %605 = vmatprep.subr.bf16.mxu0 0
  %606 = vmatpush2.bf16.msra.mxu0 0
  %607 = vmatprep.subr.bf16.mxu0 0
  %608 = vmatpush2.bf16.msra.mxu0 0
  %609 = vmatprep.subr.bf16.mxu0 0
  %610 = vmatpush2.bf16.msra.mxu0 0
  %611 = vmatprep.mubr.bf16.mxu0 0
  %612 = vmatmul.mubr.bf16.gmra.mxu0 %v534
  %v613 = vpop.f32.mrf.mxu0
  %v614 = vadd.f32 0.0, %v613
  %v615 = vpop.f32.mrf.mxu0
  %v616 = vadd.f32 0.0, %v615
  %v617 = vpop.f32.mrf.mxu0
  %v618 = vadd.f32 0.0, %v617
  %v619 = vpop.f32.mrf.mxu0
  %v620 = vadd.f32 0.0, %v619
  %621 = vdwg.mxu0
  %v624 = vunpack.c.l.b16 %v33
  %v625 = vunpack.c.l.b16 %v34
  %v626 = vpack.c.b16 %v625, %v624
  %v643 = vunpack.c.l.b16 %v83
  %v644 = vunpack.c.h.b16 %v83
  %v645 = vunpack.c.l.b16 %v84
  %v646 = vunpack.c.h.b16 %v84
  %v647 = vunpack.c.l.b16 %v85
  %v648 = vunpack.c.h.b16 %v85
  %v649 = vunpack.c.l.b16 %v86
  %v650 = vunpack.c.h.b16 %v86
  %v651 = vunpack.c.l.b16 %v87
  %v652 = vunpack.c.h.b16 %v87
  %v653 = vunpack.c.l.b16 %v88
  %v654 = vunpack.c.h.b16 %v88
  %v655 = vunpack.c.l.b16 %v89
  %v656 = vunpack.c.h.b16 %v89
  %v657 = vunpack.c.l.b16 %v90
  %v658 = vunpack.c.h.b16 %v90
  %v659 = vunpack.c.l.b16 %v91
  %v660 = vunpack.c.h.b16 %v91
  %v661 = vunpack.c.l.b16 %v92
  %v662 = vunpack.c.h.b16 %v92
  %v663 = vunpack.c.l.b16 %v93
  %v664 = vunpack.c.h.b16 %v93
  %v665 = vunpack.c.l.b16 %v94
  %v666 = vunpack.c.h.b16 %v94
  %v667 = vunpack.c.l.b16 %v95
  %v668 = vunpack.c.h.b16 %v95
  %v669 = vunpack.c.l.b16 %v96
  %v670 = vunpack.c.h.b16 %v96
  %v671 = vunpack.c.l.b16 %v97
  %v672 = vunpack.c.h.b16 %v97
  %v673 = vunpack.c.l.b16 %v98
  %v674 = vunpack.c.h.b16 %v98
  %v675 = vpack.c.b16 %v647, %v643
  %v676 = vpack.c.b16 %v648, %v644
  %v677 = vpack.c.b16 %v649, %v645
  %v678 = vpack.c.b16 %v650, %v646
  %v679 = vpack.c.b16 %v655, %v651
  %v680 = vpack.c.b16 %v656, %v652
  %v681 = vpack.c.b16 %v657, %v653
  %v682 = vpack.c.b16 %v658, %v654
  %v683 = vpack.c.b16 %v663, %v659
  %v684 = vpack.c.b16 %v664, %v660
  %v685 = vpack.c.b16 %v665, %v661
  %v686 = vpack.c.b16 %v666, %v662
  %v687 = vpack.c.b16 %v671, %v667
  %v688 = vpack.c.b16 %v672, %v668
  %v689 = vpack.c.b16 %v673, %v669
  %v690 = vpack.c.b16 %v674, %v670
  %v708 = vsel %vm184, %v626, 0
  %710 = vmatprep.subr.bf16.mxu0 0
  %711 = vmatpush1.bf16.msra.mxu0 0
  %712 = vmatprep.subr.bf16.mxu0 0
  %713 = vmatpush1.bf16.msra.mxu0 0
  %714 = vmatprep.subr.bf16.mxu0 0
  %715 = vmatpush1.bf16.msra.mxu0 0
  %716 = vmatprep.subr.bf16.mxu0 0
  %717 = vmatpush1.bf16.msra.mxu0 0
  %718 = vmatprep.subr.bf16.mxu0 %v688
  %719 = vmatpush1.bf16.msra.mxu0 %v687
  %720 = vmatprep.subr.bf16.mxu0 %v684
  %721 = vmatpush1.bf16.msra.mxu0 %v683
  %722 = vmatprep.subr.bf16.mxu0 %v680
  %723 = vmatpush1.bf16.msra.mxu0 %v679
  %724 = vmatprep.subr.bf16.mxu0 %v676
  %725 = vmatpush1.bf16.msra.mxu0 %v675
  %726 = vmatprep.subr.bf16.mxu0 0
  %727 = vmatpush2.bf16.msra.mxu0 0
  %728 = vmatprep.subr.bf16.mxu0 0
  %729 = vmatpush2.bf16.msra.mxu0 0
  %730 = vmatprep.subr.bf16.mxu0 0
  %731 = vmatpush2.bf16.msra.mxu0 0
  %732 = vmatprep.subr.bf16.mxu0 0
  %733 = vmatpush2.bf16.msra.mxu0 0
  %734 = vmatprep.subr.bf16.mxu0 0
  %735 = vmatpush2.bf16.msra.mxu0 0
  %736 = vmatprep.subr.bf16.mxu0 0
  %737 = vmatpush2.bf16.msra.mxu0 0
  %738 = vmatprep.subr.bf16.mxu0 0
  %739 = vmatpush2.bf16.msra.mxu0 0
  %740 = vmatprep.subr.bf16.mxu0 0
  %741 = vmatpush2.bf16.msra.mxu0 0
  %742 = vmatprep.mubr.bf16.mxu0 0
  %743 = vmatmul.mubr.bf16.gmra.mxu0 %v708
  %v744 = vpop.f32.mrf.mxu0
  %v745 = vadd.f32 0.0, %v744
  %v746 = vpop.f32.mrf.mxu0
  %v747 = vadd.f32 0.0, %v746
  %v748 = vpop.f32.mrf.mxu0
  %v749 = vadd.f32 0.0, %v748
  %v750 = vpop.f32.mrf.mxu0
  %v751 = vadd.f32 0.0, %v750
  %752 = vdwg.mxu0
  %753 = vmatprep.subr.bf16.mxu0 0
  %754 = vmatpush1.bf16.msra.mxu0 0
  %755 = vmatprep.subr.bf16.mxu0 0
  %756 = vmatpush1.bf16.msra.mxu0 0
  %757 = vmatprep.subr.bf16.mxu0 0
  %758 = vmatpush1.bf16.msra.mxu0 0
  %759 = vmatprep.subr.bf16.mxu0 0
  %760 = vmatpush1.bf16.msra.mxu0 0
  %761 = vmatprep.subr.bf16.mxu0 %v690
  %762 = vmatpush1.bf16.msra.mxu0 %v689
  %763 = vmatprep.subr.bf16.mxu0 %v686
  %764 = vmatpush1.bf16.msra.mxu0 %v685
  %765 = vmatprep.subr.bf16.mxu0 %v682
  %766 = vmatpush1.bf16.msra.mxu0 %v681
  %767 = vmatprep.subr.bf16.mxu0 %v678
  %768 = vmatpush1.bf16.msra.mxu0 %v677
  %769 = vmatprep.subr.bf16.mxu0 0
  %770 = vmatpush2.bf16.msra.mxu0 0
  %771 = vmatprep.subr.bf16.mxu0 0
  %772 = vmatpush2.bf16.msra.mxu0 0
  %773 = vmatprep.subr.bf16.mxu0 0
  %774 = vmatpush2.bf16.msra.mxu0 0
  %775 = vmatprep.subr.bf16.mxu0 0
  %776 = vmatpush2.bf16.msra.mxu0 0
  %777 = vmatprep.subr.bf16.mxu0 0
  %778 = vmatpush2.bf16.msra.mxu0 0
  %779 = vmatprep.subr.bf16.mxu0 0
  %780 = vmatpush2.bf16.msra.mxu0 0
  %781 = vmatprep.subr.bf16.mxu0 0
  %782 = vmatpush2.bf16.msra.mxu0 0
  %783 = vmatprep.subr.bf16.mxu0 0
  %784 = vmatpush2.bf16.msra.mxu0 0
  %785 = vmatprep.mubr.bf16.mxu0 0
  %786 = vmatmul.mubr.bf16.gmra.mxu0 %v708
  %v787 = vpop.f32.mrf.mxu0
  %v788 = vadd.f32 0.0, %v787
  %v789 = vpop.f32.mrf.mxu0
  %v790 = vadd.f32 0.0, %v789
  %v791 = vpop.f32.mrf.mxu0
  %v792 = vadd.f32 0.0, %v791
  %v793 = vpop.f32.mrf.mxu0
  %v794 = vadd.f32 0.0, %v793
  %795 = vdwg.mxu0
  %s796 = smul.u32 0, 512
  %s797 = sshra.s32 %s796, 7
  %s798 = sand.u32 %s796, 127
  %s799 = smul.addr %s797, 8
  %s800 = scalar_lea.vmem [#allocation2], %s799
  %801 = vst [vmem:[%s800] sm:$0xff] %v223
  %802 = vst [vmem:[%s800 + $0x8] sm:$0xff] %v225
  %803 = vst [vmem:[%s800 + $0x10] sm:$0xff] %v266
  %804 = vst [vmem:[%s800 + $0x18] sm:$0xff] %v268
  %805 = vst [vmem:[%s800 + $0x20] sm:$0xff] %v227
  %806 = vst [vmem:[%s800 + $0x28] sm:$0xff] %v229
  %807 = vst [vmem:[%s800 + $0x30] sm:$0xff] %v270
  %808 = vst [vmem:[%s800 + $0x38] sm:$0xff] %v272
  %809 = vst [vmem:[%s800 + $0x40] sm:$0xff] %v397
  %810 = vst [vmem:[%s800 + $0x48] sm:$0xff] %v399
  %811 = vst [vmem:[%s800 + $0x50] sm:$0xff] %v440
  %812 = vst [vmem:[%s800 + $0x58] sm:$0xff] %v442
  %813 = vst [vmem:[%s800 + $0x60] sm:$0xff] %v401
  %814 = vst [vmem:[%s800 + $0x68] sm:$0xff] %v403
  %815 = vst [vmem:[%s800 + $0x70] sm:$0xff] %v444
  %816 = vst [vmem:[%s800 + $0x78] sm:$0xff] %v446
  %817 = vst [vmem:[%s800 + $0x80] sm:$0xff] %v571
  %818 = vst [vmem:[%s800 + $0x88] sm:$0xff] %v573
  %819 = vst [vmem:[%s800 + $0x90] sm:$0xff] %v614
  %820 = vst [vmem:[%s800 + $0x98] sm:$0xff] %v616
  %821 = vst [vmem:[%s800 + $0xa0] sm:$0xff] %v575
  %822 = vst [vmem:[%s800 + $0xa8] sm:$0xff] %v577
  %823 = vst [vmem:[%s800 + $0xb0] sm:$0xff] %v618
  %824 = vst [vmem:[%s800 + $0xb8] sm:$0xff] %v620
  %825 = vst [vmem:[%s800 + $0xc0] sm:$0xff] %v745
  %826 = vst [vmem:[%s800 + $0xc8] sm:$0xff] %v747
  %827 = vst [vmem:[%s800 + $0xd0] sm:$0xff] %v788
  %828 = vst [vmem:[%s800 + $0xd8] sm:$0xff] %v790
  %829 = vst [vmem:[%s800 + $0xe0] sm:$0xff] %v749
  %830 = vst [vmem:[%s800 + $0xe8] sm:$0xff] %v751
  %831 = vst [vmem:[%s800 + $0xf0] sm:$0xff] %v792
  %832 = vst [vmem:[%s800 + $0xf8] sm:$0xff] %v794
  %v833 = vld [vmem:[#allocation3] sm:$0xff]
  %v834 = vld [vmem:[#allocation3 + $0x8] sm:$0xff]
  %v835 = vadd.f32 %v223, %v225
  %v836 = vadd.f32 %v835, %v266
  %v837 = vadd.f32 %v836, %v268
  %838 = vadd.xlane.f32.xlu0 %v837
  %v839 = vpop.xlane.xlu0 %838
  %v840 = vadd.f32 %v227, %v229
  %v841 = vadd.f32 %v840, %v270
  %v842 = vadd.f32 %v841, %v272
  %843 = vadd.xlane.f32.xlu0 %v842
  %v844 = vpop.xlane.xlu0 %843
  %v845 = vadd.f32 %v397, %v399
  %v846 = vadd.f32 %v845, %v440
  %v847 = vadd.f32 %v846, %v442
  %848 = vadd.xlane.f32.xlu0 %v847
  %v849 = vpop.xlane.xlu0 %848
  %v850 = vadd.f32 %v401, %v403
  %v851 = vadd.f32 %v850, %v444
  %v852 = vadd.f32 %v851, %v446
  %853 = vadd.xlane.f32.xlu0 %v852
  %v854 = vpop.xlane.xlu0 %853
  %v855 = vadd.f32 %v571, %v573
  %v856 = vadd.f32 %v855, %v614
  %v857 = vadd.f32 %v856, %v616
  %858 = vadd.xlane.f32.xlu0 %v857
  %v859 = vpop.xlane.xlu0 %858
  %v860 = vadd.f32 %v575, %v577
  %v861 = vadd.f32 %v860, %v618
  %v862 = vadd.f32 %v861, %v620
  %863 = vadd.xlane.f32.xlu0 %v862
  %v864 = vpop.xlane.xlu0 %863
  %v865 = vadd.f32 %v745, %v747
  %v866 = vadd.f32 %v865, %v788
  %v867 = vadd.f32 %v866, %v790
  %868 = vadd.xlane.f32.xlu0 %v867
  %v869 = vpop.xlane.xlu0 %868
  %v870 = vadd.f32 %v749, %v751
  %v871 = vadd.f32 %v870, %v792
  %v872 = vadd.f32 %v871, %v794
  %873 = vadd.xlane.f32.xlu0 %v872
  %v874 = vpop.xlane.xlu0 %873
  %v875 = vadd.f32 %v839, %v849
  %v876 = vadd.f32 %v875, %v859
  %v877 = vadd.f32 %v876, %v869
  %v878 = vadd.f32 %v844, %v854
  %v879 = vadd.f32 %v878, %v864
  %v880 = vadd.f32 %v879, %v874
  %v881 = vadd.f32 %v833, %v877
  %v882 = vadd.f32 %v834, %v880
  %vm883 = vcmask 7168
  %884 = vst.msk [vmem:[#allocation3] sm:$0xff] %vm883, %v881
  %885 = vst.msk [vmem:[#allocation3 + $0x8] sm:$0xff] %vm883, %v882
  %v886 = vld [vmem:[#allocation4] sm:$0xff]
  %v887 = vld [vmem:[#allocation4 + $0x8] sm:$0xff]
  %v888 = vmul.f32 %v223, %v223
  %v889 = vmul.f32 %v225, %v225
  %v890 = vmul.f32 %v266, %v266
  %v891 = vmul.f32 %v268, %v268
  %v892 = vmul.f32 %v227, %v227
  %v893 = vmul.f32 %v229, %v229
  %v894 = vmul.f32 %v270, %v270
  %v895 = vmul.f32 %v272, %v272
  %v896 = vmul.f32 %v397, %v397
  %v897 = vmul.f32 %v399, %v399
  %v898 = vmul.f32 %v440, %v440
  %v899 = vmul.f32 %v442, %v442
  %v900 = vmul.f32 %v401, %v401
  %v901 = vmul.f32 %v403, %v403
  %v902 = vmul.f32 %v444, %v444
  %v903 = vmul.f32 %v446, %v446
  %v904 = vmul.f32 %v571, %v571
  %v905 = vmul.f32 %v573, %v573
  %v906 = vmul.f32 %v614, %v614
  %v907 = vmul.f32 %v616, %v616
  %v908 = vmul.f32 %v575, %v575
  %v909 = vmul.f32 %v577, %v577
  %v910 = vmul.f32 %v618, %v618
  %v911 = vmul.f32 %v620, %v620
  %v912 = vmul.f32 %v745, %v745
  %v913 = vmul.f32 %v747, %v747
  %v914 = vmul.f32 %v788, %v788
  %v915 = vmul.f32 %v790, %v790
  %v916 = vmul.f32 %v749, %v749
  %v917 = vmul.f32 %v751, %v751
  %v918 = vmul.f32 %v792, %v792
  %v919 = vmul.f32 %v794, %v794
  %v920 = vadd.f32 %v888, %v889
  %v921 = vadd.f32 %v920, %v890
  %v922 = vadd.f32 %v921, %v891
  %923 = vadd.xlane.f32.xlu0 %v922
  %v924 = vpop.xlane.xlu0 %923
  %v925 = vadd.f32 %v892, %v893
  %v926 = vadd.f32 %v925, %v894
  %v927 = vadd.f32 %v926, %v895
  %928 = vadd.xlane.f32.xlu0 %v927
  %v929 = vpop.xlane.xlu0 %928
  %v930 = vadd.f32 %v896, %v897
  %v931 = vadd.f32 %v930, %v898
  %v932 = vadd.f32 %v931, %v899
  %933 = vadd.xlane.f32.xlu0 %v932
  %v934 = vpop.xlane.xlu0 %933
  %v935 = vadd.f32 %v900, %v901
  %v936 = vadd.f32 %v935, %v902
  %v937 = vadd.f32 %v936, %v903
  %938 = vadd.xlane.f32.xlu0 %v937
  %v939 = vpop.xlane.xlu0 %938
  %v940 = vadd.f32 %v904, %v905
  %v941 = vadd.f32 %v940, %v906
  %v942 = vadd.f32 %v941, %v907
  %943 = vadd.xlane.f32.xlu0 %v942
  %v944 = vpop.xlane.xlu0 %943
  %v945 = vadd.f32 %v908, %v909
  %v946 = vadd.f32 %v945, %v910
  %v947 = vadd.f32 %v946, %v911
  %948 = vadd.xlane.f32.xlu0 %v947
  %v949 = vpop.xlane.xlu0 %948
  %v950 = vadd.f32 %v912, %v913
  %v951 = vadd.f32 %v950, %v914
  %v952 = vadd.f32 %v951, %v915
  %953 = vadd.xlane.f32.xlu0 %v952
  %v954 = vpop.xlane.xlu0 %953
  %v955 = vadd.f32 %v916, %v917
  %v956 = vadd.f32 %v955, %v918
  %v957 = vadd.f32 %v956, %v919
  %958 = vadd.xlane.f32.xlu0 %v957
  %v959 = vpop.xlane.xlu0 %958
  %v960 = vadd.f32 %v924, %v934
  %v961 = vadd.f32 %v960, %v944
  %v962 = vadd.f32 %v961, %v954
  %v963 = vadd.f32 %v929, %v939
  %v964 = vadd.f32 %v963, %v949
  %v965 = vadd.f32 %v964, %v959
  %v966 = vadd.f32 %v886, %v962
  %v967 = vadd.f32 %v887, %v965
  %968 = vst.msk [vmem:[#allocation4] sm:$0xff] %vm883, %v966
  %969 = vst.msk [vmem:[#allocation4 + $0x8] sm:$0xff] %vm883, %v967
  // Predicated region
  $region22: #{_lambda_.8} parent=0 // pred_check
    %p970 = pneg %p18
  $region23: #{_lambda_.8} parent=0 // pred_check_branch
    %972 = sbr.rel (%p970) target = $region25
  $region24: #{_lambda_.8} parent=0 // pred_region
    %v973 = vld [vmem:[#allocation3] sm:$0xff]
    %v974 = vld [vmem:[#allocation3 + $0x8] sm:$0xff]
    %v975 = vmul.f32 %v973, 0.00052083336
    %v976 = vmul.f32 %v974, 0.00052083336
    %v977 = vld [vmem:[#allocation4] sm:$0xff]
    %v978 = vld [vmem:[#allocation4 + $0x8] sm:$0xff]
    %v979 = vmul.f32 %v977, 0.00052083336
    %v980 = vmul.f32 %v978, 0.00052083336
    %v981 = vmul.f32 %v975, %v975
    %v982 = vmul.f32 %v976, %v976
    %v983 = vsub.f32 %v979, %v981
    %v984 = vsub.f32 %v980, %v982
    %v985 = vmax.f32 %v983, 0.0
    %v986 = vmax.f32 %v984, 0.0
    %v987 = vld [vmem:[%s2] sm:$0xff]
    %v988 = vld [vmem:[%s2 + $0x8] sm:$0xff]
    %v989 = vadd.f32 %v985, 1e-05
    %v990 = vadd.f32 %v986, 1e-05
    %v991 = vrsqrt.pop %v989
    %v992 = vrsqrt.pop %v990
    %v993 = vmul.f32 %v987, %v991
    %v994 = vmul.f32 %v988, %v992
    %v995 = vld [vmem:[%s3] sm:$0xff]
    %v996 = vld [vmem:[%s3 + $0x8] sm:$0xff]
    %v997 = vmul.f32 %v975, %v993
    %v998 = vmul.f32 %v976, %v994
    %v999 = vsub.f32 %v995, %v997
    %v1000 = vsub.f32 %v996, %v998
    %v1001 = vld [vmem:[#allocation2] sm:$0xff]
    %v1002 = vld [vmem:[#allocation2 + $0x8] sm:$0xff]
    %v1003 = vld [vmem:[#allocation2 + $0x10] sm:$0xff]
    %v1004 = vld [vmem:[#allocation2 + $0x18] sm:$0xff]
    %v1005 = vld [vmem:[#allocation2 + $0x20] sm:$0xff]
    %v1006 = vld [vmem:[#allocation2 + $0x28] sm:$0xff]
    %v1007 = vld [vmem:[#allocation2 + $0x30] sm:$0xff]
    %v1008 = vld [vmem:[#allocation2 + $0x38] sm:$0xff]
    %v1009 = vld [vmem:[#allocation2 + $0x40] sm:$0xff]
    %v1010 = vld [vmem:[#allocation2 + $0x48] sm:$0xff]
    %v1011 = vld [vmem:[#allocation2 + $0x50] sm:$0xff]
    %v1012 = vld [vmem:[#allocation2 + $0x58] sm:$0xff]
    %v1013 = vld [vmem:[#allocation2 + $0x60] sm:$0xff]
    %v1014 = vld [vmem:[#allocation2 + $0x68] sm:$0xff]
    %v1015 = vld [vmem:[#allocation2 + $0x70] sm:$0xff]
    %v1016 = vld [vmem:[#allocation2 + $0x78] sm:$0xff]
    %v1017 = vld [vmem:[#allocation2 + $0x80] sm:$0xff]
    %v1018 = vld [vmem:[#allocation2 + $0x88] sm:$0xff]
    %v1019 = vld [vmem:[#allocation2 + $0x90] sm:$0xff]
    %v1020 = vld [vmem:[#allocation2 + $0x98] sm:$0xff]
    %v1021 = vld [vmem:[#allocation2 + $0xa0] sm:$0xff]
    %v1022 = vld [vmem:[#allocation2 + $0xa8] sm:$0xff]
    %v1023 = vld [vmem:[#allocation2 + $0xb0] sm:$0xff]
    %v1024 = vld [vmem:[#allocation2 + $0xb8] sm:$0xff]
    %v1025 = vld [vmem:[#allocation2 + $0xc0] sm:$0xff]
    %v1026 = vld [vmem:[#allocation2 + $0xc8] sm:$0xff]
    %v1027 = vld [vmem:[#allocation2 + $0xd0] sm:$0xff]
    %v1028 = vld [vmem:[#allocation2 + $0xd8] sm:$0xff]
    %v1029 = vld [vmem:[#allocation2 + $0xe0] sm:$0xff]
    %v1030 = vld [vmem:[#allocation2 + $0xe8] sm:$0xff]
    %v1031 = vld [vmem:[#allocation2 + $0xf0] sm:$0xff]
    %v1032 = vld [vmem:[#allocation2 + $0xf8] sm:$0xff]
    %1034 = vset.pattern.permute.xlu0 0
    %1035 = vperm.xlu0 %1034, %v993
    %v1036 = vpop.permute.xlu0 %1035
    %1039 = vset.pattern.permute.xlu0 0
    %1040 = vperm.xlu0 %1039, %v994
    %v1041 = vpop.permute.xlu0 %1040
    %v1043 = vmul.f32 %v1001, %v1036
    %v1044 = vmul.f32 %v1002, %v1036
    %v1045 = vmul.f32 %v1003, %v1036
    %v1046 = vmul.f32 %v1004, %v1036
    %v1047 = vmul.f32 %v1005, %v1041
    %v1048 = vmul.f32 %v1006, %v1041
    %v1049 = vmul.f32 %v1007, %v1041
    %v1050 = vmul.f32 %v1008, %v1041
    %v1051 = vmul.f32 %v1009, %v1036
    %v1052 = vmul.f32 %v1010, %v1036
    %v1053 = vmul.f32 %v1011, %v1036
    %v1054 = vmul.f32 %v1012, %v1036
    %v1055 = vmul.f32 %v1013, %v1041
    %v1056 = vmul.f32 %v1014, %v1041
    %v1057 = vmul.f32 %v1015, %v1041
    %v1058 = vmul.f32 %v1016, %v1041
    %v1059 = vmul.f32 %v1017, %v1036
    %v1060 = vmul.f32 %v1018, %v1036
    %v1061 = vmul.f32 %v1019, %v1036
    %v1062 = vmul.f32 %v1020, %v1036
    %v1063 = vmul.f32 %v1021, %v1041
    %v1064 = vmul.f32 %v1022, %v1041
    %v1065 = vmul.f32 %v1023, %v1041
    %v1066 = vmul.f32 %v1024, %v1041
    %v1067 = vmul.f32 %v1025, %v1036
    %v1068 = vmul.f32 %v1026, %v1036
    %v1069 = vmul.f32 %v1027, %v1036
    %v1070 = vmul.f32 %v1028, %v1036
    %v1071 = vmul.f32 %v1029, %v1041
    %v1072 = vmul.f32 %v1030, %v1041
    %v1073 = vmul.f32 %v1031, %v1041
    %v1074 = vmul.f32 %v1032, %v1041
    %1076 = vset.pattern.permute.xlu0 0
    %1077 = vperm.xlu0 %1076, %v999
    %v1078 = vpop.permute.xlu0 %1077
    %1081 = vset.pattern.permute.xlu0 0
    %1082 = vperm.xlu0 %1081, %v1000
    %v1083 = vpop.permute.xlu0 %1082
    %v1085 = vadd.f32 %v1043, %v1078
    %v1086 = vadd.f32 %v1044, %v1078
    %v1087 = vadd.f32 %v1045, %v1078
    %v1088 = vadd.f32 %v1046, %v1078
    %v1089 = vadd.f32 %v1047, %v1083
    %v1090 = vadd.f32 %v1048, %v1083
    %v1091 = vadd.f32 %v1049, %v1083
    %v1092 = vadd.f32 %v1050, %v1083
    %v1093 = vadd.f32 %v1051, %v1078
    %v1094 = vadd.f32 %v1052, %v1078
    %v1095 = vadd.f32 %v1053, %v1078
    %v1096 = vadd.f32 %v1054, %v1078
    %v1097 = vadd.f32 %v1055, %v1083
    %v1098 = vadd.f32 %v1056, %v1083
    %v1099 = vadd.f32 %v1057, %v1083
    %v1100 = vadd.f32 %v1058, %v1083
    %v1101 = vadd.f32 %v1059, %v1078
    %v1102 = vadd.f32 %v1060, %v1078
    %v1103 = vadd.f32 %v1061, %v1078
    %v1104 = vadd.f32 %v1062, %v1078
    %v1105 = vadd.f32 %v1063, %v1083
    %v1106 = vadd.f32 %v1064, %v1083
    %v1107 = vadd.f32 %v1065, %v1083
    %v1108 = vadd.f32 %v1066, %v1083
    %v1109 = vadd.f32 %v1067, %v1078
    %v1110 = vadd.f32 %v1068, %v1078
    %v1111 = vadd.f32 %v1069, %v1078
    %v1112 = vadd.f32 %v1070, %v1078
    %v1113 = vadd.f32 %v1071, %v1083
    %v1114 = vadd.f32 %v1072, %v1083
    %v1115 = vadd.f32 %v1073, %v1083
    %v1116 = vadd.f32 %v1074, %v1083
    %v1117 = vmax.f32 %v1085, 0.0
    %v1118 = vmax.f32 %v1086, 0.0
    %v1119 = vmax.f32 %v1087, 0.0
    %v1120 = vmax.f32 %v1088, 0.0
    %v1121 = vmax.f32 %v1089, 0.0
    %v1122 = vmax.f32 %v1090, 0.0
    %v1123 = vmax.f32 %v1091, 0.0
    %v1124 = vmax.f32 %v1092, 0.0
    %v1125 = vmax.f32 %v1093, 0.0
    %v1126 = vmax.f32 %v1094, 0.0
    %v1127 = vmax.f32 %v1095, 0.0
    %v1128 = vmax.f32 %v1096, 0.0
    %v1129 = vmax.f32 %v1097, 0.0
    %v1130 = vmax.f32 %v1098, 0.0
    %v1131 = vmax.f32 %v1099, 0.0
    %v1132 = vmax.f32 %v1100, 0.0
    %v1133 = vmax.f32 %v1101, 0.0
    %v1134 = vmax.f32 %v1102, 0.0
    %v1135 = vmax.f32 %v1103, 0.0
    %v1136 = vmax.f32 %v1104, 0.0
    %v1137 = vmax.f32 %v1105, 0.0
    %v1138 = vmax.f32 %v1106, 0.0
    %v1139 = vmax.f32 %v1107, 0.0
    %v1140 = vmax.f32 %v1108, 0.0
    %v1141 = vmax.f32 %v1109, 0.0
    %v1142 = vmax.f32 %v1110, 0.0
    %v1143 = vmax.f32 %v1111, 0.0
    %v1144 = vmax.f32 %v1112, 0.0
    %v1145 = vmax.f32 %v1113, 0.0
    %v1146 = vmax.f32 %v1114, 0.0
    %v1147 = vmax.f32 %v1115, 0.0
    %v1148 = vmax.f32 %v1116, 0.0
    %v1149 = vpack.c.bf16 %v1121, %v1117
    %v1150 = vpack.c.bf16 %v1122, %v1118
    %v1151 = vpack.c.bf16 %v1123, %v1119
    %v1152 = vpack.c.bf16 %v1124, %v1120
    %v1153 = vpack.c.bf16 %v1129, %v1125
    %v1154 = vpack.c.bf16 %v1130, %v1126
    %v1155 = vpack.c.bf16 %v1131, %v1127
    %v1156 = vpack.c.bf16 %v1132, %v1128
    %v1157 = vpack.c.bf16 %v1137, %v1133
    %v1158 = vpack.c.bf16 %v1138, %v1134
    %v1159 = vpack.c.bf16 %v1139, %v1135
    %v1160 = vpack.c.bf16 %v1140, %v1136
    %v1161 = vpack.c.bf16 %v1145, %v1141
    %v1162 = vpack.c.bf16 %v1146, %v1142
    %v1163 = vpack.c.bf16 %v1147, %v1143
    %v1164 = vpack.c.bf16 %v1148, %v1144
    %v1181 = vunpack.c.l.b16 %v1149
    %v1182 = vunpack.c.l.b16 %v1150
    %v1183 = vunpack.c.l.b16 %v1151
    %v1184 = vunpack.c.l.b16 %v1152
    %v1185 = vunpack.c.h.b16 %v1149
    %v1186 = vunpack.c.h.b16 %v1150
    %v1187 = vunpack.c.h.b16 %v1151
    %v1188 = vunpack.c.h.b16 %v1152
    %v1189 = vunpack.c.l.b16 %v1153
    %v1190 = vunpack.c.l.b16 %v1154
    %v1191 = vunpack.c.l.b16 %v1155
    %v1192 = vunpack.c.l.b16 %v1156
    %v1193 = vunpack.c.h.b16 %v1153
    %v1194 = vunpack.c.h.b16 %v1154
    %v1195 = vunpack.c.h.b16 %v1155
    %v1196 = vunpack.c.h.b16 %v1156
    %v1197 = vunpack.c.l.b16 %v1157
    %v1198 = vunpack.c.l.b16 %v1158
    %v1199 = vunpack.c.l.b16 %v1159
    %v1200 = vunpack.c.l.b16 %v1160
    %v1201 = vunpack.c.h.b16 %v1157
    %v1202 = vunpack.c.h.b16 %v1158
    %v1203 = vunpack.c.h.b16 %v1159
    %v1204 = vunpack.c.h.b16 %v1160
    %v1205 = vunpack.c.l.b16 %v1161
    %v1206 = vunpack.c.l.b16 %v1162
    %v1207 = vunpack.c.l.b16 %v1163
    %v1208 = vunpack.c.l.b16 %v1164
    %v1209 = vunpack.c.h.b16 %v1161
    %v1210 = vunpack.c.h.b16 %v1162
    %v1211 = vunpack.c.h.b16 %v1163
    %v1212 = vunpack.c.h.b16 %v1164
    %v1213 = vpack.c.b16 %v1182, %v1181
    %v1214 = vpack.c.b16 %v1184, %v1183
    %v1215 = vpack.c.b16 %v1186, %v1185
    %v1216 = vpack.c.b16 %v1188, %v1187
    %v1217 = vpack.c.b16 %v1190, %v1189
    %v1218 = vpack.c.b16 %v1192, %v1191
    %v1219 = vpack.c.b16 %v1194, %v1193
    %v1220 = vpack.c.b16 %v1196, %v1195
    %v1221 = vpack.c.b16 %v1198, %v1197
    %v1222 = vpack.c.b16 %v1200, %v1199
    %v1223 = vpack.c.b16 %v1202, %v1201
    %v1224 = vpack.c.b16 %v1204, %v1203
    %v1225 = vpack.c.b16 %v1206, %v1205
    %v1226 = vpack.c.b16 %v1208, %v1207
    %v1227 = vpack.c.b16 %v1210, %v1209
    %v1228 = vpack.c.b16 %v1212, %v1211
    %1245 = vst [vmem:[%s4] sm:$0xff] %v1213
    %1246 = vst [vmem:[%s4 + $0x8] sm:$0xff] %v1214
    %1247 = vst [vmem:[%s4 + $0x10] sm:$0xff] %v1215
    %1248 = vst [vmem:[%s4 + $0x18] sm:$0xff] %v1216
    %1249 = vst [vmem:[%s4 + $0x20] sm:$0xff] %v1217
    %1250 = vst [vmem:[%s4 + $0x28] sm:$0xff] %v1218
    %1251 = vst [vmem:[%s4 + $0x30] sm:$0xff] %v1219
    %1252 = vst [vmem:[%s4 + $0x38] sm:$0xff] %v1220
    %1253 = vst [vmem:[%s4 + $0x40] sm:$0xff] %v1221
    %1254 = vst [vmem:[%s4 + $0x48] sm:$0xff] %v1222
    %1255 = vst [vmem:[%s4 + $0x50] sm:$0xff] %v1223
    %1256 = vst [vmem:[%s4 + $0x58] sm:$0xff] %v1224
    %1257 = vst [vmem:[%s4 + $0x60] sm:$0xff] %v1225
    %1258 = vst [vmem:[%s4 + $0x68] sm:$0xff] %v1226
    %1259 = vst [vmem:[%s4 + $0x70] sm:$0xff] %v1227
    %1260 = vst [vmem:[%s4 + $0x78] sm:$0xff] %v1228
  $region25: #{_lambda_.8} parent=0 // pred_fallthru
    _
  // Predicated region
  $region26: #{_lambda_.8} parent=0 // pred_check
    _
  $region27: #{_lambda_.8} parent=0 // pred_check_branch
    %1262 = sbr.rel (0) target = $region29
  $region28: #{_lambda_.8} parent=0 // pred_region
    _
  $region29: #{_lambda_.8} parent=0 // pred_fallthru
    _
  // Predicated region
  $region30: #{_lambda_.8} parent=0 // pred_check
    _
  $region31: #{_lambda_.8} parent=0 // pred_check_branch
    %1264 = sbr.rel (0) target = $region33
  $region32: #{_lambda_.8} parent=0 // pred_region
    _
  $region33: #{_lambda_.8} parent=0 // pred_fallthru
    _

// kernel: _lambda_.9
$region0: #{_lambda_.9}
  #allocation0 [shape = 'u32[]', space=smem, size = 0x4, offset = 0x4, fixed_abs, tag = 'smem constant byte address 0x4 - core index']
  #allocation1 [shape = 'u32[144,128]{1,0:T(1,128)}', space=vmem, size = 0x12000, scoped, tag = 'internal scratch']
  %s0 = inlined_call_operand.vmem [shape: bf16[4,16,32], index: 0, kind: input, shape index: {}]
  %s1 = inlined_call_operand.vmem [shape: bf16[4,32,1920], index: 1, kind: input, shape index: {}]
  %s2 = inlined_call_operand.vmem [shape: f32[4,16,1920], index: 2, kind: output, shape index: {}]
  %s3 = sld [smem:[#allocation0]]
  $region18: #{_lambda_.9} parent=0
    _
  %s5 = ssub.s32 1, %s3
  %s6 = scalar_select 0, %s5, %s3
  // Predicated region
  $region2: #{_lambda_.9} parent=0 // pred_check
    _
  $region3: #{_lambda_.9} parent=0 // pred_check_branch
    %8 = sbr.rel (0) target = $region5
  $region4: #{_lambda_.9} parent=0 // pred_region
    _
  $region5: #{_lambda_.9} parent=0 // pred_fallthru
    _
  // Predicated region
  $region6: #{_lambda_.9} parent=0 // pred_check
    _
  $region7: #{_lambda_.9} parent=0 // pred_check_branch
    %10 = sbr.rel (0) target = $region9
  $region8: #{_lambda_.9} parent=0 // pred_region
    _
  $region9: #{_lambda_.9} parent=0 // pred_fallthru
    _
  %v12 = vld [vmem:[%s0] sm:$0xf]
  %v13 = vld [vmem:[%s0 + $0x4] sm:$0xf]
  %v14 = vld [vmem:[%s0 + $0x8] sm:$0xf]
  %v15 = vld [vmem:[%s0 + $0xc] sm:$0xf]
  %v16 = vld [vmem:[%s0 + $0x10] sm:$0xf]
  %v17 = vld [vmem:[%s0 + $0x14] sm:$0xf]
  %v18 = vld [vmem:[%s0 + $0x18] sm:$0xf]
  %v19 = vld [vmem:[%s0 + $0x1c] sm:$0xf]
  %v20 = vld [vmem:[%s1] sm:$0xff]
  %v21 = vld [vmem:[%s1 + $0x8] sm:$0xff]
  %v22 = vld [vmem:[%s1 + $0x10] sm:$0xff]
  %v23 = vld [vmem:[%s1 + $0x18] sm:$0xff]
  %v24 = vld [vmem:[%s1 + $0x20] sm:$0xff]
  %v25 = vld [vmem:[%s1 + $0x28] sm:$0xff]
  %v26 = vld [vmem:[%s1 + $0x30] sm:$0xff]
  %v27 = vld [vmem:[%s1 + $0x38] sm:$0xf]
  %v28 = vld [vmem:[%s1 + $0x3c] sm:$0xff]
  %v29 = vld [vmem:[%s1 + $0x44] sm:$0xff]
  %v30 = vld [vmem:[%s1 + $0x4c] sm:$0xff]
  %v31 = vld [vmem:[%s1 + $0x54] sm:$0xff]
  %v32 = vld [vmem:[%s1 + $0x5c] sm:$0xff]
  %v33 = vld [vmem:[%s1 + $0x64] sm:$0xff]
  %v34 = vld [vmem:[%s1 + $0x6c] sm:$0xff]
  %v35 = vld [vmem:[%s1 + $0x74] sm:$0xf]
  %v36 = vld [vmem:[%s1 + $0x78] sm:$0xff]
  %v37 = vld [vmem:[%s1 + $0x80] sm:$0xff]
  %v38 = vld [vmem:[%s1 + $0x88] sm:$0xff]
  %v39 = vld [vmem:[%s1 + $0x90] sm:$0xff]
  %v40 = vld [vmem:[%s1 + $0x98] sm:$0xff]
  %v41 = vld [vmem:[%s1 + $0xa0] sm:$0xff]
  %v42 = vld [vmem:[%s1 + $0xa8] sm:$0xff]
  %v43 = vld [vmem:[%s1 + $0xb0] sm:$0xf]
  %v44 = vld [vmem:[%s1 + $0xb4] sm:$0xff]
  %v45 = vld [vmem:[%s1 + $0xbc] sm:$0xff]
  %v46 = vld [vmem:[%s1 + $0xc4] sm:$0xff]
  %v47 = vld [vmem:[%s1 + $0xcc] sm:$0xff]
  %v48 = vld [vmem:[%s1 + $0xd4] sm:$0xff]
  %v49 = vld [vmem:[%s1 + $0xdc] sm:$0xff]
  %v50 = vld [vmem:[%s1 + $0xe4] sm:$0xff]
  %v51 = vld [vmem:[%s1 + $0xec] sm:$0xf]
  %v52 = vld [vmem:[%s1 + $0xf0] sm:$0xff]
  %v53 = vld [vmem:[%s1 + $0xf8] sm:$0xff]
  %v54 = vld [vmem:[%s1 + $0x100] sm:$0xff]
  %v55 = vld [vmem:[%s1 + $0x108] sm:$0xff]
  %v56 = vld [vmem:[%s1 + $0x110] sm:$0xff]
  %v57 = vld [vmem:[%s1 + $0x118] sm:$0xff]
  %v58 = vld [vmem:[%s1 + $0x120] sm:$0xff]
  %v59 = vld [vmem:[%s1 + $0x128] sm:$0xf]
  %v60 = vld [vmem:[%s1 + $0x12c] sm:$0xff]
  %v61 = vld [vmem:[%s1 + $0x134] sm:$0xff]
  %v62 = vld [vmem:[%s1 + $0x13c] sm:$0xff]
  %v63 = vld [vmem:[%s1 + $0x144] sm:$0xff]
  %v64 = vld [vmem:[%s1 + $0x14c] sm:$0xff]
  %v65 = vld [vmem:[%s1 + $0x154] sm:$0xff]
  %v66 = vld [vmem:[%s1 + $0x15c] sm:$0xff]
  %v67 = vld [vmem:[%s1 + $0x164] sm:$0xf]
  %v68 = vld [vmem:[%s1 + $0x168] sm:$0xff]
  %v69 = vld [vmem:[%s1 + $0x170] sm:$0xff]
  %v70 = vld [vmem:[%s1 + $0x178] sm:$0xff]
  %v71 = vld [vmem:[%s1 + $0x180] sm:$0xff]
  %v72 = vld [vmem:[%s1 + $0x188] sm:$0xff]
  %v73 = vld [vmem:[%s1 + $0x190] sm:$0xff]
  %v74 = vld [vmem:[%s1 + $0x198] sm:$0xff]
  %v75 = vld [vmem:[%s1 + $0x1a0] sm:$0xf]
  %v76 = vld [vmem:[%s1 + $0x1a4] sm:$0xff]
  %v77 = vld [vmem:[%s1 + $0x1ac] sm:$0xff]
  %v78 = vld [vmem:[%s1 + $0x1b4] sm:$0xff]
  %v79 = vld [vmem:[%s1 + $0x1bc] sm:$0xff]
  %v80 = vld [vmem:[%s1 + $0x1c4] sm:$0xff]
  %v81 = vld [vmem:[%s1 + $0x1cc] sm:$0xff]
  %v82 = vld [vmem:[%s1 + $0x1d4] sm:$0xff]
  %v83 = vld [vmem:[%s1 + $0x1dc] sm:$0xf]
  %v84 = vld [vmem:[%s1 + $0x1e0] sm:$0xff]
  %v85 = vld [vmem:[%s1 + $0x1e8] sm:$0xff]
  %v86 = vld [vmem:[%s1 + $0x1f0] sm:$0xff]
  %v87 = vld [vmem:[%s1 + $0x1f8] sm:$0xff]
  %v88 = vld [vmem:[%s1 + $0x200] sm:$0xff]
  %v89 = vld [vmem:[%s1 + $0x208] sm:$0xff]
  %v90 = vld [vmem:[%s1 + $0x210] sm:$0xff]
  %v91 = vld [vmem:[%s1 + $0x218] sm:$0xf]
  %v92 = vld [vmem:[%s1 + $0x21c] sm:$0xff]
  %v93 = vld [vmem:[%s1 + $0x224] sm:$0xff]
  %v94 = vld [vmem:[%s1 + $0x22c] sm:$0xff]
  %v95 = vld [vmem:[%s1 + $0x234] sm:$0xff]
  %v96 = vld [vmem:[%s1 + $0x23c] sm:$0xff]
  %v97 = vld [vmem:[%s1 + $0x244] sm:$0xff]
  %v98 = vld [vmem:[%s1 + $0x24c] sm:$0xff]
  %v99 = vld [vmem:[%s1 + $0x254] sm:$0xf]
  %v100 = vld [vmem:[%s1 + $0x258] sm:$0xff]
  %v101 = vld [vmem:[%s1 + $0x260] sm:$0xff]
  %v102 = vld [vmem:[%s1 + $0x268] sm:$0xff]
  %v103 = vld [vmem:[%s1 + $0x270] sm:$0xff]
  %v104 = vld [vmem:[%s1 + $0x278] sm:$0xff]
  %v105 = vld [vmem:[%s1 + $0x280] sm:$0xff]
  %v106 = vld [vmem:[%s1 + $0x288] sm:$0xff]
  %v107 = vld [vmem:[%s1 + $0x290] sm:$0xf]
  %v108 = vld [vmem:[%s1 + $0x294] sm:$0xff]
  %v109 = vld [vmem:[%s1 + $0x29c] sm:$0xff]
  %v110 = vld [vmem:[%s1 + $0x2a4] sm:$0xff]
  %v111 = vld [vmem:[%s1 + $0x2ac] sm:$0xff]
  %v112 = vld [vmem:[%s1 + $0x2b4] sm:$0xff]
  %v113 = vld [vmem:[%s1 + $0x2bc] sm:$0xff]
  %v114 = vld [vmem:[%s1 + $0x2c4] sm:$0xff]
  %v115 = vld [vmem:[%s1 + $0x2cc] sm:$0xf]
  %v116 = vld [vmem:[%s1 + $0x2d0] sm:$0xff]
  %v117 = vld [vmem:[%s1 + $0x2d8] sm:$0xff]
  %v118 = vld [vmem:[%s1 + $0x2e0] sm:$0xff]
  %v119 = vld [vmem:[%s1 + $0x2e8] sm:$0xff]
  %v120 = vld [vmem:[%s1 + $0x2f0] sm:$0xff]
  %v121 = vld [vmem:[%s1 + $0x2f8] sm:$0xff]
  %v122 = vld [vmem:[%s1 + $0x300] sm:$0xff]
  %v123 = vld [vmem:[%s1 + $0x308] sm:$0xf]
  %v124 = vld [vmem:[%s1 + $0x30c] sm:$0xff]
  %v125 = vld [vmem:[%s1 + $0x314] sm:$0xff]
  %v126 = vld [vmem:[%s1 + $0x31c] sm:$0xff]
  %v127 = vld [vmem:[%s1 + $0x324] sm:$0xff]
  %v128 = vld [vmem:[%s1 + $0x32c] sm:$0xff]
  %v129 = vld [vmem:[%s1 + $0x334] sm:$0xff]
  %v130 = vld [vmem:[%s1 + $0x33c] sm:$0xff]
  %v131 = vld [vmem:[%s1 + $0x344] sm:$0xf]
  %v132 = vld [vmem:[%s1 + $0x348] sm:$0xff]
  %v133 = vld [vmem:[%s1 + $0x350] sm:$0xff]
  %v134 = vld [vmem:[%s1 + $0x358] sm:$0xff]
  %v135 = vld [vmem:[%s1 + $0x360] sm:$0xff]
  %v136 = vld [vmem:[%s1 + $0x368] sm:$0xff]
  %v137 = vld [vmem:[%s1 + $0x370] sm:$0xff]
  %v138 = vld [vmem:[%s1 + $0x378] sm:$0xff]
  %v139 = vld [vmem:[%s1 + $0x380] sm:$0xf]
  %v140 = vld [vmem:[%s1 + $0x384] sm:$0xff]
  %v141 = vld [vmem:[%s1 + $0x38c] sm:$0xff]
  %v142 = vld [vmem:[%s1 + $0x394] sm:$0xff]
  %v143 = vld [vmem:[%s1 + $0x39c] sm:$0xff]
  %v144 = vld [vmem:[%s1 + $0x3a4] sm:$0xff]
  %v145 = vld [vmem:[%s1 + $0x3ac] sm:$0xff]
  %v146 = vld [vmem:[%s1 + $0x3b4] sm:$0xff]
  %v147 = vld [vmem:[%s1 + $0x3bc] sm:$0xf]
  %v150 = vunpack.c.l.b16 %v12
  %v151 = vunpack.c.l.b16 %v13
  %v152 = vpack.c.b16 %v151, %v150
  %v185 = vunpack.c.l.b16 %v20
  %v186 = vunpack.c.h.b16 %v20
  %v187 = vunpack.c.l.b16 %v21
  %v188 = vunpack.c.h.b16 %v21
  %v189 = vunpack.c.l.b16 %v22
  %v190 = vunpack.c.h.b16 %v22
  %v191 = vunpack.c.l.b16 %v23
  %v192 = vunpack.c.h.b16 %v23
  %v193 = vunpack.c.l.b16 %v24
  %v194 = vunpack.c.h.b16 %v24
  %v195 = vunpack.c.l.b16 %v25
  %v196 = vunpack.c.h.b16 %v25
  %v197 = vunpack.c.l.b16 %v26
  %v198 = vunpack.c.h.b16 %v26
  %v199 = vunpack.c.l.b16 %v27
  %v200 = vunpack.c.l.b16 %v28
  %v201 = vunpack.c.h.b16 %v28
  %v202 = vunpack.c.l.b16 %v29
  %v203 = vunpack.c.h.b16 %v29
  %v204 = vunpack.c.l.b16 %v30
  %v205 = vunpack.c.h.b16 %v30
  %v206 = vunpack.c.l.b16 %v31
  %v207 = vunpack.c.h.b16 %v31
  %v208 = vunpack.c.l.b16 %v32
  %v209 = vunpack.c.h.b16 %v32
  %v210 = vunpack.c.l.b16 %v33
  %v211 = vunpack.c.h.b16 %v33
  %v212 = vunpack.c.l.b16 %v34
  %v213 = vunpack.c.h.b16 %v34
  %v214 = vunpack.c.l.b16 %v35
  %v215 = vunpack.c.l.b16 %v36
  %v216 = vunpack.c.h.b16 %v36
  %v217 = vunpack.c.l.b16 %v37
  %v218 = vunpack.c.h.b16 %v37
  %v219 = vunpack.c.l.b16 %v38
  %v220 = vunpack.c.h.b16 %v38
  %v221 = vunpack.c.l.b16 %v39
  %v222 = vunpack.c.h.b16 %v39
  %v223 = vunpack.c.l.b16 %v40
  %v224 = vunpack.c.h.b16 %v40
  %v225 = vunpack.c.l.b16 %v41
  %v226 = vunpack.c.h.b16 %v41
  %v227 = vunpack.c.l.b16 %v42
  %v228 = vunpack.c.h.b16 %v42
  %v229 = vunpack.c.l.b16 %v43
  %v230 = vunpack.c.l.b16 %v44
  %v231 = vunpack.c.h.b16 %v44
  %v232 = vunpack.c.l.b16 %v45
  %v233 = vunpack.c.h.b16 %v45
  %v234 = vunpack.c.l.b16 %v46
  %v235 = vunpack.c.h.b16 %v46
  %v236 = vunpack.c.l.b16 %v47
  %v237 = vunpack.c.h.b16 %v47
  %v238 = vunpack.c.l.b16 %v48
  %v239 = vunpack.c.h.b16 %v48
  %v240 = vunpack.c.l.b16 %v49
  %v241 = vunpack.c.h.b16 %v49
  %v242 = vunpack.c.l.b16 %v50
  %v243 = vunpack.c.h.b16 %v50
  %v244 = vunpack.c.l.b16 %v51
  %v245 = vpack.c.b16 %v200, %v185
  %v246 = vpack.c.b16 %v201, %v186
  %v247 = vpack.c.b16 %v202, %v187
  %v248 = vpack.c.b16 %v203, %v188
  %v249 = vpack.c.b16 %v204, %v189
  %v250 = vpack.c.b16 %v205, %v190
  %v251 = vpack.c.b16 %v206, %v191
  %v252 = vpack.c.b16 %v207, %v192
  %v253 = vpack.c.b16 %v208, %v193
  %v254 = vpack.c.b16 %v209, %v194
  %v255 = vpack.c.b16 %v210, %v195
  %v256 = vpack.c.b16 %v211, %v196
  %v257 = vpack.c.b16 %v212, %v197
  %v258 = vpack.c.b16 %v213, %v198
  %v259 = vpack.c.b16 %v214, %v199
  %v260 = vpack.c.b16 %v230, %v215
  %v261 = vpack.c.b16 %v231, %v216
  %v262 = vpack.c.b16 %v232, %v217
  %v263 = vpack.c.b16 %v233, %v218
  %v264 = vpack.c.b16 %v234, %v219
  %v265 = vpack.c.b16 %v235, %v220
  %v266 = vpack.c.b16 %v236, %v221
  %v267 = vpack.c.b16 %v237, %v222
  %v268 = vpack.c.b16 %v238, %v223
  %v269 = vpack.c.b16 %v239, %v224
  %v270 = vpack.c.b16 %v240, %v225
  %v271 = vpack.c.b16 %v241, %v226
  %v272 = vpack.c.b16 %v242, %v227
  %v273 = vpack.c.b16 %v243, %v228
  %v274 = vpack.c.b16 %v244, %v229
  %vm305 = vcmask 261120
  %v307 = vsel %vm305, %v152, 0
  %309 = vmatprep.subr.bf16.mxu0 0
  %310 = vmatpush1.bf16.msra.mxu0 0
  %311 = vmatprep.subr.bf16.mxu0 0
  %312 = vmatpush1.bf16.msra.mxu0 0
  %313 = vmatprep.subr.bf16.mxu0 0
  %314 = vmatpush1.bf16.msra.mxu0 0
  %315 = vmatprep.subr.bf16.mxu0 0
  %316 = vmatpush1.bf16.msra.mxu0 0
  %317 = vmatprep.subr.bf16.mxu0 0
  %318 = vmatpush1.bf16.msra.mxu0 0
  %319 = vmatprep.subr.bf16.mxu0 0
  %320 = vmatpush1.bf16.msra.mxu0 0
  %321 = vmatprep.subr.bf16.mxu0 %v261
  %322 = vmatpush1.bf16.msra.mxu0 %v260
  %323 = vmatprep.subr.bf16.mxu0 %v246
  %324 = vmatpush1.bf16.msra.mxu0 %v245
  %325 = vmatprep.subr.bf16.mxu0 0
  %326 = vmatpush2.bf16.msra.mxu0 0
  %327 = vmatprep.subr.bf16.mxu0 0
  %328 = vmatpush2.bf16.msra.mxu0 0
  %329 = vmatprep.subr.bf16.mxu0 0
  %330 = vmatpush2.bf16.msra.mxu0 0
  %331 = vmatprep.subr.bf16.mxu0 0
  %332 = vmatpush2.bf16.msra.mxu0 0
  %333 = vmatprep.subr.bf16.mxu0 0
  %334 = vmatpush2.bf16.msra.mxu0 0
  %335 = vmatprep.subr.bf16.mxu0 0
  %336 = vmatpush2.bf16.msra.mxu0 0
  %337 = vmatprep.subr.bf16.mxu0 0
  %338 = vmatpush2.bf16.msra.mxu0 0
  %339 = vmatprep.subr.bf16.mxu0 0
  %340 = vmatpush2.bf16.msra.mxu0 0
  %341 = vmatprep.mubr.bf16.mxu0 0
  %342 = vmatmul.mubr.bf16.gmra.mxu0 %v307
  %v343 = vpop.f32.mrf.mxu0
  %v344 = vadd.f32 0.0, %v343
  %v345 = vpop.f32.mrf.mxu0
  %v346 = vadd.f32 0.0, %v345
  %v347 = vpop.f32.mrf.mxu0
  %v348 = vadd.f32 0.0, %v347
  %v349 = vpop.f32.mrf.mxu0
  %v350 = vadd.f32 0.0, %v349
  %351 = vdwg.mxu0
  %352 = vmatprep.subr.bf16.mxu0 0
  %353 = vmatpush1.bf16.msra.mxu0 0
  %354 = vmatprep.subr.bf16.mxu0 0
  %355 = vmatpush1.bf16.msra.mxu0 0
  %356 = vmatprep.subr.bf16.mxu0 0
  %357 = vmatpush1.bf16.msra.mxu0 0
  %358 = vmatprep.subr.bf16.mxu0 0
  %359 = vmatpush1.bf16.msra.mxu0 0
  %360 = vmatprep.subr.bf16.mxu0 0
  %361 = vmatpush1.bf16.msra.mxu0 0
  %362 = vmatprep.subr.bf16.mxu0 0
  %363 = vmatpush1.bf16.msra.mxu0 0
  %364 = vmatprep.subr.bf16.mxu0 %v263
  %365 = vmatpush1.bf16.msra.mxu0 %v262
  %366 = vmatprep.subr.bf16.mxu0 %v248
  %367 = vmatpush1.bf16.msra.mxu0 %v247
  %368 = vmatprep.subr.bf16.mxu0 0
  %369 = vmatpush2.bf16.msra.mxu0 0
  %370 = vmatprep.subr.bf16.mxu0 0
  %371 = vmatpush2.bf16.msra.mxu0 0
  %372 = vmatprep.subr.bf16.mxu0 0
  %373 = vmatpush2.bf16.msra.mxu0 0
  %374 = vmatprep.subr.bf16.mxu0 0
  %375 = vmatpush2.bf16.msra.mxu0 0
  %376 = vmatprep.subr.bf16.mxu0 0
  %377 = vmatpush2.bf16.msra.mxu0 0
  %378 = vmatprep.subr.bf16.mxu0 0
  %379 = vmatpush2.bf16.msra.mxu0 0
  %380 = vmatprep.subr.bf16.mxu0 0
  %381 = vmatpush2.bf16.msra.mxu0 0
  %382 = vmatprep.subr.bf16.mxu0 0
  %383 = vmatpush2.bf16.msra.mxu0 0
  %384 = vmatprep.mubr.bf16.mxu0 0
  %385 = vmatmul.mubr.bf16.gmra.mxu0 %v307
  %v386 = vpop.f32.mrf.mxu0
  %v387 = vadd.f32 0.0, %v386
  %v388 = vpop.f32.mrf.mxu0
  %v389 = vadd.f32 0.0, %v388
  %v390 = vpop.f32.mrf.mxu0
  %v391 = vadd.f32 0.0, %v390
  %v392 = vpop.f32.mrf.mxu0
  %v393 = vadd.f32 0.0, %v392
  %394 = vdwg.mxu0
  %395 = vmatprep.subr.bf16.mxu0 0
  %396 = vmatpush1.bf16.msra.mxu0 0
  %397 = vmatprep.subr.bf16.mxu0 0
  %398 = vmatpush1.bf16.msra.mxu0 0
  %399 = vmatprep.subr.bf16.mxu0 0
  %400 = vmatpush1.bf16.msra.mxu0 0
  %401 = vmatprep.subr.bf16.mxu0 0
  %402 = vmatpush1.bf16.msra.mxu0 0
  %403 = vmatprep.subr.bf16.mxu0 0
  %404 = vmatpush1.bf16.msra.mxu0 0
  %405 = vmatprep.subr.bf16.mxu0 0
  %406 = vmatpush1.bf16.msra.mxu0 0
  %407 = vmatprep.subr.bf16.mxu0 %v265
  %408 = vmatpush1.bf16.msra.mxu0 %v264
  %409 = vmatprep.subr.bf16.mxu0 %v250
  %410 = vmatpush1.bf16.msra.mxu0 %v249
  %411 = vmatprep.subr.bf16.mxu0 0
  %412 = vmatpush2.bf16.msra.mxu0 0
  %413 = vmatprep.subr.bf16.mxu0 0
  %414 = vmatpush2.bf16.msra.mxu0 0
  %415 = vmatprep.subr.bf16.mxu0 0
  %416 = vmatpush2.bf16.msra.mxu0 0
  %417 = vmatprep.subr.bf16.mxu0 0
  %418 = vmatpush2.bf16.msra.mxu0 0
  %419 = vmatprep.subr.bf16.mxu0 0
  %420 = vmatpush2.bf16.msra.mxu0 0
  %421 = vmatprep.subr.bf16.mxu0 0
  %422 = vmatpush2.bf16.msra.mxu0 0
  %423 = vmatprep.subr.bf16.mxu0 0
  %424 = vmatpush2.bf16.msra.mxu0 0
  %425 = vmatprep.subr.bf16.mxu0 0
  %426 = vmatpush2.bf16.msra.mxu0 0
  %427 = vmatprep.mubr.bf16.mxu0 0
  %428 = vmatmul.mubr.bf16.gmra.mxu0 %v307
  %v429 = vpop.f32.mrf.mxu0
  %v430 = vadd.f32 0.0, %v429
  %v431 = vpop.f32.mrf.mxu0
  %v432 = vadd.f32 0.0, %v431
  %v433 = vpop.f32.mrf.mxu0
  %v434 = vadd.f32 0.0, %v433
  %v435 = vpop.f32.mrf.mxu0
  %v436 = vadd.f32 0.0, %v435
  %437 = vdwg.mxu0
  %438 = vmatprep.subr.bf16.mxu0 0
  %439 = vmatpush1.bf16.msra.mxu0 0
  %440 = vmatprep.subr.bf16.mxu0 0
  %441 = vmatpush1.bf16.msra.mxu0 0
  %442 = vmatprep.subr.bf16.mxu0 0
  %443 = vmatpush1.bf16.msra.mxu0 0
  %444 = vmatprep.subr.bf16.mxu0 0
  %445 = vmatpush1.bf16.msra.mxu0 0
  %446 = vmatprep.subr.bf16.mxu0 0
  %447 = vmatpush1.bf16.msra.mxu0 0
  %448 = vmatprep.subr.bf16.mxu0 0
  %449 = vmatpush1.bf16.msra.mxu0 0
  %450 = vmatprep.subr.bf16.mxu0 %v267
  %451 = vmatpush1.bf16.msra.mxu0 %v266
  %452 = vmatprep.subr.bf16.mxu0 %v252
  %453 = vmatpush1.bf16.msra.mxu0 %v251
  %454 = vmatprep.subr.bf16.mxu0 0
  %455 = vmatpush2.bf16.msra.mxu0 0
  %456 = vmatprep.subr.bf16.mxu0 0
  %457 = vmatpush2.bf16.msra.mxu0 0
  %458 = vmatprep.subr.bf16.mxu0 0
  %459 = vmatpush2.bf16.msra.mxu0 0
  %460 = vmatprep.subr.bf16.mxu0 0
  %461 = vmatpush2.bf16.msra.mxu0 0
  %462 = vmatprep.subr.bf16.mxu0 0
  %463 = vmatpush2.bf16.msra.mxu0 0
  %464 = vmatprep.subr.bf16.mxu0 0
  %465 = vmatpush2.bf16.msra.mxu0 0
  %466 = vmatprep.subr.bf16.mxu0 0
  %467 = vmatpush2.bf16.msra.mxu0 0
  %468 = vmatprep.subr.bf16.mxu0 0
  %469 = vmatpush2.bf16.msra.mxu0 0
  %470 = vmatprep.mubr.bf16.mxu0 0
  %471 = vmatmul.mubr.bf16.gmra.mxu0 %v307
  %v472 = vpop.f32.mrf.mxu0
  %v473 = vadd.f32 0.0, %v472
  %v474 = vpop.f32.mrf.mxu0
  %v475 = vadd.f32 0.0, %v474
  %v476 = vpop.f32.mrf.mxu0
  %v477 = vadd.f32 0.0, %v476
  %v478 = vpop.f32.mrf.mxu0
  %v479 = vadd.f32 0.0, %v478
  %480 = vdwg.mxu0
  %481 = vmatprep.subr.bf16.mxu0 0
  %482 = vmatpush1.bf16.msra.mxu0 0
  %483 = vmatprep.subr.bf16.mxu0 0
  %484 = vmatpush1.bf16.msra.mxu0 0
  %485 = vmatprep.subr.bf16.mxu0 0
  %486 = vmatpush1.bf16.msra.mxu0 0
  %487 = vmatprep.subr.bf16.mxu0 0
  %488 = vmatpush1.bf16.msra.mxu0 0
  %489 = vmatprep.subr.bf16.mxu0 0
  %490 = vmatpush1.bf16.msra.mxu0 0
  %491 = vmatprep.subr.bf16.mxu0 0
  %492 = vmatpush1.bf16.msra.mxu0 0
  %493 = vmatprep.subr.bf16.mxu0 %v269
  %494 = vmatpush1.bf16.msra.mxu0 %v268
  %495 = vmatprep.subr.bf16.mxu0 %v254
  %496 = vmatpush1.bf16.msra.mxu0 %v253
  %497 = vmatprep.subr.bf16.mxu0 0
  %498 = vmatpush2.bf16.msra.mxu0 0
  %499 = vmatprep.subr.bf16.mxu0 0
  %500 = vmatpush2.bf16.msra.mxu0 0
  %501 = vmatprep.subr.bf16.mxu0 0
  %502 = vmatpush2.bf16.msra.mxu0 0
  %503 = vmatprep.subr.bf16.mxu0 0
  %504 = vmatpush2.bf16.msra.mxu0 0
  %505 = vmatprep.subr.bf16.mxu0 0
  %506 = vmatpush2.bf16.msra.mxu0 0
  %507 = vmatprep.subr.bf16.mxu0 0
  %508 = vmatpush2.bf16.msra.mxu0 0
  %509 = vmatprep.subr.bf16.mxu0 0
  %510 = vmatpush2.bf16.msra.mxu0 0
  %511 = vmatprep.subr.bf16.mxu0 0
  %512 = vmatpush2.bf16.msra.mxu0 0
  %513 = vmatprep.mubr.bf16.mxu0 0
  %514 = vmatmul.mubr.bf16.gmra.mxu0 %v307
  %v515 = vpop.f32.mrf.mxu0
  %v516 = vadd.f32 0.0, %v515
  %v517 = vpop.f32.mrf.mxu0
  %v518 = vadd.f32 0.0, %v517
  %v519 = vpop.f32.mrf.mxu0
  %v520 = vadd.f32 0.0, %v519
  %v521 = vpop.f32.mrf.mxu0
  %v522 = vadd.f32 0.0, %v521
  %523 = vdwg.mxu0
  %524 = vmatprep.subr.bf16.mxu0 0
  %525 = vmatpush1.bf16.msra.mxu0 0
  %526 = vmatprep.subr.bf16.mxu0 0
  %527 = vmatpush1.bf16.msra.mxu0 0
  %528 = vmatprep.subr.bf16.mxu0 0
  %529 = vmatpush1.bf16.msra.mxu0 0
  %530 = vmatprep.subr.bf16.mxu0 0
  %531 = vmatpush1.bf16.msra.mxu0 0
  %532 = vmatprep.subr.bf16.mxu0 0
  %533 = vmatpush1.bf16.msra.mxu0 0
  %534 = vmatprep.subr.bf16.mxu0 0
  %535 = vmatpush1.bf16.msra.mxu0 0
  %536 = vmatprep.subr.bf16.mxu0 %v271
  %537 = vmatpush1.bf16.msra.mxu0 %v270
  %538 = vmatprep.subr.bf16.mxu0 %v256
  %539 = vmatpush1.bf16.msra.mxu0 %v255
  %540 = vmatprep.subr.bf16.mxu0 0
  %541 = vmatpush2.bf16.msra.mxu0 0
  %542 = vmatprep.subr.bf16.mxu0 0
  %543 = vmatpush2.bf16.msra.mxu0 0
  %544 = vmatprep.subr.bf16.mxu0 0
  %545 = vmatpush2.bf16.msra.mxu0 0
  %546 = vmatprep.subr.bf16.mxu0 0
  %547 = vmatpush2.bf16.msra.mxu0 0
  %548 = vmatprep.subr.bf16.mxu0 0
  %549 = vmatpush2.bf16.msra.mxu0 0
  %550 = vmatprep.subr.bf16.mxu0 0
  %551 = vmatpush2.bf16.msra.mxu0 0
  %552 = vmatprep.subr.bf16.mxu0 0
  %553 = vmatpush2.bf16.msra.mxu0 0
  %554 = vmatprep.subr.bf16.mxu0 0
  %555 = vmatpush2.bf16.msra.mxu0 0
  %556 = vmatprep.mubr.bf16.mxu0 0
  %557 = vmatmul.mubr.bf16.gmra.mxu0 %v307
  %v558 = vpop.f32.mrf.mxu0
  %v559 = vadd.f32 0.0, %v558
  %v560 = vpop.f32.mrf.mxu0
  %v561 = vadd.f32 0.0, %v560
  %v562 = vpop.f32.mrf.mxu0
  %v563 = vadd.f32 0.0, %v562
  %v564 = vpop.f32.mrf.mxu0
  %v565 = vadd.f32 0.0, %v564
  %566 = vdwg.mxu0
  %567 = vmatprep.subr.bf16.mxu0 0
  %568 = vmatpush1.bf16.msra.mxu0 0
  %569 = vmatprep.subr.bf16.mxu0 0
  %570 = vmatpush1.bf16.msra.mxu0 0
  %571 = vmatprep.subr.bf16.mxu0 0
  %572 = vmatpush1.bf16.msra.mxu0 0
  %573 = vmatprep.subr.bf16.mxu0 0
  %574 = vmatpush1.bf16.msra.mxu0 0
  %575 = vmatprep.subr.bf16.mxu0 0
  %576 = vmatpush1.bf16.msra.mxu0 0
  %577 = vmatprep.subr.bf16.mxu0 0
  %578 = vmatpush1.bf16.msra.mxu0 0
  %579 = vmatprep.subr.bf16.mxu0 %v273
  %580 = vmatpush1.bf16.msra.mxu0 %v272
  %581 = vmatprep.subr.bf16.mxu0 %v258
  %582 = vmatpush1.bf16.msra.mxu0 %v257
  %583 = vmatprep.subr.bf16.mxu0 0
  %584 = vmatpush2.bf16.msra.mxu0 0
  %585 = vmatprep.subr.bf16.mxu0 0
  %586 = vmatpush2.bf16.msra.mxu0 0
  %587 = vmatprep.subr.bf16.mxu0 0
  %588 = vmatpush2.bf16.msra.mxu0 0
  %589 = vmatprep.subr.bf16.mxu0 0
  %590 = vmatpush2.bf16.msra.mxu0 0
  %591 = vmatprep.subr.bf16.mxu0 0
  %592 = vmatpush2.bf16.msra.mxu0 0
  %593 = vmatprep.subr.bf16.mxu0 0
  %594 = vmatpush2.bf16.msra.mxu0 0
  %595 = vmatprep.subr.bf16.mxu0 0
  %596 = vmatpush2.bf16.msra.mxu0 0
  %597 = vmatprep.subr.bf16.mxu0 0
  %598 = vmatpush2.bf16.msra.mxu0 0
  %599 = vmatprep.mubr.bf16.mxu0 0
  %600 = vmatmul.mubr.bf16.gmra.mxu0 %v307
  %v601 = vpop.f32.mrf.mxu0
  %v602 = vadd.f32 0.0, %v601
  %v603 = vpop.f32.mrf.mxu0
  %v604 = vadd.f32 0.0, %v603
  %v605 = vpop.f32.mrf.mxu0
  %v606 = vadd.f32 0.0, %v605
  %v607 = vpop.f32.mrf.mxu0
  %v608 = vadd.f32 0.0, %v607
  %609 = vdwg.mxu0
  %610 = vmatprep.subr.bf16.mxu0 0
  %611 = vmatpush1.bf16.msra.mxu0 0
  %612 = vmatprep.subr.bf16.mxu0 0
  %613 = vmatpush1.bf16.msra.mxu0 0
  %614 = vmatprep.subr.bf16.mxu0 0
  %615 = vmatpush1.bf16.msra.mxu0 0
  %616 = vmatprep.subr.bf16.mxu0 0
  %617 = vmatpush1.bf16.msra.mxu0 0
  %618 = vmatprep.subr.bf16.mxu0 0
  %619 = vmatpush1.bf16.msra.mxu0 0
  %620 = vmatprep.subr.bf16.mxu0 0
  %621 = vmatpush1.bf16.msra.mxu0 0
  %622 = vmatprep.subr.bf16.mxu0 0
  %623 = vmatpush1.bf16.msra.mxu0 %v274
  %624 = vmatprep.subr.bf16.mxu0 0
  %625 = vmatpush1.bf16.msra.mxu0 %v259
  %626 = vmatprep.subr.bf16.mxu0 0
  %627 = vmatpush2.bf16.msra.mxu0 0
  %628 = vmatprep.subr.bf16.mxu0 0
  %629 = vmatpush2.bf16.msra.mxu0 0
  %630 = vmatprep.subr.bf16.mxu0 0
  %631 = vmatpush2.bf16.msra.mxu0 0
  %632 = vmatprep.subr.bf16.mxu0 0
  %633 = vmatpush2.bf16.msra.mxu0 0
  %634 = vmatprep.subr.bf16.mxu0 0
  %635 = vmatpush2.bf16.msra.mxu0 0
  %636 = vmatprep.subr.bf16.mxu0 0
  %637 = vmatpush2.bf16.msra.mxu0 0
  %638 = vmatprep.subr.bf16.mxu0 0
  %639 = vmatpush2.bf16.msra.mxu0 0
  %640 = vmatprep.subr.bf16.mxu0 0
  %641 = vmatpush2.bf16.msra.mxu0 0
  %642 = vmatprep.mubr.bf16.mxu0 0
  %643 = vmatmul.mubr.bf16.gmra.mxu0 %v307
  %v644 = vpop.f32.mrf.mxu0
  %v645 = vadd.f32 0.0, %v644
  %v646 = vpop.f32.mrf.mxu0
  %v647 = vpop.f32.mrf.mxu0
  %v648 = vadd.f32 0.0, %v647
  %v649 = vpop.f32.mrf.mxu0
  %650 = vdwg.mxu0
  %v653 = vunpack.c.l.b16 %v14
  %v654 = vunpack.c.l.b16 %v15
  %v655 = vpack.c.b16 %v654, %v653
  %v688 = vunpack.c.l.b16 %v52
  %v689 = vunpack.c.h.b16 %v52
  %v690 = vunpack.c.l.b16 %v53
  %v691 = vunpack.c.h.b16 %v53
  %v692 = vunpack.c.l.b16 %v54
  %v693 = vunpack.c.h.b16 %v54
  %v694 = vunpack.c.l.b16 %v55
  %v695 = vunpack.c.h.b16 %v55
  %v696 = vunpack.c.l.b16 %v56
  %v697 = vunpack.c.h.b16 %v56
  %v698 = vunpack.c.l.b16 %v57
  %v699 = vunpack.c.h.b16 %v57
  %v700 = vunpack.c.l.b16 %v58
  %v701 = vunpack.c.h.b16 %v58
  %v702 = vunpack.c.l.b16 %v59
  %v703 = vunpack.c.l.b16 %v60
  %v704 = vunpack.c.h.b16 %v60
  %v705 = vunpack.c.l.b16 %v61
  %v706 = vunpack.c.h.b16 %v61
  %v707 = vunpack.c.l.b16 %v62
  %v708 = vunpack.c.h.b16 %v62
  %v709 = vunpack.c.l.b16 %v63
  %v710 = vunpack.c.h.b16 %v63
  %v711 = vunpack.c.l.b16 %v64
  %v712 = vunpack.c.h.b16 %v64
  %v713 = vunpack.c.l.b16 %v65
  %v714 = vunpack.c.h.b16 %v65
  %v715 = vunpack.c.l.b16 %v66
  %v716 = vunpack.c.h.b16 %v66
  %v717 = vunpack.c.l.b16 %v67
  %v718 = vunpack.c.l.b16 %v68
  %v719 = vunpack.c.h.b16 %v68
  %v720 = vunpack.c.l.b16 %v69
  %v721 = vunpack.c.h.b16 %v69
  %v722 = vunpack.c.l.b16 %v70
  %v723 = vunpack.c.h.b16 %v70
  %v724 = vunpack.c.l.b16 %v71
  %v725 = vunpack.c.h.b16 %v71
  %v726 = vunpack.c.l.b16 %v72
  %v727 = vunpack.c.h.b16 %v72
  %v728 = vunpack.c.l.b16 %v73
  %v729 = vunpack.c.h.b16 %v73
  %v730 = vunpack.c.l.b16 %v74
  %v731 = vunpack.c.h.b16 %v74
  %v732 = vunpack.c.l.b16 %v75
  %v733 = vunpack.c.l.b16 %v76
  %v734 = vunpack.c.h.b16 %v76
  %v735 = vunpack.c.l.b16 %v77
  %v736 = vunpack.c.h.b16 %v77
  %v737 = vunpack.c.l.b16 %v78
  %v738 = vunpack.c.h.b16 %v78
  %v739 = vunpack.c.l.b16 %v79
  %v740 = vunpack.c.h.b16 %v79
  %v741 = vunpack.c.l.b16 %v80
  %v742 = vunpack.c.h.b16 %v80
  %v743 = vunpack.c.l.b16 %v81
  %v744 = vunpack.c.h.b16 %v81
  %v745 = vunpack.c.l.b16 %v82
  %v746 = vunpack.c.h.b16 %v82
  %v747 = vunpack.c.l.b16 %v83
  %v748 = vpack.c.b16 %v703, %v688
  %v749 = vpack.c.b16 %v704, %v689
  %v750 = vpack.c.b16 %v705, %v690
  %v751 = vpack.c.b16 %v706, %v691
  %v752 = vpack.c.b16 %v707, %v692
  %v753 = vpack.c.b16 %v708, %v693
  %v754 = vpack.c.b16 %v709, %v694
  %v755 = vpack.c.b16 %v710, %v695
  %v756 = vpack.c.b16 %v711, %v696
  %v757 = vpack.c.b16 %v712, %v697
  %v758 = vpack.c.b16 %v713, %v698
  %v759 = vpack.c.b16 %v714, %v699
  %v760 = vpack.c.b16 %v715, %v700
  %v761 = vpack.c.b16 %v716, %v701
  %v762 = vpack.c.b16 %v717, %v702
  %v763 = vpack.c.b16 %v733, %v718
  %v764 = vpack.c.b16 %v734, %v719
  %v765 = vpack.c.b16 %v735, %v720
  %v766 = vpack.c.b16 %v736, %v721
  %v767 = vpack.c.b16 %v737, %v722
  %v768 = vpack.c.b16 %v738, %v723
  %v769 = vpack.c.b16 %v739, %v724
  %v770 = vpack.c.b16 %v740, %v725
  %v771 = vpack.c.b16 %v741, %v726
  %v772 = vpack.c.b16 %v742, %v727
  %v773 = vpack.c.b16 %v743, %v728
  %v774 = vpack.c.b16 %v744, %v729
  %v775 = vpack.c.b16 %v745, %v730
  %v776 = vpack.c.b16 %v746, %v731
  %v777 = vpack.c.b16 %v747, %v732
  %v809 = vsel %vm305, %v655, 0
  %811 = vmatprep.subr.bf16.mxu0 0
  %812 = vmatpush1.bf16.msra.mxu0 0
  %813 = vmatprep.subr.bf16.mxu0 0
  %814 = vmatpush1.bf16.msra.mxu0 0
  %815 = vmatprep.subr.bf16.mxu0 0
  %816 = vmatpush1.bf16.msra.mxu0 0
  %817 = vmatprep.subr.bf16.mxu0 0
  %818 = vmatpush1.bf16.msra.mxu0 0
  %819 = vmatprep.subr.bf16.mxu0 0
  %820 = vmatpush1.bf16.msra.mxu0 0
  %821 = vmatprep.subr.bf16.mxu0 0
  %822 = vmatpush1.bf16.msra.mxu0 0
  %823 = vmatprep.subr.bf16.mxu0 %v764
  %824 = vmatpush1.bf16.msra.mxu0 %v763
  %825 = vmatprep.subr.bf16.mxu0 %v749
  %826 = vmatpush1.bf16.msra.mxu0 %v748
  %827 = vmatprep.subr.bf16.mxu0 0
  %828 = vmatpush2.bf16.msra.mxu0 0
  %829 = vmatprep.subr.bf16.mxu0 0
  %830 = vmatpush2.bf16.msra.mxu0 0
  %831 = vmatprep.subr.bf16.mxu0 0
  %832 = vmatpush2.bf16.msra.mxu0 0
  %833 = vmatprep.subr.bf16.mxu0 0
  %834 = vmatpush2.bf16.msra.mxu0 0
  %835 = vmatprep.subr.bf16.mxu0 0
  %836 = vmatpush2.bf16.msra.mxu0 0
  %837 = vmatprep.subr.bf16.mxu0 0
  %838 = vmatpush2.bf16.msra.mxu0 0
  %839 = vmatprep.subr.bf16.mxu0 0
  %840 = vmatpush2.bf16.msra.mxu0 0
  %841 = vmatprep.subr.bf16.mxu0 0
  %842 = vmatpush2.bf16.msra.mxu0 0
  %843 = vmatprep.mubr.bf16.mxu0 0
  %844 = vmatmul.mubr.bf16.gmra.mxu0 %v809
  %v845 = vpop.f32.mrf.mxu0
  %v846 = vadd.f32 0.0, %v845
  %v847 = vpop.f32.mrf.mxu0
  %v848 = vadd.f32 0.0, %v847
  %v849 = vpop.f32.mrf.mxu0
  %v850 = vadd.f32 0.0, %v849
  %v851 = vpop.f32.mrf.mxu0
  %v852 = vadd.f32 0.0, %v851
  %853 = vdwg.mxu0
  %854 = vmatprep.subr.bf16.mxu0 0
  %855 = vmatpush1.bf16.msra.mxu0 0
  %856 = vmatprep.subr.bf16.mxu0 0
  %857 = vmatpush1.bf16.msra.mxu0 0
  %858 = vmatprep.subr.bf16.mxu0 0
  %859 = vmatpush1.bf16.msra.mxu0 0
  %860 = vmatprep.subr.bf16.mxu0 0
  %861 = vmatpush1.bf16.msra.mxu0 0
  %862 = vmatprep.subr.bf16.mxu0 0
  %863 = vmatpush1.bf16.msra.mxu0 0
  %864 = vmatprep.subr.bf16.mxu0 0
  %865 = vmatpush1.bf16.msra.mxu0 0
  %866 = vmatprep.subr.bf16.mxu0 %v766
  %867 = vmatpush1.bf16.msra.mxu0 %v765
  %868 = vmatprep.subr.bf16.mxu0 %v751
  %869 = vmatpush1.bf16.msra.mxu0 %v750
  %870 = vmatprep.subr.bf16.mxu0 0
  %871 = vmatpush2.bf16.msra.mxu0 0
  %872 = vmatprep.subr.bf16.mxu0 0
  %873 = vmatpush2.bf16.msra.mxu0 0
  %874 = vmatprep.subr.bf16.mxu0 0
  %875 = vmatpush2.bf16.msra.mxu0 0
  %876 = vmatprep.subr.bf16.mxu0 0
  %877 = vmatpush2.bf16.msra.mxu0 0
  %878 = vmatprep.subr.bf16.mxu0 0
  %879 = vmatpush2.bf16.msra.mxu0 0
  %880 = vmatprep.subr.bf16.mxu0 0
  %881 = vmatpush2.bf16.msra.mxu0 0
  %882 = vmatprep.subr.bf16.mxu0 0
  %883 = vmatpush2.bf16.msra.mxu0 0
  %884 = vmatprep.subr.bf16.mxu0 0
  %885 = vmatpush2.bf16.msra.mxu0 0
  %886 = vmatprep.mubr.bf16.mxu0 0
  %887 = vmatmul.mubr.bf16.gmra.mxu0 %v809
  %v888 = vpop.f32.mrf.mxu0
  %v889 = vadd.f32 0.0, %v888
  %v890 = vpop.f32.mrf.mxu0
  %v891 = vadd.f32 0.0, %v890
  %v892 = vpop.f32.mrf.mxu0
  %v893 = vadd.f32 0.0, %v892
  %v894 = vpop.f32.mrf.mxu0
  %v895 = vadd.f32 0.0, %v894
  %896 = vdwg.mxu0
  %897 = vmatprep.subr.bf16.mxu0 0
  %898 = vmatpush1.bf16.msra.mxu0 0
  %899 = vmatprep.subr.bf16.mxu0 0
  %900 = vmatpush1.bf16.msra.mxu0 0
  %901 = vmatprep.subr.bf16.mxu0 0
  %902 = vmatpush1.bf16.msra.mxu0 0
  %903 = vmatprep.subr.bf16.mxu0 0
  %904 = vmatpush1.bf16.msra.mxu0 0
  %905 = vmatprep.subr.bf16.mxu0 0
  %906 = vmatpush1.bf16.msra.mxu0 0
  %907 = vmatprep.subr.bf16.mxu0 0
  %908 = vmatpush1.bf16.msra.mxu0 0
  %909 = vmatprep.subr.bf16.mxu0 %v768
  %910 = vmatpush1.bf16.msra.mxu0 %v767
  %911 = vmatprep.subr.bf16.mxu0 %v753
  %912 = vmatpush1.bf16.msra.mxu0 %v752
  %913 = vmatprep.subr.bf16.mxu0 0
  %914 = vmatpush2.bf16.msra.mxu0 0
  %915 = vmatprep.subr.bf16.mxu0 0
  %916 = vmatpush2.bf16.msra.mxu0 0
  %917 = vmatprep.subr.bf16.mxu0 0
  %918 = vmatpush2.bf16.msra.mxu0 0
  %919 = vmatprep.subr.bf16.mxu0 0
  %920 = vmatpush2.bf16.msra.mxu0 0
  %921 = vmatprep.subr.bf16.mxu0 0
  %922 = vmatpush2.bf16.msra.mxu0 0
  %923 = vmatprep.subr.bf16.mxu0 0
  %924 = vmatpush2.bf16.msra.mxu0 0
  %925 = vmatprep.subr.bf16.mxu0 0
  %926 = vmatpush2.bf16.msra.mxu0 0
  %927 = vmatprep.subr.bf16.mxu0 0
  %928 = vmatpush2.bf16.msra.mxu0 0
  %929 = vmatprep.mubr.bf16.mxu0 0
  %930 = vmatmul.mubr.bf16.gmra.mxu0 %v809
  %v931 = vpop.f32.mrf.mxu0
  %v932 = vadd.f32 0.0, %v931
  %v933 = vpop.f32.mrf.mxu0
  %v934 = vadd.f32 0.0, %v933
  %v935 = vpop.f32.mrf.mxu0
  %v936 = vadd.f32 0.0, %v935
  %v937 = vpop.f32.mrf.mxu0
  %v938 = vadd.f32 0.0, %v937
  %939 = vdwg.mxu0
  %940 = vmatprep.subr.bf16.mxu0 0
  %941 = vmatpush1.bf16.msra.mxu0 0
  %942 = vmatprep.subr.bf16.mxu0 0
  %943 = vmatpush1.bf16.msra.mxu0 0
  %944 = vmatprep.subr.bf16.mxu0 0
  %945 = vmatpush1.bf16.msra.mxu0 0
  %946 = vmatprep.subr.bf16.mxu0 0
  %947 = vmatpush1.bf16.msra.mxu0 0
  %948 = vmatprep.subr.bf16.mxu0 0
  %949 = vmatpush1.bf16.msra.mxu0 0
  %950 = vmatprep.subr.bf16.mxu0 0
  %951 = vmatpush1.bf16.msra.mxu0 0
  %952 = vmatprep.subr.bf16.mxu0 %v770
  %953 = vmatpush1.bf16.msra.mxu0 %v769
  %954 = vmatprep.subr.bf16.mxu0 %v755
  %955 = vmatpush1.bf16.msra.mxu0 %v754
  %956 = vmatprep.subr.bf16.mxu0 0
  %957 = vmatpush2.bf16.msra.mxu0 0
  %958 = vmatprep.subr.bf16.mxu0 0
  %959 = vmatpush2.bf16.msra.mxu0 0
  %960 = vmatprep.subr.bf16.mxu0 0
  %961 = vmatpush2.bf16.msra.mxu0 0
  %962 = vmatprep.subr.bf16.mxu0 0
  %963 = vmatpush2.bf16.msra.mxu0 0
  %964 = vmatprep.subr.bf16.mxu0 0
  %965 = vmatpush2.bf16.msra.mxu0 0
  %966 = vmatprep.subr.bf16.mxu0 0
  %967 = vmatpush2.bf16.msra.mxu0 0
  %968 = vmatprep.subr.bf16.mxu0 0
  %969 = vmatpush2.bf16.msra.mxu0 0
  %970 = vmatprep.subr.bf16.mxu0 0
  %971 = vmatpush2.bf16.msra.mxu0 0
  %972 = vmatprep.mubr.bf16.mxu0 0
  %973 = vmatmul.mubr.bf16.gmra.mxu0 %v809
  %v974 = vpop.f32.mrf.mxu0
  %v975 = vadd.f32 0.0, %v974
  %v976 = vpop.f32.mrf.mxu0
  %v977 = vadd.f32 0.0, %v976
  %v978 = vpop.f32.mrf.mxu0
  %v979 = vadd.f32 0.0, %v978
  %v980 = vpop.f32.mrf.mxu0
  %v981 = vadd.f32 0.0, %v980
  %982 = vdwg.mxu0
  %983 = vmatprep.subr.bf16.mxu0 0
  %984 = vmatpush1.bf16.msra.mxu0 0
  %985 = vmatprep.subr.bf16.mxu0 0
  %986 = vmatpush1.bf16.msra.mxu0 0
  %987 = vmatprep.subr.bf16.mxu0 0
  %988 = vmatpush1.bf16.msra.mxu0 0
  %989 = vmatprep.subr.bf16.mxu0 0
  %990 = vmatpush1.bf16.msra.mxu0 0
  %991 = vmatprep.subr.bf16.mxu0 0
  %992 = vmatpush1.bf16.msra.mxu0 0
  %993 = vmatprep.subr.bf16.mxu0 0
  %994 = vmatpush1.bf16.msra.mxu0 0
  %995 = vmatprep.subr.bf16.mxu0 %v772
  %996 = vmatpush1.bf16.msra.mxu0 %v771
  %997 = vmatprep.subr.bf16.mxu0 %v757
  %998 = vmatpush1.bf16.msra.mxu0 %v756
  %999 = vmatprep.subr.bf16.mxu0 0
  %1000 = vmatpush2.bf16.msra.mxu0 0
  %1001 = vmatprep.subr.bf16.mxu0 0
  %1002 = vmatpush2.bf16.msra.mxu0 0
  %1003 = vmatprep.subr.bf16.mxu0 0
  %1004 = vmatpush2.bf16.msra.mxu0 0
  %1005 = vmatprep.subr.bf16.mxu0 0
  %1006 = vmatpush2.bf16.msra.mxu0 0
  %1007 = vmatprep.subr.bf16.mxu0 0
  %1008 = vmatpush2.bf16.msra.mxu0 0
  %1009 = vmatprep.subr.bf16.mxu0 0
  %1010 = vmatpush2.bf16.msra.mxu0 0
  %1011 = vmatprep.subr.bf16.mxu0 0
  %1012 = vmatpush2.bf16.msra.mxu0 0
  %1013 = vmatprep.subr.bf16.mxu0 0
  %1014 = vmatpush2.bf16.msra.mxu0 0
  %1015 = vmatprep.mubr.bf16.mxu0 0
  %1016 = vmatmul.mubr.bf16.gmra.mxu0 %v809
  %v1017 = vpop.f32.mrf.mxu0
  %v1018 = vadd.f32 0.0, %v1017
  %v1019 = vpop.f32.mrf.mxu0
  %v1020 = vadd.f32 0.0, %v1019
  %v1021 = vpop.f32.mrf.mxu0
  %v1022 = vadd.f32 0.0, %v1021
  %v1023 = vpop.f32.mrf.mxu0
  %v1024 = vadd.f32 0.0, %v1023
  %1025 = vdwg.mxu0
  %1026 = vmatprep.subr.bf16.mxu0 0
  %1027 = vmatpush1.bf16.msra.mxu0 0
  %1028 = vmatprep.subr.bf16.mxu0 0
  %1029 = vmatpush1.bf16.msra.mxu0 0
  %1030 = vmatprep.subr.bf16.mxu0 0
  %1031 = vmatpush1.bf16.msra.mxu0 0
  %1032 = vmatprep.subr.bf16.mxu0 0
  %1033 = vmatpush1.bf16.msra.mxu0 0
  %1034 = vmatprep.subr.bf16.mxu0 0
  %1035 = vmatpush1.bf16.msra.mxu0 0
  %1036 = vmatprep.subr.bf16.mxu0 0
  %1037 = vmatpush1.bf16.msra.mxu0 0
  %1038 = vmatprep.subr.bf16.mxu0 %v774
  %1039 = vmatpush1.bf16.msra.mxu0 %v773
  %1040 = vmatprep.subr.bf16.mxu0 %v759
  %1041 = vmatpush1.bf16.msra.mxu0 %v758
  %1042 = vmatprep.subr.bf16.mxu0 0
  %1043 = vmatpush2.bf16.msra.mxu0 0
  %1044 = vmatprep.subr.bf16.mxu0 0
  %1045 = vmatpush2.bf16.msra.mxu0 0
  %1046 = vmatprep.subr.bf16.mxu0 0
  %1047 = vmatpush2.bf16.msra.mxu0 0
  %1048 = vmatprep.subr.bf16.mxu0 0
  %1049 = vmatpush2.bf16.msra.mxu0 0
  %1050 = vmatprep.subr.bf16.mxu0 0
  %1051 = vmatpush2.bf16.msra.mxu0 0
  %1052 = vmatprep.subr.bf16.mxu0 0
  %1053 = vmatpush2.bf16.msra.mxu0 0
  %1054 = vmatprep.subr.bf16.mxu0 0
  %1055 = vmatpush2.bf16.msra.mxu0 0
  %1056 = vmatprep.subr.bf16.mxu0 0
  %1057 = vmatpush2.bf16.msra.mxu0 0
  %1058 = vmatprep.mubr.bf16.mxu0 0
  %1059 = vmatmul.mubr.bf16.gmra.mxu0 %v809
  %v1060 = vpop.f32.mrf.mxu0
  %v1061 = vadd.f32 0.0, %v1060
  %v1062 = vpop.f32.mrf.mxu0
  %v1063 = vadd.f32 0.0, %v1062
  %v1064 = vpop.f32.mrf.mxu0
  %v1065 = vadd.f32 0.0, %v1064
  %v1066 = vpop.f32.mrf.mxu0
  %v1067 = vadd.f32 0.0, %v1066
  %1068 = vdwg.mxu0
  %1069 = vmatprep.subr.bf16.mxu0 0
  %1070 = vmatpush1.bf16.msra.mxu0 0
  %1071 = vmatprep.subr.bf16.mxu0 0
  %1072 = vmatpush1.bf16.msra.mxu0 0
  %1073 = vmatprep.subr.bf16.mxu0 0
  %1074 = vmatpush1.bf16.msra.mxu0 0
  %1075 = vmatprep.subr.bf16.mxu0 0
  %1076 = vmatpush1.bf16.msra.mxu0 0
  %1077 = vmatprep.subr.bf16.mxu0 0
  %1078 = vmatpush1.bf16.msra.mxu0 0
  %1079 = vmatprep.subr.bf16.mxu0 0
  %1080 = vmatpush1.bf16.msra.mxu0 0
  %1081 = vmatprep.subr.bf16.mxu0 %v776
  %1082 = vmatpush1.bf16.msra.mxu0 %v775
  %1083 = vmatprep.subr.bf16.mxu0 %v761
  %1084 = vmatpush1.bf16.msra.mxu0 %v760
  %1085 = vmatprep.subr.bf16.mxu0 0
  %1086 = vmatpush2.bf16.msra.mxu0 0
  %1087 = vmatprep.subr.bf16.mxu0 0
  %1088 = vmatpush2.bf16.msra.mxu0 0
  %1089 = vmatprep.subr.bf16.mxu0 0
  %1090 = vmatpush2.bf16.msra.mxu0 0
  %1091 = vmatprep.subr.bf16.mxu0 0
  %1092 = vmatpush2.bf16.msra.mxu0 0
  %1093 = vmatprep.subr.bf16.mxu0 0
  %1094 = vmatpush2.bf16.msra.mxu0 0
  %1095 = vmatprep.subr.bf16.mxu0 0
  %1096 = vmatpush2.bf16.msra.mxu0 0
  %1097 = vmatprep.subr.bf16.mxu0 0
  %1098 = vmatpush2.bf16.msra.mxu0 0
  %1099 = vmatprep.subr.bf16.mxu0 0
  %1100 = vmatpush2.bf16.msra.mxu0 0
  %1101 = vmatprep.mubr.bf16.mxu0 0
  %1102 = vmatmul.mubr.bf16.gmra.mxu0 %v809
  %v1103 = vpop.f32.mrf.mxu0
  %v1104 = vadd.f32 0.0, %v1103
  %v1105 = vpop.f32.mrf.mxu0
  %v1106 = vadd.f32 0.0, %v1105
  %v1107 = vpop.f32.mrf.mxu0
  %v1108 = vadd.f32 0.0, %v1107
  %v1109 = vpop.f32.mrf.mxu0
  %v1110 = vadd.f32 0.0, %v1109
  %1111 = vdwg.mxu0
  %1112 = vmatprep.subr.bf16.mxu0 0
  %1113 = vmatpush1.bf16.msra.mxu0 0
  %1114 = vmatprep.subr.bf16.mxu0 0
  %1115 = vmatpush1.bf16.msra.mxu0 0
  %1116 = vmatprep.subr.bf16.mxu0 0
  %1117 = vmatpush1.bf16.msra.mxu0 0
  %1118 = vmatprep.subr.bf16.mxu0 0
  %1119 = vmatpush1.bf16.msra.mxu0 0
  %1120 = vmatprep.subr.bf16.mxu0 0
  %1121 = vmatpush1.bf16.msra.mxu0 0
  %1122 = vmatprep.subr.bf16.mxu0 0
  %1123 = vmatpush1.bf16.msra.mxu0 0
  %1124 = vmatprep.subr.bf16.mxu0 0
  %1125 = vmatpush1.bf16.msra.mxu0 %v777
  %1126 = vmatprep.subr.bf16.mxu0 0
  %1127 = vmatpush1.bf16.msra.mxu0 %v762
  %1128 = vmatprep.subr.bf16.mxu0 0
  %1129 = vmatpush2.bf16.msra.mxu0 0
  %1130 = vmatprep.subr.bf16.mxu0 0
  %1131 = vmatpush2.bf16.msra.mxu0 0
  %1132 = vmatprep.subr.bf16.mxu0 0
  %1133 = vmatpush2.bf16.msra.mxu0 0
  %1134 = vmatprep.subr.bf16.mxu0 0
  %1135 = vmatpush2.bf16.msra.mxu0 0
  %1136 = vmatprep.subr.bf16.mxu0 0
  %1137 = vmatpush2.bf16.msra.mxu0 0
  %1138 = vmatprep.subr.bf16.mxu0 0
  %1139 = vmatpush2.bf16.msra.mxu0 0
  %1140 = vmatprep.subr.bf16.mxu0 0
  %1141 = vmatpush2.bf16.msra.mxu0 0
  %1142 = vmatprep.subr.bf16.mxu0 0
  %1143 = vmatpush2.bf16.msra.mxu0 0
  %1144 = vmatprep.mubr.bf16.mxu0 0
  %1145 = vmatmul.mubr.bf16.gmra.mxu0 %v809
  %v1146 = vpop.f32.mrf.mxu0
  %v1147 = vadd.f32 0.0, %v1146
  %v1148 = vpop.f32.mrf.mxu0
  %v1149 = vpop.f32.mrf.mxu0
  %v1150 = vadd.f32 0.0, %v1149
  %v1151 = vpop.f32.mrf.mxu0
  %1152 = vdwg.mxu0
  %v1155 = vunpack.c.l.b16 %v16
  %v1156 = vunpack.c.l.b16 %v17
  %v1157 = vpack.c.b16 %v1156, %v1155
  %v1190 = vunpack.c.l.b16 %v84
  %v1191 = vunpack.c.h.b16 %v84
  %v1192 = vunpack.c.l.b16 %v85
  %v1193 = vunpack.c.h.b16 %v85
  %v1194 = vunpack.c.l.b16 %v86
  %v1195 = vunpack.c.h.b16 %v86
  %v1196 = vunpack.c.l.b16 %v87
  %v1197 = vunpack.c.h.b16 %v87
  %v1198 = vunpack.c.l.b16 %v88
  %v1199 = vunpack.c.h.b16 %v88
  %v1200 = vunpack.c.l.b16 %v89
  %v1201 = vunpack.c.h.b16 %v89
  %v1202 = vunpack.c.l.b16 %v90
  %v1203 = vunpack.c.h.b16 %v90
  %v1204 = vunpack.c.l.b16 %v91
  %v1205 = vunpack.c.l.b16 %v92
  %v1206 = vunpack.c.h.b16 %v92
  %v1207 = vunpack.c.l.b16 %v93
  %v1208 = vunpack.c.h.b16 %v93
  %v1209 = vunpack.c.l.b16 %v94
  %v1210 = vunpack.c.h.b16 %v94
  %v1211 = vunpack.c.l.b16 %v95
  %v1212 = vunpack.c.h.b16 %v95
  %v1213 = vunpack.c.l.b16 %v96
  %v1214 = vunpack.c.h.b16 %v96
  %v1215 = vunpack.c.l.b16 %v97
  %v1216 = vunpack.c.h.b16 %v97
  %v1217 = vunpack.c.l.b16 %v98
  %v1218 = vunpack.c.h.b16 %v98
  %v1219 = vunpack.c.l.b16 %v99
  %v1220 = vunpack.c.l.b16 %v100
  %v1221 = vunpack.c.h.b16 %v100
  %v1222 = vunpack.c.l.b16 %v101
  %v1223 = vunpack.c.h.b16 %v101
  %v1224 = vunpack.c.l.b16 %v102
  %v1225 = vunpack.c.h.b16 %v102
  %v1226 = vunpack.c.l.b16 %v103
  %v1227 = vunpack.c.h.b16 %v103
  %v1228 = vunpack.c.l.b16 %v104
  %v1229 = vunpack.c.h.b16 %v104
  %v1230 = vunpack.c.l.b16 %v105
  %v1231 = vunpack.c.h.b16 %v105
  %v1232 = vunpack.c.l.b16 %v106
  %v1233 = vunpack.c.h.b16 %v106
  %v1234 = vunpack.c.l.b16 %v107
  %v1235 = vunpack.c.l.b16 %v108
  %v1236 = vunpack.c.h.b16 %v108
  %v1237 = vunpack.c.l.b16 %v109
  %v1238 = vunpack.c.h.b16 %v109
  %v1239 = vunpack.c.l.b16 %v110
  %v1240 = vunpack.c.h.b16 %v110
  %v1241 = vunpack.c.l.b16 %v111
  %v1242 = vunpack.c.h.b16 %v111
  %v1243 = vunpack.c.l.b16 %v112
  %v1244 = vunpack.c.h.b16 %v112
  %v1245 = vunpack.c.l.b16 %v113
  %v1246 = vunpack.c.h.b16 %v113
  %v1247 = vunpack.c.l.b16 %v114
  %v1248 = vunpack.c.h.b16 %v114
  %v1249 = vunpack.c.l.b16 %v115
  %v1250 = vpack.c.b16 %v1205, %v1190
  %v1251 = vpack.c.b16 %v1206, %v1191
  %v1252 = vpack.c.b16 %v1207, %v1192
  %v1253 = vpack.c.b16 %v1208, %v1193
  %v1254 = vpack.c.b16 %v1209, %v1194
  %v1255 = vpack.c.b16 %v1210, %v1195
  %v1256 = vpack.c.b16 %v1211, %v1196
  %v1257 = vpack.c.b16 %v1212, %v1197
  %v1258 = vpack.c.b16 %v1213, %v1198
  %v1259 = vpack.c.b16 %v1214, %v1199
  %v1260 = vpack.c.b16 %v1215, %v1200
  %v1261 = vpack.c.b16 %v1216, %v1201
  %v1262 = vpack.c.b16 %v1217, %v1202
  %v1263 = vpack.c.b16 %v1218, %v1203
  %v1264 = vpack.c.b16 %v1219, %v1204
  %v1265 = vpack.c.b16 %v1235, %v1220
  %v1266 = vpack.c.b16 %v1236, %v1221
  %v1267 = vpack.c.b16 %v1237, %v1222
  %v1268 = vpack.c.b16 %v1238, %v1223
  %v1269 = vpack.c.b16 %v1239, %v1224
  %v1270 = vpack.c.b16 %v1240, %v1225
  %v1271 = vpack.c.b16 %v1241, %v1226
  %v1272 = vpack.c.b16 %v1242, %v1227
  %v1273 = vpack.c.b16 %v1243, %v1228
  %v1274 = vpack.c.b16 %v1244, %v1229
  %v1275 = vpack.c.b16 %v1245, %v1230
  %v1276 = vpack.c.b16 %v1246, %v1231
  %v1277 = vpack.c.b16 %v1247, %v1232
  %v1278 = vpack.c.b16 %v1248, %v1233
  %v1279 = vpack.c.b16 %v1249, %v1234
  %v1311 = vsel %vm305, %v1157, 0
  %1313 = vmatprep.subr.bf16.mxu0 0
  %1314 = vmatpush1.bf16.msra.mxu0 0
  %1315 = vmatprep.subr.bf16.mxu0 0
  %1316 = vmatpush1.bf16.msra.mxu0 0
  %1317 = vmatprep.subr.bf16.mxu0 0
  %1318 = vmatpush1.bf16.msra.mxu0 0
  %1319 = vmatprep.subr.bf16.mxu0 0
  %1320 = vmatpush1.bf16.msra.mxu0 0
  %1321 = vmatprep.subr.bf16.mxu0 0
  %1322 = vmatpush1.bf16.msra.mxu0 0
  %1323 = vmatprep.subr.bf16.mxu0 0
  %1324 = vmatpush1.bf16.msra.mxu0 0
  %1325 = vmatprep.subr.bf16.mxu0 %v1266
  %1326 = vmatpush1.bf16.msra.mxu0 %v1265
  %1327 = vmatprep.subr.bf16.mxu0 %v1251
  %1328 = vmatpush1.bf16.msra.mxu0 %v1250
  %1329 = vmatprep.subr.bf16.mxu0 0
  %1330 = vmatpush2.bf16.msra.mxu0 0
  %1331 = vmatprep.subr.bf16.mxu0 0
  %1332 = vmatpush2.bf16.msra.mxu0 0
  %1333 = vmatprep.subr.bf16.mxu0 0
  %1334 = vmatpush2.bf16.msra.mxu0 0
  %1335 = vmatprep.subr.bf16.mxu0 0
  %1336 = vmatpush2.bf16.msra.mxu0 0
  %1337 = vmatprep.subr.bf16.mxu0 0
  %1338 = vmatpush2.bf16.msra.mxu0 0
  %1339 = vmatprep.subr.bf16.mxu0 0
  %1340 = vmatpush2.bf16.msra.mxu0 0
  %1341 = vmatprep.subr.bf16.mxu0 0
  %1342 = vmatpush2.bf16.msra.mxu0 0
  %1343 = vmatprep.subr.bf16.mxu0 0
  %1344 = vmatpush2.bf16.msra.mxu0 0
  %1345 = vmatprep.mubr.bf16.mxu0 0
  %1346 = vmatmul.mubr.bf16.gmra.mxu0 %v1311
  %v1347 = vpop.f32.mrf.mxu0
  %v1348 = vadd.f32 0.0, %v1347
  %v1349 = vpop.f32.mrf.mxu0
  %v1350 = vadd.f32 0.0, %v1349
  %v1351 = vpop.f32.mrf.mxu0
  %v1352 = vadd.f32 0.0, %v1351
  %v1353 = vpop.f32.mrf.mxu0
  %v1354 = vadd.f32 0.0, %v1353
  %1355 = vdwg.mxu0
  %1356 = vmatprep.subr.bf16.mxu0 0
  %1357 = vmatpush1.bf16.msra.mxu0 0
  %1358 = vmatprep.subr.bf16.mxu0 0
  %1359 = vmatpush1.bf16.msra.mxu0 0
  %1360 = vmatprep.subr.bf16.mxu0 0
  %1361 = vmatpush1.bf16.msra.mxu0 0
  %1362 = vmatprep.subr.bf16.mxu0 0
  %1363 = vmatpush1.bf16.msra.mxu0 0
  %1364 = vmatprep.subr.bf16.mxu0 0
  %1365 = vmatpush1.bf16.msra.mxu0 0
  %1366 = vmatprep.subr.bf16.mxu0 0
  %1367 = vmatpush1.bf16.msra.mxu0 0
  %1368 = vmatprep.subr.bf16.mxu0 %v1268
  %1369 = vmatpush1.bf16.msra.mxu0 %v1267
  %1370 = vmatprep.subr.bf16.mxu0 %v1253
  %1371 = vmatpush1.bf16.msra.mxu0 %v1252
  %1372 = vmatprep.subr.bf16.mxu0 0
  %1373 = vmatpush2.bf16.msra.mxu0 0
  %1374 = vmatprep.subr.bf16.mxu0 0
  %1375 = vmatpush2.bf16.msra.mxu0 0
  %1376 = vmatprep.subr.bf16.mxu0 0
  %1377 = vmatpush2.bf16.msra.mxu0 0
  %1378 = vmatprep.subr.bf16.mxu0 0
  %1379 = vmatpush2.bf16.msra.mxu0 0
  %1380 = vmatprep.subr.bf16.mxu0 0
  %1381 = vmatpush2.bf16.msra.mxu0 0
  %1382 = vmatprep.subr.bf16.mxu0 0
  %1383 = vmatpush2.bf16.msra.mxu0 0
  %1384 = vmatprep.subr.bf16.mxu0 0
  %1385 = vmatpush2.bf16.msra.mxu0 0
  %1386 = vmatprep.subr.bf16.mxu0 0
  %1387 = vmatpush2.bf16.msra.mxu0 0
  %1388 = vmatprep.mubr.bf16.mxu0 0
  %1389 = vmatmul.mubr.bf16.gmra.mxu0 %v1311
  %v1390 = vpop.f32.mrf.mxu0
  %v1391 = vadd.f32 0.0, %v1390
  %v1392 = vpop.f32.mrf.mxu0
  %v1393 = vadd.f32 0.0, %v1392
  %v1394 = vpop.f32.mrf.mxu0
  %v1395 = vadd.f32 0.0, %v1394
  %v1396 = vpop.f32.mrf.mxu0
  %v1397 = vadd.f32 0.0, %v1396
  %1398 = vdwg.mxu0
  %1399 = vmatprep.subr.bf16.mxu0 0
  %1400 = vmatpush1.bf16.msra.mxu0 0
  %1401 = vmatprep.subr.bf16.mxu0 0
  %1402 = vmatpush1.bf16.msra.mxu0 0
  %1403 = vmatprep.subr.bf16.mxu0 0
  %1404 = vmatpush1.bf16.msra.mxu0 0
  %1405 = vmatprep.subr.bf16.mxu0 0
  %1406 = vmatpush1.bf16.msra.mxu0 0
  %1407 = vmatprep.subr.bf16.mxu0 0
  %1408 = vmatpush1.bf16.msra.mxu0 0
  %1409 = vmatprep.subr.bf16.mxu0 0
  %1410 = vmatpush1.bf16.msra.mxu0 0
  %1411 = vmatprep.subr.bf16.mxu0 %v1270
  %1412 = vmatpush1.bf16.msra.mxu0 %v1269
  %1413 = vmatprep.subr.bf16.mxu0 %v1255
  %1414 = vmatpush1.bf16.msra.mxu0 %v1254
  %1415 = vmatprep.subr.bf16.mxu0 0
  %1416 = vmatpush2.bf16.msra.mxu0 0
  %1417 = vmatprep.subr.bf16.mxu0 0
  %1418 = vmatpush2.bf16.msra.mxu0 0
  %1419 = vmatprep.subr.bf16.mxu0 0
  %1420 = vmatpush2.bf16.msra.mxu0 0
  %1421 = vmatprep.subr.bf16.mxu0 0
  %1422 = vmatpush2.bf16.msra.mxu0 0
  %1423 = vmatprep.subr.bf16.mxu0 0
  %1424 = vmatpush2.bf16.msra.mxu0 0
  %1425 = vmatprep.subr.bf16.mxu0 0
  %1426 = vmatpush2.bf16.msra.mxu0 0
  %1427 = vmatprep.subr.bf16.mxu0 0
  %1428 = vmatpush2.bf16.msra.mxu0 0
  %1429 = vmatprep.subr.bf16.mxu0 0
  %1430 = vmatpush2.bf16.msra.mxu0 0
  %1431 = vmatprep.mubr.bf16.mxu0 0
  %1432 = vmatmul.mubr.bf16.gmra.mxu0 %v1311
  %v1433 = vpop.f32.mrf.mxu0
  %v1434 = vadd.f32 0.0, %v1433
  %v1435 = vpop.f32.mrf.mxu0
  %v1436 = vadd.f32 0.0, %v1435
  %v1437 = vpop.f32.mrf.mxu0
  %v1438 = vadd.f32 0.0, %v1437
  %v1439 = vpop.f32.mrf.mxu0
  %v1440 = vadd.f32 0.0, %v1439
  %1441 = vdwg.mxu0
  %1442 = vmatprep.subr.bf16.mxu0 0
  %1443 = vmatpush1.bf16.msra.mxu0 0
  %1444 = vmatprep.subr.bf16.mxu0 0
  %1445 = vmatpush1.bf16.msra.mxu0 0
  %1446 = vmatprep.subr.bf16.mxu0 0
  %1447 = vmatpush1.bf16.msra.mxu0 0
  %1448 = vmatprep.subr.bf16.mxu0 0
  %1449 = vmatpush1.bf16.msra.mxu0 0
  %1450 = vmatprep.subr.bf16.mxu0 0
  %1451 = vmatpush1.bf16.msra.mxu0 0
  %1452 = vmatprep.subr.bf16.mxu0 0
  %1453 = vmatpush1.bf16.msra.mxu0 0
  %1454 = vmatprep.subr.bf16.mxu0 %v1272
  %1455 = vmatpush1.bf16.msra.mxu0 %v1271
  %1456 = vmatprep.subr.bf16.mxu0 %v1257
  %1457 = vmatpush1.bf16.msra.mxu0 %v1256
  %1458 = vmatprep.subr.bf16.mxu0 0
  %1459 = vmatpush2.bf16.msra.mxu0 0
  %1460 = vmatprep.subr.bf16.mxu0 0
  %1461 = vmatpush2.bf16.msra.mxu0 0
  %1462 = vmatprep.subr.bf16.mxu0 0
  %1463 = vmatpush2.bf16.msra.mxu0 0
  %1464 = vmatprep.subr.bf16.mxu0 0
  %1465 = vmatpush2.bf16.msra.mxu0 0
  %1466 = vmatprep.subr.bf16.mxu0 0
  %1467 = vmatpush2.bf16.msra.mxu0 0
  %1468 = vmatprep.subr.bf16.mxu0 0
  %1469 = vmatpush2.bf16.msra.mxu0 0
  %1470 = vmatprep.subr.bf16.mxu0 0
  %1471 = vmatpush2.bf16.msra.mxu0 0
  %1472 = vmatprep.subr.bf16.mxu0 0
  %1473 = vmatpush2.bf16.msra.mxu0 0
  %1474 = vmatprep.mubr.bf16.mxu0 0
  %1475 = vmatmul.mubr.bf16.gmra.mxu0 %v1311
  %v1476 = vpop.f32.mrf.mxu0
  %v1477 = vadd.f32 0.0, %v1476
  %v1478 = vpop.f32.mrf.mxu0
  %v1479 = vadd.f32 0.0, %v1478
  %v1480 = vpop.f32.mrf.mxu0
  %v1481 = vadd.f32 0.0, %v1480
  %v1482 = vpop.f32.mrf.mxu0
  %v1483 = vadd.f32 0.0, %v1482
  %1484 = vdwg.mxu0
  %1485 = vmatprep.subr.bf16.mxu0 0
  %1486 = vmatpush1.bf16.msra.mxu0 0
  %1487 = vmatprep.subr.bf16.mxu0 0
  %1488 = vmatpush1.bf16.msra.mxu0 0
  %1489 = vmatprep.subr.bf16.mxu0 0
  %1490 = vmatpush1.bf16.msra.mxu0 0
  %1491 = vmatprep.subr.bf16.mxu0 0
  %1492 = vmatpush1.bf16.msra.mxu0 0
  %1493 = vmatprep.subr.bf16.mxu0 0
  %1494 = vmatpush1.bf16.msra.mxu0 0
  %1495 = vmatprep.subr.bf16.mxu0 0
  %1496 = vmatpush1.bf16.msra.mxu0 0
  %1497 = vmatprep.subr.bf16.mxu0 %v1274
  %1498 = vmatpush1.bf16.msra.mxu0 %v1273
  %1499 = vmatprep.subr.bf16.mxu0 %v1259
  %1500 = vmatpush1.bf16.msra.mxu0 %v1258
  %1501 = vmatprep.subr.bf16.mxu0 0
  %1502 = vmatpush2.bf16.msra.mxu0 0
  %1503 = vmatprep.subr.bf16.mxu0 0
  %1504 = vmatpush2.bf16.msra.mxu0 0
  %1505 = vmatprep.subr.bf16.mxu0 0
  %1506 = vmatpush2.bf16.msra.mxu0 0
  %1507 = vmatprep.subr.bf16.mxu0 0
  %1508 = vmatpush2.bf16.msra.mxu0 0
  %1509 = vmatprep.subr.bf16.mxu0 0
  %1510 = vmatpush2.bf16.msra.mxu0 0
  %1511 = vmatprep.subr.bf16.mxu0 0
  %1512 = vmatpush2.bf16.msra.mxu0 0
  %1513 = vmatprep.subr.bf16.mxu0 0
  %1514 = vmatpush2.bf16.msra.mxu0 0
  %1515 = vmatprep.subr.bf16.mxu0 0
  %1516 = vmatpush2.bf16.msra.mxu0 0
  %1517 = vmatprep.mubr.bf16.mxu0 0
  %1518 = vmatmul.mubr.bf16.gmra.mxu0 %v1311
  %v1519 = vpop.f32.mrf.mxu0
  %v1520 = vadd.f32 0.0, %v1519
  %v1521 = vpop.f32.mrf.mxu0
  %v1522 = vadd.f32 0.0, %v1521
  %v1523 = vpop.f32.mrf.mxu0
  %v1524 = vadd.f32 0.0, %v1523
  %v1525 = vpop.f32.mrf.mxu0
  %v1526 = vadd.f32 0.0, %v1525
  %1527 = vdwg.mxu0
  %1528 = vmatprep.subr.bf16.mxu0 0
  %1529 = vmatpush1.bf16.msra.mxu0 0
  %1530 = vmatprep.subr.bf16.mxu0 0
  %1531 = vmatpush1.bf16.msra.mxu0 0
  %1532 = vmatprep.subr.bf16.mxu0 0
  %1533 = vmatpush1.bf16.msra.mxu0 0
  %1534 = vmatprep.subr.bf16.mxu0 0
  %1535 = vmatpush1.bf16.msra.mxu0 0
  %1536 = vmatprep.subr.bf16.mxu0 0
  %1537 = vmatpush1.bf16.msra.mxu0 0
  %1538 = vmatprep.subr.bf16.mxu0 0
  %1539 = vmatpush1.bf16.msra.mxu0 0
  %1540 = vmatprep.subr.bf16.mxu0 %v1276
  %1541 = vmatpush1.bf16.msra.mxu0 %v1275
  %1542 = vmatprep.subr.bf16.mxu0 %v1261
  %1543 = vmatpush1.bf16.msra.mxu0 %v1260
  %1544 = vmatprep.subr.bf16.mxu0 0
  %1545 = vmatpush2.bf16.msra.mxu0 0
  %1546 = vmatprep.subr.bf16.mxu0 0
  %1547 = vmatpush2.bf16.msra.mxu0 0
  %1548 = vmatprep.subr.bf16.mxu0 0
  %1549 = vmatpush2.bf16.msra.mxu0 0
  %1550 = vmatprep.subr.bf16.mxu0 0
  %1551 = vmatpush2.bf16.msra.mxu0 0
  %1552 = vmatprep.subr.bf16.mxu0 0
  %1553 = vmatpush2.bf16.msra.mxu0 0
  %1554 = vmatprep.subr.bf16.mxu0 0
  %1555 = vmatpush2.bf16.msra.mxu0 0
  %1556 = vmatprep.subr.bf16.mxu0 0
  %1557 = vmatpush2.bf16.msra.mxu0 0
  %1558 = vmatprep.subr.bf16.mxu0 0
  %1559 = vmatpush2.bf16.msra.mxu0 0
  %1560 = vmatprep.mubr.bf16.mxu0 0
  %1561 = vmatmul.mubr.bf16.gmra.mxu0 %v1311
  %v1562 = vpop.f32.mrf.mxu0
  %v1563 = vadd.f32 0.0, %v1562
  %v1564 = vpop.f32.mrf.mxu0
  %v1565 = vadd.f32 0.0, %v1564
  %v1566 = vpop.f32.mrf.mxu0
  %v1567 = vadd.f32 0.0, %v1566
  %v1568 = vpop.f32.mrf.mxu0
  %v1569 = vadd.f32 0.0, %v1568
  %1570 = vdwg.mxu0
  %1571 = vmatprep.subr.bf16.mxu0 0
  %1572 = vmatpush1.bf16.msra.mxu0 0
  %1573 = vmatprep.subr.bf16.mxu0 0
  %1574 = vmatpush1.bf16.msra.mxu0 0
  %1575 = vmatprep.subr.bf16.mxu0 0
  %1576 = vmatpush1.bf16.msra.mxu0 0
  %1577 = vmatprep.subr.bf16.mxu0 0
  %1578 = vmatpush1.bf16.msra.mxu0 0
  %1579 = vmatprep.subr.bf16.mxu0 0
  %1580 = vmatpush1.bf16.msra.mxu0 0
  %1581 = vmatprep.subr.bf16.mxu0 0
  %1582 = vmatpush1.bf16.msra.mxu0 0
  %1583 = vmatprep.subr.bf16.mxu0 %v1278
  %1584 = vmatpush1.bf16.msra.mxu0 %v1277
  %1585 = vmatprep.subr.bf16.mxu0 %v1263
  %1586 = vmatpush1.bf16.msra.mxu0 %v1262
  %1587 = vmatprep.subr.bf16.mxu0 0
  %1588 = vmatpush2.bf16.msra.mxu0 0
  %1589 = vmatprep.subr.bf16.mxu0 0
  %1590 = vmatpush2.bf16.msra.mxu0 0
  %1591 = vmatprep.subr.bf16.mxu0 0
  %1592 = vmatpush2.bf16.msra.mxu0 0
  %1593 = vmatprep.subr.bf16.mxu0 0
  %1594 = vmatpush2.bf16.msra.mxu0 0
  %1595 = vmatprep.subr.bf16.mxu0 0
  %1596 = vmatpush2.bf16.msra.mxu0 0
  %1597 = vmatprep.subr.bf16.mxu0 0
  %1598 = vmatpush2.bf16.msra.mxu0 0
  %1599 = vmatprep.subr.bf16.mxu0 0
  %1600 = vmatpush2.bf16.msra.mxu0 0
  %1601 = vmatprep.subr.bf16.mxu0 0
  %1602 = vmatpush2.bf16.msra.mxu0 0
  %1603 = vmatprep.mubr.bf16.mxu0 0
  %1604 = vmatmul.mubr.bf16.gmra.mxu0 %v1311
  %v1605 = vpop.f32.mrf.mxu0
  %v1606 = vadd.f32 0.0, %v1605
  %v1607 = vpop.f32.mrf.mxu0
  %v1608 = vadd.f32 0.0, %v1607
  %v1609 = vpop.f32.mrf.mxu0
  %v1610 = vadd.f32 0.0, %v1609
  %v1611 = vpop.f32.mrf.mxu0
  %v1612 = vadd.f32 0.0, %v1611
  %1613 = vdwg.mxu0
  %1614 = vmatprep.subr.bf16.mxu0 0
  %1615 = vmatpush1.bf16.msra.mxu0 0
  %1616 = vmatprep.subr.bf16.mxu0 0
  %1617 = vmatpush1.bf16.msra.mxu0 0
  %1618 = vmatprep.subr.bf16.mxu0 0
  %1619 = vmatpush1.bf16.msra.mxu0 0
  %1620 = vmatprep.subr.bf16.mxu0 0
  %1621 = vmatpush1.bf16.msra.mxu0 0
  %1622 = vmatprep.subr.bf16.mxu0 0
  %1623 = vmatpush1.bf16.msra.mxu0 0
  %1624 = vmatprep.subr.bf16.mxu0 0
  %1625 = vmatpush1.bf16.msra.mxu0 0
  %1626 = vmatprep.subr.bf16.mxu0 0
  %1627 = vmatpush1.bf16.msra.mxu0 %v1279
  %1628 = vmatprep.subr.bf16.mxu0 0
  %1629 = vmatpush1.bf16.msra.mxu0 %v1264
  %1630 = vmatprep.subr.bf16.mxu0 0
  %1631 = vmatpush2.bf16.msra.mxu0 0
  %1632 = vmatprep.subr.bf16.mxu0 0
  %1633 = vmatpush2.bf16.msra.mxu0 0
  %1634 = vmatprep.subr.bf16.mxu0 0
  %1635 = vmatpush2.bf16.msra.mxu0 0
  %1636 = vmatprep.subr.bf16.mxu0 0
  %1637 = vmatpush2.bf16.msra.mxu0 0
  %1638 = vmatprep.subr.bf16.mxu0 0
  %1639 = vmatpush2.bf16.msra.mxu0 0
  %1640 = vmatprep.subr.bf16.mxu0 0
  %1641 = vmatpush2.bf16.msra.mxu0 0
  %1642 = vmatprep.subr.bf16.mxu0 0
  %1643 = vmatpush2.bf16.msra.mxu0 0
  %1644 = vmatprep.subr.bf16.mxu0 0
  %1645 = vmatpush2.bf16.msra.mxu0 0
  %1646 = vmatprep.mubr.bf16.mxu0 0
  %1647 = vmatmul.mubr.bf16.gmra.mxu0 %v1311
  %v1648 = vpop.f32.mrf.mxu0
  %v1649 = vadd.f32 0.0, %v1648
  %v1650 = vpop.f32.mrf.mxu0
  %v1651 = vpop.f32.mrf.mxu0
  %v1652 = vadd.f32 0.0, %v1651
  %v1653 = vpop.f32.mrf.mxu0
  %1654 = vdwg.mxu0
  %v1657 = vunpack.c.l.b16 %v18
  %v1658 = vunpack.c.l.b16 %v19
  %v1659 = vpack.c.b16 %v1658, %v1657
  %v1692 = vunpack.c.l.b16 %v116
  %v1693 = vunpack.c.h.b16 %v116
  %v1694 = vunpack.c.l.b16 %v117
  %v1695 = vunpack.c.h.b16 %v117
  %v1696 = vunpack.c.l.b16 %v118
  %v1697 = vunpack.c.h.b16 %v118
  %v1698 = vunpack.c.l.b16 %v119
  %v1699 = vunpack.c.h.b16 %v119
  %v1700 = vunpack.c.l.b16 %v120
  %v1701 = vunpack.c.h.b16 %v120
  %v1702 = vunpack.c.l.b16 %v121
  %v1703 = vunpack.c.h.b16 %v121
  %v1704 = vunpack.c.l.b16 %v122
  %v1705 = vunpack.c.h.b16 %v122
  %v1706 = vunpack.c.l.b16 %v123
  %v1707 = vunpack.c.l.b16 %v124
  %v1708 = vunpack.c.h.b16 %v124
  %v1709 = vunpack.c.l.b16 %v125
  %v1710 = vunpack.c.h.b16 %v125
  %v1711 = vunpack.c.l.b16 %v126
  %v1712 = vunpack.c.h.b16 %v126
  %v1713 = vunpack.c.l.b16 %v127
  %v1714 = vunpack.c.h.b16 %v127
  %v1715 = vunpack.c.l.b16 %v128
  %v1716 = vunpack.c.h.b16 %v128
  %v1717 = vunpack.c.l.b16 %v129
  %v1718 = vunpack.c.h.b16 %v129
  %v1719 = vunpack.c.l.b16 %v130
  %v1720 = vunpack.c.h.b16 %v130
  %v1721 = vunpack.c.l.b16 %v131
  %v1722 = vunpack.c.l.b16 %v132
  %v1723 = vunpack.c.h.b16 %v132
  %v1724 = vunpack.c.l.b16 %v133
  %v1725 = vunpack.c.h.b16 %v133
  %v1726 = vunpack.c.l.b16 %v134
  %v1727 = vunpack.c.h.b16 %v134
  %v1728 = vunpack.c.l.b16 %v135
  %v1729 = vunpack.c.h.b16 %v135
  %v1730 = vunpack.c.l.b16 %v136
  %v1731 = vunpack.c.h.b16 %v136
  %v1732 = vunpack.c.l.b16 %v137
  %v1733 = vunpack.c.h.b16 %v137
  %v1734 = vunpack.c.l.b16 %v138
  %v1735 = vunpack.c.h.b16 %v138
  %v1736 = vunpack.c.l.b16 %v139
  %v1737 = vunpack.c.l.b16 %v140
  %v1738 = vunpack.c.h.b16 %v140
  %v1739 = vunpack.c.l.b16 %v141
  %v1740 = vunpack.c.h.b16 %v141
  %v1741 = vunpack.c.l.b16 %v142
  %v1742 = vunpack.c.h.b16 %v142
  %v1743 = vunpack.c.l.b16 %v143
  %v1744 = vunpack.c.h.b16 %v143
  %v1745 = vunpack.c.l.b16 %v144
  %v1746 = vunpack.c.h.b16 %v144
  %v1747 = vunpack.c.l.b16 %v145
  %v1748 = vunpack.c.h.b16 %v145
  %v1749 = vunpack.c.l.b16 %v146
  %v1750 = vunpack.c.h.b16 %v146
  %v1751 = vunpack.c.l.b16 %v147
  %v1752 = vpack.c.b16 %v1707, %v1692
  %v1753 = vpack.c.b16 %v1708, %v1693
  %v1754 = vpack.c.b16 %v1709, %v1694
  %v1755 = vpack.c.b16 %v1710, %v1695
  %v1756 = vpack.c.b16 %v1711, %v1696
  %v1757 = vpack.c.b16 %v1712, %v1697
  %v1758 = vpack.c.b16 %v1713, %v1698
  %v1759 = vpack.c.b16 %v1714, %v1699
  %v1760 = vpack.c.b16 %v1715, %v1700
  %v1761 = vpack.c.b16 %v1716, %v1701
  %v1762 = vpack.c.b16 %v1717, %v1702
  %v1763 = vpack.c.b16 %v1718, %v1703
  %v1764 = vpack.c.b16 %v1719, %v1704
  %v1765 = vpack.c.b16 %v1720, %v1705
  %v1766 = vpack.c.b16 %v1721, %v1706
  %v1767 = vpack.c.b16 %v1737, %v1722
  %v1768 = vpack.c.b16 %v1738, %v1723
  %v1769 = vpack.c.b16 %v1739, %v1724
  %v1770 = vpack.c.b16 %v1740, %v1725
  %v1771 = vpack.c.b16 %v1741, %v1726
  %v1772 = vpack.c.b16 %v1742, %v1727
  %v1773 = vpack.c.b16 %v1743, %v1728
  %v1774 = vpack.c.b16 %v1744, %v1729
  %v1775 = vpack.c.b16 %v1745, %v1730
  %v1776 = vpack.c.b16 %v1746, %v1731
  %v1777 = vpack.c.b16 %v1747, %v1732
  %v1778 = vpack.c.b16 %v1748, %v1733
  %v1779 = vpack.c.b16 %v1749, %v1734
  %v1780 = vpack.c.b16 %v1750, %v1735
  %v1781 = vpack.c.b16 %v1751, %v1736
  %v1813 = vsel %vm305, %v1659, 0
  %1815 = vmatprep.subr.bf16.mxu0 0
  %1816 = vmatpush1.bf16.msra.mxu0 0
  %1817 = vmatprep.subr.bf16.mxu0 0
  %1818 = vmatpush1.bf16.msra.mxu0 0
  %1819 = vmatprep.subr.bf16.mxu0 0
  %1820 = vmatpush1.bf16.msra.mxu0 0
  %1821 = vmatprep.subr.bf16.mxu0 0
  %1822 = vmatpush1.bf16.msra.mxu0 0
  %1823 = vmatprep.subr.bf16.mxu0 0
  %1824 = vmatpush1.bf16.msra.mxu0 0
  %1825 = vmatprep.subr.bf16.mxu0 0
  %1826 = vmatpush1.bf16.msra.mxu0 0
  %1827 = vmatprep.subr.bf16.mxu0 %v1768
  %1828 = vmatpush1.bf16.msra.mxu0 %v1767
  %1829 = vmatprep.subr.bf16.mxu0 %v1753
  %1830 = vmatpush1.bf16.msra.mxu0 %v1752
  %1831 = vmatprep.subr.bf16.mxu0 0
  %1832 = vmatpush2.bf16.msra.mxu0 0
  %1833 = vmatprep.subr.bf16.mxu0 0
  %1834 = vmatpush2.bf16.msra.mxu0 0
  %1835 = vmatprep.subr.bf16.mxu0 0
  %1836 = vmatpush2.bf16.msra.mxu0 0
  %1837 = vmatprep.subr.bf16.mxu0 0
  %1838 = vmatpush2.bf16.msra.mxu0 0
  %1839 = vmatprep.subr.bf16.mxu0 0
  %1840 = vmatpush2.bf16.msra.mxu0 0
  %1841 = vmatprep.subr.bf16.mxu0 0
  %1842 = vmatpush2.bf16.msra.mxu0 0
  %1843 = vmatprep.subr.bf16.mxu0 0
  %1844 = vmatpush2.bf16.msra.mxu0 0
  %1845 = vmatprep.subr.bf16.mxu0 0
  %1846 = vmatpush2.bf16.msra.mxu0 0
  %1847 = vmatprep.mubr.bf16.mxu0 0
  %1848 = vmatmul.mubr.bf16.gmra.mxu0 %v1813
  %v1849 = vpop.f32.mrf.mxu0
  %v1850 = vadd.f32 0.0, %v1849
  %v1851 = vpop.f32.mrf.mxu0
  %v1852 = vadd.f32 0.0, %v1851
  %v1853 = vpop.f32.mrf.mxu0
  %v1854 = vadd.f32 0.0, %v1853
  %v1855 = vpop.f32.mrf.mxu0
  %v1856 = vadd.f32 0.0, %v1855
  %1857 = vdwg.mxu0
  %1858 = vmatprep.subr.bf16.mxu0 0
  %1859 = vmatpush1.bf16.msra.mxu0 0
  %1860 = vmatprep.subr.bf16.mxu0 0
  %1861 = vmatpush1.bf16.msra.mxu0 0
  %1862 = vmatprep.subr.bf16.mxu0 0
  %1863 = vmatpush1.bf16.msra.mxu0 0
  %1864 = vmatprep.subr.bf16.mxu0 0
  %1865 = vmatpush1.bf16.msra.mxu0 0
  %1866 = vmatprep.subr.bf16.mxu0 0
  %1867 = vmatpush1.bf16.msra.mxu0 0
  %1868 = vmatprep.subr.bf16.mxu0 0
  %1869 = vmatpush1.bf16.msra.mxu0 0
  %1870 = vmatprep.subr.bf16.mxu0 %v1770
  %1871 = vmatpush1.bf16.msra.mxu0 %v1769
  %1872 = vmatprep.subr.bf16.mxu0 %v1755
  %1873 = vmatpush1.bf16.msra.mxu0 %v1754
  %1874 = vmatprep.subr.bf16.mxu0 0
  %1875 = vmatpush2.bf16.msra.mxu0 0
  %1876 = vmatprep.subr.bf16.mxu0 0
  %1877 = vmatpush2.bf16.msra.mxu0 0
  %1878 = vmatprep.subr.bf16.mxu0 0
  %1879 = vmatpush2.bf16.msra.mxu0 0
  %1880 = vmatprep.subr.bf16.mxu0 0
  %1881 = vmatpush2.bf16.msra.mxu0 0
  %1882 = vmatprep.subr.bf16.mxu0 0
  %1883 = vmatpush2.bf16.msra.mxu0 0
  %1884 = vmatprep.subr.bf16.mxu0 0
  %1885 = vmatpush2.bf16.msra.mxu0 0
  %1886 = vmatprep.subr.bf16.mxu0 0
  %1887 = vmatpush2.bf16.msra.mxu0 0
  %1888 = vmatprep.subr.bf16.mxu0 0
  %1889 = vmatpush2.bf16.msra.mxu0 0
  %1890 = vmatprep.mubr.bf16.mxu0 0
  %1891 = vmatmul.mubr.bf16.gmra.mxu0 %v1813
  %v1892 = vpop.f32.mrf.mxu0
  %v1893 = vadd.f32 0.0, %v1892
  %v1894 = vpop.f32.mrf.mxu0
  %v1895 = vadd.f32 0.0, %v1894
  %v1896 = vpop.f32.mrf.mxu0
  %v1897 = vadd.f32 0.0, %v1896
  %v1898 = vpop.f32.mrf.mxu0
  %v1899 = vadd.f32 0.0, %v1898
  %1900 = vdwg.mxu0
  %1901 = vmatprep.subr.bf16.mxu0 0
  %1902 = vmatpush1.bf16.msra.mxu0 0
  %1903 = vmatprep.subr.bf16.mxu0 0
  %1904 = vmatpush1.bf16.msra.mxu0 0
  %1905 = vmatprep.subr.bf16.mxu0 0
  %1906 = vmatpush1.bf16.msra.mxu0 0
  %1907 = vmatprep.subr.bf16.mxu0 0
  %1908 = vmatpush1.bf16.msra.mxu0 0
  %1909 = vmatprep.subr.bf16.mxu0 0
  %1910 = vmatpush1.bf16.msra.mxu0 0
  %1911 = vmatprep.subr.bf16.mxu0 0
  %1912 = vmatpush1.bf16.msra.mxu0 0
  %1913 = vmatprep.subr.bf16.mxu0 %v1772
  %1914 = vmatpush1.bf16.msra.mxu0 %v1771
  %1915 = vmatprep.subr.bf16.mxu0 %v1757
  %1916 = vmatpush1.bf16.msra.mxu0 %v1756
  %1917 = vmatprep.subr.bf16.mxu0 0
  %1918 = vmatpush2.bf16.msra.mxu0 0
  %1919 = vmatprep.subr.bf16.mxu0 0
  %1920 = vmatpush2.bf16.msra.mxu0 0
  %1921 = vmatprep.subr.bf16.mxu0 0
  %1922 = vmatpush2.bf16.msra.mxu0 0
  %1923 = vmatprep.subr.bf16.mxu0 0
  %1924 = vmatpush2.bf16.msra.mxu0 0
  %1925 = vmatprep.subr.bf16.mxu0 0
  %1926 = vmatpush2.bf16.msra.mxu0 0
  %1927 = vmatprep.subr.bf16.mxu0 0
  %1928 = vmatpush2.bf16.msra.mxu0 0
  %1929 = vmatprep.subr.bf16.mxu0 0
  %1930 = vmatpush2.bf16.msra.mxu0 0
  %1931 = vmatprep.subr.bf16.mxu0 0
  %1932 = vmatpush2.bf16.msra.mxu0 0
  %1933 = vmatprep.mubr.bf16.mxu0 0
  %1934 = vmatmul.mubr.bf16.gmra.mxu0 %v1813
  %v1935 = vpop.f32.mrf.mxu0
  %v1936 = vadd.f32 0.0, %v1935
  %v1937 = vpop.f32.mrf.mxu0
  %v1938 = vadd.f32 0.0, %v1937
  %v1939 = vpop.f32.mrf.mxu0
  %v1940 = vadd.f32 0.0, %v1939
  %v1941 = vpop.f32.mrf.mxu0
  %v1942 = vadd.f32 0.0, %v1941
  %1943 = vdwg.mxu0
  %1944 = vmatprep.subr.bf16.mxu0 0
  %1945 = vmatpush1.bf16.msra.mxu0 0
  %1946 = vmatprep.subr.bf16.mxu0 0
  %1947 = vmatpush1.bf16.msra.mxu0 0
  %1948 = vmatprep.subr.bf16.mxu0 0
  %1949 = vmatpush1.bf16.msra.mxu0 0
  %1950 = vmatprep.subr.bf16.mxu0 0
  %1951 = vmatpush1.bf16.msra.mxu0 0
  %1952 = vmatprep.subr.bf16.mxu0 0
  %1953 = vmatpush1.bf16.msra.mxu0 0
  %1954 = vmatprep.subr.bf16.mxu0 0
  %1955 = vmatpush1.bf16.msra.mxu0 0
  %1956 = vmatprep.subr.bf16.mxu0 %v1774
  %1957 = vmatpush1.bf16.msra.mxu0 %v1773
  %1958 = vmatprep.subr.bf16.mxu0 %v1759
  %1959 = vmatpush1.bf16.msra.mxu0 %v1758
  %1960 = vmatprep.subr.bf16.mxu0 0
  %1961 = vmatpush2.bf16.msra.mxu0 0
  %1962 = vmatprep.subr.bf16.mxu0 0
  %1963 = vmatpush2.bf16.msra.mxu0 0
  %1964 = vmatprep.subr.bf16.mxu0 0
  %1965 = vmatpush2.bf16.msra.mxu0 0
  %1966 = vmatprep.subr.bf16.mxu0 0
  %1967 = vmatpush2.bf16.msra.mxu0 0
  %1968 = vmatprep.subr.bf16.mxu0 0
  %1969 = vmatpush2.bf16.msra.mxu0 0
  %1970 = vmatprep.subr.bf16.mxu0 0
  %1971 = vmatpush2.bf16.msra.mxu0 0
  %1972 = vmatprep.subr.bf16.mxu0 0
  %1973 = vmatpush2.bf16.msra.mxu0 0
  %1974 = vmatprep.subr.bf16.mxu0 0
  %1975 = vmatpush2.bf16.msra.mxu0 0
  %1976 = vmatprep.mubr.bf16.mxu0 0
  %1977 = vmatmul.mubr.bf16.gmra.mxu0 %v1813
  %v1978 = vpop.f32.mrf.mxu0
  %v1979 = vadd.f32 0.0, %v1978
  %v1980 = vpop.f32.mrf.mxu0
  %v1981 = vadd.f32 0.0, %v1980
  %v1982 = vpop.f32.mrf.mxu0
  %v1983 = vadd.f32 0.0, %v1982
  %v1984 = vpop.f32.mrf.mxu0
  %v1985 = vadd.f32 0.0, %v1984
  %1986 = vdwg.mxu0
  %1987 = vmatprep.subr.bf16.mxu0 0
  %1988 = vmatpush1.bf16.msra.mxu0 0
  %1989 = vmatprep.subr.bf16.mxu0 0
  %1990 = vmatpush1.bf16.msra.mxu0 0
  %1991 = vmatprep.subr.bf16.mxu0 0
  %1992 = vmatpush1.bf16.msra.mxu0 0
  %1993 = vmatprep.subr.bf16.mxu0 0
  %1994 = vmatpush1.bf16.msra.mxu0 0
  %1995 = vmatprep.subr.bf16.mxu0 0
  %1996 = vmatpush1.bf16.msra.mxu0 0
  %1997 = vmatprep.subr.bf16.mxu0 0
  %1998 = vmatpush1.bf16.msra.mxu0 0
  %1999 = vmatprep.subr.bf16.mxu0 %v1776
  %2000 = vmatpush1.bf16.msra.mxu0 %v1775
  %2001 = vmatprep.subr.bf16.mxu0 %v1761
  %2002 = vmatpush1.bf16.msra.mxu0 %v1760
  %2003 = vmatprep.subr.bf16.mxu0 0
  %2004 = vmatpush2.bf16.msra.mxu0 0
  %2005 = vmatprep.subr.bf16.mxu0 0
  %2006 = vmatpush2.bf16.msra.mxu0 0
  %2007 = vmatprep.subr.bf16.mxu0 0
  %2008 = vmatpush2.bf16.msra.mxu0 0
  %2009 = vmatprep.subr.bf16.mxu0 0
  %2010 = vmatpush2.bf16.msra.mxu0 0
  %2011 = vmatprep.subr.bf16.mxu0 0
  %2012 = vmatpush2.bf16.msra.mxu0 0
  %2013 = vmatprep.subr.bf16.mxu0 0
  %2014 = vmatpush2.bf16.msra.mxu0 0
  %2015 = vmatprep.subr.bf16.mxu0 0
  %2016 = vmatpush2.bf16.msra.mxu0 0
  %2017 = vmatprep.subr.bf16.mxu0 0
  %2018 = vmatpush2.bf16.msra.mxu0 0
  %2019 = vmatprep.mubr.bf16.mxu0 0
  %2020 = vmatmul.mubr.bf16.gmra.mxu0 %v1813
  %v2021 = vpop.f32.mrf.mxu0
  %v2022 = vadd.f32 0.0, %v2021
  %v2023 = vpop.f32.mrf.mxu0
  %v2024 = vadd.f32 0.0, %v2023
  %v2025 = vpop.f32.mrf.mxu0
  %v2026 = vadd.f32 0.0, %v2025
  %v2027 = vpop.f32.mrf.mxu0
  %v2028 = vadd.f32 0.0, %v2027
  %2029 = vdwg.mxu0
  %2030 = vmatprep.subr.bf16.mxu0 0
  %2031 = vmatpush1.bf16.msra.mxu0 0
  %2032 = vmatprep.subr.bf16.mxu0 0
  %2033 = vmatpush1.bf16.msra.mxu0 0
  %2034 = vmatprep.subr.bf16.mxu0 0
  %2035 = vmatpush1.bf16.msra.mxu0 0
  %2036 = vmatprep.subr.bf16.mxu0 0
  %2037 = vmatpush1.bf16.msra.mxu0 0
  %2038 = vmatprep.subr.bf16.mxu0 0
  %2039 = vmatpush1.bf16.msra.mxu0 0
  %2040 = vmatprep.subr.bf16.mxu0 0
  %2041 = vmatpush1.bf16.msra.mxu0 0
  %2042 = vmatprep.subr.bf16.mxu0 %v1778
  %2043 = vmatpush1.bf16.msra.mxu0 %v1777
  %2044 = vmatprep.subr.bf16.mxu0 %v1763
  %2045 = vmatpush1.bf16.msra.mxu0 %v1762
  %2046 = vmatprep.subr.bf16.mxu0 0
  %2047 = vmatpush2.bf16.msra.mxu0 0
  %2048 = vmatprep.subr.bf16.mxu0 0
  %2049 = vmatpush2.bf16.msra.mxu0 0
  %2050 = vmatprep.subr.bf16.mxu0 0
  %2051 = vmatpush2.bf16.msra.mxu0 0
  %2052 = vmatprep.subr.bf16.mxu0 0
  %2053 = vmatpush2.bf16.msra.mxu0 0
  %2054 = vmatprep.subr.bf16.mxu0 0
  %2055 = vmatpush2.bf16.msra.mxu0 0
  %2056 = vmatprep.subr.bf16.mxu0 0
  %2057 = vmatpush2.bf16.msra.mxu0 0
  %2058 = vmatprep.subr.bf16.mxu0 0
  %2059 = vmatpush2.bf16.msra.mxu0 0
  %2060 = vmatprep.subr.bf16.mxu0 0
  %2061 = vmatpush2.bf16.msra.mxu0 0
  %2062 = vmatprep.mubr.bf16.mxu0 0
  %2063 = vmatmul.mubr.bf16.gmra.mxu0 %v1813
  %v2064 = vpop.f32.mrf.mxu0
  %v2065 = vadd.f32 0.0, %v2064
  %v2066 = vpop.f32.mrf.mxu0
  %v2067 = vadd.f32 0.0, %v2066
  %v2068 = vpop.f32.mrf.mxu0
  %v2069 = vadd.f32 0.0, %v2068
  %v2070 = vpop.f32.mrf.mxu0
  %v2071 = vadd.f32 0.0, %v2070
  %2072 = vdwg.mxu0
  %2073 = vmatprep.subr.bf16.mxu0 0
  %2074 = vmatpush1.bf16.msra.mxu0 0
  %2075 = vmatprep.subr.bf16.mxu0 0
  %2076 = vmatpush1.bf16.msra.mxu0 0
  %2077 = vmatprep.subr.bf16.mxu0 0
  %2078 = vmatpush1.bf16.msra.mxu0 0
  %2079 = vmatprep.subr.bf16.mxu0 0
  %2080 = vmatpush1.bf16.msra.mxu0 0
  %2081 = vmatprep.subr.bf16.mxu0 0
  %2082 = vmatpush1.bf16.msra.mxu0 0
  %2083 = vmatprep.subr.bf16.mxu0 0
  %2084 = vmatpush1.bf16.msra.mxu0 0
  %2085 = vmatprep.subr.bf16.mxu0 %v1780
  %2086 = vmatpush1.bf16.msra.mxu0 %v1779
  %2087 = vmatprep.subr.bf16.mxu0 %v1765
  %2088 = vmatpush1.bf16.msra.mxu0 %v1764
  %2089 = vmatprep.subr.bf16.mxu0 0
  %2090 = vmatpush2.bf16.msra.mxu0 0
  %2091 = vmatprep.subr.bf16.mxu0 0
  %2092 = vmatpush2.bf16.msra.mxu0 0
  %2093 = vmatprep.subr.bf16.mxu0 0
  %2094 = vmatpush2.bf16.msra.mxu0 0
  %2095 = vmatprep.subr.bf16.mxu0 0
  %2096 = vmatpush2.bf16.msra.mxu0 0
  %2097 = vmatprep.subr.bf16.mxu0 0
  %2098 = vmatpush2.bf16.msra.mxu0 0
  %2099 = vmatprep.subr.bf16.mxu0 0
  %2100 = vmatpush2.bf16.msra.mxu0 0
  %2101 = vmatprep.subr.bf16.mxu0 0
  %2102 = vmatpush2.bf16.msra.mxu0 0
  %2103 = vmatprep.subr.bf16.mxu0 0
  %2104 = vmatpush2.bf16.msra.mxu0 0
  %2105 = vmatprep.mubr.bf16.mxu0 0
  %2106 = vmatmul.mubr.bf16.gmra.mxu0 %v1813
  %v2107 = vpop.f32.mrf.mxu0
  %v2108 = vadd.f32 0.0, %v2107
  %v2109 = vpop.f32.mrf.mxu0
  %v2110 = vadd.f32 0.0, %v2109
  %v2111 = vpop.f32.mrf.mxu0
  %v2112 = vadd.f32 0.0, %v2111
  %v2113 = vpop.f32.mrf.mxu0
  %v2114 = vadd.f32 0.0, %v2113
  %2115 = vdwg.mxu0
  %2116 = vmatprep.subr.bf16.mxu0 0
  %2117 = vmatpush1.bf16.msra.mxu0 0
  %2118 = vmatprep.subr.bf16.mxu0 0
  %2119 = vmatpush1.bf16.msra.mxu0 0
  %2120 = vmatprep.subr.bf16.mxu0 0
  %2121 = vmatpush1.bf16.msra.mxu0 0
  %2122 = vmatprep.subr.bf16.mxu0 0
  %2123 = vmatpush1.bf16.msra.mxu0 0
  %2124 = vmatprep.subr.bf16.mxu0 0
  %2125 = vmatpush1.bf16.msra.mxu0 0
  %2126 = vmatprep.subr.bf16.mxu0 0
  %2127 = vmatpush1.bf16.msra.mxu0 0
  %2128 = vmatprep.subr.bf16.mxu0 0
  %2129 = vmatpush1.bf16.msra.mxu0 %v1781
  %2130 = vmatprep.subr.bf16.mxu0 0
  %2131 = vmatpush1.bf16.msra.mxu0 %v1766
  %2132 = vmatprep.subr.bf16.mxu0 0
  %2133 = vmatpush2.bf16.msra.mxu0 0
  %2134 = vmatprep.subr.bf16.mxu0 0
  %2135 = vmatpush2.bf16.msra.mxu0 0
  %2136 = vmatprep.subr.bf16.mxu0 0
  %2137 = vmatpush2.bf16.msra.mxu0 0
  %2138 = vmatprep.subr.bf16.mxu0 0
  %2139 = vmatpush2.bf16.msra.mxu0 0
  %2140 = vmatprep.subr.bf16.mxu0 0
  %2141 = vmatpush2.bf16.msra.mxu0 0
  %2142 = vmatprep.subr.bf16.mxu0 0
  %2143 = vmatpush2.bf16.msra.mxu0 0
  %2144 = vmatprep.subr.bf16.mxu0 0
  %2145 = vmatpush2.bf16.msra.mxu0 0
  %2146 = vmatprep.subr.bf16.mxu0 0
  %2147 = vmatpush2.bf16.msra.mxu0 0
  %2148 = vmatprep.mubr.bf16.mxu0 0
  %2149 = vmatmul.mubr.bf16.gmra.mxu0 %v1813
  %v2150 = vpop.f32.mrf.mxu0
  %v2151 = vadd.f32 0.0, %v2150
  %v2152 = vpop.f32.mrf.mxu0
  %v2153 = vpop.f32.mrf.mxu0
  %v2154 = vadd.f32 0.0, %v2153
  %v2155 = vpop.f32.mrf.mxu0
  %2156 = vdwg.mxu0
  %v2157 = vtanh.pop %v344
  %v2158 = vtanh.pop %v346
  %v2159 = vtanh.pop %v387
  %v2160 = vtanh.pop %v389
  %v2161 = vtanh.pop %v430
  %v2162 = vtanh.pop %v432
  %v2163 = vtanh.pop %v473
  %v2164 = vtanh.pop %v475
  %v2165 = vtanh.pop %v516
  %v2166 = vtanh.pop %v518
  %v2167 = vtanh.pop %v559
  %v2168 = vtanh.pop %v561
  %v2169 = vtanh.pop %v602
  %v2170 = vtanh.pop %v604
  %v2171 = vtanh.pop %v645
  %v2172 = vtanh.pop %v348
  %v2173 = vtanh.pop %v350
  %v2174 = vtanh.pop %v391
  %v2175 = vtanh.pop %v393
  %v2176 = vtanh.pop %v434
  %v2177 = vtanh.pop %v436
  %v2178 = vtanh.pop %v477
  %v2179 = vtanh.pop %v479
  %v2180 = vtanh.pop %v520
  %v2181 = vtanh.pop %v522
  %v2182 = vtanh.pop %v563
  %v2183 = vtanh.pop %v565
  %v2184 = vtanh.pop %v606
  %v2185 = vtanh.pop %v608
  %v2186 = vtanh.pop %v648
  %v2187 = vtanh.pop %v846
  %v2188 = vtanh.pop %v848
  %v2189 = vtanh.pop %v889
  %v2190 = vtanh.pop %v891
  %v2191 = vtanh.pop %v932
  %v2192 = vtanh.pop %v934
  %v2193 = vtanh.pop %v975
  %v2194 = vtanh.pop %v977
  %v2195 = vtanh.pop %v1018
  %v2196 = vtanh.pop %v1020
  %v2197 = vtanh.pop %v1061
  %v2198 = vtanh.pop %v1063
  %v2199 = vtanh.pop %v1104
  %v2200 = vtanh.pop %v1106
  %v2201 = vtanh.pop %v1147
  %v2202 = vtanh.pop %v850
  %v2203 = vtanh.pop %v852
  %v2204 = vtanh.pop %v893
  %v2205 = vtanh.pop %v895
  %v2206 = vtanh.pop %v936
  %v2207 = vtanh.pop %v938
  %v2208 = vtanh.pop %v979
  %v2209 = vtanh.pop %v981
  %v2210 = vtanh.pop %v1022
  %v2211 = vtanh.pop %v1024
  %v2212 = vtanh.pop %v1065
  %v2213 = vtanh.pop %v1067
  %v2214 = vtanh.pop %v1108
  %v2215 = vtanh.pop %v1110
  %v2216 = vtanh.pop %v1150
  %v2217 = vtanh.pop %v1348
  %v2218 = vtanh.pop %v1350
  %v2219 = vtanh.pop %v1391
  %v2220 = vtanh.pop %v1393
  %v2221 = vtanh.pop %v1434
  %v2222 = vtanh.pop %v1436
  %v2223 = vtanh.pop %v1477
  %v2224 = vtanh.pop %v1479
  %v2225 = vtanh.pop %v1520
  %v2226 = vtanh.pop %v1522
  %v2227 = vtanh.pop %v1563
  %v2228 = vtanh.pop %v1565
  %v2229 = vtanh.pop %v1606
  %v2230 = vtanh.pop %v1608
  %v2231 = vtanh.pop %v1649
  %v2232 = vtanh.pop %v1352
  %v2233 = vtanh.pop %v1354
  %v2234 = vtanh.pop %v1395
  %v2235 = vtanh.pop %v1397
  %v2236 = vtanh.pop %v1438
  %v2237 = vtanh.pop %v1440
  %v2238 = vtanh.pop %v1481
  %v2239 = vtanh.pop %v1483
  %v2240 = vtanh.pop %v1524
  %v2241 = vtanh.pop %v1526
  %v2242 = vtanh.pop %v1567
  %v2243 = vtanh.pop %v1569
  %v2244 = vtanh.pop %v1610
  %v2245 = vtanh.pop %v1612
  %v2246 = vtanh.pop %v1652
  %v2247 = vtanh.pop %v1850
  %v2248 = vtanh.pop %v1852
  %v2249 = vtanh.pop %v1893
  %v2250 = vtanh.pop %v1895
  %v2251 = vtanh.pop %v1936
  %v2252 = vtanh.pop %v1938
  %v2253 = vtanh.pop %v1979
  %v2254 = vtanh.pop %v1981
  %v2255 = vtanh.pop %v2022
  %v2256 = vtanh.pop %v2024
  %v2257 = vtanh.pop %v2065
  %v2258 = vtanh.pop %v2067
  %v2259 = vtanh.pop %v2108
  %v2260 = vtanh.pop %v2110
  %v2261 = vtanh.pop %v2151
  %v2262 = vtanh.pop %v1854
  %v2263 = vtanh.pop %v1856
  %v2264 = vtanh.pop %v1897
  %v2265 = vtanh.pop %v1899
  %v2266 = vtanh.pop %v1940
  %v2267 = vtanh.pop %v1942
  %v2268 = vtanh.pop %v1983
  %v2269 = vtanh.pop %v1985
  %v2270 = vtanh.pop %v2026
  %v2271 = vtanh.pop %v2028
  %v2272 = vtanh.pop %v2069
  %v2273 = vtanh.pop %v2071
  %v2274 = vtanh.pop %v2112
  %v2275 = vtanh.pop %v2114
  %v2276 = vtanh.pop %v2154
  %2277 = vst [vmem:[%s2] sm:$0xff] %v2157
  %2278 = vst [vmem:[%s2 + $0x8] sm:$0xff] %v2158
  %2279 = vst [vmem:[%s2 + $0x10] sm:$0xff] %v2159
  %2280 = vst [vmem:[%s2 + $0x18] sm:$0xff] %v2160
  %2281 = vst [vmem:[%s2 + $0x20] sm:$0xff] %v2161
  %2282 = vst [vmem:[%s2 + $0x28] sm:$0xff] %v2162
  %2283 = vst [vmem:[%s2 + $0x30] sm:$0xff] %v2163
  %2284 = vst [vmem:[%s2 + $0x38] sm:$0xff] %v2164
  %2285 = vst [vmem:[%s2 + $0x40] sm:$0xff] %v2165
  %2286 = vst [vmem:[%s2 + $0x48] sm:$0xff] %v2166
  %2287 = vst [vmem:[%s2 + $0x50] sm:$0xff] %v2167
  %2288 = vst [vmem:[%s2 + $0x58] sm:$0xff] %v2168
  %2289 = vst [vmem:[%s2 + $0x60] sm:$0xff] %v2169
  %2290 = vst [vmem:[%s2 + $0x68] sm:$0xff] %v2170
  %2291 = vst [vmem:[%s2 + $0x70] sm:$0xff] %v2171
  %2292 = vst [vmem:[%s2 + $0x78] sm:$0xff] %v2172
  %2293 = vst [vmem:[%s2 + $0x80] sm:$0xff] %v2173
  %2294 = vst [vmem:[%s2 + $0x88] sm:$0xff] %v2174
  %2295 = vst [vmem:[%s2 + $0x90] sm:$0xff] %v2175
  %2296 = vst [vmem:[%s2 + $0x98] sm:$0xff] %v2176
  %2297 = vst [vmem:[%s2 + $0xa0] sm:$0xff] %v2177
  %2298 = vst [vmem:[%s2 + $0xa8] sm:$0xff] %v2178
  %2299 = vst [vmem:[%s2 + $0xb0] sm:$0xff] %v2179
  %2300 = vst [vmem:[%s2 + $0xb8] sm:$0xff] %v2180
  %2301 = vst [vmem:[%s2 + $0xc0] sm:$0xff] %v2181
  %2302 = vst [vmem:[%s2 + $0xc8] sm:$0xff] %v2182
  %2303 = vst [vmem:[%s2 + $0xd0] sm:$0xff] %v2183
  %2304 = vst [vmem:[%s2 + $0xd8] sm:$0xff] %v2184
  %2305 = vst [vmem:[%s2 + $0xe0] sm:$0xff] %v2185
  %2306 = vst [vmem:[%s2 + $0xe8] sm:$0xff] %v2186
  %2307 = vst [vmem:[%s2 + $0xf0] sm:$0xff] %v2187
  %2308 = vst [vmem:[%s2 + $0xf8] sm:$0xff] %v2188
  %2309 = vst [vmem:[%s2 + $0x100] sm:$0xff] %v2189
  %2310 = vst [vmem:[%s2 + $0x108] sm:$0xff] %v2190
  %2311 = vst [vmem:[%s2 + $0x110] sm:$0xff] %v2191
  %2312 = vst [vmem:[%s2 + $0x118] sm:$0xff] %v2192
  %2313 = vst [vmem:[%s2 + $0x120] sm:$0xff] %v2193
  %2314 = vst [vmem:[%s2 + $0x128] sm:$0xff] %v2194
  %2315 = vst [vmem:[%s2 + $0x130] sm:$0xff] %v2195
  %2316 = vst [vmem:[%s2 + $0x138] sm:$0xff] %v2196
  %2317 = vst [vmem:[%s2 + $0x140] sm:$0xff] %v2197
  %2318 = vst [vmem:[%s2 + $0x148] sm:$0xff] %v2198
  %2319 = vst [vmem:[%s2 + $0x150] sm:$0xff] %v2199
  %2320 = vst [vmem:[%s2 + $0x158] sm:$0xff] %v2200
  %2321 = vst [vmem:[%s2 + $0x160] sm:$0xff] %v2201
  %2322 = vst [vmem:[%s2 + $0x168] sm:$0xff] %v2202
  %2323 = vst [vmem:[%s2 + $0x170] sm:$0xff] %v2203
  %2324 = vst [vmem:[%s2 + $0x178] sm:$0xff] %v2204
  %2325 = vst [vmem:[%s2 + $0x180] sm:$0xff] %v2205
  %2326 = vst [vmem:[%s2 + $0x188] sm:$0xff] %v2206
  %2327 = vst [vmem:[%s2 + $0x190] sm:$0xff] %v2207
  %2328 = vst [vmem:[%s2 + $0x198] sm:$0xff] %v2208
  %2329 = vst [vmem:[%s2 + $0x1a0] sm:$0xff] %v2209
  %2330 = vst [vmem:[%s2 + $0x1a8] sm:$0xff] %v2210
  %2331 = vst [vmem:[%s2 + $0x1b0] sm:$0xff] %v2211
  %2332 = vst [vmem:[%s2 + $0x1b8] sm:$0xff] %v2212
  %2333 = vst [vmem:[%s2 + $0x1c0] sm:$0xff] %v2213
  %2334 = vst [vmem:[%s2 + $0x1c8] sm:$0xff] %v2214
  %2335 = vst [vmem:[%s2 + $0x1d0] sm:$0xff] %v2215
  %2336 = vst [vmem:[%s2 + $0x1d8] sm:$0xff] %v2216
  %2337 = vst [vmem:[%s2 + $0x1e0] sm:$0xff] %v2217
  %2338 = vst [vmem:[%s2 + $0x1e8] sm:$0xff] %v2218
  %2339 = vst [vmem:[%s2 + $0x1f0] sm:$0xff] %v2219
  %2340 = vst [vmem:[%s2 + $0x1f8] sm:$0xff] %v2220
  %2341 = vst [vmem:[%s2 + $0x200] sm:$0xff] %v2221
  %2342 = vst [vmem:[%s2 + $0x208] sm:$0xff] %v2222
  %2343 = vst [vmem:[%s2 + $0x210] sm:$0xff] %v2223
  %2344 = vst [vmem:[%s2 + $0x218] sm:$0xff] %v2224
  %2345 = vst [vmem:[%s2 + $0x220] sm:$0xff] %v2225
  %2346 = vst [vmem:[%s2 + $0x228] sm:$0xff] %v2226
  %2347 = vst [vmem:[%s2 + $0x230] sm:$0xff] %v2227
  %2348 = vst [vmem:[%s2 + $0x238] sm:$0xff] %v2228
  %2349 = vst [vmem:[%s2 + $0x240] sm:$0xff] %v2229
  %2350 = vst [vmem:[%s2 + $0x248] sm:$0xff] %v2230
  %2351 = vst [vmem:[%s2 + $0x250] sm:$0xff] %v2231
  %2352 = vst [vmem:[%s2 + $0x258] sm:$0xff] %v2232
  %2353 = vst [vmem:[%s2 + $0x260] sm:$0xff] %v2233
  %2354 = vst [vmem:[%s2 + $0x268] sm:$0xff] %v2234
  %2355 = vst [vmem:[%s2 + $0x270] sm:$0xff] %v2235
  %2356 = vst [vmem:[%s2 + $0x278] sm:$0xff] %v2236
  %2357 = vst [vmem:[%s2 + $0x280] sm:$0xff] %v2237
  %2358 = vst [vmem:[%s2 + $0x288] sm:$0xff] %v2238
  %2359 = vst [vmem:[%s2 + $0x290] sm:$0xff] %v2239
  %2360 = vst [vmem:[%s2 + $0x298] sm:$0xff] %v2240
  %2361 = vst [vmem:[%s2 + $0x2a0] sm:$0xff] %v2241
  %2362 = vst [vmem:[%s2 + $0x2a8] sm:$0xff] %v2242
  %2363 = vst [vmem:[%s2 + $0x2b0] sm:$0xff] %v2243
  %2364 = vst [vmem:[%s2 + $0x2b8] sm:$0xff] %v2244
  %2365 = vst [vmem:[%s2 + $0x2c0] sm:$0xff] %v2245
  %2366 = vst [vmem:[%s2 + $0x2c8] sm:$0xff] %v2246
  %2367 = vst [vmem:[%s2 + $0x2d0] sm:$0xff] %v2247
  %2368 = vst [vmem:[%s2 + $0x2d8] sm:$0xff] %v2248
  %2369 = vst [vmem:[%s2 + $0x2e0] sm:$0xff] %v2249
  %2370 = vst [vmem:[%s2 + $0x2e8] sm:$0xff] %v2250
  %2371 = vst [vmem:[%s2 + $0x2f0] sm:$0xff] %v2251
  %2372 = vst [vmem:[%s2 + $0x2f8] sm:$0xff] %v2252
  %2373 = vst [vmem:[%s2 + $0x300] sm:$0xff] %v2253
  %2374 = vst [vmem:[%s2 + $0x308] sm:$0xff] %v2254
  %2375 = vst [vmem:[%s2 + $0x310] sm:$0xff] %v2255
  %2376 = vst [vmem:[%s2 + $0x318] sm:$0xff] %v2256
  %2377 = vst [vmem:[%s2 + $0x320] sm:$0xff] %v2257
  %2378 = vst [vmem:[%s2 + $0x328] sm:$0xff] %v2258
  %2379 = vst [vmem:[%s2 + $0x330] sm:$0xff] %v2259
  %2380 = vst [vmem:[%s2 + $0x338] sm:$0xff] %v2260
  %2381 = vst [vmem:[%s2 + $0x340] sm:$0xff] %v2261
  %2382 = vst [vmem:[%s2 + $0x348] sm:$0xff] %v2262
  %2383 = vst [vmem:[%s2 + $0x350] sm:$0xff] %v2263
  %2384 = vst [vmem:[%s2 + $0x358] sm:$0xff] %v2264
  %2385 = vst [vmem:[%s2 + $0x360] sm:$0xff] %v2265
  %2386 = vst [vmem:[%s2 + $0x368] sm:$0xff] %v2266
  %2387 = vst [vmem:[%s2 + $0x370] sm:$0xff] %v2267
  %2388 = vst [vmem:[%s2 + $0x378] sm:$0xff] %v2268
  %2389 = vst [vmem:[%s2 + $0x380] sm:$0xff] %v2269
  %2390 = vst [vmem:[%s2 + $0x388] sm:$0xff] %v2270
  %2391 = vst [vmem:[%s2 + $0x390] sm:$0xff] %v2271
  %2392 = vst [vmem:[%s2 + $0x398] sm:$0xff] %v2272
  %2393 = vst [vmem:[%s2 + $0x3a0] sm:$0xff] %v2273
  %2394 = vst [vmem:[%s2 + $0x3a8] sm:$0xff] %v2274
  %2395 = vst [vmem:[%s2 + $0x3b0] sm:$0xff] %v2275
  %2396 = vst [vmem:[%s2 + $0x3b8] sm:$0xff] %v2276
  // Predicated region
  $region10: #{_lambda_.9} parent=0 // pred_check
    _
  $region11: #{_lambda_.9} parent=0 // pred_check_branch
    %2398 = sbr.rel (0) target = $region13
  $region12: #{_lambda_.9} parent=0 // pred_region
    _
  $region13: #{_lambda_.9} parent=0 // pred_fallthru
    _
  // Predicated region
  $region14: #{_lambda_.9} parent=0 // pred_check
    _
  $region15: #{_lambda_.9} parent=0 // pred_check_branch
    %2400 = sbr.rel (0) target = $region17
  $region16: #{_lambda_.9} parent=0 // pred_region
    _
  $region17: #{_lambda_.9} parent=0 // pred_fallthru
    _

</llo_original>
